<compile_context>
chip_gen: v5e
topology: v5e:2x2
jax: 0.10.0
libtpu: 0.0.40
codegen_flags: <defaults>
</compile_context>

<pallas_src>
import functools

import jax
import jax.numpy as jnp
from jax.experimental import pallas as pl
from jax.experimental.pallas import tpu as pltpu

LATENT_DIM = 100
NUM_CLASSES = 10
IMG_PIXELS = 28 * 28          # 784
OUT_PADDED = 7 * 128          # 896, lane-aligned padded output width
H1, H2, H3 = 256, 512, 1024
MEGACORE_MIN_ROWS = 2048      # only shard across v7x's 2 TCs above this batch


def _round_up(x, m):
    return ((x + m - 1) // m) * m


def _leaky_relu(x, slope=0.2):
    return jnp.where(x > 0, x, slope * x)


def _default_act_dtype():
    """bf16 LeakyReLU epilogue on v6e/v7x; f32 on v5e & older (no bf16 VPU)."""
    try:
        kind = jax.devices()[0].device_kind.lower()
    except Exception:  # pragma: no cover - conservative fallback
        return jnp.float32
    if any(t in kind for t in ("v2", "v3", "v4", "v5 lite", "v5e")):
        return jnp.float32
    return jnp.bfloat16


_ACT_DTYPE = _default_act_dtype()


def generator_mlp_kernel(cls_ref, z_ref,
                         w1z_ref,
                         w2_ref, b2_ref,
                         w3_ref, b3_ref,
                         w4_ref, b4_ref,
                         out_ref, *, act_dtype):
    """One batch tile of the generator MLP.

    cls_ref: (TB, 256) f32   per-row (emb @ W1[:10] + b1), gathered by label
    z_ref:   (TB, 100) bf16  latent noise
    wN_ref:  (in, out) bf16  weights (x @ W layout), last layer padded to 896
    bN_ref:  (1, out)  f32   biases
    out_ref: (TB, 896) bf16  tanh'd flat image (cols >= 784 are padding)
    """
    # Layer 1: the label-embedding contribution is pre-folded into cls_ref.
    h = jnp.dot(z_ref[...], w1z_ref[...],
                preferred_element_type=jnp.float32) + cls_ref[...]
    h = _leaky_relu(h.astype(act_dtype))

    h = jnp.dot(h.astype(jnp.bfloat16), w2_ref[...],
                preferred_element_type=jnp.float32) + b2_ref[...]
    h = _leaky_relu(h.astype(act_dtype))

    h = jnp.dot(h.astype(jnp.bfloat16), w3_ref[...],
                preferred_element_type=jnp.float32) + b3_ref[...]
    h = _leaky_relu(h.astype(act_dtype))

    h = jnp.dot(h.astype(jnp.bfloat16), w4_ref[...],
                preferred_element_type=jnp.float32) + b4_ref[...]
    out_ref[...] = jnp.tanh(h).astype(out_ref.dtype)


def _choose_tiling(batch, tile_b=None):
    """Pick (tile_b, padded_batch, dimension_semantics) for a static batch."""
    bp8 = _round_up(batch, 8)
    if tile_b is not None:
        tb = max(128, _round_up(tile_b, 128))
    elif bp8 <= 1024:
        # Weight-DMA-bound regime: a single grid step so the ~3 MB bf16 weight
        # set is fetched exactly once (and never duplicated per TensorCore).
        tb = _round_up(bp8, 128)
    else:
        tb = 512                      # multiple of 256: full MXU M-passes
    bp = _round_up(bp8, tb)
    n_steps = bp // tb
    dims = ("parallel",) if (n_steps >= 2 and bp >= MEGACORE_MIN_ROWS) \
        else ("arbitrary",)
    return tb, bp, dims


@functools.partial(jax.jit, static_argnames=("tile_b",))
def generator_forward(z, labels, packed, tile_b=None):
    """JAX wrapper reproducing Generator.forward(z, labels) -> (B, 1, 28, 28)."""
    B = z.shape[0]
    # Embedding lookup, algebraically folded: rows of (emb @ W1[:10] + b1).
    cls_rows = packed["cls"][labels]                  # (B, 256) f32, JAX glue

    tb, Bp, dims = _choose_tiling(B, tile_b)
    z_in = z.astype(jnp.bfloat16)
    if Bp != B:
        pad = Bp - B
        z_in = jnp.pad(z_in, ((0, pad), (0, 0)))
        cls_in = jnp.pad(cls_rows, ((0, pad), (0, 0)))
    else:
        cls_in = cls_rows

    grid = (Bp // tb,)

    # Activations tiled along batch; weights/biases resident (constant index).
    batch_spec = lambda cols: pl.BlockSpec((tb, cols), lambda i: (i, 0))
    const_spec = lambda r, c: pl.BlockSpec((r, c), lambda i: (0, 0))

    flops = 2 * Bp * (LATENT_DIM * H1 + H1 * H2 + H2 * H3 + H3 * OUT_PADDED)
    weight_bytes = 2 * (LATENT_DIM * H1 + H1 * H2 + H2 * H3 + H3 * OUT_PADDED)
    act_bytes = Bp * (2 * LATENT_DIM + 4 * H1 + 2 * OUT_PADDED)

    kernel = functools.partial(generator_mlp_kernel, act_dtype=_ACT_DTYPE)

    out_flat = pl.pallas_call(
        kernel,
        out_shape=jax.ShapeDtypeStruct((Bp, OUT_PADDED), jnp.bfloat16),
        grid=grid,
        in_specs=[
            batch_spec(H1),                     # cls rows (emb@W1 + b1)
            batch_spec(LATENT_DIM),             # z (bf16)
            const_spec(LATENT_DIM, H1),         # w1_z
            const_spec(H1, H2),                 # w2
            const_spec(1, H2),                  # b2
            const_spec(H2, H3),                 # w3
            const_spec(1, H3),                  # b3
            const_spec(H3, OUT_PADDED),         # w4 (padded)
            const_spec(1, OUT_PADDED),          # b4 (padded)
        ],
        out_specs=batch_spec(OUT_PADDED),
        compiler_params=pltpu.CompilerParams(
            dimension_semantics=dims,
            vmem_limit_bytes=32 * 1024 * 1024,
        ),
        cost_estimate=pl.CostEstimate(
            flops=flops,
            transcendentals=Bp * OUT_PADDED,
            bytes_accessed=weight_bytes + act_bytes,
        ),
    )(
        cls_in, z_in,
        packed["w1z"],
        packed["w2"], packed["b2"],
        packed["w3"], packed["b3"],
        packed["w4"], packed["b4"],
    )
    # Drop batch + lane padding (bf16 copy), then img.view(B, 1, 28, 28).
    return out_flat[:B, :IMG_PIXELS].reshape(B, 1, 28, 28)


def init_params(key):
    """Deterministic synthetic f32 parameters matching the torch module."""
    dims = [LATENT_DIM + NUM_CLASSES, H1, H2, H3, IMG_PIXELS]
    keys = jax.random.split(key, 9)
    params = {
        # nn.Embedding(10, 10): N(0, 1) init like torch default
        "emb": jax.random.normal(keys[0], (NUM_CLASSES, NUM_CLASSES),
                                 dtype=jnp.float32),
    }
    for i in range(4):
        fan_in, fan_out = dims[i], dims[i + 1]
        bound = 1.0 / jnp.sqrt(float(fan_in))
        # torch Linear stores weight as (out, in); keep (in, out) so the kernel
        # computes x @ W + b directly.
        params[f"w{i+1}"] = jax.random.uniform(
            keys[1 + 2 * i], (fan_in, fan_out),
            minval=-bound, maxval=bound, dtype=jnp.float32)
        params[f"b{i+1}"] = jax.random.uniform(
            keys[2 + 2 * i], (1, fan_out),
            minval=-bound, maxval=bound, dtype=jnp.float32)
    return params


def pack_params_for_kernel(params):
    """Fold embedding into a class table, pad the last layer, cast weights bf16."""
    w1 = params["w1"]                                    # (110, 256) f32
    # Exact f32 fold of the embedding path: one (10,256) table, bias included.
    cls_table = params["emb"] @ w1[:NUM_CLASSES] + params["b1"]
    w4 = jnp.pad(params["w4"], ((0, 0), (0, OUT_PADDED - IMG_PIXELS)))
    b4 = jnp.pad(params["b4"], ((0, 0), (0, OUT_PADDED - IMG_PIXELS)))
    return {
        "cls": cls_table,                                # (10, 256) f32
        "w1z": w1[NUM_CLASSES:].astype(jnp.bfloat16),    # (100, 256)
        "w2": params["w2"].astype(jnp.bfloat16),
        "b2": params["b2"],
        "w3": params["w3"].astype(jnp.bfloat16),
        "b3": params["b3"],
        "w4": w4.astype(jnp.bfloat16),
        "b4": b4,
    }


def _reference_forward_f32(z, labels, params):
    """Exact f32 module semantics (loose sanity check vs. the bf16 kernel)."""
    x = jnp.concatenate([params["emb"][labels], z], axis=-1)
    h = x @ params["w1"] + params["b1"]
    h = jnp.where(h > 0, h, 0.2 * h)
    h = h @ params["w2"] + params["b2"]
    h = jnp.where(h > 0, h, 0.2 * h)
    h = h @ params["w3"] + params["b3"]
    h = jnp.where(h > 0, h, 0.2 * h)
    h = h @ params["w4"] + params["b4"]
    return jnp.tanh(h).reshape(z.shape[0], 1, 28, 28)


def _reference_forward_packed(z, labels, packed, act_dtype=_ACT_DTYPE):
    """Pure-JAX reference mirroring the kernel's bf16 quantization exactly."""
    cls = packed["cls"][labels]
    dot = lambda a, w: jnp.dot(a.astype(jnp.bfloat16), w,
                               preferred_element_type=jnp.float32)
    h = dot(z, packed["w1z"]) + cls
    h = _leaky_relu(h.astype(act_dtype))
    h = dot(h, packed["w2"]) + packed["b2"]
    h = _leaky_relu(h.astype(act_dtype))
    h = dot(h, packed["w3"]) + packed["b3"]
    h = _leaky_relu(h.astype(act_dtype))
    h = dot(h, packed["w4"]) + packed["b4"]
    img = jnp.tanh(h).astype(jnp.bfloat16)
    return img[:, :IMG_PIXELS].reshape(z.shape[0], 1, 28, 28)


if __name__ == "__main__":
    key = jax.random.PRNGKey(0)
    k_params, k_z, k_lbl = jax.random.split(key, 3)

    params = init_params(k_params)
    packed = pack_params_for_kernel(params)

    # Case 1: small batch, auto tiling (single grid step, weight-bound regime).
    B = 8
    z = jax.random.normal(k_z, (B, LATENT_DIM), dtype=jnp.float32)
    labels = jax.random.randint(k_lbl, (B,), 0, NUM_CLASSES, dtype=jnp.int32)

    img = jax.block_until_ready(generator_forward(z, labels, packed))
    assert img.shape == (B, 1, 28, 28), img.shape
    assert img.dtype == jnp.bfloat16, img.dtype

    ref_q = _reference_forward_packed(z, labels, packed)
    assert jnp.allclose(img.astype(jnp.float32), ref_q.astype(jnp.float32),
                        atol=1.5e-2), "mismatch vs bf16-quantized reference"
    ref_f32 = _reference_forward_f32(z, labels, params)
    assert jnp.allclose(img.astype(jnp.float32), ref_f32, atol=8e-2), \
        "mismatch vs f32 reference (beyond bf16 tolerance)"

    # Case 2: forced 128-row tiles -> multi-step grid (exercises pipelining).
    B2 = 200
    k_z2, k_lbl2 = jax.random.split(jax.random.PRNGKey(1))
    z2 = jax.random.normal(k_z2, (B2, LATENT_DIM), dtype=jnp.float32)
    labels2 = jax.random.randint(k_lbl2, (B2,), 0, NUM_CLASSES, dtype=jnp.int32)

    img2 = jax.block_until_ready(generator_forward(z2, labels2, packed,
                                                   tile_b=128))
    assert img2.shape == (B2, 1, 28, 28), img2.shape
    ref2 = _reference_forward_packed(z2, labels2, packed)
    assert jnp.allclose(img2.astype(jnp.float32), ref2.astype(jnp.float32),
                        atol=1.5e-2), \
        "mismatch vs bf16-quantized reference (tiled batch)"

    print("KERNEL_OK")
</pallas_src>

<mosaic_0001>
module attributes {stable_mosaic.version = 11 : i64} {
  func.func @generator_mlp_kernel(%arg0: i32, %arg1: memref<128x256xf32, #tpu.memory_space<vmem>>, %arg2: memref<128x100xbf16, #tpu.memory_space<vmem>>, %arg3: memref<100x256xbf16, #tpu.memory_space<vmem>>, %arg4: memref<256x512xbf16, #tpu.memory_space<vmem>>, %arg5: memref<1x512xf32, #tpu.memory_space<vmem>>, %arg6: memref<512x1024xbf16, #tpu.memory_space<vmem>>, %arg7: memref<1x1024xf32, #tpu.memory_space<vmem>>, %arg8: memref<1024x896xbf16, #tpu.memory_space<vmem>>, %arg9: memref<1x896xf32, #tpu.memory_space<vmem>>, %arg10: memref<128x896xbf16, #tpu.memory_space<vmem>>) attributes {dimension_semantics = [#tpu.dimension_semantics<arbitrary>], iteration_bounds = array<i64: 1>, scalar_prefetch = 0 : i64, scratch_operands = 0 : i64, tpu.core_type = #tpu.core_type<tc>, window_params = [{transform_indices = @transform_0, window_bounds = array<i64: 128, 256>}, {transform_indices = @transform_1, window_bounds = array<i64: 128, 100>}, {pipeline_mode = #tpu.pipeline_mode<synchronous>, transform_indices = @transform_2, window_bounds = array<i64: 100, 256>}, {pipeline_mode = #tpu.pipeline_mode<synchronous>, transform_indices = @transform_3, window_bounds = array<i64: 256, 512>}, {pipeline_mode = #tpu.pipeline_mode<synchronous>, transform_indices = @transform_4, window_bounds = array<i64: 1, 512>}, {pipeline_mode = #tpu.pipeline_mode<synchronous>, transform_indices = @transform_5, window_bounds = array<i64: 512, 1024>}, {pipeline_mode = #tpu.pipeline_mode<synchronous>, transform_indices = @transform_6, window_bounds = array<i64: 1, 1024>}, {pipeline_mode = #tpu.pipeline_mode<synchronous>, transform_indices = @transform_7, window_bounds = array<i64: 1024, 896>}, {pipeline_mode = #tpu.pipeline_mode<synchronous>, transform_indices = @transform_8, window_bounds = array<i64: 1, 896>}, {transform_indices = @transform_9, window_bounds = array<i64: 128, 896>}]} {
    %c0 = arith.constant 0 : index
    %c0_0 = arith.constant 0 : index
    %0 = vector.load %arg2[%c0, %c0_0] : memref<128x100xbf16, #tpu.memory_space<vmem>>, vector<128x100xbf16>
    %c0_1 = arith.constant 0 : index
    %c0_2 = arith.constant 0 : index
    %1 = vector.load %arg3[%c0_1, %c0_2] : memref<100x256xbf16, #tpu.memory_space<vmem>>, vector<100x256xbf16>
    %cst = arith.constant dense<0.000000e+00> : vector<128x256xf32>
    %2 = tpu.matmul %0, %1, %cst {dimension_numbers = #tpu.dot_dimension_numbers<[1], [0], [0], [1], [0, 0, 1, 1], [], []>} : vector<128x100xbf16>, vector<100x256xbf16>, vector<128x256xf32> -> vector<128x256xf32>
    %c0_3 = arith.constant 0 : index
    %c0_4 = arith.constant 0 : index
    %3 = vector.load %arg1[%c0_3, %c0_4] : memref<128x256xf32, #tpu.memory_space<vmem>>, vector<128x256xf32>
    %4 = arith.addf %2, %3 : vector<128x256xf32>
    %5 = arith.truncf %4 : vector<128x256xf32> to vector<128x256xbf16>
    %cst_5 = arith.constant 0.000000e+00 : bf16
    %6 = vector.broadcast %cst_5 : bf16 to vector<128x256xbf16>
    %7 = arith.cmpf ogt, %5, %6 : vector<128x256xbf16>
    %cst_6 = arith.constant 2.001950e-01 : bf16
    %8 = vector.broadcast %cst_6 : bf16 to vector<128x256xbf16>
    %9 = arith.mulf %8, %5 : vector<128x256xbf16>
    %10 = arith.select %7, %5, %9 : vector<128x256xi1>, vector<128x256xbf16>
    %c0_7 = arith.constant 0 : index
    %c0_8 = arith.constant 0 : index
    %11 = vector.load %arg4[%c0_7, %c0_8] : memref<256x512xbf16, #tpu.memory_space<vmem>>, vector<256x512xbf16>
    %cst_9 = arith.constant dense<0.000000e+00> : vector<128x512xf32>
    %12 = tpu.matmul %10, %11, %cst_9 {dimension_numbers = #tpu.dot_dimension_numbers<[1], [0], [0], [1], [0, 0, 1, 1], [], []>} : vector<128x256xbf16>, vector<256x512xbf16>, vector<128x512xf32> -> vector<128x512xf32>
    %c0_10 = arith.constant 0 : index
    %c0_11 = arith.constant 0 : index
    %13 = vector.load %arg5[%c0_10, %c0_11] : memref<1x512xf32, #tpu.memory_space<vmem>>, vector<1x512xf32>
    %14 = vector.broadcast %13 : vector<1x512xf32> to vector<128x512xf32>
    %15 = arith.addf %12, %14 : vector<128x512xf32>
    %16 = arith.truncf %15 : vector<128x512xf32> to vector<128x512xbf16>
    %cst_12 = arith.constant 0.000000e+00 : bf16
    %17 = vector.broadcast %cst_12 : bf16 to vector<128x512xbf16>
    %18 = arith.cmpf ogt, %16, %17 : vector<128x512xbf16>
    %cst_13 = arith.constant 2.001950e-01 : bf16
    %19 = vector.broadcast %cst_13 : bf16 to vector<128x512xbf16>
    %20 = arith.mulf %19, %16 : vector<128x512xbf16>
    %21 = arith.select %18, %16, %20 : vector<128x512xi1>, vector<128x512xbf16>
    %c0_14 = arith.constant 0 : index
    %c0_15 = arith.constant 0 : index
    %22 = vector.load %arg6[%c0_14, %c0_15] : memref<512x1024xbf16, #tpu.memory_space<vmem>>, vector<512x1024xbf16>
    %cst_16 = arith.constant dense<0.000000e+00> : vector<128x1024xf32>
    %23 = tpu.matmul %21, %22, %cst_16 {dimension_numbers = #tpu.dot_dimension_numbers<[1], [0], [0], [1], [0, 0, 1, 1], [], []>} : vector<128x512xbf16>, vector<512x1024xbf16>, vector<128x1024xf32> -> vector<128x1024xf32>
    %c0_17 = arith.constant 0 : index
    %c0_18 = arith.constant 0 : index
    %24 = vector.load %arg7[%c0_17, %c0_18] : memref<1x1024xf32, #tpu.memory_space<vmem>>, vector<1x1024xf32>
    %25 = vector.broadcast %24 : vector<1x1024xf32> to vector<128x1024xf32>
    %26 = arith.addf %23, %25 : vector<128x1024xf32>
    %27 = arith.truncf %26 : vector<128x1024xf32> to vector<128x1024xbf16>
    %cst_19 = arith.constant 0.000000e+00 : bf16
    %28 = vector.broadcast %cst_19 : bf16 to vector<128x1024xbf16>
    %29 = arith.cmpf ogt, %27, %28 : vector<128x1024xbf16>
    %cst_20 = arith.constant 2.001950e-01 : bf16
    %30 = vector.broadcast %cst_20 : bf16 to vector<128x1024xbf16>
    %31 = arith.mulf %30, %27 : vector<128x1024xbf16>
    %32 = arith.select %29, %27, %31 : vector<128x1024xi1>, vector<128x1024xbf16>
    %c0_21 = arith.constant 0 : index
    %c0_22 = arith.constant 0 : index
    %33 = vector.load %arg8[%c0_21, %c0_22] : memref<1024x896xbf16, #tpu.memory_space<vmem>>, vector<1024x896xbf16>
    %cst_23 = arith.constant dense<0.000000e+00> : vector<128x896xf32>
    %34 = tpu.matmul %32, %33, %cst_23 {dimension_numbers = #tpu.dot_dimension_numbers<[1], [0], [0], [1], [0, 0, 1, 1], [], []>} : vector<128x1024xbf16>, vector<1024x896xbf16>, vector<128x896xf32> -> vector<128x896xf32>
    %c0_24 = arith.constant 0 : index
    %c0_25 = arith.constant 0 : index
    %35 = vector.load %arg9[%c0_24, %c0_25] : memref<1x896xf32, #tpu.memory_space<vmem>>, vector<1x896xf32>
    %36 = vector.broadcast %35 : vector<1x896xf32> to vector<128x896xf32>
    %37 = arith.addf %34, %36 : vector<128x896xf32>
    %38 = math.tanh %37 : vector<128x896xf32>
    %39 = arith.truncf %38 : vector<128x896xf32> to vector<128x896xbf16>
    %c0_26 = arith.constant 0 : index
    %c0_27 = arith.constant 0 : index
    %40 = vector.load %arg10[%c0_26, %c0_27] : memref<128x896xbf16, #tpu.memory_space<vmem>>, vector<128x896xbf16>
    tpu.vector_store %arg10[%c0_26, %c0_27], %39 {strides = array<i32>} : memref<128x896xbf16, #tpu.memory_space<vmem>>, vector<128x896xbf16>,
    return
  }
  func.func @transform_0(%arg0: i32) -> (i32, i32) {
    %c0_i32 = arith.constant 0 : i32
    %c0_i32_0 = arith.constant 0 : i32
    return %arg0, %c0_i32 : i32, i32
  }
  func.func @transform_1(%arg0: i32) -> (i32, i32) {
    %c0_i32 = arith.constant 0 : i32
    %c0_i32_0 = arith.constant 0 : i32
    return %arg0, %c0_i32 : i32, i32
  }
  func.func @transform_2(%arg0: i32) -> (i32, i32) {
    %c0_i32 = arith.constant 0 : i32
    %c0_i32_0 = arith.constant 0 : i32
    %c0_i32_1 = arith.constant 0 : i32
    return %c0_i32, %c0_i32_0 : i32, i32
  }
  func.func @transform_3(%arg0: i32) -> (i32, i32) {
    %c0_i32 = arith.constant 0 : i32
    %c0_i32_0 = arith.constant 0 : i32
    %c0_i32_1 = arith.constant 0 : i32
    return %c0_i32, %c0_i32_0 : i32, i32
  }
  func.func @transform_4(%arg0: i32) -> (i32, i32) {
    %c0_i32 = arith.constant 0 : i32
    %c0_i32_0 = arith.constant 0 : i32
    %c0_i32_1 = arith.constant 0 : i32
    return %c0_i32, %c0_i32_0 : i32, i32
  }
  func.func @transform_5(%arg0: i32) -> (i32, i32) {
    %c0_i32 = arith.constant 0 : i32
    %c0_i32_0 = arith.constant 0 : i32
    %c0_i32_1 = arith.constant 0 : i32
    return %c0_i32, %c0_i32_0 : i32, i32
  }
  func.func @transform_6(%arg0: i32) -> (i32, i32) {
    %c0_i32 = arith.constant 0 : i32
    %c0_i32_0 = arith.constant 0 : i32
    %c0_i32_1 = arith.constant 0 : i32
    return %c0_i32, %c0_i32_0 : i32, i32
  }
  func.func @transform_7(%arg0: i32) -> (i32, i32) {
    %c0_i32 = arith.constant 0 : i32
    %c0_i32_0 = arith.constant 0 : i32
    %c0_i32_1 = arith.constant 0 : i32
    return %c0_i32, %c0_i32_0 : i32, i32
  }
  func.func @transform_8(%arg0: i32) -> (i32, i32) {
    %c0_i32 = arith.constant 0 : i32
    %c0_i32_0 = arith.constant 0 : i32
    %c0_i32_1 = arith.constant 0 : i32
    return %c0_i32, %c0_i32_0 : i32, i32
  }
  func.func @transform_9(%arg0: i32) -> (i32, i32) {
    %c0_i32 = arith.constant 0 : i32
    %c0_i32_0 = arith.constant 0 : i32
    return %arg0, %c0_i32 : i32, i32
  }
}

</mosaic_0001>

<llo_original>
// kernel: generator_forward.1
$region0: #{generator_forward.1}
  #allocation0 [shape = 'u32[]', space=smem, size = 0x4, offset = 0x4, fixed_abs, tag = 'smem constant byte address 0x4 - core index']
  #allocation1 [shape = 'u32[72,128]{1,0:T(1,128)}', space=vmem, size = 0x9000, scoped, tag = 'internal scratch']
  %s0 = inlined_call_operand.vmem [shape: f32[128,256], index: 0, kind: input, shape index: {}]
  %s1 = inlined_call_operand.vmem [shape: bf16[128,100], index: 1, kind: input, shape index: {}]
  %s2 = inlined_call_operand.hbm [shape: bf16[100,256], index: 2, kind: input, shape index: {}]
  %s3 = inlined_call_operand.hbm [shape: bf16[256,512], index: 3, kind: input, shape index: {}]
  %s4 = inlined_call_operand.hbm [shape: f32[1,512], index: 4, kind: input, shape index: {}]
  %s5 = inlined_call_operand.hbm [shape: bf16[512,1024], index: 5, kind: input, shape index: {}]
  %s6 = inlined_call_operand.hbm [shape: f32[1,1024], index: 6, kind: input, shape index: {}]
  %s7 = inlined_call_operand.hbm [shape: bf16[1024,896], index: 7, kind: input, shape index: {}]
  %s8 = inlined_call_operand.hbm [shape: f32[1,896], index: 8, kind: input, shape index: {}]
  %s9 = inlined_call_operand.vmem [shape: bf16[128,896], index: 9, kind: output, shape index: {}]
  %s10 = sld [smem:[#allocation0]]
  $region74: #{generator_forward.1} parent=0
    _
  %s12 = ssub.s32 1, %s10
  %s13 = scalar_select 0, %s12, %s10
  $region1: #{generator_forward.1} parent=0
    #allocation2 [shape = 'u8[53248]{0}', space=vmem, size = 0xd000, scoped, tag = 'input window, operand 2, single buffered']
    #allocation3 [shape = 's32[1]{0}', space=sflag, size = 0x4, scoped, tag = 'scoped memory for generator_forward.1']
    #allocation4 [shape = 'u8[262144]{0}', space=vmem, size = 0x40000, scoped, tag = 'input window, operand 3, single buffered']
    #allocation5 [shape = 's32[1]{0}', space=sflag, size = 0x4, scoped, tag = 'scoped memory for generator_forward.1']
    #allocation6 [shape = 'u8[2048]{0}', space=vmem, size = 0x800, scoped, tag = 'input window, operand 4, single buffered']
    #allocation7 [shape = 'u8[1048576]{0}', space=vmem, size = 0x100000, scoped, tag = 'input window, operand 5, single buffered']
    #allocation8 [shape = 's32[1]{0}', space=sflag, size = 0x4, scoped, tag = 'scoped memory for generator_forward.1']
    #allocation9 [shape = 'u8[4096]{0}', space=vmem, size = 0x1000, scoped, tag = 'input window, operand 6, single buffered']
    #allocation10 [shape = 'u8[1835008]{0}', space=vmem, size = 0x1c0000, scoped, tag = 'input window, operand 7, single buffered']
    #allocation11 [shape = 's32[1]{0}', space=sflag, size = 0x4, scoped, tag = 'scoped memory for generator_forward.1']
    #allocation12 [shape = 'u8[3584]{0}', space=vmem, size = 0x1000, scoped, tag = 'input window, operand 8, single buffered']
    %14 = vsyncpa [#allocation3], 0
    %15 = vsyncpa [#allocation5], 0
    %16 = vsyncpa [#allocation8], 0
    %17 = vsyncpa [#allocation11], 0
    // Predicated region
    $region2: #{generator_forward.1} parent=1 // pred_check
      _
    $region3: #{generator_forward.1} parent=1 // pred_check_branch
      %19 = sbr.rel (0) target = $region5
    $region4: #{generator_forward.1} parent=1 // pred_region
      _
    $region5: #{generator_forward.1} parent=1 // pred_fallthru
      _
    // Predicated region
    $region6: #{generator_forward.1} parent=1 // pred_check
      _
    $region7: #{generator_forward.1} parent=1 // pred_check_branch
      %21 = sbr.rel (0) target = $region9
    $region8: #{generator_forward.1} parent=1 // pred_region
      _
    $region9: #{generator_forward.1} parent=1 // pred_fallthru
      _
    // Predicated region
    $region10: #{generator_forward.1} parent=1 // pred_check
      _
    $region11: #{generator_forward.1} parent=1 // pred_check_branch
      %23 = sbr.rel (0) target = $region13
    $region12: #{generator_forward.1} parent=1 // pred_region
      %25 = vsyncadd [#allocation3], 0
      %s26 = sshll.u32 %s2, 4
      %s27 = int_to_ptr.hbm [resolvable:$true] %s26
      %s28 = sshll.u32 [#allocation2], 4
      %s29 = int_to_ptr.vmem [resolvable:$true] %s28
      %34 = dma.hbm_to_vmem [thread:$0]  %s27, 1664, %s29, [#allocation3], 128, 128, 8
    $region13: #{generator_forward.1} parent=1 // pred_fallthru
      _
    // Predicated region
    $region14: #{generator_forward.1} parent=1 // pred_check
      _
    $region15: #{generator_forward.1} parent=1 // pred_check_branch
      %36 = sbr.rel (0) target = $region17
    $region16: #{generator_forward.1} parent=1 // pred_region
      %38 = vsyncadd [#allocation5], 0
      %s39 = sshll.u32 %s3, 4
      %s40 = int_to_ptr.hbm [resolvable:$true] %s39
      %s41 = sshll.u32 [#allocation4], 4
      %s42 = int_to_ptr.vmem [resolvable:$true] %s41
      %47 = dma.hbm_to_vmem [thread:$0]  %s40, 8192, %s42, [#allocation5], 256, 256, 16
    $region17: #{generator_forward.1} parent=1 // pred_fallthru
      _
    // Predicated region
    $region18: #{generator_forward.1} parent=1 // pred_check
      _
    $region19: #{generator_forward.1} parent=1 // pred_check_branch
      %49 = sbr.rel (0) target = $region21
    $region20: #{generator_forward.1} parent=1 // pred_region
      %51 = vsyncadd [#allocation5], 0
      %s53 = sshll.u32 %s4, 4
      %s54 = int_to_ptr.hbm [resolvable:$true] %s53
      %s55 = sshll.u32 [#allocation6], 4
      %s56 = int_to_ptr.vmem [resolvable:$true] %s55
      %58 = dma.hbm_to_vmem [thread:$0]  %s54, 64, %s56, [#allocation5]
    $region21: #{generator_forward.1} parent=1 // pred_fallthru
      _
    // Predicated region
    $region22: #{generator_forward.1} parent=1 // pred_check
      _
    $region23: #{generator_forward.1} parent=1 // pred_check_branch
      %60 = sbr.rel (0) target = $region25
    $region24: #{generator_forward.1} parent=1 // pred_region
      %62 = vsyncadd [#allocation8], 0
      %s63 = sshll.u32 %s5, 4
      %s64 = int_to_ptr.hbm [resolvable:$true] %s63
      %s65 = sshll.u32 [#allocation7], 4
      %s66 = int_to_ptr.vmem [resolvable:$true] %s65
      %71 = dma.hbm_to_vmem [thread:$0]  %s64, 32768, %s66, [#allocation8], 512, 512, 32
    $region25: #{generator_forward.1} parent=1 // pred_fallthru
      _
    // Predicated region
    $region26: #{generator_forward.1} parent=1 // pred_check
      _
    $region27: #{generator_forward.1} parent=1 // pred_check_branch
      %73 = sbr.rel (0) target = $region29
    $region28: #{generator_forward.1} parent=1 // pred_region
      %75 = vsyncadd [#allocation8], 0
      %s77 = sshll.u32 %s6, 4
      %s78 = int_to_ptr.hbm [resolvable:$true] %s77
      %s79 = sshll.u32 [#allocation9], 4
      %s80 = int_to_ptr.vmem [resolvable:$true] %s79
      %82 = dma.hbm_to_vmem [thread:$0]  %s78, 128, %s80, [#allocation8]
    $region29: #{generator_forward.1} parent=1 // pred_fallthru
      _
    // Predicated region
    $region30: #{generator_forward.1} parent=1 // pred_check
      _
    $region31: #{generator_forward.1} parent=1 // pred_check_branch
      %84 = sbr.rel (0) target = $region33
    $region32: #{generator_forward.1} parent=1 // pred_region
      %86 = vsyncadd [#allocation11], 0
      %s87 = sshll.u32 %s7, 4
      %s88 = int_to_ptr.hbm [resolvable:$true] %s87
      %s89 = sshll.u32 [#allocation10], 4
      %s90 = int_to_ptr.vmem [resolvable:$true] %s89
      %95 = dma.hbm_to_vmem [thread:$0]  %s88, 57344, %s90, [#allocation11], 448, 448, 28
    $region33: #{generator_forward.1} parent=1 // pred_fallthru
      _
    // Predicated region
    $region34: #{generator_forward.1} parent=1 // pred_check
      _
    $region35: #{generator_forward.1} parent=1 // pred_check_branch
      %97 = sbr.rel (0) target = $region37
    $region36: #{generator_forward.1} parent=1 // pred_region
      %99 = vsyncadd [#allocation11], 0
      %s101 = sshll.u32 %s8, 4
      %s102 = int_to_ptr.hbm [resolvable:$true] %s101
      %s103 = sshll.u32 [#allocation12], 4
      %s104 = int_to_ptr.vmem [resolvable:$true] %s103
      %106 = dma.hbm_to_vmem [thread:$0]  %s102, 112, %s104, [#allocation11]
    $region37: #{generator_forward.1} parent=1 // pred_fallthru
      _
    // Predicated region
    $region38: #{generator_forward.1} parent=1 // pred_check
      _
    $region39: #{generator_forward.1} parent=1 // pred_check_branch
      %108 = sbr.rel (0) target = $region41
    $region40: #{generator_forward.1} parent=1 // pred_region
      %110 = dma.done [#allocation3], 1664
    $region41: #{generator_forward.1} parent=1 // pred_fallthru
      _
    // Predicated region
    $region42: #{generator_forward.1} parent=1 // pred_check
      _
    $region43: #{generator_forward.1} parent=1 // pred_check_branch
      %112 = sbr.rel (0) target = $region45
    $region44: #{generator_forward.1} parent=1 // pred_region
      %114 = dma.done [#allocation5], 8192
    $region45: #{generator_forward.1} parent=1 // pred_fallthru
      _
    // Predicated region
    $region46: #{generator_forward.1} parent=1 // pred_check
      _
    $region47: #{generator_forward.1} parent=1 // pred_check_branch
      %116 = sbr.rel (0) target = $region49
    $region48: #{generator_forward.1} parent=1 // pred_region
      %118 = dma.done [#allocation5], 64
    $region49: #{generator_forward.1} parent=1 // pred_fallthru
      _
    // Predicated region
    $region50: #{generator_forward.1} parent=1 // pred_check
      _
    $region51: #{generator_forward.1} parent=1 // pred_check_branch
      %120 = sbr.rel (0) target = $region53
    $region52: #{generator_forward.1} parent=1 // pred_region
      %122 = dma.done [#allocation8], 32768
    $region53: #{generator_forward.1} parent=1 // pred_fallthru
      _
    // Predicated region
    $region54: #{generator_forward.1} parent=1 // pred_check
      _
    $region55: #{generator_forward.1} parent=1 // pred_check_branch
      %124 = sbr.rel (0) target = $region57
    $region56: #{generator_forward.1} parent=1 // pred_region
      %126 = dma.done [#allocation8], 128
    $region57: #{generator_forward.1} parent=1 // pred_fallthru
      _
    // Predicated region
    $region58: #{generator_forward.1} parent=1 // pred_check
      _
    $region59: #{generator_forward.1} parent=1 // pred_check_branch
      %128 = sbr.rel (0) target = $region61
    $region60: #{generator_forward.1} parent=1 // pred_region
      %130 = dma.done [#allocation11], 57344
    $region61: #{generator_forward.1} parent=1 // pred_fallthru
      _
    // Predicated region
    $region62: #{generator_forward.1} parent=1 // pred_check
      _
    $region63: #{generator_forward.1} parent=1 // pred_check_branch
      %132 = sbr.rel (0) target = $region65
    $region64: #{generator_forward.1} parent=1 // pred_region
      %134 = dma.done [#allocation11], 112
    $region65: #{generator_forward.1} parent=1 // pred_fallthru
      _
    %v136 = vld [vmem:[%s1] sm:$0xf]
    %v137 = vld [vmem:[%s1 + $0x4] sm:$0xf]
    %v138 = vld [vmem:[%s1 + $0x8] sm:$0xf]
    %v139 = vld [vmem:[%s1 + $0xc] sm:$0xf]
    %v140 = vld [vmem:[%s1 + $0x10] sm:$0xf]
    %v141 = vld [vmem:[%s1 + $0x14] sm:$0xf]
    %v142 = vld [vmem:[%s1 + $0x18] sm:$0xf]
    %v143 = vld [vmem:[%s1 + $0x1c] sm:$0xf]
    %v144 = vld [vmem:[%s1 + $0x20] sm:$0xf]
    %v145 = vld [vmem:[%s1 + $0x24] sm:$0xf]
    %v146 = vld [vmem:[%s1 + $0x28] sm:$0xf]
    %v147 = vld [vmem:[%s1 + $0x2c] sm:$0xf]
    %v148 = vld [vmem:[%s1 + $0x30] sm:$0xf]
    %v149 = vld [vmem:[%s1 + $0x34] sm:$0xf]
    %v150 = vld [vmem:[%s1 + $0x38] sm:$0xf]
    %v151 = vld [vmem:[%s1 + $0x3c] sm:$0xf]
    %v152 = vld [vmem:[#allocation2] sm:$0xff]
    %v153 = vld [vmem:[#allocation2 + $0x8] sm:$0xff]
    %v154 = vld [vmem:[#allocation2 + $0x10] sm:$0xff]
    %v155 = vld [vmem:[#allocation2 + $0x18] sm:$0xff]
    %v156 = vld [vmem:[#allocation2 + $0x20] sm:$0xff]
    %v157 = vld [vmem:[#allocation2 + $0x28] sm:$0xff]
    %v158 = vld [vmem:[#allocation2 + $0x30] sm:$0xff]
    %v159 = vld [vmem:[#allocation2 + $0x38] sm:$0xff]
    %v160 = vld [vmem:[#allocation2 + $0x40] sm:$0xff]
    %v161 = vld [vmem:[#allocation2 + $0x48] sm:$0xff]
    %v162 = vld [vmem:[#allocation2 + $0x50] sm:$0xff]
    %v163 = vld [vmem:[#allocation2 + $0x58] sm:$0xff]
    %v164 = vld [vmem:[#allocation2 + $0x60] sm:$0x33]
    %v165 = vld [vmem:[%s0] sm:$0xff]
    %v166 = vld [vmem:[%s0 + $0x8] sm:$0xff]
    %v167 = vld [vmem:[%s0 + $0x10] sm:$0xff]
    %v168 = vld [vmem:[%s0 + $0x18] sm:$0xff]
    %v169 = vld [vmem:[%s0 + $0x20] sm:$0xff]
    %v170 = vld [vmem:[%s0 + $0x28] sm:$0xff]
    %v171 = vld [vmem:[%s0 + $0x30] sm:$0xff]
    %v172 = vld [vmem:[%s0 + $0x38] sm:$0xff]
    %v173 = vld [vmem:[%s0 + $0x40] sm:$0xff]
    %v174 = vld [vmem:[%s0 + $0x48] sm:$0xff]
    %v175 = vld [vmem:[%s0 + $0x50] sm:$0xff]
    %v176 = vld [vmem:[%s0 + $0x58] sm:$0xff]
    %v177 = vld [vmem:[%s0 + $0x60] sm:$0xff]
    %v178 = vld [vmem:[%s0 + $0x68] sm:$0xff]
    %v179 = vld [vmem:[%s0 + $0x70] sm:$0xff]
    %v180 = vld [vmem:[%s0 + $0x78] sm:$0xff]
    %v181 = vld [vmem:[%s0 + $0x80] sm:$0xff]
    %v182 = vld [vmem:[%s0 + $0x88] sm:$0xff]
    %v183 = vld [vmem:[%s0 + $0x90] sm:$0xff]
    %v184 = vld [vmem:[%s0 + $0x98] sm:$0xff]
    %v185 = vld [vmem:[%s0 + $0xa0] sm:$0xff]
    %v186 = vld [vmem:[%s0 + $0xa8] sm:$0xff]
    %v187 = vld [vmem:[%s0 + $0xb0] sm:$0xff]
    %v188 = vld [vmem:[%s0 + $0xb8] sm:$0xff]
    %v189 = vld [vmem:[%s0 + $0xc0] sm:$0xff]
    %v190 = vld [vmem:[%s0 + $0xc8] sm:$0xff]
    %v191 = vld [vmem:[%s0 + $0xd0] sm:$0xff]
    %v192 = vld [vmem:[%s0 + $0xd8] sm:$0xff]
    %v193 = vld [vmem:[%s0 + $0xe0] sm:$0xff]
    %v194 = vld [vmem:[%s0 + $0xe8] sm:$0xff]
    %v195 = vld [vmem:[%s0 + $0xf0] sm:$0xff]
    %v196 = vld [vmem:[%s0 + $0xf8] sm:$0xff]
    %v213 = vunpack.c.l.b16 %v136
    %v214 = vunpack.c.l.b16 %v137
    %v215 = vunpack.c.l.b16 %v138
    %v216 = vunpack.c.l.b16 %v139
    %v217 = vunpack.c.l.b16 %v140
    %v218 = vunpack.c.l.b16 %v141
    %v219 = vunpack.c.l.b16 %v142
    %v220 = vunpack.c.l.b16 %v143
    %v221 = vunpack.c.l.b16 %v144
    %v222 = vunpack.c.l.b16 %v145
    %v223 = vunpack.c.l.b16 %v146
    %v224 = vunpack.c.l.b16 %v147
    %v225 = vunpack.c.l.b16 %v148
    %v226 = vunpack.c.l.b16 %v149
    %v227 = vunpack.c.l.b16 %v150
    %v228 = vunpack.c.l.b16 %v151
    %v229 = vpack.c.b16 %v214, %v213
    %v230 = vpack.c.b16 %v216, %v215
    %v231 = vpack.c.b16 %v218, %v217
    %v232 = vpack.c.b16 %v220, %v219
    %v233 = vpack.c.b16 %v222, %v221
    %v234 = vpack.c.b16 %v224, %v223
    %v235 = vpack.c.b16 %v226, %v225
    %v236 = vpack.c.b16 %v228, %v227
    %v250 = vunpack.c.l.b16 %v152
    %v251 = vunpack.c.h.b16 %v152
    %v252 = vunpack.c.l.b16 %v153
    %v253 = vunpack.c.h.b16 %v153
    %v254 = vunpack.c.l.b16 %v154
    %v255 = vunpack.c.h.b16 %v154
    %v256 = vunpack.c.l.b16 %v155
    %v257 = vunpack.c.h.b16 %v155
    %v258 = vunpack.c.l.b16 %v156
    %v259 = vunpack.c.h.b16 %v156
    %v260 = vunpack.c.l.b16 %v157
    %v261 = vunpack.c.h.b16 %v157
    %v262 = vunpack.c.l.b16 %v158
    %v263 = vunpack.c.h.b16 %v158
    %v264 = vunpack.c.l.b16 %v159
    %v265 = vunpack.c.h.b16 %v159
    %v266 = vunpack.c.l.b16 %v160
    %v267 = vunpack.c.h.b16 %v160
    %v268 = vunpack.c.l.b16 %v161
    %v269 = vunpack.c.h.b16 %v161
    %v270 = vunpack.c.l.b16 %v162
    %v271 = vunpack.c.h.b16 %v162
    %v272 = vunpack.c.l.b16 %v163
    %v273 = vunpack.c.h.b16 %v163
    %v274 = vunpack.c.l.b16 %v164
    %v275 = vunpack.c.h.b16 %v164
    %v276 = vpack.c.b16 %v252, %v250
    %v277 = vpack.c.b16 %v253, %v251
    %v278 = vpack.c.b16 %v256, %v254
    %v279 = vpack.c.b16 %v257, %v255
    %v280 = vpack.c.b16 %v260, %v258
    %v281 = vpack.c.b16 %v261, %v259
    %v282 = vpack.c.b16 %v264, %v262
    %v283 = vpack.c.b16 %v265, %v263
    %v284 = vpack.c.b16 %v268, %v266
    %v285 = vpack.c.b16 %v269, %v267
    %v286 = vpack.c.b16 %v272, %v270
    %v287 = vpack.c.b16 %v273, %v271
    %v288 = vpack.c.b16 %v274, %v274
    %v289 = vpack.c.b16 %v275, %v275
    %vm302 = vcmask 818176
    %v304 = vsel %vm302, %v229, 0
    %v307 = vsel %vm302, %v230, 0
    %v310 = vsel %vm302, %v231, 0
    %v313 = vsel %vm302, %v232, 0
    %v316 = vsel %vm302, %v233, 0
    %v319 = vsel %vm302, %v234, 0
    %v322 = vsel %vm302, %v235, 0
    %v325 = vsel %vm302, %v236, 0
    %vm327 = vcmask 1041408
    %v329 = vsel %vm327, %v288, 0
    %v332 = vsel %vm327, %v289, 0
    %334 = vmatpush.bf16.msra.mxu0 0
    %335 = vmatpush.bf16.msra.mxu0 %v329
    %336 = vmatpush.bf16.msra.mxu0 %v286
    %337 = vmatpush.bf16.msra.mxu0 %v284
    %338 = vmatpush.bf16.msra.mxu0 %v282
    %339 = vmatpush.bf16.msra.mxu0 %v280
    %340 = vmatpush.bf16.msra.mxu0 %v278
    %341 = vmatpush.bf16.msra.mxu0 %v276
    %342 = vmatmul.bf16.gmra.mxu0 %v304
    %v343 = vpop.f32.mrf.mxu0
    %v344 = vadd.f32 %v165, %v343
    %v345 = vpop.f32.mrf.mxu0
    %v346 = vadd.f32 %v167, %v345
    %347 = vmatmul.bf16.gmra.mxu0 %v307
    %v348 = vpop.f32.mrf.mxu0
    %v349 = vadd.f32 %v169, %v348
    %v350 = vpop.f32.mrf.mxu0
    %v351 = vadd.f32 %v171, %v350
    %352 = vmatmul.bf16.gmra.mxu0 %v310
    %v353 = vpop.f32.mrf.mxu0
    %v354 = vadd.f32 %v173, %v353
    %v355 = vpop.f32.mrf.mxu0
    %v356 = vadd.f32 %v175, %v355
    %357 = vmatmul.bf16.gmra.mxu0 %v313
    %v358 = vpop.f32.mrf.mxu0
    %v359 = vadd.f32 %v177, %v358
    %v360 = vpop.f32.mrf.mxu0
    %v361 = vadd.f32 %v179, %v360
    %362 = vmatmul.bf16.gmra.mxu0 %v316
    %v363 = vpop.f32.mrf.mxu0
    %v364 = vadd.f32 %v181, %v363
    %v365 = vpop.f32.mrf.mxu0
    %v366 = vadd.f32 %v183, %v365
    %367 = vmatmul.bf16.gmra.mxu0 %v319
    %v368 = vpop.f32.mrf.mxu0
    %v369 = vadd.f32 %v185, %v368
    %v370 = vpop.f32.mrf.mxu0
    %v371 = vadd.f32 %v187, %v370
    %372 = vmatmul.bf16.gmra.mxu0 %v322
    %v373 = vpop.f32.mrf.mxu0
    %v374 = vadd.f32 %v189, %v373
    %v375 = vpop.f32.mrf.mxu0
    %v376 = vadd.f32 %v191, %v375
    %377 = vmatmul.bf16.gmra.mxu0 %v325
    %v378 = vpop.f32.mrf.mxu0
    %v379 = vadd.f32 %v193, %v378
    %v380 = vpop.f32.mrf.mxu0
    %v381 = vadd.f32 %v195, %v380
    %382 = vdwg.mxu0
    %383 = vmatpush.bf16.msra.mxu0 0
    %384 = vmatpush.bf16.msra.mxu0 %v332
    %385 = vmatpush.bf16.msra.mxu0 %v287
    %386 = vmatpush.bf16.msra.mxu0 %v285
    %387 = vmatpush.bf16.msra.mxu0 %v283
    %388 = vmatpush.bf16.msra.mxu0 %v281
    %389 = vmatpush.bf16.msra.mxu0 %v279
    %390 = vmatpush.bf16.msra.mxu0 %v277
    %391 = vmatmul.bf16.gmra.mxu0 %v304
    %v392 = vpop.f32.mrf.mxu0
    %v393 = vadd.f32 %v166, %v392
    %v394 = vpop.f32.mrf.mxu0
    %v395 = vadd.f32 %v168, %v394
    %396 = vmatmul.bf16.gmra.mxu0 %v307
    %v397 = vpop.f32.mrf.mxu0
    %v398 = vadd.f32 %v170, %v397
    %v399 = vpop.f32.mrf.mxu0
    %v400 = vadd.f32 %v172, %v399
    %401 = vmatmul.bf16.gmra.mxu0 %v310
    %v402 = vpop.f32.mrf.mxu0
    %v403 = vadd.f32 %v174, %v402
    %v404 = vpop.f32.mrf.mxu0
    %v405 = vadd.f32 %v176, %v404
    %406 = vmatmul.bf16.gmra.mxu0 %v313
    %v407 = vpop.f32.mrf.mxu0
    %v408 = vadd.f32 %v178, %v407
    %v409 = vpop.f32.mrf.mxu0
    %v410 = vadd.f32 %v180, %v409
    %411 = vmatmul.bf16.gmra.mxu0 %v316
    %v412 = vpop.f32.mrf.mxu0
    %v413 = vadd.f32 %v182, %v412
    %v414 = vpop.f32.mrf.mxu0
    %v415 = vadd.f32 %v184, %v414
    %416 = vmatmul.bf16.gmra.mxu0 %v319
    %v417 = vpop.f32.mrf.mxu0
    %v418 = vadd.f32 %v186, %v417
    %v419 = vpop.f32.mrf.mxu0
    %v420 = vadd.f32 %v188, %v419
    %421 = vmatmul.bf16.gmra.mxu0 %v322
    %v422 = vpop.f32.mrf.mxu0
    %v423 = vadd.f32 %v190, %v422
    %v424 = vpop.f32.mrf.mxu0
    %v425 = vadd.f32 %v192, %v424
    %426 = vmatmul.bf16.gmra.mxu0 %v325
    %v427 = vpop.f32.mrf.mxu0
    %v428 = vadd.f32 %v194, %v427
    %v429 = vpop.f32.mrf.mxu0
    %v430 = vadd.f32 %v196, %v429
    %431 = vdwg.mxu0
    %v432 = vpack.c.bf16 %v393, %v344
    %v433 = vpack.c.bf16 %v395, %v346
    %v434 = vpack.c.bf16 %v398, %v349
    %v435 = vpack.c.bf16 %v400, %v351
    %v436 = vpack.c.bf16 %v403, %v354
    %v437 = vpack.c.bf16 %v405, %v356
    %v438 = vpack.c.bf16 %v408, %v359
    %v439 = vpack.c.bf16 %v410, %v361
    %v440 = vpack.c.bf16 %v413, %v364
    %v441 = vpack.c.bf16 %v415, %v366
    %v442 = vpack.c.bf16 %v418, %v369
    %v443 = vpack.c.bf16 %v420, %v371
    %v444 = vpack.c.bf16 %v423, %v374
    %v445 = vpack.c.bf16 %v425, %v376
    %v446 = vpack.c.bf16 %v428, %v379
    %v447 = vpack.c.bf16 %v430, %v381
    %v448 = vunpack.c.l.bf16 %v432
    %v449 = vunpack.c.h.bf16 %v432
    %v450 = vunpack.c.l.bf16 %v433
    %v451 = vunpack.c.h.bf16 %v433
    %v452 = vunpack.c.l.bf16 %v434
    %v453 = vunpack.c.h.bf16 %v434
    %v454 = vunpack.c.l.bf16 %v435
    %v455 = vunpack.c.h.bf16 %v435
    %v456 = vunpack.c.l.bf16 %v436
    %v457 = vunpack.c.h.bf16 %v436
    %v458 = vunpack.c.l.bf16 %v437
    %v459 = vunpack.c.h.bf16 %v437
    %v460 = vunpack.c.l.bf16 %v438
    %v461 = vunpack.c.h.bf16 %v438
    %v462 = vunpack.c.l.bf16 %v439
    %v463 = vunpack.c.h.bf16 %v439
    %v464 = vunpack.c.l.bf16 %v440
    %v465 = vunpack.c.h.bf16 %v440
    %v466 = vunpack.c.l.bf16 %v441
    %v467 = vunpack.c.h.bf16 %v441
    %v468 = vunpack.c.l.bf16 %v442
    %v469 = vunpack.c.h.bf16 %v442
    %v470 = vunpack.c.l.bf16 %v443
    %v471 = vunpack.c.h.bf16 %v443
    %v472 = vunpack.c.l.bf16 %v444
    %v473 = vunpack.c.h.bf16 %v444
    %v474 = vunpack.c.l.bf16 %v445
    %v475 = vunpack.c.h.bf16 %v445
    %v476 = vunpack.c.l.bf16 %v446
    %v477 = vunpack.c.h.bf16 %v446
    %v478 = vunpack.c.l.bf16 %v447
    %v479 = vunpack.c.h.bf16 %v447
    %vm480 = vcmp.gt.f32.partialorder %v448, 0.0
    %vm481 = vcmp.gt.f32.partialorder %v449, 0.0
    %vm482 = vcmp.gt.f32.partialorder %v450, 0.0
    %vm483 = vcmp.gt.f32.partialorder %v451, 0.0
    %vm484 = vcmp.gt.f32.partialorder %v452, 0.0
    %vm485 = vcmp.gt.f32.partialorder %v453, 0.0
    %vm486 = vcmp.gt.f32.partialorder %v454, 0.0
    %vm487 = vcmp.gt.f32.partialorder %v455, 0.0
    %vm488 = vcmp.gt.f32.partialorder %v456, 0.0
    %vm489 = vcmp.gt.f32.partialorder %v457, 0.0
    %vm490 = vcmp.gt.f32.partialorder %v458, 0.0
    %vm491 = vcmp.gt.f32.partialorder %v459, 0.0
    %vm492 = vcmp.gt.f32.partialorder %v460, 0.0
    %vm493 = vcmp.gt.f32.partialorder %v461, 0.0
    %vm494 = vcmp.gt.f32.partialorder %v462, 0.0
    %vm495 = vcmp.gt.f32.partialorder %v463, 0.0
    %vm496 = vcmp.gt.f32.partialorder %v464, 0.0
    %vm497 = vcmp.gt.f32.partialorder %v465, 0.0
    %vm498 = vcmp.gt.f32.partialorder %v466, 0.0
    %vm499 = vcmp.gt.f32.partialorder %v467, 0.0
    %vm500 = vcmp.gt.f32.partialorder %v468, 0.0
    %vm501 = vcmp.gt.f32.partialorder %v469, 0.0
    %vm502 = vcmp.gt.f32.partialorder %v470, 0.0
    %vm503 = vcmp.gt.f32.partialorder %v471, 0.0
    %vm504 = vcmp.gt.f32.partialorder %v472, 0.0
    %vm505 = vcmp.gt.f32.partialorder %v473, 0.0
    %vm506 = vcmp.gt.f32.partialorder %v474, 0.0
    %vm507 = vcmp.gt.f32.partialorder %v475, 0.0
    %vm508 = vcmp.gt.f32.partialorder %v476, 0.0
    %vm509 = vcmp.gt.f32.partialorder %v477, 0.0
    %vm510 = vcmp.gt.f32.partialorder %v478, 0.0
    %vm511 = vcmp.gt.f32.partialorder %v479, 0.0
    %v512 = vmul.f32 %v448, 0.20019531
    %v513 = vmul.f32 %v449, 0.20019531
    %v514 = vmul.f32 %v450, 0.20019531
    %v515 = vmul.f32 %v451, 0.20019531
    %v516 = vmul.f32 %v452, 0.20019531
    %v517 = vmul.f32 %v453, 0.20019531
    %v518 = vmul.f32 %v454, 0.20019531
    %v519 = vmul.f32 %v455, 0.20019531
    %v520 = vmul.f32 %v456, 0.20019531
    %v521 = vmul.f32 %v457, 0.20019531
    %v522 = vmul.f32 %v458, 0.20019531
    %v523 = vmul.f32 %v459, 0.20019531
    %v524 = vmul.f32 %v460, 0.20019531
    %v525 = vmul.f32 %v461, 0.20019531
    %v526 = vmul.f32 %v462, 0.20019531
    %v527 = vmul.f32 %v463, 0.20019531
    %v528 = vmul.f32 %v464, 0.20019531
    %v529 = vmul.f32 %v465, 0.20019531
    %v530 = vmul.f32 %v466, 0.20019531
    %v531 = vmul.f32 %v467, 0.20019531
    %v532 = vmul.f32 %v468, 0.20019531
    %v533 = vmul.f32 %v469, 0.20019531
    %v534 = vmul.f32 %v470, 0.20019531
    %v535 = vmul.f32 %v471, 0.20019531
    %v536 = vmul.f32 %v472, 0.20019531
    %v537 = vmul.f32 %v473, 0.20019531
    %v538 = vmul.f32 %v474, 0.20019531
    %v539 = vmul.f32 %v475, 0.20019531
    %v540 = vmul.f32 %v476, 0.20019531
    %v541 = vmul.f32 %v477, 0.20019531
    %v542 = vmul.f32 %v478, 0.20019531
    %v543 = vmul.f32 %v479, 0.20019531
    %v544 = vpack.c.bf16 %v513, %v512
    %v545 = vpack.c.bf16 %v515, %v514
    %v546 = vpack.c.bf16 %v517, %v516
    %v547 = vpack.c.bf16 %v519, %v518
    %v548 = vpack.c.bf16 %v521, %v520
    %v549 = vpack.c.bf16 %v523, %v522
    %v550 = vpack.c.bf16 %v525, %v524
    %v551 = vpack.c.bf16 %v527, %v526
    %v552 = vpack.c.bf16 %v529, %v528
    %v553 = vpack.c.bf16 %v531, %v530
    %v554 = vpack.c.bf16 %v533, %v532
    %v555 = vpack.c.bf16 %v535, %v534
    %v556 = vpack.c.bf16 %v537, %v536
    %v557 = vpack.c.bf16 %v539, %v538
    %v558 = vpack.c.bf16 %v541, %v540
    %v559 = vpack.c.bf16 %v543, %v542
    %vm560 = vmpackc.low %vm481, %vm480
    %vm561 = vmpackc.low %vm483, %vm482
    %vm562 = vmpackc.low %vm485, %vm484
    %vm563 = vmpackc.low %vm487, %vm486
    %vm564 = vmpackc.low %vm489, %vm488
    %vm565 = vmpackc.low %vm491, %vm490
    %vm566 = vmpackc.low %vm493, %vm492
    %vm567 = vmpackc.low %vm495, %vm494
    %vm568 = vmpackc.low %vm497, %vm496
    %vm569 = vmpackc.low %vm499, %vm498
    %vm570 = vmpackc.low %vm501, %vm500
    %vm571 = vmpackc.low %vm503, %vm502
    %vm572 = vmpackc.low %vm505, %vm504
    %vm573 = vmpackc.low %vm507, %vm506
    %vm574 = vmpackc.low %vm509, %vm508
    %vm575 = vmpackc.low %vm511, %vm510
    %v576 = vsel %vm560, %v432, %v544
    %v577 = vsel %vm561, %v433, %v545
    %v578 = vsel %vm562, %v434, %v546
    %v579 = vsel %vm563, %v435, %v547
    %v580 = vsel %vm564, %v436, %v548
    %v581 = vsel %vm565, %v437, %v549
    %v582 = vsel %vm566, %v438, %v550
    %v583 = vsel %vm567, %v439, %v551
    %v584 = vsel %vm568, %v440, %v552
    %v585 = vsel %vm569, %v441, %v553
    %v586 = vsel %vm570, %v442, %v554
    %v587 = vsel %vm571, %v443, %v555
    %v588 = vsel %vm572, %v444, %v556
    %v589 = vsel %vm573, %v445, %v557
    %v590 = vsel %vm574, %v446, %v558
    %v591 = vsel %vm575, %v447, %v559
    %v592 = vld [vmem:[#allocation4] sm:$0xff]
    %v593 = vld [vmem:[#allocation4 + $0x8] sm:$0xff]
    %v594 = vld [vmem:[#allocation4 + $0x10] sm:$0xff]
    %v595 = vld [vmem:[#allocation4 + $0x18] sm:$0xff]
    %v596 = vld [vmem:[#allocation4 + $0x20] sm:$0xff]
    %v597 = vld [vmem:[#allocation4 + $0x28] sm:$0xff]
    %v598 = vld [vmem:[#allocation4 + $0x30] sm:$0xff]
    %v599 = vld [vmem:[#allocation4 + $0x38] sm:$0xff]
    %v600 = vld [vmem:[#allocation4 + $0x40] sm:$0xff]
    %v601 = vld [vmem:[#allocation4 + $0x48] sm:$0xff]
    %v602 = vld [vmem:[#allocation4 + $0x50] sm:$0xff]
    %v603 = vld [vmem:[#allocation4 + $0x58] sm:$0xff]
    %v604 = vld [vmem:[#allocation4 + $0x60] sm:$0xff]
    %v605 = vld [vmem:[#allocation4 + $0x68] sm:$0xff]
    %v606 = vld [vmem:[#allocation4 + $0x70] sm:$0xff]
    %v607 = vld [vmem:[#allocation4 + $0x78] sm:$0xff]
    %v608 = vld [vmem:[#allocation4 + $0x80] sm:$0xff]
    %v609 = vld [vmem:[#allocation4 + $0x88] sm:$0xff]
    %v610 = vld [vmem:[#allocation4 + $0x90] sm:$0xff]
    %v611 = vld [vmem:[#allocation4 + $0x98] sm:$0xff]
    %v612 = vld [vmem:[#allocation4 + $0xa0] sm:$0xff]
    %v613 = vld [vmem:[#allocation4 + $0xa8] sm:$0xff]
    %v614 = vld [vmem:[#allocation4 + $0xb0] sm:$0xff]
    %v615 = vld [vmem:[#allocation4 + $0xb8] sm:$0xff]
    %v616 = vld [vmem:[#allocation4 + $0xc0] sm:$0xff]
    %v617 = vld [vmem:[#allocation4 + $0xc8] sm:$0xff]
    %v618 = vld [vmem:[#allocation4 + $0xd0] sm:$0xff]
    %v619 = vld [vmem:[#allocation4 + $0xd8] sm:$0xff]
    %v620 = vld [vmem:[#allocation4 + $0xe0] sm:$0xff]
    %v621 = vld [vmem:[#allocation4 + $0xe8] sm:$0xff]
    %v622 = vld [vmem:[#allocation4 + $0xf0] sm:$0xff]
    %v623 = vld [vmem:[#allocation4 + $0xf8] sm:$0xff]
    %v624 = vld [vmem:[#allocation4 + $0x100] sm:$0xff]
    %v625 = vld [vmem:[#allocation4 + $0x108] sm:$0xff]
    %v626 = vld [vmem:[#allocation4 + $0x110] sm:$0xff]
    %v627 = vld [vmem:[#allocation4 + $0x118] sm:$0xff]
    %v628 = vld [vmem:[#allocation4 + $0x120] sm:$0xff]
    %v629 = vld [vmem:[#allocation4 + $0x128] sm:$0xff]
    %v630 = vld [vmem:[#allocation4 + $0x130] sm:$0xff]
    %v631 = vld [vmem:[#allocation4 + $0x138] sm:$0xff]
    %v632 = vld [vmem:[#allocation4 + $0x140] sm:$0xff]
    %v633 = vld [vmem:[#allocation4 + $0x148] sm:$0xff]
    %v634 = vld [vmem:[#allocation4 + $0x150] sm:$0xff]
    %v635 = vld [vmem:[#allocation4 + $0x158] sm:$0xff]
    %v636 = vld [vmem:[#allocation4 + $0x160] sm:$0xff]
    %v637 = vld [vmem:[#allocation4 + $0x168] sm:$0xff]
    %v638 = vld [vmem:[#allocation4 + $0x170] sm:$0xff]
    %v639 = vld [vmem:[#allocation4 + $0x178] sm:$0xff]
    %v640 = vld [vmem:[#allocation4 + $0x180] sm:$0xff]
    %v641 = vld [vmem:[#allocation4 + $0x188] sm:$0xff]
    %v642 = vld [vmem:[#allocation4 + $0x190] sm:$0xff]
    %v643 = vld [vmem:[#allocation4 + $0x198] sm:$0xff]
    %v644 = vld [vmem:[#allocation4 + $0x1a0] sm:$0xff]
    %v645 = vld [vmem:[#allocation4 + $0x1a8] sm:$0xff]
    %v646 = vld [vmem:[#allocation4 + $0x1b0] sm:$0xff]
    %v647 = vld [vmem:[#allocation4 + $0x1b8] sm:$0xff]
    %v648 = vld [vmem:[#allocation4 + $0x1c0] sm:$0xff]
    %v649 = vld [vmem:[#allocation4 + $0x1c8] sm:$0xff]
    %v650 = vld [vmem:[#allocation4 + $0x1d0] sm:$0xff]
    %v651 = vld [vmem:[#allocation4 + $0x1d8] sm:$0xff]
    %v652 = vld [vmem:[#allocation4 + $0x1e0] sm:$0xff]
    %v653 = vld [vmem:[#allocation4 + $0x1e8] sm:$0xff]
    %v654 = vld [vmem:[#allocation4 + $0x1f0] sm:$0xff]
    %v655 = vld [vmem:[#allocation4 + $0x1f8] sm:$0xff]
    %v656 = vld [vmem:[#allocation6] sm:$0xf]
    %v658 = vperm.slane %v656, 0
    %v659 = vperm.slane %v656, 1
    %v660 = vperm.slane %v656, 2
    %v661 = vperm.slane %v656, 3
    %v682 = vunpack.c.l.b16 %v576
    %v683 = vunpack.c.h.b16 %v576
    %v684 = vunpack.c.l.b16 %v577
    %v685 = vunpack.c.h.b16 %v577
    %v686 = vunpack.c.l.b16 %v578
    %v687 = vunpack.c.h.b16 %v578
    %v688 = vunpack.c.l.b16 %v579
    %v689 = vunpack.c.h.b16 %v579
    %v690 = vunpack.c.l.b16 %v580
    %v691 = vunpack.c.h.b16 %v580
    %v692 = vunpack.c.l.b16 %v581
    %v693 = vunpack.c.h.b16 %v581
    %v694 = vunpack.c.l.b16 %v582
    %v695 = vunpack.c.h.b16 %v582
    %v696 = vunpack.c.l.b16 %v583
    %v697 = vunpack.c.h.b16 %v583
    %v698 = vunpack.c.l.b16 %v584
    %v699 = vunpack.c.h.b16 %v584
    %v700 = vunpack.c.l.b16 %v585
    %v701 = vunpack.c.h.b16 %v585
    %v702 = vunpack.c.l.b16 %v586
    %v703 = vunpack.c.h.b16 %v586
    %v704 = vunpack.c.l.b16 %v587
    %v705 = vunpack.c.h.b16 %v587
    %v706 = vunpack.c.l.b16 %v588
    %v707 = vunpack.c.h.b16 %v588
    %v708 = vunpack.c.l.b16 %v589
    %v709 = vunpack.c.h.b16 %v589
    %v710 = vunpack.c.l.b16 %v590
    %v711 = vunpack.c.h.b16 %v590
    %v712 = vunpack.c.l.b16 %v591
    %v713 = vunpack.c.h.b16 %v591
    %v714 = vpack.c.b16 %v684, %v682
    %v715 = vpack.c.b16 %v685, %v683
    %v716 = vpack.c.b16 %v688, %v686
    %v717 = vpack.c.b16 %v689, %v687
    %v718 = vpack.c.b16 %v692, %v690
    %v719 = vpack.c.b16 %v693, %v691
    %v720 = vpack.c.b16 %v696, %v694
    %v721 = vpack.c.b16 %v697, %v695
    %v722 = vpack.c.b16 %v700, %v698
    %v723 = vpack.c.b16 %v701, %v699
    %v724 = vpack.c.b16 %v704, %v702
    %v725 = vpack.c.b16 %v705, %v703
    %v726 = vpack.c.b16 %v708, %v706
    %v727 = vpack.c.b16 %v709, %v707
    %v728 = vpack.c.b16 %v712, %v710
    %v729 = vpack.c.b16 %v713, %v711
    %v810 = vunpack.c.l.b16 %v592
    %v811 = vunpack.c.h.b16 %v592
    %v812 = vunpack.c.l.b16 %v593
    %v813 = vunpack.c.h.b16 %v593
    %v814 = vunpack.c.l.b16 %v594
    %v815 = vunpack.c.h.b16 %v594
    %v816 = vunpack.c.l.b16 %v595
    %v817 = vunpack.c.h.b16 %v595
    %v818 = vunpack.c.l.b16 %v596
    %v819 = vunpack.c.h.b16 %v596
    %v820 = vunpack.c.l.b16 %v597
    %v821 = vunpack.c.h.b16 %v597
    %v822 = vunpack.c.l.b16 %v598
    %v823 = vunpack.c.h.b16 %v598
    %v824 = vunpack.c.l.b16 %v599
    %v825 = vunpack.c.h.b16 %v599
    %v826 = vunpack.c.l.b16 %v600
    %v827 = vunpack.c.h.b16 %v600
    %v828 = vunpack.c.l.b16 %v601
    %v829 = vunpack.c.h.b16 %v601
    %v830 = vunpack.c.l.b16 %v602
    %v831 = vunpack.c.h.b16 %v602
    %v832 = vunpack.c.l.b16 %v603
    %v833 = vunpack.c.h.b16 %v603
    %v834 = vunpack.c.l.b16 %v604
    %v835 = vunpack.c.h.b16 %v604
    %v836 = vunpack.c.l.b16 %v605
    %v837 = vunpack.c.h.b16 %v605
    %v838 = vunpack.c.l.b16 %v606
    %v839 = vunpack.c.h.b16 %v606
    %v840 = vunpack.c.l.b16 %v607
    %v841 = vunpack.c.h.b16 %v607
    %v842 = vunpack.c.l.b16 %v608
    %v843 = vunpack.c.h.b16 %v608
    %v844 = vunpack.c.l.b16 %v609
    %v845 = vunpack.c.h.b16 %v609
    %v846 = vunpack.c.l.b16 %v610
    %v847 = vunpack.c.h.b16 %v610
    %v848 = vunpack.c.l.b16 %v611
    %v849 = vunpack.c.h.b16 %v611
    %v850 = vunpack.c.l.b16 %v612
    %v851 = vunpack.c.h.b16 %v612
    %v852 = vunpack.c.l.b16 %v613
    %v853 = vunpack.c.h.b16 %v613
    %v854 = vunpack.c.l.b16 %v614
    %v855 = vunpack.c.h.b16 %v614
    %v856 = vunpack.c.l.b16 %v615
    %v857 = vunpack.c.h.b16 %v615
    %v858 = vunpack.c.l.b16 %v616
    %v859 = vunpack.c.h.b16 %v616
    %v860 = vunpack.c.l.b16 %v617
    %v861 = vunpack.c.h.b16 %v617
    %v862 = vunpack.c.l.b16 %v618
    %v863 = vunpack.c.h.b16 %v618
    %v864 = vunpack.c.l.b16 %v619
    %v865 = vunpack.c.h.b16 %v619
    %v866 = vunpack.c.l.b16 %v620
    %v867 = vunpack.c.h.b16 %v620
    %v868 = vunpack.c.l.b16 %v621
    %v869 = vunpack.c.h.b16 %v621
    %v870 = vunpack.c.l.b16 %v622
    %v871 = vunpack.c.h.b16 %v622
    %v872 = vunpack.c.l.b16 %v623
    %v873 = vunpack.c.h.b16 %v623
    %v874 = vunpack.c.l.b16 %v624
    %v875 = vunpack.c.h.b16 %v624
    %v876 = vunpack.c.l.b16 %v625
    %v877 = vunpack.c.h.b16 %v625
    %v878 = vunpack.c.l.b16 %v626
    %v879 = vunpack.c.h.b16 %v626
    %v880 = vunpack.c.l.b16 %v627
    %v881 = vunpack.c.h.b16 %v627
    %v882 = vunpack.c.l.b16 %v628
    %v883 = vunpack.c.h.b16 %v628
    %v884 = vunpack.c.l.b16 %v629
    %v885 = vunpack.c.h.b16 %v629
    %v886 = vunpack.c.l.b16 %v630
    %v887 = vunpack.c.h.b16 %v630
    %v888 = vunpack.c.l.b16 %v631
    %v889 = vunpack.c.h.b16 %v631
    %v890 = vunpack.c.l.b16 %v632
    %v891 = vunpack.c.h.b16 %v632
    %v892 = vunpack.c.l.b16 %v633
    %v893 = vunpack.c.h.b16 %v633
    %v894 = vunpack.c.l.b16 %v634
    %v895 = vunpack.c.h.b16 %v634
    %v896 = vunpack.c.l.b16 %v635
    %v897 = vunpack.c.h.b16 %v635
    %v898 = vunpack.c.l.b16 %v636
    %v899 = vunpack.c.h.b16 %v636
    %v900 = vunpack.c.l.b16 %v637
    %v901 = vunpack.c.h.b16 %v637
    %v902 = vunpack.c.l.b16 %v638
    %v903 = vunpack.c.h.b16 %v638
    %v904 = vunpack.c.l.b16 %v639
    %v905 = vunpack.c.h.b16 %v639
    %v906 = vunpack.c.l.b16 %v640
    %v907 = vunpack.c.h.b16 %v640
    %v908 = vunpack.c.l.b16 %v641
    %v909 = vunpack.c.h.b16 %v641
    %v910 = vunpack.c.l.b16 %v642
    %v911 = vunpack.c.h.b16 %v642
    %v912 = vunpack.c.l.b16 %v643
    %v913 = vunpack.c.h.b16 %v643
    %v914 = vunpack.c.l.b16 %v644
    %v915 = vunpack.c.h.b16 %v644
    %v916 = vunpack.c.l.b16 %v645
    %v917 = vunpack.c.h.b16 %v645
    %v918 = vunpack.c.l.b16 %v646
    %v919 = vunpack.c.h.b16 %v646
    %v920 = vunpack.c.l.b16 %v647
    %v921 = vunpack.c.h.b16 %v647
    %v922 = vunpack.c.l.b16 %v648
    %v923 = vunpack.c.h.b16 %v648
    %v924 = vunpack.c.l.b16 %v649
    %v925 = vunpack.c.h.b16 %v649
    %v926 = vunpack.c.l.b16 %v650
    %v927 = vunpack.c.h.b16 %v650
    %v928 = vunpack.c.l.b16 %v651
    %v929 = vunpack.c.h.b16 %v651
    %v930 = vunpack.c.l.b16 %v652
    %v931 = vunpack.c.h.b16 %v652
    %v932 = vunpack.c.l.b16 %v653
    %v933 = vunpack.c.h.b16 %v653
    %v934 = vunpack.c.l.b16 %v654
    %v935 = vunpack.c.h.b16 %v654
    %v936 = vunpack.c.l.b16 %v655
    %v937 = vunpack.c.h.b16 %v655
    %v938 = vpack.c.b16 %v814, %v810
    %v939 = vpack.c.b16 %v815, %v811
    %v940 = vpack.c.b16 %v816, %v812
    %v941 = vpack.c.b16 %v817, %v813
    %v942 = vpack.c.b16 %v822, %v818
    %v943 = vpack.c.b16 %v823, %v819
    %v944 = vpack.c.b16 %v824, %v820
    %v945 = vpack.c.b16 %v825, %v821
    %v946 = vpack.c.b16 %v830, %v826
    %v947 = vpack.c.b16 %v831, %v827
    %v948 = vpack.c.b16 %v832, %v828
    %v949 = vpack.c.b16 %v833, %v829
    %v950 = vpack.c.b16 %v838, %v834
    %v951 = vpack.c.b16 %v839, %v835
    %v952 = vpack.c.b16 %v840, %v836
    %v953 = vpack.c.b16 %v841, %v837
    %v954 = vpack.c.b16 %v846, %v842
    %v955 = vpack.c.b16 %v847, %v843
    %v956 = vpack.c.b16 %v848, %v844
    %v957 = vpack.c.b16 %v849, %v845
    %v958 = vpack.c.b16 %v854, %v850
    %v959 = vpack.c.b16 %v855, %v851
    %v960 = vpack.c.b16 %v856, %v852
    %v961 = vpack.c.b16 %v857, %v853
    %v962 = vpack.c.b16 %v862, %v858
    %v963 = vpack.c.b16 %v863, %v859
    %v964 = vpack.c.b16 %v864, %v860
    %v965 = vpack.c.b16 %v865, %v861
    %v966 = vpack.c.b16 %v870, %v866
    %v967 = vpack.c.b16 %v871, %v867
    %v968 = vpack.c.b16 %v872, %v868
    %v969 = vpack.c.b16 %v873, %v869
    %v970 = vpack.c.b16 %v878, %v874
    %v971 = vpack.c.b16 %v879, %v875
    %v972 = vpack.c.b16 %v880, %v876
    %v973 = vpack.c.b16 %v881, %v877
    %v974 = vpack.c.b16 %v886, %v882
    %v975 = vpack.c.b16 %v887, %v883
    %v976 = vpack.c.b16 %v888, %v884
    %v977 = vpack.c.b16 %v889, %v885
    %v978 = vpack.c.b16 %v894, %v890
    %v979 = vpack.c.b16 %v895, %v891
    %v980 = vpack.c.b16 %v896, %v892
    %v981 = vpack.c.b16 %v897, %v893
    %v982 = vpack.c.b16 %v902, %v898
    %v983 = vpack.c.b16 %v903, %v899
    %v984 = vpack.c.b16 %v904, %v900
    %v985 = vpack.c.b16 %v905, %v901
    %v986 = vpack.c.b16 %v910, %v906
    %v987 = vpack.c.b16 %v911, %v907
    %v988 = vpack.c.b16 %v912, %v908
    %v989 = vpack.c.b16 %v913, %v909
    %v990 = vpack.c.b16 %v918, %v914
    %v991 = vpack.c.b16 %v919, %v915
    %v992 = vpack.c.b16 %v920, %v916
    %v993 = vpack.c.b16 %v921, %v917
    %v994 = vpack.c.b16 %v926, %v922
    %v995 = vpack.c.b16 %v927, %v923
    %v996 = vpack.c.b16 %v928, %v924
    %v997 = vpack.c.b16 %v929, %v925
    %v998 = vpack.c.b16 %v934, %v930
    %v999 = vpack.c.b16 %v935, %v931
    %v1000 = vpack.c.b16 %v936, %v932
    %v1001 = vpack.c.b16 %v937, %v933
    %1066 = vmatpush.bf16.msra.mxu0 %v966
    %1067 = vmatpush.bf16.msra.mxu0 %v962
    %1068 = vmatpush.bf16.msra.mxu0 %v958
    %1069 = vmatpush.bf16.msra.mxu0 %v954
    %1070 = vmatpush.bf16.msra.mxu0 %v950
    %1071 = vmatpush.bf16.msra.mxu0 %v946
    %1072 = vmatpush.bf16.msra.mxu0 %v942
    %1073 = vmatpush.bf16.msra.mxu0 %v938
    %1074 = vmatmul.bf16.gmra.mxu0 %v714
    %v1075 = vpop.f32.mrf.mxu0
    %v1076 = vadd.f32 %v658, %v1075
    %v1077 = vpop.f32.mrf.mxu0
    %v1078 = vadd.f32 %v658, %v1077
    %1079 = vmatmul.bf16.gmra.mxu0 %v716
    %v1080 = vpop.f32.mrf.mxu0
    %v1081 = vadd.f32 %v658, %v1080
    %v1082 = vpop.f32.mrf.mxu0
    %v1083 = vadd.f32 %v658, %v1082
    %1084 = vmatmul.bf16.gmra.mxu0 %v718
    %v1085 = vpop.f32.mrf.mxu0
    %v1086 = vadd.f32 %v658, %v1085
    %v1087 = vpop.f32.mrf.mxu0
    %v1088 = vadd.f32 %v658, %v1087
    %1089 = vmatmul.bf16.gmra.mxu0 %v720
    %v1090 = vpop.f32.mrf.mxu0
    %v1091 = vadd.f32 %v658, %v1090
    %v1092 = vpop.f32.mrf.mxu0
    %v1093 = vadd.f32 %v658, %v1092
    %1094 = vmatmul.bf16.gmra.mxu0 %v722
    %v1095 = vpop.f32.mrf.mxu0
    %v1096 = vadd.f32 %v658, %v1095
    %v1097 = vpop.f32.mrf.mxu0
    %v1098 = vadd.f32 %v658, %v1097
    %1099 = vmatmul.bf16.gmra.mxu0 %v724
    %v1100 = vpop.f32.mrf.mxu0
    %v1101 = vadd.f32 %v658, %v1100
    %v1102 = vpop.f32.mrf.mxu0
    %v1103 = vadd.f32 %v658, %v1102
    %1104 = vmatmul.bf16.gmra.mxu0 %v726
    %v1105 = vpop.f32.mrf.mxu0
    %v1106 = vadd.f32 %v658, %v1105
    %v1107 = vpop.f32.mrf.mxu0
    %v1108 = vadd.f32 %v658, %v1107
    %1109 = vmatmul.bf16.gmra.mxu0 %v728
    %v1110 = vpop.f32.mrf.mxu0
    %v1111 = vadd.f32 %v658, %v1110
    %v1112 = vpop.f32.mrf.mxu0
    %v1113 = vadd.f32 %v658, %v1112
    %1114 = vdwg.mxu0
    %1115 = vmatpush.bf16.msra.mxu0 %v998
    %1116 = vmatpush.bf16.msra.mxu0 %v994
    %1117 = vmatpush.bf16.msra.mxu0 %v990
    %1118 = vmatpush.bf16.msra.mxu0 %v986
    %1119 = vmatpush.bf16.msra.mxu0 %v982
    %1120 = vmatpush.bf16.msra.mxu0 %v978
    %1121 = vmatpush.bf16.msra.mxu0 %v974
    %1122 = vmatpush.bf16.msra.mxu0 %v970
    %1123 = vmatmul.bf16.gmra.mxu0 %v715
    %v1124 = vpop.f32.mrf.mxu0
    %v1125 = vadd.f32 %v1076, %v1124
    %v1126 = vpop.f32.mrf.mxu0
    %v1127 = vadd.f32 %v1078, %v1126
    %1128 = vmatmul.bf16.gmra.mxu0 %v717
    %v1129 = vpop.f32.mrf.mxu0
    %v1130 = vadd.f32 %v1081, %v1129
    %v1131 = vpop.f32.mrf.mxu0
    %v1132 = vadd.f32 %v1083, %v1131
    %1133 = vmatmul.bf16.gmra.mxu0 %v719
    %v1134 = vpop.f32.mrf.mxu0
    %v1135 = vadd.f32 %v1086, %v1134
    %v1136 = vpop.f32.mrf.mxu0
    %v1137 = vadd.f32 %v1088, %v1136
    %1138 = vmatmul.bf16.gmra.mxu0 %v721
    %v1139 = vpop.f32.mrf.mxu0
    %v1140 = vadd.f32 %v1091, %v1139
    %v1141 = vpop.f32.mrf.mxu0
    %v1142 = vadd.f32 %v1093, %v1141
    %1143 = vmatmul.bf16.gmra.mxu0 %v723
    %v1144 = vpop.f32.mrf.mxu0
    %v1145 = vadd.f32 %v1096, %v1144
    %v1146 = vpop.f32.mrf.mxu0
    %v1147 = vadd.f32 %v1098, %v1146
    %1148 = vmatmul.bf16.gmra.mxu0 %v725
    %v1149 = vpop.f32.mrf.mxu0
    %v1150 = vadd.f32 %v1101, %v1149
    %v1151 = vpop.f32.mrf.mxu0
    %v1152 = vadd.f32 %v1103, %v1151
    %1153 = vmatmul.bf16.gmra.mxu0 %v727
    %v1154 = vpop.f32.mrf.mxu0
    %v1155 = vadd.f32 %v1106, %v1154
    %v1156 = vpop.f32.mrf.mxu0
    %v1157 = vadd.f32 %v1108, %v1156
    %1158 = vmatmul.bf16.gmra.mxu0 %v729
    %v1159 = vpop.f32.mrf.mxu0
    %v1160 = vadd.f32 %v1111, %v1159
    %v1161 = vpop.f32.mrf.mxu0
    %v1162 = vadd.f32 %v1113, %v1161
    %1163 = vdwg.mxu0
    %1164 = vmatpush.bf16.msra.mxu0 %v967
    %1165 = vmatpush.bf16.msra.mxu0 %v963
    %1166 = vmatpush.bf16.msra.mxu0 %v959
    %1167 = vmatpush.bf16.msra.mxu0 %v955
    %1168 = vmatpush.bf16.msra.mxu0 %v951
    %1169 = vmatpush.bf16.msra.mxu0 %v947
    %1170 = vmatpush.bf16.msra.mxu0 %v943
    %1171 = vmatpush.bf16.msra.mxu0 %v939
    %1172 = vmatmul.bf16.gmra.mxu0 %v714
    %v1173 = vpop.f32.mrf.mxu0
    %v1174 = vadd.f32 %v659, %v1173
    %v1175 = vpop.f32.mrf.mxu0
    %v1176 = vadd.f32 %v659, %v1175
    %1177 = vmatmul.bf16.gmra.mxu0 %v716
    %v1178 = vpop.f32.mrf.mxu0
    %v1179 = vadd.f32 %v659, %v1178
    %v1180 = vpop.f32.mrf.mxu0
    %v1181 = vadd.f32 %v659, %v1180
    %1182 = vmatmul.bf16.gmra.mxu0 %v718
    %v1183 = vpop.f32.mrf.mxu0
    %v1184 = vadd.f32 %v659, %v1183
    %v1185 = vpop.f32.mrf.mxu0
    %v1186 = vadd.f32 %v659, %v1185
    %1187 = vmatmul.bf16.gmra.mxu0 %v720
    %v1188 = vpop.f32.mrf.mxu0
    %v1189 = vadd.f32 %v659, %v1188
    %v1190 = vpop.f32.mrf.mxu0
    %v1191 = vadd.f32 %v659, %v1190
    %1192 = vmatmul.bf16.gmra.mxu0 %v722
    %v1193 = vpop.f32.mrf.mxu0
    %v1194 = vadd.f32 %v659, %v1193
    %v1195 = vpop.f32.mrf.mxu0
    %v1196 = vadd.f32 %v659, %v1195
    %1197 = vmatmul.bf16.gmra.mxu0 %v724
    %v1198 = vpop.f32.mrf.mxu0
    %v1199 = vadd.f32 %v659, %v1198
    %v1200 = vpop.f32.mrf.mxu0
    %v1201 = vadd.f32 %v659, %v1200
    %1202 = vmatmul.bf16.gmra.mxu0 %v726
    %v1203 = vpop.f32.mrf.mxu0
    %v1204 = vadd.f32 %v659, %v1203
    %v1205 = vpop.f32.mrf.mxu0
    %v1206 = vadd.f32 %v659, %v1205
    %1207 = vmatmul.bf16.gmra.mxu0 %v728
    %v1208 = vpop.f32.mrf.mxu0
    %v1209 = vadd.f32 %v659, %v1208
    %v1210 = vpop.f32.mrf.mxu0
    %v1211 = vadd.f32 %v659, %v1210
    %1212 = vdwg.mxu0
    %1213 = vmatpush.bf16.msra.mxu0 %v999
    %1214 = vmatpush.bf16.msra.mxu0 %v995
    %1215 = vmatpush.bf16.msra.mxu0 %v991
    %1216 = vmatpush.bf16.msra.mxu0 %v987
    %1217 = vmatpush.bf16.msra.mxu0 %v983
    %1218 = vmatpush.bf16.msra.mxu0 %v979
    %1219 = vmatpush.bf16.msra.mxu0 %v975
    %1220 = vmatpush.bf16.msra.mxu0 %v971
    %1221 = vmatmul.bf16.gmra.mxu0 %v715
    %v1222 = vpop.f32.mrf.mxu0
    %v1223 = vadd.f32 %v1174, %v1222
    %v1224 = vpop.f32.mrf.mxu0
    %v1225 = vadd.f32 %v1176, %v1224
    %1226 = vmatmul.bf16.gmra.mxu0 %v717
    %v1227 = vpop.f32.mrf.mxu0
    %v1228 = vadd.f32 %v1179, %v1227
    %v1229 = vpop.f32.mrf.mxu0
    %v1230 = vadd.f32 %v1181, %v1229
    %1231 = vmatmul.bf16.gmra.mxu0 %v719
    %v1232 = vpop.f32.mrf.mxu0
    %v1233 = vadd.f32 %v1184, %v1232
    %v1234 = vpop.f32.mrf.mxu0
    %v1235 = vadd.f32 %v1186, %v1234
    %1236 = vmatmul.bf16.gmra.mxu0 %v721
    %v1237 = vpop.f32.mrf.mxu0
    %v1238 = vadd.f32 %v1189, %v1237
    %v1239 = vpop.f32.mrf.mxu0
    %v1240 = vadd.f32 %v1191, %v1239
    %1241 = vmatmul.bf16.gmra.mxu0 %v723
    %v1242 = vpop.f32.mrf.mxu0
    %v1243 = vadd.f32 %v1194, %v1242
    %v1244 = vpop.f32.mrf.mxu0
    %v1245 = vadd.f32 %v1196, %v1244
    %1246 = vmatmul.bf16.gmra.mxu0 %v725
    %v1247 = vpop.f32.mrf.mxu0
    %v1248 = vadd.f32 %v1199, %v1247
    %v1249 = vpop.f32.mrf.mxu0
    %v1250 = vadd.f32 %v1201, %v1249
    %1251 = vmatmul.bf16.gmra.mxu0 %v727
    %v1252 = vpop.f32.mrf.mxu0
    %v1253 = vadd.f32 %v1204, %v1252
    %v1254 = vpop.f32.mrf.mxu0
    %v1255 = vadd.f32 %v1206, %v1254
    %1256 = vmatmul.bf16.gmra.mxu0 %v729
    %v1257 = vpop.f32.mrf.mxu0
    %v1258 = vadd.f32 %v1209, %v1257
    %v1259 = vpop.f32.mrf.mxu0
    %v1260 = vadd.f32 %v1211, %v1259
    %1261 = vdwg.mxu0
    %1262 = vmatpush.bf16.msra.mxu0 %v968
    %1263 = vmatpush.bf16.msra.mxu0 %v964
    %1264 = vmatpush.bf16.msra.mxu0 %v960
    %1265 = vmatpush.bf16.msra.mxu0 %v956
    %1266 = vmatpush.bf16.msra.mxu0 %v952
    %1267 = vmatpush.bf16.msra.mxu0 %v948
    %1268 = vmatpush.bf16.msra.mxu0 %v944
    %1269 = vmatpush.bf16.msra.mxu0 %v940
    %1270 = vmatmul.bf16.gmra.mxu0 %v714
    %v1271 = vpop.f32.mrf.mxu0
    %v1272 = vadd.f32 %v660, %v1271
    %v1273 = vpop.f32.mrf.mxu0
    %v1274 = vadd.f32 %v660, %v1273
    %1275 = vmatmul.bf16.gmra.mxu0 %v716
    %v1276 = vpop.f32.mrf.mxu0
    %v1277 = vadd.f32 %v660, %v1276
    %v1278 = vpop.f32.mrf.mxu0
    %v1279 = vadd.f32 %v660, %v1278
    %1280 = vmatmul.bf16.gmra.mxu0 %v718
    %v1281 = vpop.f32.mrf.mxu0
    %v1282 = vadd.f32 %v660, %v1281
    %v1283 = vpop.f32.mrf.mxu0
    %v1284 = vadd.f32 %v660, %v1283
    %1285 = vmatmul.bf16.gmra.mxu0 %v720
    %v1286 = vpop.f32.mrf.mxu0
    %v1287 = vadd.f32 %v660, %v1286
    %v1288 = vpop.f32.mrf.mxu0
    %v1289 = vadd.f32 %v660, %v1288
    %1290 = vmatmul.bf16.gmra.mxu0 %v722
    %v1291 = vpop.f32.mrf.mxu0
    %v1292 = vadd.f32 %v660, %v1291
    %v1293 = vpop.f32.mrf.mxu0
    %v1294 = vadd.f32 %v660, %v1293
    %1295 = vmatmul.bf16.gmra.mxu0 %v724
    %v1296 = vpop.f32.mrf.mxu0
    %v1297 = vadd.f32 %v660, %v1296
    %v1298 = vpop.f32.mrf.mxu0
    %v1299 = vadd.f32 %v660, %v1298
    %1300 = vmatmul.bf16.gmra.mxu0 %v726
    %v1301 = vpop.f32.mrf.mxu0
    %v1302 = vadd.f32 %v660, %v1301
    %v1303 = vpop.f32.mrf.mxu0
    %v1304 = vadd.f32 %v660, %v1303
    %1305 = vmatmul.bf16.gmra.mxu0 %v728
    %v1306 = vpop.f32.mrf.mxu0
    %v1307 = vadd.f32 %v660, %v1306
    %v1308 = vpop.f32.mrf.mxu0
    %v1309 = vadd.f32 %v660, %v1308
    %1310 = vdwg.mxu0
    %1311 = vmatpush.bf16.msra.mxu0 %v1000
    %1312 = vmatpush.bf16.msra.mxu0 %v996
    %1313 = vmatpush.bf16.msra.mxu0 %v992
    %1314 = vmatpush.bf16.msra.mxu0 %v988
    %1315 = vmatpush.bf16.msra.mxu0 %v984
    %1316 = vmatpush.bf16.msra.mxu0 %v980
    %1317 = vmatpush.bf16.msra.mxu0 %v976
    %1318 = vmatpush.bf16.msra.mxu0 %v972
    %1319 = vmatmul.bf16.gmra.mxu0 %v715
    %v1320 = vpop.f32.mrf.mxu0
    %v1321 = vadd.f32 %v1272, %v1320
    %v1322 = vpop.f32.mrf.mxu0
    %v1323 = vadd.f32 %v1274, %v1322
    %1324 = vmatmul.bf16.gmra.mxu0 %v717
    %v1325 = vpop.f32.mrf.mxu0
    %v1326 = vadd.f32 %v1277, %v1325
    %v1327 = vpop.f32.mrf.mxu0
    %v1328 = vadd.f32 %v1279, %v1327
    %1329 = vmatmul.bf16.gmra.mxu0 %v719
    %v1330 = vpop.f32.mrf.mxu0
    %v1331 = vadd.f32 %v1282, %v1330
    %v1332 = vpop.f32.mrf.mxu0
    %v1333 = vadd.f32 %v1284, %v1332
    %1334 = vmatmul.bf16.gmra.mxu0 %v721
    %v1335 = vpop.f32.mrf.mxu0
    %v1336 = vadd.f32 %v1287, %v1335
    %v1337 = vpop.f32.mrf.mxu0
    %v1338 = vadd.f32 %v1289, %v1337
    %1339 = vmatmul.bf16.gmra.mxu0 %v723
    %v1340 = vpop.f32.mrf.mxu0
    %v1341 = vadd.f32 %v1292, %v1340
    %v1342 = vpop.f32.mrf.mxu0
    %v1343 = vadd.f32 %v1294, %v1342
    %1344 = vmatmul.bf16.gmra.mxu0 %v725
    %v1345 = vpop.f32.mrf.mxu0
    %v1346 = vadd.f32 %v1297, %v1345
    %v1347 = vpop.f32.mrf.mxu0
    %v1348 = vadd.f32 %v1299, %v1347
    %1349 = vmatmul.bf16.gmra.mxu0 %v727
    %v1350 = vpop.f32.mrf.mxu0
    %v1351 = vadd.f32 %v1302, %v1350
    %v1352 = vpop.f32.mrf.mxu0
    %v1353 = vadd.f32 %v1304, %v1352
    %1354 = vmatmul.bf16.gmra.mxu0 %v729
    %v1355 = vpop.f32.mrf.mxu0
    %v1356 = vadd.f32 %v1307, %v1355
    %v1357 = vpop.f32.mrf.mxu0
    %v1358 = vadd.f32 %v1309, %v1357
    %1359 = vdwg.mxu0
    %1360 = vmatpush.bf16.msra.mxu0 %v969
    %1361 = vmatpush.bf16.msra.mxu0 %v965
    %1362 = vmatpush.bf16.msra.mxu0 %v961
    %1363 = vmatpush.bf16.msra.mxu0 %v957
    %1364 = vmatpush.bf16.msra.mxu0 %v953
    %1365 = vmatpush.bf16.msra.mxu0 %v949
    %1366 = vmatpush.bf16.msra.mxu0 %v945
    %1367 = vmatpush.bf16.msra.mxu0 %v941
    %1368 = vmatmul.bf16.gmra.mxu0 %v714
    %v1369 = vpop.f32.mrf.mxu0
    %v1370 = vadd.f32 %v661, %v1369
    %v1371 = vpop.f32.mrf.mxu0
    %v1372 = vadd.f32 %v661, %v1371
    %1373 = vmatmul.bf16.gmra.mxu0 %v716
    %v1374 = vpop.f32.mrf.mxu0
    %v1375 = vadd.f32 %v661, %v1374
    %v1376 = vpop.f32.mrf.mxu0
    %v1377 = vadd.f32 %v661, %v1376
    %1378 = vmatmul.bf16.gmra.mxu0 %v718
    %v1379 = vpop.f32.mrf.mxu0
    %v1380 = vadd.f32 %v661, %v1379
    %v1381 = vpop.f32.mrf.mxu0
    %v1382 = vadd.f32 %v661, %v1381
    %1383 = vmatmul.bf16.gmra.mxu0 %v720
    %v1384 = vpop.f32.mrf.mxu0
    %v1385 = vadd.f32 %v661, %v1384
    %v1386 = vpop.f32.mrf.mxu0
    %v1387 = vadd.f32 %v661, %v1386
    %1388 = vmatmul.bf16.gmra.mxu0 %v722
    %v1389 = vpop.f32.mrf.mxu0
    %v1390 = vadd.f32 %v661, %v1389
    %v1391 = vpop.f32.mrf.mxu0
    %v1392 = vadd.f32 %v661, %v1391
    %1393 = vmatmul.bf16.gmra.mxu0 %v724
    %v1394 = vpop.f32.mrf.mxu0
    %v1395 = vadd.f32 %v661, %v1394
    %v1396 = vpop.f32.mrf.mxu0
    %v1397 = vadd.f32 %v661, %v1396
    %1398 = vmatmul.bf16.gmra.mxu0 %v726
    %v1399 = vpop.f32.mrf.mxu0
    %v1400 = vadd.f32 %v661, %v1399
    %v1401 = vpop.f32.mrf.mxu0
    %v1402 = vadd.f32 %v661, %v1401
    %1403 = vmatmul.bf16.gmra.mxu0 %v728
    %v1404 = vpop.f32.mrf.mxu0
    %v1405 = vadd.f32 %v661, %v1404
    %v1406 = vpop.f32.mrf.mxu0
    %v1407 = vadd.f32 %v661, %v1406
    %1408 = vdwg.mxu0
    %1409 = vmatpush.bf16.msra.mxu0 %v1001
    %1410 = vmatpush.bf16.msra.mxu0 %v997
    %1411 = vmatpush.bf16.msra.mxu0 %v993
    %1412 = vmatpush.bf16.msra.mxu0 %v989
    %1413 = vmatpush.bf16.msra.mxu0 %v985
    %1414 = vmatpush.bf16.msra.mxu0 %v981
    %1415 = vmatpush.bf16.msra.mxu0 %v977
    %1416 = vmatpush.bf16.msra.mxu0 %v973
    %1417 = vmatmul.bf16.gmra.mxu0 %v715
    %v1418 = vpop.f32.mrf.mxu0
    %v1419 = vadd.f32 %v1370, %v1418
    %v1420 = vpop.f32.mrf.mxu0
    %v1421 = vadd.f32 %v1372, %v1420
    %1422 = vmatmul.bf16.gmra.mxu0 %v717
    %v1423 = vpop.f32.mrf.mxu0
    %v1424 = vadd.f32 %v1375, %v1423
    %v1425 = vpop.f32.mrf.mxu0
    %v1426 = vadd.f32 %v1377, %v1425
    %1427 = vmatmul.bf16.gmra.mxu0 %v719
    %v1428 = vpop.f32.mrf.mxu0
    %v1429 = vadd.f32 %v1380, %v1428
    %v1430 = vpop.f32.mrf.mxu0
    %v1431 = vadd.f32 %v1382, %v1430
    %1432 = vmatmul.bf16.gmra.mxu0 %v721
    %v1433 = vpop.f32.mrf.mxu0
    %v1434 = vadd.f32 %v1385, %v1433
    %v1435 = vpop.f32.mrf.mxu0
    %v1436 = vadd.f32 %v1387, %v1435
    %1437 = vmatmul.bf16.gmra.mxu0 %v723
    %v1438 = vpop.f32.mrf.mxu0
    %v1439 = vadd.f32 %v1390, %v1438
    %v1440 = vpop.f32.mrf.mxu0
    %v1441 = vadd.f32 %v1392, %v1440
    %1442 = vmatmul.bf16.gmra.mxu0 %v725
    %v1443 = vpop.f32.mrf.mxu0
    %v1444 = vadd.f32 %v1395, %v1443
    %v1445 = vpop.f32.mrf.mxu0
    %v1446 = vadd.f32 %v1397, %v1445
    %1447 = vmatmul.bf16.gmra.mxu0 %v727
    %v1448 = vpop.f32.mrf.mxu0
    %v1449 = vadd.f32 %v1400, %v1448
    %v1450 = vpop.f32.mrf.mxu0
    %v1451 = vadd.f32 %v1402, %v1450
    %1452 = vmatmul.bf16.gmra.mxu0 %v729
    %v1453 = vpop.f32.mrf.mxu0
    %v1454 = vadd.f32 %v1405, %v1453
    %v1455 = vpop.f32.mrf.mxu0
    %v1456 = vadd.f32 %v1407, %v1455
    %1457 = vdwg.mxu0
    %v1458 = vpack.c.bf16 %v1223, %v1125
    %v1459 = vpack.c.bf16 %v1419, %v1321
    %v1460 = vpack.c.bf16 %v1225, %v1127
    %v1461 = vpack.c.bf16 %v1421, %v1323
    %v1462 = vpack.c.bf16 %v1228, %v1130
    %v1463 = vpack.c.bf16 %v1424, %v1326
    %v1464 = vpack.c.bf16 %v1230, %v1132
    %v1465 = vpack.c.bf16 %v1426, %v1328
    %v1466 = vpack.c.bf16 %v1233, %v1135
    %v1467 = vpack.c.bf16 %v1429, %v1331
    %v1468 = vpack.c.bf16 %v1235, %v1137
    %v1469 = vpack.c.bf16 %v1431, %v1333
    %v1470 = vpack.c.bf16 %v1238, %v1140
    %v1471 = vpack.c.bf16 %v1434, %v1336
    %v1472 = vpack.c.bf16 %v1240, %v1142
    %v1473 = vpack.c.bf16 %v1436, %v1338
    %v1474 = vpack.c.bf16 %v1243, %v1145
    %v1475 = vpack.c.bf16 %v1439, %v1341
    %v1476 = vpack.c.bf16 %v1245, %v1147
    %v1477 = vpack.c.bf16 %v1441, %v1343
    %v1478 = vpack.c.bf16 %v1248, %v1150
    %v1479 = vpack.c.bf16 %v1444, %v1346
    %v1480 = vpack.c.bf16 %v1250, %v1152
    %v1481 = vpack.c.bf16 %v1446, %v1348
    %v1482 = vpack.c.bf16 %v1253, %v1155
    %v1483 = vpack.c.bf16 %v1449, %v1351
    %v1484 = vpack.c.bf16 %v1255, %v1157
    %v1485 = vpack.c.bf16 %v1451, %v1353
    %v1486 = vpack.c.bf16 %v1258, %v1160
    %v1487 = vpack.c.bf16 %v1454, %v1356
    %v1488 = vpack.c.bf16 %v1260, %v1162
    %v1489 = vpack.c.bf16 %v1456, %v1358
    %v1490 = vunpack.c.l.bf16 %v1458
    %v1491 = vunpack.c.h.bf16 %v1458
    %v1492 = vunpack.c.l.bf16 %v1459
    %v1493 = vunpack.c.h.bf16 %v1459
    %v1494 = vunpack.c.l.bf16 %v1460
    %v1495 = vunpack.c.h.bf16 %v1460
    %v1496 = vunpack.c.l.bf16 %v1461
    %v1497 = vunpack.c.h.bf16 %v1461
    %v1498 = vunpack.c.l.bf16 %v1462
    %v1499 = vunpack.c.h.bf16 %v1462
    %v1500 = vunpack.c.l.bf16 %v1463
    %v1501 = vunpack.c.h.bf16 %v1463
    %v1502 = vunpack.c.l.bf16 %v1464
    %v1503 = vunpack.c.h.bf16 %v1464
    %v1504 = vunpack.c.l.bf16 %v1465
    %v1505 = vunpack.c.h.bf16 %v1465
    %v1506 = vunpack.c.l.bf16 %v1466
    %v1507 = vunpack.c.h.bf16 %v1466
    %v1508 = vunpack.c.l.bf16 %v1467
    %v1509 = vunpack.c.h.bf16 %v1467
    %v1510 = vunpack.c.l.bf16 %v1468
    %v1511 = vunpack.c.h.bf16 %v1468
    %v1512 = vunpack.c.l.bf16 %v1469
    %v1513 = vunpack.c.h.bf16 %v1469
    %v1514 = vunpack.c.l.bf16 %v1470
    %v1515 = vunpack.c.h.bf16 %v1470
    %v1516 = vunpack.c.l.bf16 %v1471
    %v1517 = vunpack.c.h.bf16 %v1471
    %v1518 = vunpack.c.l.bf16 %v1472
    %v1519 = vunpack.c.h.bf16 %v1472
    %v1520 = vunpack.c.l.bf16 %v1473
    %v1521 = vunpack.c.h.bf16 %v1473
    %v1522 = vunpack.c.l.bf16 %v1474
    %v1523 = vunpack.c.h.bf16 %v1474
    %v1524 = vunpack.c.l.bf16 %v1475
    %v1525 = vunpack.c.h.bf16 %v1475
    %v1526 = vunpack.c.l.bf16 %v1476
    %v1527 = vunpack.c.h.bf16 %v1476
    %v1528 = vunpack.c.l.bf16 %v1477
    %v1529 = vunpack.c.h.bf16 %v1477
    %v1530 = vunpack.c.l.bf16 %v1478
    %v1531 = vunpack.c.h.bf16 %v1478
    %v1532 = vunpack.c.l.bf16 %v1479
    %v1533 = vunpack.c.h.bf16 %v1479
    %v1534 = vunpack.c.l.bf16 %v1480
    %v1535 = vunpack.c.h.bf16 %v1480
    %v1536 = vunpack.c.l.bf16 %v1481
    %v1537 = vunpack.c.h.bf16 %v1481
    %v1538 = vunpack.c.l.bf16 %v1482
    %v1539 = vunpack.c.h.bf16 %v1482
    %v1540 = vunpack.c.l.bf16 %v1483
    %v1541 = vunpack.c.h.bf16 %v1483
    %v1542 = vunpack.c.l.bf16 %v1484
    %v1543 = vunpack.c.h.bf16 %v1484
    %v1544 = vunpack.c.l.bf16 %v1485
    %v1545 = vunpack.c.h.bf16 %v1485
    %v1546 = vunpack.c.l.bf16 %v1486
    %v1547 = vunpack.c.h.bf16 %v1486
    %v1548 = vunpack.c.l.bf16 %v1487
    %v1549 = vunpack.c.h.bf16 %v1487
    %v1550 = vunpack.c.l.bf16 %v1488
    %v1551 = vunpack.c.h.bf16 %v1488
    %v1552 = vunpack.c.l.bf16 %v1489
    %v1553 = vunpack.c.h.bf16 %v1489
    %vm1554 = vcmp.gt.f32.partialorder %v1490, 0.0
    %vm1555 = vcmp.gt.f32.partialorder %v1491, 0.0
    %vm1556 = vcmp.gt.f32.partialorder %v1492, 0.0
    %vm1557 = vcmp.gt.f32.partialorder %v1493, 0.0
    %vm1558 = vcmp.gt.f32.partialorder %v1494, 0.0
    %vm1559 = vcmp.gt.f32.partialorder %v1495, 0.0
    %vm1560 = vcmp.gt.f32.partialorder %v1496, 0.0
    %vm1561 = vcmp.gt.f32.partialorder %v1497, 0.0
    %vm1562 = vcmp.gt.f32.partialorder %v1498, 0.0
    %vm1563 = vcmp.gt.f32.partialorder %v1499, 0.0
    %vm1564 = vcmp.gt.f32.partialorder %v1500, 0.0
    %vm1565 = vcmp.gt.f32.partialorder %v1501, 0.0
    %vm1566 = vcmp.gt.f32.partialorder %v1502, 0.0
    %vm1567 = vcmp.gt.f32.partialorder %v1503, 0.0
    %vm1568 = vcmp.gt.f32.partialorder %v1504, 0.0
    %vm1569 = vcmp.gt.f32.partialorder %v1505, 0.0
    %vm1570 = vcmp.gt.f32.partialorder %v1506, 0.0
    %vm1571 = vcmp.gt.f32.partialorder %v1507, 0.0
    %vm1572 = vcmp.gt.f32.partialorder %v1508, 0.0
    %vm1573 = vcmp.gt.f32.partialorder %v1509, 0.0
    %vm1574 = vcmp.gt.f32.partialorder %v1510, 0.0
    %vm1575 = vcmp.gt.f32.partialorder %v1511, 0.0
    %vm1576 = vcmp.gt.f32.partialorder %v1512, 0.0
    %vm1577 = vcmp.gt.f32.partialorder %v1513, 0.0
    %vm1578 = vcmp.gt.f32.partialorder %v1514, 0.0
    %vm1579 = vcmp.gt.f32.partialorder %v1515, 0.0
    %vm1580 = vcmp.gt.f32.partialorder %v1516, 0.0
    %vm1581 = vcmp.gt.f32.partialorder %v1517, 0.0
    %vm1582 = vcmp.gt.f32.partialorder %v1518, 0.0
    %vm1583 = vcmp.gt.f32.partialorder %v1519, 0.0
    %vm1584 = vcmp.gt.f32.partialorder %v1520, 0.0
    %vm1585 = vcmp.gt.f32.partialorder %v1521, 0.0
    %vm1586 = vcmp.gt.f32.partialorder %v1522, 0.0
    %vm1587 = vcmp.gt.f32.partialorder %v1523, 0.0
    %vm1588 = vcmp.gt.f32.partialorder %v1524, 0.0
    %vm1589 = vcmp.gt.f32.partialorder %v1525, 0.0
    %vm1590 = vcmp.gt.f32.partialorder %v1526, 0.0
    %vm1591 = vcmp.gt.f32.partialorder %v1527, 0.0
    %vm1592 = vcmp.gt.f32.partialorder %v1528, 0.0
    %vm1593 = vcmp.gt.f32.partialorder %v1529, 0.0
    %vm1594 = vcmp.gt.f32.partialorder %v1530, 0.0
    %vm1595 = vcmp.gt.f32.partialorder %v1531, 0.0
    %vm1596 = vcmp.gt.f32.partialorder %v1532, 0.0
    %vm1597 = vcmp.gt.f32.partialorder %v1533, 0.0
    %vm1598 = vcmp.gt.f32.partialorder %v1534, 0.0
    %vm1599 = vcmp.gt.f32.partialorder %v1535, 0.0
    %vm1600 = vcmp.gt.f32.partialorder %v1536, 0.0
    %vm1601 = vcmp.gt.f32.partialorder %v1537, 0.0
    %vm1602 = vcmp.gt.f32.partialorder %v1538, 0.0
    %vm1603 = vcmp.gt.f32.partialorder %v1539, 0.0
    %vm1604 = vcmp.gt.f32.partialorder %v1540, 0.0
    %vm1605 = vcmp.gt.f32.partialorder %v1541, 0.0
    %vm1606 = vcmp.gt.f32.partialorder %v1542, 0.0
    %vm1607 = vcmp.gt.f32.partialorder %v1543, 0.0
    %vm1608 = vcmp.gt.f32.partialorder %v1544, 0.0
    %vm1609 = vcmp.gt.f32.partialorder %v1545, 0.0
    %vm1610 = vcmp.gt.f32.partialorder %v1546, 0.0
    %vm1611 = vcmp.gt.f32.partialorder %v1547, 0.0
    %vm1612 = vcmp.gt.f32.partialorder %v1548, 0.0
    %vm1613 = vcmp.gt.f32.partialorder %v1549, 0.0
    %vm1614 = vcmp.gt.f32.partialorder %v1550, 0.0
    %vm1615 = vcmp.gt.f32.partialorder %v1551, 0.0
    %vm1616 = vcmp.gt.f32.partialorder %v1552, 0.0
    %vm1617 = vcmp.gt.f32.partialorder %v1553, 0.0
    %v1618 = vmul.f32 %v1490, 0.20019531
    %v1619 = vmul.f32 %v1491, 0.20019531
    %v1620 = vmul.f32 %v1492, 0.20019531
    %v1621 = vmul.f32 %v1493, 0.20019531
    %v1622 = vmul.f32 %v1494, 0.20019531
    %v1623 = vmul.f32 %v1495, 0.20019531
    %v1624 = vmul.f32 %v1496, 0.20019531
    %v1625 = vmul.f32 %v1497, 0.20019531
    %v1626 = vmul.f32 %v1498, 0.20019531
    %v1627 = vmul.f32 %v1499, 0.20019531
    %v1628 = vmul.f32 %v1500, 0.20019531
    %v1629 = vmul.f32 %v1501, 0.20019531
    %v1630 = vmul.f32 %v1502, 0.20019531
    %v1631 = vmul.f32 %v1503, 0.20019531
    %v1632 = vmul.f32 %v1504, 0.20019531
    %v1633 = vmul.f32 %v1505, 0.20019531
    %v1634 = vmul.f32 %v1506, 0.20019531
    %v1635 = vmul.f32 %v1507, 0.20019531
    %v1636 = vmul.f32 %v1508, 0.20019531
    %v1637 = vmul.f32 %v1509, 0.20019531
    %v1638 = vmul.f32 %v1510, 0.20019531
    %v1639 = vmul.f32 %v1511, 0.20019531
    %v1640 = vmul.f32 %v1512, 0.20019531
    %v1641 = vmul.f32 %v1513, 0.20019531
    %v1642 = vmul.f32 %v1514, 0.20019531
    %v1643 = vmul.f32 %v1515, 0.20019531
    %v1644 = vmul.f32 %v1516, 0.20019531
    %v1645 = vmul.f32 %v1517, 0.20019531
    %v1646 = vmul.f32 %v1518, 0.20019531
    %v1647 = vmul.f32 %v1519, 0.20019531
    %v1648 = vmul.f32 %v1520, 0.20019531
    %v1649 = vmul.f32 %v1521, 0.20019531
    %v1650 = vmul.f32 %v1522, 0.20019531
    %v1651 = vmul.f32 %v1523, 0.20019531
    %v1652 = vmul.f32 %v1524, 0.20019531
    %v1653 = vmul.f32 %v1525, 0.20019531
    %v1654 = vmul.f32 %v1526, 0.20019531
    %v1655 = vmul.f32 %v1527, 0.20019531
    %v1656 = vmul.f32 %v1528, 0.20019531
    %v1657 = vmul.f32 %v1529, 0.20019531
    %v1658 = vmul.f32 %v1530, 0.20019531
    %v1659 = vmul.f32 %v1531, 0.20019531
    %v1660 = vmul.f32 %v1532, 0.20019531
    %v1661 = vmul.f32 %v1533, 0.20019531
    %v1662 = vmul.f32 %v1534, 0.20019531
    %v1663 = vmul.f32 %v1535, 0.20019531
    %v1664 = vmul.f32 %v1536, 0.20019531
    %v1665 = vmul.f32 %v1537, 0.20019531
    %v1666 = vmul.f32 %v1538, 0.20019531
    %v1667 = vmul.f32 %v1539, 0.20019531
    %v1668 = vmul.f32 %v1540, 0.20019531
    %v1669 = vmul.f32 %v1541, 0.20019531
    %v1670 = vmul.f32 %v1542, 0.20019531
    %v1671 = vmul.f32 %v1543, 0.20019531
    %v1672 = vmul.f32 %v1544, 0.20019531
    %v1673 = vmul.f32 %v1545, 0.20019531
    %v1674 = vmul.f32 %v1546, 0.20019531
    %v1675 = vmul.f32 %v1547, 0.20019531
    %v1676 = vmul.f32 %v1548, 0.20019531
    %v1677 = vmul.f32 %v1549, 0.20019531
    %v1678 = vmul.f32 %v1550, 0.20019531
    %v1679 = vmul.f32 %v1551, 0.20019531
    %v1680 = vmul.f32 %v1552, 0.20019531
    %v1681 = vmul.f32 %v1553, 0.20019531
    %v1682 = vpack.c.bf16 %v1619, %v1618
    %v1683 = vpack.c.bf16 %v1621, %v1620
    %v1684 = vpack.c.bf16 %v1623, %v1622
    %v1685 = vpack.c.bf16 %v1625, %v1624
    %v1686 = vpack.c.bf16 %v1627, %v1626
    %v1687 = vpack.c.bf16 %v1629, %v1628
    %v1688 = vpack.c.bf16 %v1631, %v1630
    %v1689 = vpack.c.bf16 %v1633, %v1632
    %v1690 = vpack.c.bf16 %v1635, %v1634
    %v1691 = vpack.c.bf16 %v1637, %v1636
    %v1692 = vpack.c.bf16 %v1639, %v1638
    %v1693 = vpack.c.bf16 %v1641, %v1640
    %v1694 = vpack.c.bf16 %v1643, %v1642
    %v1695 = vpack.c.bf16 %v1645, %v1644
    %v1696 = vpack.c.bf16 %v1647, %v1646
    %v1697 = vpack.c.bf16 %v1649, %v1648
    %v1698 = vpack.c.bf16 %v1651, %v1650
    %v1699 = vpack.c.bf16 %v1653, %v1652
    %v1700 = vpack.c.bf16 %v1655, %v1654
    %v1701 = vpack.c.bf16 %v1657, %v1656
    %v1702 = vpack.c.bf16 %v1659, %v1658
    %v1703 = vpack.c.bf16 %v1661, %v1660
    %v1704 = vpack.c.bf16 %v1663, %v1662
    %v1705 = vpack.c.bf16 %v1665, %v1664
    %v1706 = vpack.c.bf16 %v1667, %v1666
    %v1707 = vpack.c.bf16 %v1669, %v1668
    %v1708 = vpack.c.bf16 %v1671, %v1670
    %v1709 = vpack.c.bf16 %v1673, %v1672
    %v1710 = vpack.c.bf16 %v1675, %v1674
    %v1711 = vpack.c.bf16 %v1677, %v1676
    %v1712 = vpack.c.bf16 %v1679, %v1678
    %v1713 = vpack.c.bf16 %v1681, %v1680
    %vm1714 = vmpackc.low %vm1555, %vm1554
    %vm1715 = vmpackc.low %vm1557, %vm1556
    %vm1716 = vmpackc.low %vm1559, %vm1558
    %vm1717 = vmpackc.low %vm1561, %vm1560
    %vm1718 = vmpackc.low %vm1563, %vm1562
    %vm1719 = vmpackc.low %vm1565, %vm1564
    %vm1720 = vmpackc.low %vm1567, %vm1566
    %vm1721 = vmpackc.low %vm1569, %vm1568
    %vm1722 = vmpackc.low %vm1571, %vm1570
    %vm1723 = vmpackc.low %vm1573, %vm1572
    %vm1724 = vmpackc.low %vm1575, %vm1574
    %vm1725 = vmpackc.low %vm1577, %vm1576
    %vm1726 = vmpackc.low %vm1579, %vm1578
    %vm1727 = vmpackc.low %vm1581, %vm1580
    %vm1728 = vmpackc.low %vm1583, %vm1582
    %vm1729 = vmpackc.low %vm1585, %vm1584
    %vm1730 = vmpackc.low %vm1587, %vm1586
    %vm1731 = vmpackc.low %vm1589, %vm1588
    %vm1732 = vmpackc.low %vm1591, %vm1590
    %vm1733 = vmpackc.low %vm1593, %vm1592
    %vm1734 = vmpackc.low %vm1595, %vm1594
    %vm1735 = vmpackc.low %vm1597, %vm1596
    %vm1736 = vmpackc.low %vm1599, %vm1598
    %vm1737 = vmpackc.low %vm1601, %vm1600
    %vm1738 = vmpackc.low %vm1603, %vm1602
    %vm1739 = vmpackc.low %vm1605, %vm1604
    %vm1740 = vmpackc.low %vm1607, %vm1606
    %vm1741 = vmpackc.low %vm1609, %vm1608
    %vm1742 = vmpackc.low %vm1611, %vm1610
    %vm1743 = vmpackc.low %vm1613, %vm1612
    %vm1744 = vmpackc.low %vm1615, %vm1614
    %vm1745 = vmpackc.low %vm1617, %vm1616
    %v1746 = vsel %vm1714, %v1458, %v1682
    %v1747 = vsel %vm1715, %v1459, %v1683
    %v1748 = vsel %vm1716, %v1460, %v1684
    %v1749 = vsel %vm1717, %v1461, %v1685
    %v1750 = vsel %vm1718, %v1462, %v1686
    %v1751 = vsel %vm1719, %v1463, %v1687
    %v1752 = vsel %vm1720, %v1464, %v1688
    %v1753 = vsel %vm1721, %v1465, %v1689
    %v1754 = vsel %vm1722, %v1466, %v1690
    %v1755 = vsel %vm1723, %v1467, %v1691
    %v1756 = vsel %vm1724, %v1468, %v1692
    %v1757 = vsel %vm1725, %v1469, %v1693
    %v1758 = vsel %vm1726, %v1470, %v1694
    %v1759 = vsel %vm1727, %v1471, %v1695
    %v1760 = vsel %vm1728, %v1472, %v1696
    %v1761 = vsel %vm1729, %v1473, %v1697
    %v1762 = vsel %vm1730, %v1474, %v1698
    %v1763 = vsel %vm1731, %v1475, %v1699
    %v1764 = vsel %vm1732, %v1476, %v1700
    %v1765 = vsel %vm1733, %v1477, %v1701
    %v1766 = vsel %vm1734, %v1478, %v1702
    %v1767 = vsel %vm1735, %v1479, %v1703
    %v1768 = vsel %vm1736, %v1480, %v1704
    %v1769 = vsel %vm1737, %v1481, %v1705
    %v1770 = vsel %vm1738, %v1482, %v1706
    %v1771 = vsel %vm1739, %v1483, %v1707
    %v1772 = vsel %vm1740, %v1484, %v1708
    %v1773 = vsel %vm1741, %v1485, %v1709
    %v1774 = vsel %vm1742, %v1486, %v1710
    %v1775 = vsel %vm1743, %v1487, %v1711
    %v1776 = vsel %vm1744, %v1488, %v1712
    %v1777 = vsel %vm1745, %v1489, %v1713
    %v1778 = vld [vmem:[#allocation7] sm:$0xff]
    %v1779 = vld [vmem:[#allocation7 + $0x8] sm:$0xff]
    %v1780 = vld [vmem:[#allocation7 + $0x10] sm:$0xff]
    %v1781 = vld [vmem:[#allocation7 + $0x18] sm:$0xff]
    %v1782 = vld [vmem:[#allocation7 + $0x20] sm:$0xff]
    %v1783 = vld [vmem:[#allocation7 + $0x28] sm:$0xff]
    %v1784 = vld [vmem:[#allocation7 + $0x30] sm:$0xff]
    %v1785 = vld [vmem:[#allocation7 + $0x38] sm:$0xff]
    %v1786 = vld [vmem:[#allocation7 + $0x40] sm:$0xff]
    %v1787 = vld [vmem:[#allocation7 + $0x48] sm:$0xff]
    %v1788 = vld [vmem:[#allocation7 + $0x50] sm:$0xff]
    %v1789 = vld [vmem:[#allocation7 + $0x58] sm:$0xff]
    %v1790 = vld [vmem:[#allocation7 + $0x60] sm:$0xff]
    %v1791 = vld [vmem:[#allocation7 + $0x68] sm:$0xff]
    %v1792 = vld [vmem:[#allocation7 + $0x70] sm:$0xff]
    %v1793 = vld [vmem:[#allocation7 + $0x78] sm:$0xff]
    %v1794 = vld [vmem:[#allocation7 + $0x80] sm:$0xff]
    %v1795 = vld [vmem:[#allocation7 + $0x88] sm:$0xff]
    %v1796 = vld [vmem:[#allocation7 + $0x90] sm:$0xff]
    %v1797 = vld [vmem:[#allocation7 + $0x98] sm:$0xff]
    %v1798 = vld [vmem:[#allocation7 + $0xa0] sm:$0xff]
    %v1799 = vld [vmem:[#allocation7 + $0xa8] sm:$0xff]
    %v1800 = vld [vmem:[#allocation7 + $0xb0] sm:$0xff]
    %v1801 = vld [vmem:[#allocation7 + $0xb8] sm:$0xff]
    %v1802 = vld [vmem:[#allocation7 + $0xc0] sm:$0xff]
    %v1803 = vld [vmem:[#allocation7 + $0xc8] sm:$0xff]
    %v1804 = vld [vmem:[#allocation7 + $0xd0] sm:$0xff]
    %v1805 = vld [vmem:[#allocation7 + $0xd8] sm:$0xff]
    %v1806 = vld [vmem:[#allocation7 + $0xe0] sm:$0xff]
    %v1807 = vld [vmem:[#allocation7 + $0xe8] sm:$0xff]
    %v1808 = vld [vmem:[#allocation7 + $0xf0] sm:$0xff]
    %v1809 = vld [vmem:[#allocation7 + $0xf8] sm:$0xff]
    %v1810 = vld [vmem:[#allocation7 + $0x100] sm:$0xff]
    %v1811 = vld [vmem:[#allocation7 + $0x108] sm:$0xff]
    %v1812 = vld [vmem:[#allocation7 + $0x110] sm:$0xff]
    %v1813 = vld [vmem:[#allocation7 + $0x118] sm:$0xff]
    %v1814 = vld [vmem:[#allocation7 + $0x120] sm:$0xff]
    %v1815 = vld [vmem:[#allocation7 + $0x128] sm:$0xff]
    %v1816 = vld [vmem:[#allocation7 + $0x130] sm:$0xff]
    %v1817 = vld [vmem:[#allocation7 + $0x138] sm:$0xff]
    %v1818 = vld [vmem:[#allocation7 + $0x140] sm:$0xff]
    %v1819 = vld [vmem:[#allocation7 + $0x148] sm:$0xff]
    %v1820 = vld [vmem:[#allocation7 + $0x150] sm:$0xff]
    %v1821 = vld [vmem:[#allocation7 + $0x158] sm:$0xff]
    %v1822 = vld [vmem:[#allocation7 + $0x160] sm:$0xff]
    %v1823 = vld [vmem:[#allocation7 + $0x168] sm:$0xff]
    %v1824 = vld [vmem:[#allocation7 + $0x170] sm:$0xff]
    %v1825 = vld [vmem:[#allocation7 + $0x178] sm:$0xff]
    %v1826 = vld [vmem:[#allocation7 + $0x180] sm:$0xff]
    %v1827 = vld [vmem:[#allocation7 + $0x188] sm:$0xff]
    %v1828 = vld [vmem:[#allocation7 + $0x190] sm:$0xff]
    %v1829 = vld [vmem:[#allocation7 + $0x198] sm:$0xff]
    %v1830 = vld [vmem:[#allocation7 + $0x1a0] sm:$0xff]
    %v1831 = vld [vmem:[#allocation7 + $0x1a8] sm:$0xff]
    %v1832 = vld [vmem:[#allocation7 + $0x1b0] sm:$0xff]
    %v1833 = vld [vmem:[#allocation7 + $0x1b8] sm:$0xff]
    %v1834 = vld [vmem:[#allocation7 + $0x1c0] sm:$0xff]
    %v1835 = vld [vmem:[#allocation7 + $0x1c8] sm:$0xff]
    %v1836 = vld [vmem:[#allocation7 + $0x1d0] sm:$0xff]
    %v1837 = vld [vmem:[#allocation7 + $0x1d8] sm:$0xff]
    %v1838 = vld [vmem:[#allocation7 + $0x1e0] sm:$0xff]
    %v1839 = vld [vmem:[#allocation7 + $0x1e8] sm:$0xff]
    %v1840 = vld [vmem:[#allocation7 + $0x1f0] sm:$0xff]
    %v1841 = vld [vmem:[#allocation7 + $0x1f8] sm:$0xff]
    %v1842 = vld [vmem:[#allocation7 + $0x200] sm:$0xff]
    %v1843 = vld [vmem:[#allocation7 + $0x208] sm:$0xff]
    %v1844 = vld [vmem:[#allocation7 + $0x210] sm:$0xff]
    %v1845 = vld [vmem:[#allocation7 + $0x218] sm:$0xff]
    %v1846 = vld [vmem:[#allocation7 + $0x220] sm:$0xff]
    %v1847 = vld [vmem:[#allocation7 + $0x228] sm:$0xff]
    %v1848 = vld [vmem:[#allocation7 + $0x230] sm:$0xff]
    %v1849 = vld [vmem:[#allocation7 + $0x238] sm:$0xff]
    %v1850 = vld [vmem:[#allocation7 + $0x240] sm:$0xff]
    %v1851 = vld [vmem:[#allocation7 + $0x248] sm:$0xff]
    %v1852 = vld [vmem:[#allocation7 + $0x250] sm:$0xff]
    %v1853 = vld [vmem:[#allocation7 + $0x258] sm:$0xff]
    %v1854 = vld [vmem:[#allocation7 + $0x260] sm:$0xff]
    %v1855 = vld [vmem:[#allocation7 + $0x268] sm:$0xff]
    %v1856 = vld [vmem:[#allocation7 + $0x270] sm:$0xff]
    %v1857 = vld [vmem:[#allocation7 + $0x278] sm:$0xff]
    %v1858 = vld [vmem:[#allocation7 + $0x280] sm:$0xff]
    %v1859 = vld [vmem:[#allocation7 + $0x288] sm:$0xff]
    %v1860 = vld [vmem:[#allocation7 + $0x290] sm:$0xff]
    %v1861 = vld [vmem:[#allocation7 + $0x298] sm:$0xff]
    %v1862 = vld [vmem:[#allocation7 + $0x2a0] sm:$0xff]
    %v1863 = vld [vmem:[#allocation7 + $0x2a8] sm:$0xff]
    %v1864 = vld [vmem:[#allocation7 + $0x2b0] sm:$0xff]
    %v1865 = vld [vmem:[#allocation7 + $0x2b8] sm:$0xff]
    %v1866 = vld [vmem:[#allocation7 + $0x2c0] sm:$0xff]
    %v1867 = vld [vmem:[#allocation7 + $0x2c8] sm:$0xff]
    %v1868 = vld [vmem:[#allocation7 + $0x2d0] sm:$0xff]
    %v1869 = vld [vmem:[#allocation7 + $0x2d8] sm:$0xff]
    %v1870 = vld [vmem:[#allocation7 + $0x2e0] sm:$0xff]
    %v1871 = vld [vmem:[#allocation7 + $0x2e8] sm:$0xff]
    %v1872 = vld [vmem:[#allocation7 + $0x2f0] sm:$0xff]
    %v1873 = vld [vmem:[#allocation7 + $0x2f8] sm:$0xff]
    %v1874 = vld [vmem:[#allocation7 + $0x300] sm:$0xff]
    %v1875 = vld [vmem:[#allocation7 + $0x308] sm:$0xff]
    %v1876 = vld [vmem:[#allocation7 + $0x310] sm:$0xff]
    %v1877 = vld [vmem:[#allocation7 + $0x318] sm:$0xff]
    %v1878 = vld [vmem:[#allocation7 + $0x320] sm:$0xff]
    %v1879 = vld [vmem:[#allocation7 + $0x328] sm:$0xff]
    %v1880 = vld [vmem:[#allocation7 + $0x330] sm:$0xff]
    %v1881 = vld [vmem:[#allocation7 + $0x338] sm:$0xff]
    %v1882 = vld [vmem:[#allocation7 + $0x340] sm:$0xff]
    %v1883 = vld [vmem:[#allocation7 + $0x348] sm:$0xff]
    %v1884 = vld [vmem:[#allocation7 + $0x350] sm:$0xff]
    %v1885 = vld [vmem:[#allocation7 + $0x358] sm:$0xff]
    %v1886 = vld [vmem:[#allocation7 + $0x360] sm:$0xff]
    %v1887 = vld [vmem:[#allocation7 + $0x368] sm:$0xff]
    %v1888 = vld [vmem:[#allocation7 + $0x370] sm:$0xff]
    %v1889 = vld [vmem:[#allocation7 + $0x378] sm:$0xff]
    %v1890 = vld [vmem:[#allocation7 + $0x380] sm:$0xff]
    %v1891 = vld [vmem:[#allocation7 + $0x388] sm:$0xff]
    %v1892 = vld [vmem:[#allocation7 + $0x390] sm:$0xff]
    %v1893 = vld [vmem:[#allocation7 + $0x398] sm:$0xff]
    %v1894 = vld [vmem:[#allocation7 + $0x3a0] sm:$0xff]
    %v1895 = vld [vmem:[#allocation7 + $0x3a8] sm:$0xff]
    %v1896 = vld [vmem:[#allocation7 + $0x3b0] sm:$0xff]
    %v1897 = vld [vmem:[#allocation7 + $0x3b8] sm:$0xff]
    %v1898 = vld [vmem:[#allocation7 + $0x3c0] sm:$0xff]
    %v1899 = vld [vmem:[#allocation7 + $0x3c8] sm:$0xff]
    %v1900 = vld [vmem:[#allocation7 + $0x3d0] sm:$0xff]
    %v1901 = vld [vmem:[#allocation7 + $0x3d8] sm:$0xff]
    %v1902 = vld [vmem:[#allocation7 + $0x3e0] sm:$0xff]
    %v1903 = vld [vmem:[#allocation7 + $0x3e8] sm:$0xff]
    %v1904 = vld [vmem:[#allocation7 + $0x3f0] sm:$0xff]
    %v1905 = vld [vmem:[#allocation7 + $0x3f8] sm:$0xff]
    %v1906 = vld [vmem:[#allocation7 + $0x400] sm:$0xff]
    %v1907 = vld [vmem:[#allocation7 + $0x408] sm:$0xff]
    %v1908 = vld [vmem:[#allocation7 + $0x410] sm:$0xff]
    %v1909 = vld [vmem:[#allocation7 + $0x418] sm:$0xff]
    %v1910 = vld [vmem:[#allocation7 + $0x420] sm:$0xff]
    %v1911 = vld [vmem:[#allocation7 + $0x428] sm:$0xff]
    %v1912 = vld [vmem:[#allocation7 + $0x430] sm:$0xff]
    %v1913 = vld [vmem:[#allocation7 + $0x438] sm:$0xff]
    %v1914 = vld [vmem:[#allocation7 + $0x440] sm:$0xff]
    %v1915 = vld [vmem:[#allocation7 + $0x448] sm:$0xff]
    %v1916 = vld [vmem:[#allocation7 + $0x450] sm:$0xff]
    %v1917 = vld [vmem:[#allocation7 + $0x458] sm:$0xff]
    %v1918 = vld [vmem:[#allocation7 + $0x460] sm:$0xff]
    %v1919 = vld [vmem:[#allocation7 + $0x468] sm:$0xff]
    %v1920 = vld [vmem:[#allocation7 + $0x470] sm:$0xff]
    %v1921 = vld [vmem:[#allocation7 + $0x478] sm:$0xff]
    %v1922 = vld [vmem:[#allocation7 + $0x480] sm:$0xff]
    %v1923 = vld [vmem:[#allocation7 + $0x488] sm:$0xff]
    %v1924 = vld [vmem:[#allocation7 + $0x490] sm:$0xff]
    %v1925 = vld [vmem:[#allocation7 + $0x498] sm:$0xff]
    %v1926 = vld [vmem:[#allocation7 + $0x4a0] sm:$0xff]
    %v1927 = vld [vmem:[#allocation7 + $0x4a8] sm:$0xff]
    %v1928 = vld [vmem:[#allocation7 + $0x4b0] sm:$0xff]
    %v1929 = vld [vmem:[#allocation7 + $0x4b8] sm:$0xff]
    %v1930 = vld [vmem:[#allocation7 + $0x4c0] sm:$0xff]
    %v1931 = vld [vmem:[#allocation7 + $0x4c8] sm:$0xff]
    %v1932 = vld [vmem:[#allocation7 + $0x4d0] sm:$0xff]
    %v1933 = vld [vmem:[#allocation7 + $0x4d8] sm:$0xff]
    %v1934 = vld [vmem:[#allocation7 + $0x4e0] sm:$0xff]
    %v1935 = vld [vmem:[#allocation7 + $0x4e8] sm:$0xff]
    %v1936 = vld [vmem:[#allocation7 + $0x4f0] sm:$0xff]
    %v1937 = vld [vmem:[#allocation7 + $0x4f8] sm:$0xff]
    %v1938 = vld [vmem:[#allocation7 + $0x500] sm:$0xff]
    %v1939 = vld [vmem:[#allocation7 + $0x508] sm:$0xff]
    %v1940 = vld [vmem:[#allocation7 + $0x510] sm:$0xff]
    %v1941 = vld [vmem:[#allocation7 + $0x518] sm:$0xff]
    %v1942 = vld [vmem:[#allocation7 + $0x520] sm:$0xff]
    %v1943 = vld [vmem:[#allocation7 + $0x528] sm:$0xff]
    %v1944 = vld [vmem:[#allocation7 + $0x530] sm:$0xff]
    %v1945 = vld [vmem:[#allocation7 + $0x538] sm:$0xff]
    %v1946 = vld [vmem:[#allocation7 + $0x540] sm:$0xff]
    %v1947 = vld [vmem:[#allocation7 + $0x548] sm:$0xff]
    %v1948 = vld [vmem:[#allocation7 + $0x550] sm:$0xff]
    %v1949 = vld [vmem:[#allocation7 + $0x558] sm:$0xff]
    %v1950 = vld [vmem:[#allocation7 + $0x560] sm:$0xff]
    %v1951 = vld [vmem:[#allocation7 + $0x568] sm:$0xff]
    %v1952 = vld [vmem:[#allocation7 + $0x570] sm:$0xff]
    %v1953 = vld [vmem:[#allocation7 + $0x578] sm:$0xff]
    %v1954 = vld [vmem:[#allocation7 + $0x580] sm:$0xff]
    %v1955 = vld [vmem:[#allocation7 + $0x588] sm:$0xff]
    %v1956 = vld [vmem:[#allocation7 + $0x590] sm:$0xff]
    %v1957 = vld [vmem:[#allocation7 + $0x598] sm:$0xff]
    %v1958 = vld [vmem:[#allocation7 + $0x5a0] sm:$0xff]
    %v1959 = vld [vmem:[#allocation7 + $0x5a8] sm:$0xff]
    %v1960 = vld [vmem:[#allocation7 + $0x5b0] sm:$0xff]
    %v1961 = vld [vmem:[#allocation7 + $0x5b8] sm:$0xff]
    %v1962 = vld [vmem:[#allocation7 + $0x5c0] sm:$0xff]
    %v1963 = vld [vmem:[#allocation7 + $0x5c8] sm:$0xff]
    %v1964 = vld [vmem:[#allocation7 + $0x5d0] sm:$0xff]
    %v1965 = vld [vmem:[#allocation7 + $0x5d8] sm:$0xff]
    %v1966 = vld [vmem:[#allocation7 + $0x5e0] sm:$0xff]
    %v1967 = vld [vmem:[#allocation7 + $0x5e8] sm:$0xff]
    %v1968 = vld [vmem:[#allocation7 + $0x5f0] sm:$0xff]
    %v1969 = vld [vmem:[#allocation7 + $0x5f8] sm:$0xff]
    %v1970 = vld [vmem:[#allocation7 + $0x600] sm:$0xff]
    %v1971 = vld [vmem:[#allocation7 + $0x608] sm:$0xff]
    %v1972 = vld [vmem:[#allocation7 + $0x610] sm:$0xff]
    %v1973 = vld [vmem:[#allocation7 + $0x618] sm:$0xff]
    %v1974 = vld [vmem:[#allocation7 + $0x620] sm:$0xff]
    %v1975 = vld [vmem:[#allocation7 + $0x628] sm:$0xff]
    %v1976 = vld [vmem:[#allocation7 + $0x630] sm:$0xff]
    %v1977 = vld [vmem:[#allocation7 + $0x638] sm:$0xff]
    %v1978 = vld [vmem:[#allocation7 + $0x640] sm:$0xff]
    %v1979 = vld [vmem:[#allocation7 + $0x648] sm:$0xff]
    %v1980 = vld [vmem:[#allocation7 + $0x650] sm:$0xff]
    %v1981 = vld [vmem:[#allocation7 + $0x658] sm:$0xff]
    %v1982 = vld [vmem:[#allocation7 + $0x660] sm:$0xff]
    %v1983 = vld [vmem:[#allocation7 + $0x668] sm:$0xff]
    %v1984 = vld [vmem:[#allocation7 + $0x670] sm:$0xff]
    %v1985 = vld [vmem:[#allocation7 + $0x678] sm:$0xff]
    %v1986 = vld [vmem:[#allocation7 + $0x680] sm:$0xff]
    %v1987 = vld [vmem:[#allocation7 + $0x688] sm:$0xff]
    %v1988 = vld [vmem:[#allocation7 + $0x690] sm:$0xff]
    %v1989 = vld [vmem:[#allocation7 + $0x698] sm:$0xff]
    %v1990 = vld [vmem:[#allocation7 + $0x6a0] sm:$0xff]
    %v1991 = vld [vmem:[#allocation7 + $0x6a8] sm:$0xff]
    %v1992 = vld [vmem:[#allocation7 + $0x6b0] sm:$0xff]
    %v1993 = vld [vmem:[#allocation7 + $0x6b8] sm:$0xff]
    %v1994 = vld [vmem:[#allocation7 + $0x6c0] sm:$0xff]
    %v1995 = vld [vmem:[#allocation7 + $0x6c8] sm:$0xff]
    %v1996 = vld [vmem:[#allocation7 + $0x6d0] sm:$0xff]
    %v1997 = vld [vmem:[#allocation7 + $0x6d8] sm:$0xff]
    %v1998 = vld [vmem:[#allocation7 + $0x6e0] sm:$0xff]
    %v1999 = vld [vmem:[#allocation7 + $0x6e8] sm:$0xff]
    %v2000 = vld [vmem:[#allocation7 + $0x6f0] sm:$0xff]
    %v2001 = vld [vmem:[#allocation7 + $0x6f8] sm:$0xff]
    %v2002 = vld [vmem:[#allocation7 + $0x700] sm:$0xff]
    %v2003 = vld [vmem:[#allocation7 + $0x708] sm:$0xff]
    %v2004 = vld [vmem:[#allocation7 + $0x710] sm:$0xff]
    %v2005 = vld [vmem:[#allocation7 + $0x718] sm:$0xff]
    %v2006 = vld [vmem:[#allocation7 + $0x720] sm:$0xff]
    %v2007 = vld [vmem:[#allocation7 + $0x728] sm:$0xff]
    %v2008 = vld [vmem:[#allocation7 + $0x730] sm:$0xff]
    %v2009 = vld [vmem:[#allocation7 + $0x738] sm:$0xff]
    %v2010 = vld [vmem:[#allocation7 + $0x740] sm:$0xff]
    %v2011 = vld [vmem:[#allocation7 + $0x748] sm:$0xff]
    %v2012 = vld [vmem:[#allocation7 + $0x750] sm:$0xff]
    %v2013 = vld [vmem:[#allocation7 + $0x758] sm:$0xff]
    %v2014 = vld [vmem:[#allocation7 + $0x760] sm:$0xff]
    %v2015 = vld [vmem:[#allocation7 + $0x768] sm:$0xff]
    %v2016 = vld [vmem:[#allocation7 + $0x770] sm:$0xff]
    %v2017 = vld [vmem:[#allocation7 + $0x778] sm:$0xff]
    %v2018 = vld [vmem:[#allocation7 + $0x780] sm:$0xff]
    %v2019 = vld [vmem:[#allocation7 + $0x788] sm:$0xff]
    %v2020 = vld [vmem:[#allocation7 + $0x790] sm:$0xff]
    %v2021 = vld [vmem:[#allocation7 + $0x798] sm:$0xff]
    %v2022 = vld [vmem:[#allocation7 + $0x7a0] sm:$0xff]
    %v2023 = vld [vmem:[#allocation7 + $0x7a8] sm:$0xff]
    %v2024 = vld [vmem:[#allocation7 + $0x7b0] sm:$0xff]
    %v2025 = vld [vmem:[#allocation7 + $0x7b8] sm:$0xff]
    %v2026 = vld [vmem:[#allocation7 + $0x7c0] sm:$0xff]
    %v2027 = vld [vmem:[#allocation7 + $0x7c8] sm:$0xff]
    %v2028 = vld [vmem:[#allocation7 + $0x7d0] sm:$0xff]
    %v2029 = vld [vmem:[#allocation7 + $0x7d8] sm:$0xff]
    %v2030 = vld [vmem:[#allocation7 + $0x7e0] sm:$0xff]
    %v2031 = vld [vmem:[#allocation7 + $0x7e8] sm:$0xff]
    %v2032 = vld [vmem:[#allocation7 + $0x7f0] sm:$0xff]
    %v2033 = vld [vmem:[#allocation7 + $0x7f8] sm:$0xff]
    %v2034 = vld [vmem:[#allocation9] sm:$0xff]
    %v2036 = vperm.slane %v2034, 0
    %v2037 = vperm.slane %v2034, 1
    %v2038 = vperm.slane %v2034, 2
    %v2039 = vperm.slane %v2034, 3
    %v2040 = vperm.slane %v2034, 4
    %v2041 = vperm.slane %v2034, 5
    %v2042 = vperm.slane %v2034, 6
    %v2043 = vperm.slane %v2034, 7
    %v2084 = vunpack.c.l.b16 %v1746
    %v2085 = vunpack.c.h.b16 %v1746
    %v2086 = vunpack.c.l.b16 %v1747
    %v2087 = vunpack.c.h.b16 %v1747
    %v2088 = vunpack.c.l.b16 %v1748
    %v2089 = vunpack.c.h.b16 %v1748
    %v2090 = vunpack.c.l.b16 %v1749
    %v2091 = vunpack.c.h.b16 %v1749
    %v2092 = vunpack.c.l.b16 %v1750
    %v2093 = vunpack.c.h.b16 %v1750
    %v2094 = vunpack.c.l.b16 %v1751
    %v2095 = vunpack.c.h.b16 %v1751
    %v2096 = vunpack.c.l.b16 %v1752
    %v2097 = vunpack.c.h.b16 %v1752
    %v2098 = vunpack.c.l.b16 %v1753
    %v2099 = vunpack.c.h.b16 %v1753
    %v2100 = vunpack.c.l.b16 %v1754
    %v2101 = vunpack.c.h.b16 %v1754
    %v2102 = vunpack.c.l.b16 %v1755
    %v2103 = vunpack.c.h.b16 %v1755
    %v2104 = vunpack.c.l.b16 %v1756
    %v2105 = vunpack.c.h.b16 %v1756
    %v2106 = vunpack.c.l.b16 %v1757
    %v2107 = vunpack.c.h.b16 %v1757
    %v2108 = vunpack.c.l.b16 %v1758
    %v2109 = vunpack.c.h.b16 %v1758
    %v2110 = vunpack.c.l.b16 %v1759
    %v2111 = vunpack.c.h.b16 %v1759
    %v2112 = vunpack.c.l.b16 %v1760
    %v2113 = vunpack.c.h.b16 %v1760
    %v2114 = vunpack.c.l.b16 %v1761
    %v2115 = vunpack.c.h.b16 %v1761
    %v2116 = vunpack.c.l.b16 %v1762
    %v2117 = vunpack.c.h.b16 %v1762
    %v2118 = vunpack.c.l.b16 %v1763
    %v2119 = vunpack.c.h.b16 %v1763
    %v2120 = vunpack.c.l.b16 %v1764
    %v2121 = vunpack.c.h.b16 %v1764
    %v2122 = vunpack.c.l.b16 %v1765
    %v2123 = vunpack.c.h.b16 %v1765
    %v2124 = vunpack.c.l.b16 %v1766
    %v2125 = vunpack.c.h.b16 %v1766
    %v2126 = vunpack.c.l.b16 %v1767
    %v2127 = vunpack.c.h.b16 %v1767
    %v2128 = vunpack.c.l.b16 %v1768
    %v2129 = vunpack.c.h.b16 %v1768
    %v2130 = vunpack.c.l.b16 %v1769
    %v2131 = vunpack.c.h.b16 %v1769
    %v2132 = vunpack.c.l.b16 %v1770
    %v2133 = vunpack.c.h.b16 %v1770
    %v2134 = vunpack.c.l.b16 %v1771
    %v2135 = vunpack.c.h.b16 %v1771
    %v2136 = vunpack.c.l.b16 %v1772
    %v2137 = vunpack.c.h.b16 %v1772
    %v2138 = vunpack.c.l.b16 %v1773
    %v2139 = vunpack.c.h.b16 %v1773
    %v2140 = vunpack.c.l.b16 %v1774
    %v2141 = vunpack.c.h.b16 %v1774
    %v2142 = vunpack.c.l.b16 %v1775
    %v2143 = vunpack.c.h.b16 %v1775
    %v2144 = vunpack.c.l.b16 %v1776
    %v2145 = vunpack.c.h.b16 %v1776
    %v2146 = vunpack.c.l.b16 %v1777
    %v2147 = vunpack.c.h.b16 %v1777
    %v2148 = vpack.c.b16 %v2088, %v2084
    %v2149 = vpack.c.b16 %v2089, %v2085
    %v2150 = vpack.c.b16 %v2090, %v2086
    %v2151 = vpack.c.b16 %v2091, %v2087
    %v2152 = vpack.c.b16 %v2096, %v2092
    %v2153 = vpack.c.b16 %v2097, %v2093
    %v2154 = vpack.c.b16 %v2098, %v2094
    %v2155 = vpack.c.b16 %v2099, %v2095
    %v2156 = vpack.c.b16 %v2104, %v2100
    %v2157 = vpack.c.b16 %v2105, %v2101
    %v2158 = vpack.c.b16 %v2106, %v2102
    %v2159 = vpack.c.b16 %v2107, %v2103
    %v2160 = vpack.c.b16 %v2112, %v2108
    %v2161 = vpack.c.b16 %v2113, %v2109
    %v2162 = vpack.c.b16 %v2114, %v2110
    %v2163 = vpack.c.b16 %v2115, %v2111
    %v2164 = vpack.c.b16 %v2120, %v2116
    %v2165 = vpack.c.b16 %v2121, %v2117
    %v2166 = vpack.c.b16 %v2122, %v2118
    %v2167 = vpack.c.b16 %v2123, %v2119
    %v2168 = vpack.c.b16 %v2128, %v2124
    %v2169 = vpack.c.b16 %v2129, %v2125
    %v2170 = vpack.c.b16 %v2130, %v2126
    %v2171 = vpack.c.b16 %v2131, %v2127
    %v2172 = vpack.c.b16 %v2136, %v2132
    %v2173 = vpack.c.b16 %v2137, %v2133
    %v2174 = vpack.c.b16 %v2138, %v2134
    %v2175 = vpack.c.b16 %v2139, %v2135
    %v2176 = vpack.c.b16 %v2144, %v2140
    %v2177 = vpack.c.b16 %v2145, %v2141
    %v2178 = vpack.c.b16 %v2146, %v2142
    %v2179 = vpack.c.b16 %v2147, %v2143
    %v2468 = vunpack.c.l.b16 %v1778
    %v2469 = vunpack.c.h.b16 %v1778
    %v2470 = vunpack.c.l.b16 %v1779
    %v2471 = vunpack.c.h.b16 %v1779
    %v2472 = vunpack.c.l.b16 %v1780
    %v2473 = vunpack.c.h.b16 %v1780
    %v2474 = vunpack.c.l.b16 %v1781
    %v2475 = vunpack.c.h.b16 %v1781
    %v2476 = vunpack.c.l.b16 %v1782
    %v2477 = vunpack.c.h.b16 %v1782
    %v2478 = vunpack.c.l.b16 %v1783
    %v2479 = vunpack.c.h.b16 %v1783
    %v2480 = vunpack.c.l.b16 %v1784
    %v2481 = vunpack.c.h.b16 %v1784
    %v2482 = vunpack.c.l.b16 %v1785
    %v2483 = vunpack.c.h.b16 %v1785
    %v2484 = vunpack.c.l.b16 %v1786
    %v2485 = vunpack.c.h.b16 %v1786
    %v2486 = vunpack.c.l.b16 %v1787
    %v2487 = vunpack.c.h.b16 %v1787
    %v2488 = vunpack.c.l.b16 %v1788
    %v2489 = vunpack.c.h.b16 %v1788
    %v2490 = vunpack.c.l.b16 %v1789
    %v2491 = vunpack.c.h.b16 %v1789
    %v2492 = vunpack.c.l.b16 %v1790
    %v2493 = vunpack.c.h.b16 %v1790
    %v2494 = vunpack.c.l.b16 %v1791
    %v2495 = vunpack.c.h.b16 %v1791
    %v2496 = vunpack.c.l.b16 %v1792
    %v2497 = vunpack.c.h.b16 %v1792
    %v2498 = vunpack.c.l.b16 %v1793
    %v2499 = vunpack.c.h.b16 %v1793
    %v2500 = vunpack.c.l.b16 %v1794
    %v2501 = vunpack.c.h.b16 %v1794
    %v2502 = vunpack.c.l.b16 %v1795
    %v2503 = vunpack.c.h.b16 %v1795
    %v2504 = vunpack.c.l.b16 %v1796
    %v2505 = vunpack.c.h.b16 %v1796
    %v2506 = vunpack.c.l.b16 %v1797
    %v2507 = vunpack.c.h.b16 %v1797
    %v2508 = vunpack.c.l.b16 %v1798
    %v2509 = vunpack.c.h.b16 %v1798
    %v2510 = vunpack.c.l.b16 %v1799
    %v2511 = vunpack.c.h.b16 %v1799
    %v2512 = vunpack.c.l.b16 %v1800
    %v2513 = vunpack.c.h.b16 %v1800
    %v2514 = vunpack.c.l.b16 %v1801
    %v2515 = vunpack.c.h.b16 %v1801
    %v2516 = vunpack.c.l.b16 %v1802
    %v2517 = vunpack.c.h.b16 %v1802
    %v2518 = vunpack.c.l.b16 %v1803
    %v2519 = vunpack.c.h.b16 %v1803
    %v2520 = vunpack.c.l.b16 %v1804
    %v2521 = vunpack.c.h.b16 %v1804
    %v2522 = vunpack.c.l.b16 %v1805
    %v2523 = vunpack.c.h.b16 %v1805
    %v2524 = vunpack.c.l.b16 %v1806
    %v2525 = vunpack.c.h.b16 %v1806
    %v2526 = vunpack.c.l.b16 %v1807
    %v2527 = vunpack.c.h.b16 %v1807
    %v2528 = vunpack.c.l.b16 %v1808
    %v2529 = vunpack.c.h.b16 %v1808
    %v2530 = vunpack.c.l.b16 %v1809
    %v2531 = vunpack.c.h.b16 %v1809
    %v2532 = vunpack.c.l.b16 %v1810
    %v2533 = vunpack.c.h.b16 %v1810
    %v2534 = vunpack.c.l.b16 %v1811
    %v2535 = vunpack.c.h.b16 %v1811
    %v2536 = vunpack.c.l.b16 %v1812
    %v2537 = vunpack.c.h.b16 %v1812
    %v2538 = vunpack.c.l.b16 %v1813
    %v2539 = vunpack.c.h.b16 %v1813
    %v2540 = vunpack.c.l.b16 %v1814
    %v2541 = vunpack.c.h.b16 %v1814
    %v2542 = vunpack.c.l.b16 %v1815
    %v2543 = vunpack.c.h.b16 %v1815
    %v2544 = vunpack.c.l.b16 %v1816
    %v2545 = vunpack.c.h.b16 %v1816
    %v2546 = vunpack.c.l.b16 %v1817
    %v2547 = vunpack.c.h.b16 %v1817
    %v2548 = vunpack.c.l.b16 %v1818
    %v2549 = vunpack.c.h.b16 %v1818
    %v2550 = vunpack.c.l.b16 %v1819
    %v2551 = vunpack.c.h.b16 %v1819
    %v2552 = vunpack.c.l.b16 %v1820
    %v2553 = vunpack.c.h.b16 %v1820
    %v2554 = vunpack.c.l.b16 %v1821
    %v2555 = vunpack.c.h.b16 %v1821
    %v2556 = vunpack.c.l.b16 %v1822
    %v2557 = vunpack.c.h.b16 %v1822
    %v2558 = vunpack.c.l.b16 %v1823
    %v2559 = vunpack.c.h.b16 %v1823
    %v2560 = vunpack.c.l.b16 %v1824
    %v2561 = vunpack.c.h.b16 %v1824
    %v2562 = vunpack.c.l.b16 %v1825
    %v2563 = vunpack.c.h.b16 %v1825
    %v2564 = vunpack.c.l.b16 %v1826
    %v2565 = vunpack.c.h.b16 %v1826
    %v2566 = vunpack.c.l.b16 %v1827
    %v2567 = vunpack.c.h.b16 %v1827
    %v2568 = vunpack.c.l.b16 %v1828
    %v2569 = vunpack.c.h.b16 %v1828
    %v2570 = vunpack.c.l.b16 %v1829
    %v2571 = vunpack.c.h.b16 %v1829
    %v2572 = vunpack.c.l.b16 %v1830
    %v2573 = vunpack.c.h.b16 %v1830
    %v2574 = vunpack.c.l.b16 %v1831
    %v2575 = vunpack.c.h.b16 %v1831
    %v2576 = vunpack.c.l.b16 %v1832
    %v2577 = vunpack.c.h.b16 %v1832
    %v2578 = vunpack.c.l.b16 %v1833
    %v2579 = vunpack.c.h.b16 %v1833
    %v2580 = vunpack.c.l.b16 %v1834
    %v2581 = vunpack.c.h.b16 %v1834
    %v2582 = vunpack.c.l.b16 %v1835
    %v2583 = vunpack.c.h.b16 %v1835
    %v2584 = vunpack.c.l.b16 %v1836
    %v2585 = vunpack.c.h.b16 %v1836
    %v2586 = vunpack.c.l.b16 %v1837
    %v2587 = vunpack.c.h.b16 %v1837
    %v2588 = vunpack.c.l.b16 %v1838
    %v2589 = vunpack.c.h.b16 %v1838
    %v2590 = vunpack.c.l.b16 %v1839
    %v2591 = vunpack.c.h.b16 %v1839
    %v2592 = vunpack.c.l.b16 %v1840
    %v2593 = vunpack.c.h.b16 %v1840
    %v2594 = vunpack.c.l.b16 %v1841
    %v2595 = vunpack.c.h.b16 %v1841
    %v2596 = vunpack.c.l.b16 %v1842
    %v2597 = vunpack.c.h.b16 %v1842
    %v2598 = vunpack.c.l.b16 %v1843
    %v2599 = vunpack.c.h.b16 %v1843
    %v2600 = vunpack.c.l.b16 %v1844
    %v2601 = vunpack.c.h.b16 %v1844
    %v2602 = vunpack.c.l.b16 %v1845
    %v2603 = vunpack.c.h.b16 %v1845
    %v2604 = vunpack.c.l.b16 %v1846
    %v2605 = vunpack.c.h.b16 %v1846
    %v2606 = vunpack.c.l.b16 %v1847
    %v2607 = vunpack.c.h.b16 %v1847
    %v2608 = vunpack.c.l.b16 %v1848
    %v2609 = vunpack.c.h.b16 %v1848
    %v2610 = vunpack.c.l.b16 %v1849
    %v2611 = vunpack.c.h.b16 %v1849
    %v2612 = vunpack.c.l.b16 %v1850
    %v2613 = vunpack.c.h.b16 %v1850
    %v2614 = vunpack.c.l.b16 %v1851
    %v2615 = vunpack.c.h.b16 %v1851
    %v2616 = vunpack.c.l.b16 %v1852
    %v2617 = vunpack.c.h.b16 %v1852
    %v2618 = vunpack.c.l.b16 %v1853
    %v2619 = vunpack.c.h.b16 %v1853
    %v2620 = vunpack.c.l.b16 %v1854
    %v2621 = vunpack.c.h.b16 %v1854
    %v2622 = vunpack.c.l.b16 %v1855
    %v2623 = vunpack.c.h.b16 %v1855
    %v2624 = vunpack.c.l.b16 %v1856
    %v2625 = vunpack.c.h.b16 %v1856
    %v2626 = vunpack.c.l.b16 %v1857
    %v2627 = vunpack.c.h.b16 %v1857
    %v2628 = vunpack.c.l.b16 %v1858
    %v2629 = vunpack.c.h.b16 %v1858
    %v2630 = vunpack.c.l.b16 %v1859
    %v2631 = vunpack.c.h.b16 %v1859
    %v2632 = vunpack.c.l.b16 %v1860
    %v2633 = vunpack.c.h.b16 %v1860
    %v2634 = vunpack.c.l.b16 %v1861
    %v2635 = vunpack.c.h.b16 %v1861
    %v2636 = vunpack.c.l.b16 %v1862
    %v2637 = vunpack.c.h.b16 %v1862
    %v2638 = vunpack.c.l.b16 %v1863
    %v2639 = vunpack.c.h.b16 %v1863
    %v2640 = vunpack.c.l.b16 %v1864
    %v2641 = vunpack.c.h.b16 %v1864
    %v2642 = vunpack.c.l.b16 %v1865
    %v2643 = vunpack.c.h.b16 %v1865
    %v2644 = vunpack.c.l.b16 %v1866
    %v2645 = vunpack.c.h.b16 %v1866
    %v2646 = vunpack.c.l.b16 %v1867
    %v2647 = vunpack.c.h.b16 %v1867
    %v2648 = vunpack.c.l.b16 %v1868
    %v2649 = vunpack.c.h.b16 %v1868
    %v2650 = vunpack.c.l.b16 %v1869
    %v2651 = vunpack.c.h.b16 %v1869
    %v2652 = vunpack.c.l.b16 %v1870
    %v2653 = vunpack.c.h.b16 %v1870
    %v2654 = vunpack.c.l.b16 %v1871
    %v2655 = vunpack.c.h.b16 %v1871
    %v2656 = vunpack.c.l.b16 %v1872
    %v2657 = vunpack.c.h.b16 %v1872
    %v2658 = vunpack.c.l.b16 %v1873
    %v2659 = vunpack.c.h.b16 %v1873
    %v2660 = vunpack.c.l.b16 %v1874
    %v2661 = vunpack.c.h.b16 %v1874
    %v2662 = vunpack.c.l.b16 %v1875
    %v2663 = vunpack.c.h.b16 %v1875
    %v2664 = vunpack.c.l.b16 %v1876
    %v2665 = vunpack.c.h.b16 %v1876
    %v2666 = vunpack.c.l.b16 %v1877
    %v2667 = vunpack.c.h.b16 %v1877
    %v2668 = vunpack.c.l.b16 %v1878
    %v2669 = vunpack.c.h.b16 %v1878
    %v2670 = vunpack.c.l.b16 %v1879
    %v2671 = vunpack.c.h.b16 %v1879
    %v2672 = vunpack.c.l.b16 %v1880
    %v2673 = vunpack.c.h.b16 %v1880
    %v2674 = vunpack.c.l.b16 %v1881
    %v2675 = vunpack.c.h.b16 %v1881
    %v2676 = vunpack.c.l.b16 %v1882
    %v2677 = vunpack.c.h.b16 %v1882
    %v2678 = vunpack.c.l.b16 %v1883
    %v2679 = vunpack.c.h.b16 %v1883
    %v2680 = vunpack.c.l.b16 %v1884
    %v2681 = vunpack.c.h.b16 %v1884
    %v2682 = vunpack.c.l.b16 %v1885
    %v2683 = vunpack.c.h.b16 %v1885
    %v2684 = vunpack.c.l.b16 %v1886
    %v2685 = vunpack.c.h.b16 %v1886
    %v2686 = vunpack.c.l.b16 %v1887
    %v2687 = vunpack.c.h.b16 %v1887
    %v2688 = vunpack.c.l.b16 %v1888
    %v2689 = vunpack.c.h.b16 %v1888
    %v2690 = vunpack.c.l.b16 %v1889
    %v2691 = vunpack.c.h.b16 %v1889
    %v2692 = vunpack.c.l.b16 %v1890
    %v2693 = vunpack.c.h.b16 %v1890
    %v2694 = vunpack.c.l.b16 %v1891
    %v2695 = vunpack.c.h.b16 %v1891
    %v2696 = vunpack.c.l.b16 %v1892
    %v2697 = vunpack.c.h.b16 %v1892
    %v2698 = vunpack.c.l.b16 %v1893
    %v2699 = vunpack.c.h.b16 %v1893
    %v2700 = vunpack.c.l.b16 %v1894
    %v2701 = vunpack.c.h.b16 %v1894
    %v2702 = vunpack.c.l.b16 %v1895
    %v2703 = vunpack.c.h.b16 %v1895
    %v2704 = vunpack.c.l.b16 %v1896
    %v2705 = vunpack.c.h.b16 %v1896
    %v2706 = vunpack.c.l.b16 %v1897
    %v2707 = vunpack.c.h.b16 %v1897
    %v2708 = vunpack.c.l.b16 %v1898
    %v2709 = vunpack.c.h.b16 %v1898
    %v2710 = vunpack.c.l.b16 %v1899
    %v2711 = vunpack.c.h.b16 %v1899
    %v2712 = vunpack.c.l.b16 %v1900
    %v2713 = vunpack.c.h.b16 %v1900
    %v2714 = vunpack.c.l.b16 %v1901
    %v2715 = vunpack.c.h.b16 %v1901
    %v2716 = vunpack.c.l.b16 %v1902
    %v2717 = vunpack.c.h.b16 %v1902
    %v2718 = vunpack.c.l.b16 %v1903
    %v2719 = vunpack.c.h.b16 %v1903
    %v2720 = vunpack.c.l.b16 %v1904
    %v2721 = vunpack.c.h.b16 %v1904
    %v2722 = vunpack.c.l.b16 %v1905
    %v2723 = vunpack.c.h.b16 %v1905
    %v2724 = vunpack.c.l.b16 %v1906
    %v2725 = vunpack.c.h.b16 %v1906
    %v2726 = vunpack.c.l.b16 %v1907
    %v2727 = vunpack.c.h.b16 %v1907
    %v2728 = vunpack.c.l.b16 %v1908
    %v2729 = vunpack.c.h.b16 %v1908
    %v2730 = vunpack.c.l.b16 %v1909
    %v2731 = vunpack.c.h.b16 %v1909
    %v2732 = vunpack.c.l.b16 %v1910
    %v2733 = vunpack.c.h.b16 %v1910
    %v2734 = vunpack.c.l.b16 %v1911
    %v2735 = vunpack.c.h.b16 %v1911
    %v2736 = vunpack.c.l.b16 %v1912
    %v2737 = vunpack.c.h.b16 %v1912
    %v2738 = vunpack.c.l.b16 %v1913
    %v2739 = vunpack.c.h.b16 %v1913
    %v2740 = vunpack.c.l.b16 %v1914
    %v2741 = vunpack.c.h.b16 %v1914
    %v2742 = vunpack.c.l.b16 %v1915
    %v2743 = vunpack.c.h.b16 %v1915
    %v2744 = vunpack.c.l.b16 %v1916
    %v2745 = vunpack.c.h.b16 %v1916
    %v2746 = vunpack.c.l.b16 %v1917
    %v2747 = vunpack.c.h.b16 %v1917
    %v2748 = vunpack.c.l.b16 %v1918
    %v2749 = vunpack.c.h.b16 %v1918
    %v2750 = vunpack.c.l.b16 %v1919
    %v2751 = vunpack.c.h.b16 %v1919
    %v2752 = vunpack.c.l.b16 %v1920
    %v2753 = vunpack.c.h.b16 %v1920
    %v2754 = vunpack.c.l.b16 %v1921
    %v2755 = vunpack.c.h.b16 %v1921
    %v2756 = vunpack.c.l.b16 %v1922
    %v2757 = vunpack.c.h.b16 %v1922
    %v2758 = vunpack.c.l.b16 %v1923
    %v2759 = vunpack.c.h.b16 %v1923
    %v2760 = vunpack.c.l.b16 %v1924
    %v2761 = vunpack.c.h.b16 %v1924
    %v2762 = vunpack.c.l.b16 %v1925
    %v2763 = vunpack.c.h.b16 %v1925
    %v2764 = vunpack.c.l.b16 %v1926
    %v2765 = vunpack.c.h.b16 %v1926
    %v2766 = vunpack.c.l.b16 %v1927
    %v2767 = vunpack.c.h.b16 %v1927
    %v2768 = vunpack.c.l.b16 %v1928
    %v2769 = vunpack.c.h.b16 %v1928
    %v2770 = vunpack.c.l.b16 %v1929
    %v2771 = vunpack.c.h.b16 %v1929
    %v2772 = vunpack.c.l.b16 %v1930
    %v2773 = vunpack.c.h.b16 %v1930
    %v2774 = vunpack.c.l.b16 %v1931
    %v2775 = vunpack.c.h.b16 %v1931
    %v2776 = vunpack.c.l.b16 %v1932
    %v2777 = vunpack.c.h.b16 %v1932
    %v2778 = vunpack.c.l.b16 %v1933
    %v2779 = vunpack.c.h.b16 %v1933
    %v2780 = vunpack.c.l.b16 %v1934
    %v2781 = vunpack.c.h.b16 %v1934
    %v2782 = vunpack.c.l.b16 %v1935
    %v2783 = vunpack.c.h.b16 %v1935
    %v2784 = vunpack.c.l.b16 %v1936
    %v2785 = vunpack.c.h.b16 %v1936
    %v2786 = vunpack.c.l.b16 %v1937
    %v2787 = vunpack.c.h.b16 %v1937
    %v2788 = vunpack.c.l.b16 %v1938
    %v2789 = vunpack.c.h.b16 %v1938
    %v2790 = vunpack.c.l.b16 %v1939
    %v2791 = vunpack.c.h.b16 %v1939
    %v2792 = vunpack.c.l.b16 %v1940
    %v2793 = vunpack.c.h.b16 %v1940
    %v2794 = vunpack.c.l.b16 %v1941
    %v2795 = vunpack.c.h.b16 %v1941
    %v2796 = vunpack.c.l.b16 %v1942
    %v2797 = vunpack.c.h.b16 %v1942
    %v2798 = vunpack.c.l.b16 %v1943
    %v2799 = vunpack.c.h.b16 %v1943
    %v2800 = vunpack.c.l.b16 %v1944
    %v2801 = vunpack.c.h.b16 %v1944
    %v2802 = vunpack.c.l.b16 %v1945
    %v2803 = vunpack.c.h.b16 %v1945
    %v2804 = vunpack.c.l.b16 %v1946
    %v2805 = vunpack.c.h.b16 %v1946
    %v2806 = vunpack.c.l.b16 %v1947
    %v2807 = vunpack.c.h.b16 %v1947
    %v2808 = vunpack.c.l.b16 %v1948
    %v2809 = vunpack.c.h.b16 %v1948
    %v2810 = vunpack.c.l.b16 %v1949
    %v2811 = vunpack.c.h.b16 %v1949
    %v2812 = vunpack.c.l.b16 %v1950
    %v2813 = vunpack.c.h.b16 %v1950
    %v2814 = vunpack.c.l.b16 %v1951
    %v2815 = vunpack.c.h.b16 %v1951
    %v2816 = vunpack.c.l.b16 %v1952
    %v2817 = vunpack.c.h.b16 %v1952
    %v2818 = vunpack.c.l.b16 %v1953
    %v2819 = vunpack.c.h.b16 %v1953
    %v2820 = vunpack.c.l.b16 %v1954
    %v2821 = vunpack.c.h.b16 %v1954
    %v2822 = vunpack.c.l.b16 %v1955
    %v2823 = vunpack.c.h.b16 %v1955
    %v2824 = vunpack.c.l.b16 %v1956
    %v2825 = vunpack.c.h.b16 %v1956
    %v2826 = vunpack.c.l.b16 %v1957
    %v2827 = vunpack.c.h.b16 %v1957
    %v2828 = vunpack.c.l.b16 %v1958
    %v2829 = vunpack.c.h.b16 %v1958
    %v2830 = vunpack.c.l.b16 %v1959
    %v2831 = vunpack.c.h.b16 %v1959
    %v2832 = vunpack.c.l.b16 %v1960
    %v2833 = vunpack.c.h.b16 %v1960
    %v2834 = vunpack.c.l.b16 %v1961
    %v2835 = vunpack.c.h.b16 %v1961
    %v2836 = vunpack.c.l.b16 %v1962
    %v2837 = vunpack.c.h.b16 %v1962
    %v2838 = vunpack.c.l.b16 %v1963
    %v2839 = vunpack.c.h.b16 %v1963
    %v2840 = vunpack.c.l.b16 %v1964
    %v2841 = vunpack.c.h.b16 %v1964
    %v2842 = vunpack.c.l.b16 %v1965
    %v2843 = vunpack.c.h.b16 %v1965
    %v2844 = vunpack.c.l.b16 %v1966
    %v2845 = vunpack.c.h.b16 %v1966
    %v2846 = vunpack.c.l.b16 %v1967
    %v2847 = vunpack.c.h.b16 %v1967
    %v2848 = vunpack.c.l.b16 %v1968
    %v2849 = vunpack.c.h.b16 %v1968
    %v2850 = vunpack.c.l.b16 %v1969
    %v2851 = vunpack.c.h.b16 %v1969
    %v2852 = vunpack.c.l.b16 %v1970
    %v2853 = vunpack.c.h.b16 %v1970
    %v2854 = vunpack.c.l.b16 %v1971
    %v2855 = vunpack.c.h.b16 %v1971
    %v2856 = vunpack.c.l.b16 %v1972
    %v2857 = vunpack.c.h.b16 %v1972
    %v2858 = vunpack.c.l.b16 %v1973
    %v2859 = vunpack.c.h.b16 %v1973
    %v2860 = vunpack.c.l.b16 %v1974
    %v2861 = vunpack.c.h.b16 %v1974
    %v2862 = vunpack.c.l.b16 %v1975
    %v2863 = vunpack.c.h.b16 %v1975
    %v2864 = vunpack.c.l.b16 %v1976
    %v2865 = vunpack.c.h.b16 %v1976
    %v2866 = vunpack.c.l.b16 %v1977
    %v2867 = vunpack.c.h.b16 %v1977
    %v2868 = vunpack.c.l.b16 %v1978
    %v2869 = vunpack.c.h.b16 %v1978
    %v2870 = vunpack.c.l.b16 %v1979
    %v2871 = vunpack.c.h.b16 %v1979
    %v2872 = vunpack.c.l.b16 %v1980
    %v2873 = vunpack.c.h.b16 %v1980
    %v2874 = vunpack.c.l.b16 %v1981
    %v2875 = vunpack.c.h.b16 %v1981
    %v2876 = vunpack.c.l.b16 %v1982
    %v2877 = vunpack.c.h.b16 %v1982
    %v2878 = vunpack.c.l.b16 %v1983
    %v2879 = vunpack.c.h.b16 %v1983
    %v2880 = vunpack.c.l.b16 %v1984
    %v2881 = vunpack.c.h.b16 %v1984
    %v2882 = vunpack.c.l.b16 %v1985
    %v2883 = vunpack.c.h.b16 %v1985
    %v2884 = vunpack.c.l.b16 %v1986
    %v2885 = vunpack.c.h.b16 %v1986
    %v2886 = vunpack.c.l.b16 %v1987
    %v2887 = vunpack.c.h.b16 %v1987
    %v2888 = vunpack.c.l.b16 %v1988
    %v2889 = vunpack.c.h.b16 %v1988
    %v2890 = vunpack.c.l.b16 %v1989
    %v2891 = vunpack.c.h.b16 %v1989
    %v2892 = vunpack.c.l.b16 %v1990
    %v2893 = vunpack.c.h.b16 %v1990
    %v2894 = vunpack.c.l.b16 %v1991
    %v2895 = vunpack.c.h.b16 %v1991
    %v2896 = vunpack.c.l.b16 %v1992
    %v2897 = vunpack.c.h.b16 %v1992
    %v2898 = vunpack.c.l.b16 %v1993
    %v2899 = vunpack.c.h.b16 %v1993
    %v2900 = vunpack.c.l.b16 %v1994
    %v2901 = vunpack.c.h.b16 %v1994
    %v2902 = vunpack.c.l.b16 %v1995
    %v2903 = vunpack.c.h.b16 %v1995
    %v2904 = vunpack.c.l.b16 %v1996
    %v2905 = vunpack.c.h.b16 %v1996
    %v2906 = vunpack.c.l.b16 %v1997
    %v2907 = vunpack.c.h.b16 %v1997
    %v2908 = vunpack.c.l.b16 %v1998
    %v2909 = vunpack.c.h.b16 %v1998
    %v2910 = vunpack.c.l.b16 %v1999
    %v2911 = vunpack.c.h.b16 %v1999
    %v2912 = vunpack.c.l.b16 %v2000
    %v2913 = vunpack.c.h.b16 %v2000
    %v2914 = vunpack.c.l.b16 %v2001
    %v2915 = vunpack.c.h.b16 %v2001
    %v2916 = vunpack.c.l.b16 %v2002
    %v2917 = vunpack.c.h.b16 %v2002
    %v2918 = vunpack.c.l.b16 %v2003
    %v2919 = vunpack.c.h.b16 %v2003
    %v2920 = vunpack.c.l.b16 %v2004
    %v2921 = vunpack.c.h.b16 %v2004
    %v2922 = vunpack.c.l.b16 %v2005
    %v2923 = vunpack.c.h.b16 %v2005
    %v2924 = vunpack.c.l.b16 %v2006
    %v2925 = vunpack.c.h.b16 %v2006
    %v2926 = vunpack.c.l.b16 %v2007
    %v2927 = vunpack.c.h.b16 %v2007
    %v2928 = vunpack.c.l.b16 %v2008
    %v2929 = vunpack.c.h.b16 %v2008
    %v2930 = vunpack.c.l.b16 %v2009
    %v2931 = vunpack.c.h.b16 %v2009
    %v2932 = vunpack.c.l.b16 %v2010
    %v2933 = vunpack.c.h.b16 %v2010
    %v2934 = vunpack.c.l.b16 %v2011
    %v2935 = vunpack.c.h.b16 %v2011
    %v2936 = vunpack.c.l.b16 %v2012
    %v2937 = vunpack.c.h.b16 %v2012
    %v2938 = vunpack.c.l.b16 %v2013
    %v2939 = vunpack.c.h.b16 %v2013
    %v2940 = vunpack.c.l.b16 %v2014
    %v2941 = vunpack.c.h.b16 %v2014
    %v2942 = vunpack.c.l.b16 %v2015
    %v2943 = vunpack.c.h.b16 %v2015
    %v2944 = vunpack.c.l.b16 %v2016
    %v2945 = vunpack.c.h.b16 %v2016
    %v2946 = vunpack.c.l.b16 %v2017
    %v2947 = vunpack.c.h.b16 %v2017
    %v2948 = vunpack.c.l.b16 %v2018
    %v2949 = vunpack.c.h.b16 %v2018
    %v2950 = vunpack.c.l.b16 %v2019
    %v2951 = vunpack.c.h.b16 %v2019
    %v2952 = vunpack.c.l.b16 %v2020
    %v2953 = vunpack.c.h.b16 %v2020
    %v2954 = vunpack.c.l.b16 %v2021
    %v2955 = vunpack.c.h.b16 %v2021
    %v2956 = vunpack.c.l.b16 %v2022
    %v2957 = vunpack.c.h.b16 %v2022
    %v2958 = vunpack.c.l.b16 %v2023
    %v2959 = vunpack.c.h.b16 %v2023
    %v2960 = vunpack.c.l.b16 %v2024
    %v2961 = vunpack.c.h.b16 %v2024
    %v2962 = vunpack.c.l.b16 %v2025
    %v2963 = vunpack.c.h.b16 %v2025
    %v2964 = vunpack.c.l.b16 %v2026
    %v2965 = vunpack.c.h.b16 %v2026
    %v2966 = vunpack.c.l.b16 %v2027
    %v2967 = vunpack.c.h.b16 %v2027
    %v2968 = vunpack.c.l.b16 %v2028
    %v2969 = vunpack.c.h.b16 %v2028
    %v2970 = vunpack.c.l.b16 %v2029
    %v2971 = vunpack.c.h.b16 %v2029
    %v2972 = vunpack.c.l.b16 %v2030
    %v2973 = vunpack.c.h.b16 %v2030
    %v2974 = vunpack.c.l.b16 %v2031
    %v2975 = vunpack.c.h.b16 %v2031
    %v2976 = vunpack.c.l.b16 %v2032
    %v2977 = vunpack.c.h.b16 %v2032
    %v2978 = vunpack.c.l.b16 %v2033
    %v2979 = vunpack.c.h.b16 %v2033
    %v2980 = vpack.c.b16 %v2476, %v2468
    %v2981 = vpack.c.b16 %v2477, %v2469
    %v2982 = vpack.c.b16 %v2478, %v2470
    %v2983 = vpack.c.b16 %v2479, %v2471
    %v2984 = vpack.c.b16 %v2480, %v2472
    %v2985 = vpack.c.b16 %v2481, %v2473
    %v2986 = vpack.c.b16 %v2482, %v2474
    %v2987 = vpack.c.b16 %v2483, %v2475
    %v2988 = vpack.c.b16 %v2492, %v2484
    %v2989 = vpack.c.b16 %v2493, %v2485
    %v2990 = vpack.c.b16 %v2494, %v2486
    %v2991 = vpack.c.b16 %v2495, %v2487
    %v2992 = vpack.c.b16 %v2496, %v2488
    %v2993 = vpack.c.b16 %v2497, %v2489
    %v2994 = vpack.c.b16 %v2498, %v2490
    %v2995 = vpack.c.b16 %v2499, %v2491
    %v2996 = vpack.c.b16 %v2508, %v2500
    %v2997 = vpack.c.b16 %v2509, %v2501
    %v2998 = vpack.c.b16 %v2510, %v2502
    %v2999 = vpack.c.b16 %v2511, %v2503
    %v3000 = vpack.c.b16 %v2512, %v2504
    %v3001 = vpack.c.b16 %v2513, %v2505
    %v3002 = vpack.c.b16 %v2514, %v2506
    %v3003 = vpack.c.b16 %v2515, %v2507
    %v3004 = vpack.c.b16 %v2524, %v2516
    %v3005 = vpack.c.b16 %v2525, %v2517
    %v3006 = vpack.c.b16 %v2526, %v2518
    %v3007 = vpack.c.b16 %v2527, %v2519
    %v3008 = vpack.c.b16 %v2528, %v2520
    %v3009 = vpack.c.b16 %v2529, %v2521
    %v3010 = vpack.c.b16 %v2530, %v2522
    %v3011 = vpack.c.b16 %v2531, %v2523
    %v3012 = vpack.c.b16 %v2540, %v2532
    %v3013 = vpack.c.b16 %v2541, %v2533
    %v3014 = vpack.c.b16 %v2542, %v2534
    %v3015 = vpack.c.b16 %v2543, %v2535
    %v3016 = vpack.c.b16 %v2544, %v2536
    %v3017 = vpack.c.b16 %v2545, %v2537
    %v3018 = vpack.c.b16 %v2546, %v2538
    %v3019 = vpack.c.b16 %v2547, %v2539
    %v3020 = vpack.c.b16 %v2556, %v2548
    %v3021 = vpack.c.b16 %v2557, %v2549
    %v3022 = vpack.c.b16 %v2558, %v2550
    %v3023 = vpack.c.b16 %v2559, %v2551
    %v3024 = vpack.c.b16 %v2560, %v2552
    %v3025 = vpack.c.b16 %v2561, %v2553
    %v3026 = vpack.c.b16 %v2562, %v2554
    %v3027 = vpack.c.b16 %v2563, %v2555
    %v3028 = vpack.c.b16 %v2572, %v2564
    %v3029 = vpack.c.b16 %v2573, %v2565
    %v3030 = vpack.c.b16 %v2574, %v2566
    %v3031 = vpack.c.b16 %v2575, %v2567
    %v3032 = vpack.c.b16 %v2576, %v2568
    %v3033 = vpack.c.b16 %v2577, %v2569
    %v3034 = vpack.c.b16 %v2578, %v2570
    %v3035 = vpack.c.b16 %v2579, %v2571
    %v3036 = vpack.c.b16 %v2588, %v2580
    %v3037 = vpack.c.b16 %v2589, %v2581
    %v3038 = vpack.c.b16 %v2590, %v2582
    %v3039 = vpack.c.b16 %v2591, %v2583
    %v3040 = vpack.c.b16 %v2592, %v2584
    %v3041 = vpack.c.b16 %v2593, %v2585
    %v3042 = vpack.c.b16 %v2594, %v2586
    %v3043 = vpack.c.b16 %v2595, %v2587
    %v3044 = vpack.c.b16 %v2604, %v2596
    %v3045 = vpack.c.b16 %v2605, %v2597
    %v3046 = vpack.c.b16 %v2606, %v2598
    %v3047 = vpack.c.b16 %v2607, %v2599
    %v3048 = vpack.c.b16 %v2608, %v2600
    %v3049 = vpack.c.b16 %v2609, %v2601
    %v3050 = vpack.c.b16 %v2610, %v2602
    %v3051 = vpack.c.b16 %v2611, %v2603
    %v3052 = vpack.c.b16 %v2620, %v2612
    %v3053 = vpack.c.b16 %v2621, %v2613
    %v3054 = vpack.c.b16 %v2622, %v2614
    %v3055 = vpack.c.b16 %v2623, %v2615
    %v3056 = vpack.c.b16 %v2624, %v2616
    %v3057 = vpack.c.b16 %v2625, %v2617
    %v3058 = vpack.c.b16 %v2626, %v2618
    %v3059 = vpack.c.b16 %v2627, %v2619
    %v3060 = vpack.c.b16 %v2636, %v2628
    %v3061 = vpack.c.b16 %v2637, %v2629
    %v3062 = vpack.c.b16 %v2638, %v2630
    %v3063 = vpack.c.b16 %v2639, %v2631
    %v3064 = vpack.c.b16 %v2640, %v2632
    %v3065 = vpack.c.b16 %v2641, %v2633
    %v3066 = vpack.c.b16 %v2642, %v2634
    %v3067 = vpack.c.b16 %v2643, %v2635
    %v3068 = vpack.c.b16 %v2652, %v2644
    %v3069 = vpack.c.b16 %v2653, %v2645
    %v3070 = vpack.c.b16 %v2654, %v2646
    %v3071 = vpack.c.b16 %v2655, %v2647
    %v3072 = vpack.c.b16 %v2656, %v2648
    %v3073 = vpack.c.b16 %v2657, %v2649
    %v3074 = vpack.c.b16 %v2658, %v2650
    %v3075 = vpack.c.b16 %v2659, %v2651
    %v3076 = vpack.c.b16 %v2668, %v2660
    %v3077 = vpack.c.b16 %v2669, %v2661
    %v3078 = vpack.c.b16 %v2670, %v2662
    %v3079 = vpack.c.b16 %v2671, %v2663
    %v3080 = vpack.c.b16 %v2672, %v2664
    %v3081 = vpack.c.b16 %v2673, %v2665
    %v3082 = vpack.c.b16 %v2674, %v2666
    %v3083 = vpack.c.b16 %v2675, %v2667
    %v3084 = vpack.c.b16 %v2684, %v2676
    %v3085 = vpack.c.b16 %v2685, %v2677
    %v3086 = vpack.c.b16 %v2686, %v2678
    %v3087 = vpack.c.b16 %v2687, %v2679
    %v3088 = vpack.c.b16 %v2688, %v2680
    %v3089 = vpack.c.b16 %v2689, %v2681
    %v3090 = vpack.c.b16 %v2690, %v2682
    %v3091 = vpack.c.b16 %v2691, %v2683
    %v3092 = vpack.c.b16 %v2700, %v2692
    %v3093 = vpack.c.b16 %v2701, %v2693
    %v3094 = vpack.c.b16 %v2702, %v2694
    %v3095 = vpack.c.b16 %v2703, %v2695
    %v3096 = vpack.c.b16 %v2704, %v2696
    %v3097 = vpack.c.b16 %v2705, %v2697
    %v3098 = vpack.c.b16 %v2706, %v2698
    %v3099 = vpack.c.b16 %v2707, %v2699
    %v3100 = vpack.c.b16 %v2716, %v2708
    %v3101 = vpack.c.b16 %v2717, %v2709
    %v3102 = vpack.c.b16 %v2718, %v2710
    %v3103 = vpack.c.b16 %v2719, %v2711
    %v3104 = vpack.c.b16 %v2720, %v2712
    %v3105 = vpack.c.b16 %v2721, %v2713
    %v3106 = vpack.c.b16 %v2722, %v2714
    %v3107 = vpack.c.b16 %v2723, %v2715
    %v3108 = vpack.c.b16 %v2732, %v2724
    %v3109 = vpack.c.b16 %v2733, %v2725
    %v3110 = vpack.c.b16 %v2734, %v2726
    %v3111 = vpack.c.b16 %v2735, %v2727
    %v3112 = vpack.c.b16 %v2736, %v2728
    %v3113 = vpack.c.b16 %v2737, %v2729
    %v3114 = vpack.c.b16 %v2738, %v2730
    %v3115 = vpack.c.b16 %v2739, %v2731
    %v3116 = vpack.c.b16 %v2748, %v2740
    %v3117 = vpack.c.b16 %v2749, %v2741
    %v3118 = vpack.c.b16 %v2750, %v2742
    %v3119 = vpack.c.b16 %v2751, %v2743
    %v3120 = vpack.c.b16 %v2752, %v2744
    %v3121 = vpack.c.b16 %v2753, %v2745
    %v3122 = vpack.c.b16 %v2754, %v2746
    %v3123 = vpack.c.b16 %v2755, %v2747
    %v3124 = vpack.c.b16 %v2764, %v2756
    %v3125 = vpack.c.b16 %v2765, %v2757
    %v3126 = vpack.c.b16 %v2766, %v2758
    %v3127 = vpack.c.b16 %v2767, %v2759
    %v3128 = vpack.c.b16 %v2768, %v2760
    %v3129 = vpack.c.b16 %v2769, %v2761
    %v3130 = vpack.c.b16 %v2770, %v2762
    %v3131 = vpack.c.b16 %v2771, %v2763
    %v3132 = vpack.c.b16 %v2780, %v2772
    %v3133 = vpack.c.b16 %v2781, %v2773
    %v3134 = vpack.c.b16 %v2782, %v2774
    %v3135 = vpack.c.b16 %v2783, %v2775
    %v3136 = vpack.c.b16 %v2784, %v2776
    %v3137 = vpack.c.b16 %v2785, %v2777
    %v3138 = vpack.c.b16 %v2786, %v2778
    %v3139 = vpack.c.b16 %v2787, %v2779
    %v3140 = vpack.c.b16 %v2796, %v2788
    %v3141 = vpack.c.b16 %v2797, %v2789
    %v3142 = vpack.c.b16 %v2798, %v2790
    %v3143 = vpack.c.b16 %v2799, %v2791
    %v3144 = vpack.c.b16 %v2800, %v2792
    %v3145 = vpack.c.b16 %v2801, %v2793
    %v3146 = vpack.c.b16 %v2802, %v2794
    %v3147 = vpack.c.b16 %v2803, %v2795
    %v3148 = vpack.c.b16 %v2812, %v2804
    %v3149 = vpack.c.b16 %v2813, %v2805
    %v3150 = vpack.c.b16 %v2814, %v2806
    %v3151 = vpack.c.b16 %v2815, %v2807
    %v3152 = vpack.c.b16 %v2816, %v2808
    %v3153 = vpack.c.b16 %v2817, %v2809
    %v3154 = vpack.c.b16 %v2818, %v2810
    %v3155 = vpack.c.b16 %v2819, %v2811
    %v3156 = vpack.c.b16 %v2828, %v2820
    %v3157 = vpack.c.b16 %v2829, %v2821
    %v3158 = vpack.c.b16 %v2830, %v2822
    %v3159 = vpack.c.b16 %v2831, %v2823
    %v3160 = vpack.c.b16 %v2832, %v2824
    %v3161 = vpack.c.b16 %v2833, %v2825
    %v3162 = vpack.c.b16 %v2834, %v2826
    %v3163 = vpack.c.b16 %v2835, %v2827
    %v3164 = vpack.c.b16 %v2844, %v2836
    %v3165 = vpack.c.b16 %v2845, %v2837
    %v3166 = vpack.c.b16 %v2846, %v2838
    %v3167 = vpack.c.b16 %v2847, %v2839
    %v3168 = vpack.c.b16 %v2848, %v2840
    %v3169 = vpack.c.b16 %v2849, %v2841
    %v3170 = vpack.c.b16 %v2850, %v2842
    %v3171 = vpack.c.b16 %v2851, %v2843
    %v3172 = vpack.c.b16 %v2860, %v2852
    %v3173 = vpack.c.b16 %v2861, %v2853
    %v3174 = vpack.c.b16 %v2862, %v2854
    %v3175 = vpack.c.b16 %v2863, %v2855
    %v3176 = vpack.c.b16 %v2864, %v2856
    %v3177 = vpack.c.b16 %v2865, %v2857
    %v3178 = vpack.c.b16 %v2866, %v2858
    %v3179 = vpack.c.b16 %v2867, %v2859
    %v3180 = vpack.c.b16 %v2876, %v2868
    %v3181 = vpack.c.b16 %v2877, %v2869
    %v3182 = vpack.c.b16 %v2878, %v2870
    %v3183 = vpack.c.b16 %v2879, %v2871
    %v3184 = vpack.c.b16 %v2880, %v2872
    %v3185 = vpack.c.b16 %v2881, %v2873
    %v3186 = vpack.c.b16 %v2882, %v2874
    %v3187 = vpack.c.b16 %v2883, %v2875
    %v3188 = vpack.c.b16 %v2892, %v2884
    %v3189 = vpack.c.b16 %v2893, %v2885
    %v3190 = vpack.c.b16 %v2894, %v2886
    %v3191 = vpack.c.b16 %v2895, %v2887
    %v3192 = vpack.c.b16 %v2896, %v2888
    %v3193 = vpack.c.b16 %v2897, %v2889
    %v3194 = vpack.c.b16 %v2898, %v2890
    %v3195 = vpack.c.b16 %v2899, %v2891
    %v3196 = vpack.c.b16 %v2908, %v2900
    %v3197 = vpack.c.b16 %v2909, %v2901
    %v3198 = vpack.c.b16 %v2910, %v2902
    %v3199 = vpack.c.b16 %v2911, %v2903
    %v3200 = vpack.c.b16 %v2912, %v2904
    %v3201 = vpack.c.b16 %v2913, %v2905
    %v3202 = vpack.c.b16 %v2914, %v2906
    %v3203 = vpack.c.b16 %v2915, %v2907
    %v3204 = vpack.c.b16 %v2924, %v2916
    %v3205 = vpack.c.b16 %v2925, %v2917
    %v3206 = vpack.c.b16 %v2926, %v2918
    %v3207 = vpack.c.b16 %v2927, %v2919
    %v3208 = vpack.c.b16 %v2928, %v2920
    %v3209 = vpack.c.b16 %v2929, %v2921
    %v3210 = vpack.c.b16 %v2930, %v2922
    %v3211 = vpack.c.b16 %v2931, %v2923
    %v3212 = vpack.c.b16 %v2940, %v2932
    %v3213 = vpack.c.b16 %v2941, %v2933
    %v3214 = vpack.c.b16 %v2942, %v2934
    %v3215 = vpack.c.b16 %v2943, %v2935
    %v3216 = vpack.c.b16 %v2944, %v2936
    %v3217 = vpack.c.b16 %v2945, %v2937
    %v3218 = vpack.c.b16 %v2946, %v2938
    %v3219 = vpack.c.b16 %v2947, %v2939
    %v3220 = vpack.c.b16 %v2956, %v2948
    %v3221 = vpack.c.b16 %v2957, %v2949
    %v3222 = vpack.c.b16 %v2958, %v2950
    %v3223 = vpack.c.b16 %v2959, %v2951
    %v3224 = vpack.c.b16 %v2960, %v2952
    %v3225 = vpack.c.b16 %v2961, %v2953
    %v3226 = vpack.c.b16 %v2962, %v2954
    %v3227 = vpack.c.b16 %v2963, %v2955
    %v3228 = vpack.c.b16 %v2972, %v2964
    %v3229 = vpack.c.b16 %v2973, %v2965
    %v3230 = vpack.c.b16 %v2974, %v2966
    %v3231 = vpack.c.b16 %v2975, %v2967
    %v3232 = vpack.c.b16 %v2976, %v2968
    %v3233 = vpack.c.b16 %v2977, %v2969
    %v3234 = vpack.c.b16 %v2978, %v2970
    %v3235 = vpack.c.b16 %v2979, %v2971
    %3492 = vmatpush.bf16.msra.mxu0 %v3036
    %3493 = vmatpush.bf16.msra.mxu0 %v3028
    %3494 = vmatpush.bf16.msra.mxu0 %v3020
    %3495 = vmatpush.bf16.msra.mxu0 %v3012
    %3496 = vmatpush.bf16.msra.mxu0 %v3004
    %3497 = vmatpush.bf16.msra.mxu0 %v2996
    %3498 = vmatpush.bf16.msra.mxu0 %v2988
    %3499 = vmatpush.bf16.msra.mxu0 %v2980
    %3500 = vmatmul.bf16.gmra.mxu0 %v2148
    %v3501 = vpop.f32.mrf.mxu0
    %v3502 = vadd.f32 %v2036, %v3501
    %v3503 = vpop.f32.mrf.mxu0
    %v3504 = vadd.f32 %v2036, %v3503
    %3505 = vmatmul.bf16.gmra.mxu0 %v2152
    %v3506 = vpop.f32.mrf.mxu0
    %v3507 = vadd.f32 %v2036, %v3506
    %v3508 = vpop.f32.mrf.mxu0
    %v3509 = vadd.f32 %v2036, %v3508
    %3510 = vmatmul.bf16.gmra.mxu0 %v2156
    %v3511 = vpop.f32.mrf.mxu0
    %v3512 = vadd.f32 %v2036, %v3511
    %v3513 = vpop.f32.mrf.mxu0
    %v3514 = vadd.f32 %v2036, %v3513
    %3515 = vmatmul.bf16.gmra.mxu0 %v2160
    %v3516 = vpop.f32.mrf.mxu0
    %v3517 = vadd.f32 %v2036, %v3516
    %v3518 = vpop.f32.mrf.mxu0
    %v3519 = vadd.f32 %v2036, %v3518
    %3520 = vmatmul.bf16.gmra.mxu0 %v2164
    %v3521 = vpop.f32.mrf.mxu0
    %v3522 = vadd.f32 %v2036, %v3521
    %v3523 = vpop.f32.mrf.mxu0
    %v3524 = vadd.f32 %v2036, %v3523
    %3525 = vmatmul.bf16.gmra.mxu0 %v2168
    %v3526 = vpop.f32.mrf.mxu0
    %v3527 = vadd.f32 %v2036, %v3526
    %v3528 = vpop.f32.mrf.mxu0
    %v3529 = vadd.f32 %v2036, %v3528
    %3530 = vmatmul.bf16.gmra.mxu0 %v2172
    %v3531 = vpop.f32.mrf.mxu0
    %v3532 = vadd.f32 %v2036, %v3531
    %v3533 = vpop.f32.mrf.mxu0
    %v3534 = vadd.f32 %v2036, %v3533
    %3535 = vmatmul.bf16.gmra.mxu0 %v2176
    %v3536 = vpop.f32.mrf.mxu0
    %v3537 = vadd.f32 %v2036, %v3536
    %v3538 = vpop.f32.mrf.mxu0
    %v3539 = vadd.f32 %v2036, %v3538
    %3540 = vdwg.mxu0
    %3541 = vmatpush.bf16.msra.mxu0 %v3100
    %3542 = vmatpush.bf16.msra.mxu0 %v3092
    %3543 = vmatpush.bf16.msra.mxu0 %v3084
    %3544 = vmatpush.bf16.msra.mxu0 %v3076
    %3545 = vmatpush.bf16.msra.mxu0 %v3068
    %3546 = vmatpush.bf16.msra.mxu0 %v3060
    %3547 = vmatpush.bf16.msra.mxu0 %v3052
    %3548 = vmatpush.bf16.msra.mxu0 %v3044
    %3549 = vmatmul.bf16.gmra.mxu0 %v2149
    %v3550 = vpop.f32.mrf.mxu0
    %v3551 = vadd.f32 %v3502, %v3550
    %v3552 = vpop.f32.mrf.mxu0
    %v3553 = vadd.f32 %v3504, %v3552
    %3554 = vmatmul.bf16.gmra.mxu0 %v2153
    %v3555 = vpop.f32.mrf.mxu0
    %v3556 = vadd.f32 %v3507, %v3555
    %v3557 = vpop.f32.mrf.mxu0
    %v3558 = vadd.f32 %v3509, %v3557
    %3559 = vmatmul.bf16.gmra.mxu0 %v2157
    %v3560 = vpop.f32.mrf.mxu0
    %v3561 = vadd.f32 %v3512, %v3560
    %v3562 = vpop.f32.mrf.mxu0
    %v3563 = vadd.f32 %v3514, %v3562
    %3564 = vmatmul.bf16.gmra.mxu0 %v2161
    %v3565 = vpop.f32.mrf.mxu0
    %v3566 = vadd.f32 %v3517, %v3565
    %v3567 = vpop.f32.mrf.mxu0
    %v3568 = vadd.f32 %v3519, %v3567
    %3569 = vmatmul.bf16.gmra.mxu0 %v2165
    %v3570 = vpop.f32.mrf.mxu0
    %v3571 = vadd.f32 %v3522, %v3570
    %v3572 = vpop.f32.mrf.mxu0
    %v3573 = vadd.f32 %v3524, %v3572
    %3574 = vmatmul.bf16.gmra.mxu0 %v2169
    %v3575 = vpop.f32.mrf.mxu0
    %v3576 = vadd.f32 %v3527, %v3575
    %v3577 = vpop.f32.mrf.mxu0
    %v3578 = vadd.f32 %v3529, %v3577
    %3579 = vmatmul.bf16.gmra.mxu0 %v2173
    %v3580 = vpop.f32.mrf.mxu0
    %v3581 = vadd.f32 %v3532, %v3580
    %v3582 = vpop.f32.mrf.mxu0
    %v3583 = vadd.f32 %v3534, %v3582
    %3584 = vmatmul.bf16.gmra.mxu0 %v2177
    %v3585 = vpop.f32.mrf.mxu0
    %v3586 = vadd.f32 %v3537, %v3585
    %v3587 = vpop.f32.mrf.mxu0
    %v3588 = vadd.f32 %v3539, %v3587
    %3589 = vdwg.mxu0
    %3590 = vmatpush.bf16.msra.mxu0 %v3164
    %3591 = vmatpush.bf16.msra.mxu0 %v3156
    %3592 = vmatpush.bf16.msra.mxu0 %v3148
    %3593 = vmatpush.bf16.msra.mxu0 %v3140
    %3594 = vmatpush.bf16.msra.mxu0 %v3132
    %3595 = vmatpush.bf16.msra.mxu0 %v3124
    %3596 = vmatpush.bf16.msra.mxu0 %v3116
    %3597 = vmatpush.bf16.msra.mxu0 %v3108
    %3598 = vmatmul.bf16.gmra.mxu0 %v2150
    %v3599 = vpop.f32.mrf.mxu0
    %v3600 = vadd.f32 %v3551, %v3599
    %v3601 = vpop.f32.mrf.mxu0
    %v3602 = vadd.f32 %v3553, %v3601
    %3603 = vmatmul.bf16.gmra.mxu0 %v2154
    %v3604 = vpop.f32.mrf.mxu0
    %v3605 = vadd.f32 %v3556, %v3604
    %v3606 = vpop.f32.mrf.mxu0
    %v3607 = vadd.f32 %v3558, %v3606
    %3608 = vmatmul.bf16.gmra.mxu0 %v2158
    %v3609 = vpop.f32.mrf.mxu0
    %v3610 = vadd.f32 %v3561, %v3609
    %v3611 = vpop.f32.mrf.mxu0
    %v3612 = vadd.f32 %v3563, %v3611
    %3613 = vmatmul.bf16.gmra.mxu0 %v2162
    %v3614 = vpop.f32.mrf.mxu0
    %v3615 = vadd.f32 %v3566, %v3614
    %v3616 = vpop.f32.mrf.mxu0
    %v3617 = vadd.f32 %v3568, %v3616
    %3618 = vmatmul.bf16.gmra.mxu0 %v2166
    %v3619 = vpop.f32.mrf.mxu0
    %v3620 = vadd.f32 %v3571, %v3619
    %v3621 = vpop.f32.mrf.mxu0
    %v3622 = vadd.f32 %v3573, %v3621
    %3623 = vmatmul.bf16.gmra.mxu0 %v2170
    %v3624 = vpop.f32.mrf.mxu0
    %v3625 = vadd.f32 %v3576, %v3624
    %v3626 = vpop.f32.mrf.mxu0
    %v3627 = vadd.f32 %v3578, %v3626
    %3628 = vmatmul.bf16.gmra.mxu0 %v2174
    %v3629 = vpop.f32.mrf.mxu0
    %v3630 = vadd.f32 %v3581, %v3629
    %v3631 = vpop.f32.mrf.mxu0
    %v3632 = vadd.f32 %v3583, %v3631
    %3633 = vmatmul.bf16.gmra.mxu0 %v2178
    %v3634 = vpop.f32.mrf.mxu0
    %v3635 = vadd.f32 %v3586, %v3634
    %v3636 = vpop.f32.mrf.mxu0
    %v3637 = vadd.f32 %v3588, %v3636
    %3638 = vdwg.mxu0
    %3639 = vmatpush.bf16.msra.mxu0 %v3228
    %3640 = vmatpush.bf16.msra.mxu0 %v3220
    %3641 = vmatpush.bf16.msra.mxu0 %v3212
    %3642 = vmatpush.bf16.msra.mxu0 %v3204
    %3643 = vmatpush.bf16.msra.mxu0 %v3196
    %3644 = vmatpush.bf16.msra.mxu0 %v3188
    %3645 = vmatpush.bf16.msra.mxu0 %v3180
    %3646 = vmatpush.bf16.msra.mxu0 %v3172
    %3647 = vmatmul.bf16.gmra.mxu0 %v2151
    %v3648 = vpop.f32.mrf.mxu0
    %v3649 = vadd.f32 %v3600, %v3648
    %v3650 = vpop.f32.mrf.mxu0
    %v3651 = vadd.f32 %v3602, %v3650
    %3652 = vmatmul.bf16.gmra.mxu0 %v2155
    %v3653 = vpop.f32.mrf.mxu0
    %v3654 = vadd.f32 %v3605, %v3653
    %v3655 = vpop.f32.mrf.mxu0
    %v3656 = vadd.f32 %v3607, %v3655
    %3657 = vmatmul.bf16.gmra.mxu0 %v2159
    %v3658 = vpop.f32.mrf.mxu0
    %v3659 = vadd.f32 %v3610, %v3658
    %v3660 = vpop.f32.mrf.mxu0
    %v3661 = vadd.f32 %v3612, %v3660
    %3662 = vmatmul.bf16.gmra.mxu0 %v2163
    %v3663 = vpop.f32.mrf.mxu0
    %v3664 = vadd.f32 %v3615, %v3663
    %v3665 = vpop.f32.mrf.mxu0
    %v3666 = vadd.f32 %v3617, %v3665
    %3667 = vmatmul.bf16.gmra.mxu0 %v2167
    %v3668 = vpop.f32.mrf.mxu0
    %v3669 = vadd.f32 %v3620, %v3668
    %v3670 = vpop.f32.mrf.mxu0
    %v3671 = vadd.f32 %v3622, %v3670
    %3672 = vmatmul.bf16.gmra.mxu0 %v2171
    %v3673 = vpop.f32.mrf.mxu0
    %v3674 = vadd.f32 %v3625, %v3673
    %v3675 = vpop.f32.mrf.mxu0
    %v3676 = vadd.f32 %v3627, %v3675
    %3677 = vmatmul.bf16.gmra.mxu0 %v2175
    %v3678 = vpop.f32.mrf.mxu0
    %v3679 = vadd.f32 %v3630, %v3678
    %v3680 = vpop.f32.mrf.mxu0
    %v3681 = vadd.f32 %v3632, %v3680
    %3682 = vmatmul.bf16.gmra.mxu0 %v2179
    %v3683 = vpop.f32.mrf.mxu0
    %v3684 = vadd.f32 %v3635, %v3683
    %v3685 = vpop.f32.mrf.mxu0
    %v3686 = vadd.f32 %v3637, %v3685
    %3687 = vdwg.mxu0
    %3688 = vmatpush.bf16.msra.mxu0 %v3037
    %3689 = vmatpush.bf16.msra.mxu0 %v3029
    %3690 = vmatpush.bf16.msra.mxu0 %v3021
    %3691 = vmatpush.bf16.msra.mxu0 %v3013
    %3692 = vmatpush.bf16.msra.mxu0 %v3005
    %3693 = vmatpush.bf16.msra.mxu0 %v2997
    %3694 = vmatpush.bf16.msra.mxu0 %v2989
    %3695 = vmatpush.bf16.msra.mxu0 %v2981
    %3696 = vmatmul.bf16.gmra.mxu0 %v2148
    %v3697 = vpop.f32.mrf.mxu0
    %v3698 = vadd.f32 %v2037, %v3697
    %v3699 = vpop.f32.mrf.mxu0
    %v3700 = vadd.f32 %v2037, %v3699
    %3701 = vmatmul.bf16.gmra.mxu0 %v2152
    %v3702 = vpop.f32.mrf.mxu0
    %v3703 = vadd.f32 %v2037, %v3702
    %v3704 = vpop.f32.mrf.mxu0
    %v3705 = vadd.f32 %v2037, %v3704
    %3706 = vmatmul.bf16.gmra.mxu0 %v2156
    %v3707 = vpop.f32.mrf.mxu0
    %v3708 = vadd.f32 %v2037, %v3707
    %v3709 = vpop.f32.mrf.mxu0
    %v3710 = vadd.f32 %v2037, %v3709
    %3711 = vmatmul.bf16.gmra.mxu0 %v2160
    %v3712 = vpop.f32.mrf.mxu0
    %v3713 = vadd.f32 %v2037, %v3712
    %v3714 = vpop.f32.mrf.mxu0
    %v3715 = vadd.f32 %v2037, %v3714
    %3716 = vmatmul.bf16.gmra.mxu0 %v2164
    %v3717 = vpop.f32.mrf.mxu0
    %v3718 = vadd.f32 %v2037, %v3717
    %v3719 = vpop.f32.mrf.mxu0
    %v3720 = vadd.f32 %v2037, %v3719
    %3721 = vmatmul.bf16.gmra.mxu0 %v2168
    %v3722 = vpop.f32.mrf.mxu0
    %v3723 = vadd.f32 %v2037, %v3722
    %v3724 = vpop.f32.mrf.mxu0
    %v3725 = vadd.f32 %v2037, %v3724
    %3726 = vmatmul.bf16.gmra.mxu0 %v2172
    %v3727 = vpop.f32.mrf.mxu0
    %v3728 = vadd.f32 %v2037, %v3727
    %v3729 = vpop.f32.mrf.mxu0
    %v3730 = vadd.f32 %v2037, %v3729
    %3731 = vmatmul.bf16.gmra.mxu0 %v2176
    %v3732 = vpop.f32.mrf.mxu0
    %v3733 = vadd.f32 %v2037, %v3732
    %v3734 = vpop.f32.mrf.mxu0
    %v3735 = vadd.f32 %v2037, %v3734
    %3736 = vdwg.mxu0
    %3737 = vmatpush.bf16.msra.mxu0 %v3101
    %3738 = vmatpush.bf16.msra.mxu0 %v3093
    %3739 = vmatpush.bf16.msra.mxu0 %v3085
    %3740 = vmatpush.bf16.msra.mxu0 %v3077
    %3741 = vmatpush.bf16.msra.mxu0 %v3069
    %3742 = vmatpush.bf16.msra.mxu0 %v3061
    %3743 = vmatpush.bf16.msra.mxu0 %v3053
    %3744 = vmatpush.bf16.msra.mxu0 %v3045
    %3745 = vmatmul.bf16.gmra.mxu0 %v2149
    %v3746 = vpop.f32.mrf.mxu0
    %v3747 = vadd.f32 %v3698, %v3746
    %v3748 = vpop.f32.mrf.mxu0
    %v3749 = vadd.f32 %v3700, %v3748
    %3750 = vmatmul.bf16.gmra.mxu0 %v2153
    %v3751 = vpop.f32.mrf.mxu0
    %v3752 = vadd.f32 %v3703, %v3751
    %v3753 = vpop.f32.mrf.mxu0
    %v3754 = vadd.f32 %v3705, %v3753
    %3755 = vmatmul.bf16.gmra.mxu0 %v2157
    %v3756 = vpop.f32.mrf.mxu0
    %v3757 = vadd.f32 %v3708, %v3756
    %v3758 = vpop.f32.mrf.mxu0
    %v3759 = vadd.f32 %v3710, %v3758
    %3760 = vmatmul.bf16.gmra.mxu0 %v2161
    %v3761 = vpop.f32.mrf.mxu0
    %v3762 = vadd.f32 %v3713, %v3761
    %v3763 = vpop.f32.mrf.mxu0
    %v3764 = vadd.f32 %v3715, %v3763
    %3765 = vmatmul.bf16.gmra.mxu0 %v2165
    %v3766 = vpop.f32.mrf.mxu0
    %v3767 = vadd.f32 %v3718, %v3766
    %v3768 = vpop.f32.mrf.mxu0
    %v3769 = vadd.f32 %v3720, %v3768
    %3770 = vmatmul.bf16.gmra.mxu0 %v2169
    %v3771 = vpop.f32.mrf.mxu0
    %v3772 = vadd.f32 %v3723, %v3771
    %v3773 = vpop.f32.mrf.mxu0
    %v3774 = vadd.f32 %v3725, %v3773
    %3775 = vmatmul.bf16.gmra.mxu0 %v2173
    %v3776 = vpop.f32.mrf.mxu0
    %v3777 = vadd.f32 %v3728, %v3776
    %v3778 = vpop.f32.mrf.mxu0
    %v3779 = vadd.f32 %v3730, %v3778
    %3780 = vmatmul.bf16.gmra.mxu0 %v2177
    %v3781 = vpop.f32.mrf.mxu0
    %v3782 = vadd.f32 %v3733, %v3781
    %v3783 = vpop.f32.mrf.mxu0
    %v3784 = vadd.f32 %v3735, %v3783
    %3785 = vdwg.mxu0
    %3786 = vmatpush.bf16.msra.mxu0 %v3165
    %3787 = vmatpush.bf16.msra.mxu0 %v3157
    %3788 = vmatpush.bf16.msra.mxu0 %v3149
    %3789 = vmatpush.bf16.msra.mxu0 %v3141
    %3790 = vmatpush.bf16.msra.mxu0 %v3133
    %3791 = vmatpush.bf16.msra.mxu0 %v3125
    %3792 = vmatpush.bf16.msra.mxu0 %v3117
    %3793 = vmatpush.bf16.msra.mxu0 %v3109
    %3794 = vmatmul.bf16.gmra.mxu0 %v2150
    %v3795 = vpop.f32.mrf.mxu0
    %v3796 = vadd.f32 %v3747, %v3795
    %v3797 = vpop.f32.mrf.mxu0
    %v3798 = vadd.f32 %v3749, %v3797
    %3799 = vmatmul.bf16.gmra.mxu0 %v2154
    %v3800 = vpop.f32.mrf.mxu0
    %v3801 = vadd.f32 %v3752, %v3800
    %v3802 = vpop.f32.mrf.mxu0
    %v3803 = vadd.f32 %v3754, %v3802
    %3804 = vmatmul.bf16.gmra.mxu0 %v2158
    %v3805 = vpop.f32.mrf.mxu0
    %v3806 = vadd.f32 %v3757, %v3805
    %v3807 = vpop.f32.mrf.mxu0
    %v3808 = vadd.f32 %v3759, %v3807
    %3809 = vmatmul.bf16.gmra.mxu0 %v2162
    %v3810 = vpop.f32.mrf.mxu0
    %v3811 = vadd.f32 %v3762, %v3810
    %v3812 = vpop.f32.mrf.mxu0
    %v3813 = vadd.f32 %v3764, %v3812
    %3814 = vmatmul.bf16.gmra.mxu0 %v2166
    %v3815 = vpop.f32.mrf.mxu0
    %v3816 = vadd.f32 %v3767, %v3815
    %v3817 = vpop.f32.mrf.mxu0
    %v3818 = vadd.f32 %v3769, %v3817
    %3819 = vmatmul.bf16.gmra.mxu0 %v2170
    %v3820 = vpop.f32.mrf.mxu0
    %v3821 = vadd.f32 %v3772, %v3820
    %v3822 = vpop.f32.mrf.mxu0
    %v3823 = vadd.f32 %v3774, %v3822
    %3824 = vmatmul.bf16.gmra.mxu0 %v2174
    %v3825 = vpop.f32.mrf.mxu0
    %v3826 = vadd.f32 %v3777, %v3825
    %v3827 = vpop.f32.mrf.mxu0
    %v3828 = vadd.f32 %v3779, %v3827
    %3829 = vmatmul.bf16.gmra.mxu0 %v2178
    %v3830 = vpop.f32.mrf.mxu0
    %v3831 = vadd.f32 %v3782, %v3830
    %v3832 = vpop.f32.mrf.mxu0
    %v3833 = vadd.f32 %v3784, %v3832
    %3834 = vdwg.mxu0
    %3835 = vmatpush.bf16.msra.mxu0 %v3229
    %3836 = vmatpush.bf16.msra.mxu0 %v3221
    %3837 = vmatpush.bf16.msra.mxu0 %v3213
    %3838 = vmatpush.bf16.msra.mxu0 %v3205
    %3839 = vmatpush.bf16.msra.mxu0 %v3197
    %3840 = vmatpush.bf16.msra.mxu0 %v3189
    %3841 = vmatpush.bf16.msra.mxu0 %v3181
    %3842 = vmatpush.bf16.msra.mxu0 %v3173
    %3843 = vmatmul.bf16.gmra.mxu0 %v2151
    %v3844 = vpop.f32.mrf.mxu0
    %v3845 = vadd.f32 %v3796, %v3844
    %v3846 = vpop.f32.mrf.mxu0
    %v3847 = vadd.f32 %v3798, %v3846
    %3848 = vmatmul.bf16.gmra.mxu0 %v2155
    %v3849 = vpop.f32.mrf.mxu0
    %v3850 = vadd.f32 %v3801, %v3849
    %v3851 = vpop.f32.mrf.mxu0
    %v3852 = vadd.f32 %v3803, %v3851
    %3853 = vmatmul.bf16.gmra.mxu0 %v2159
    %v3854 = vpop.f32.mrf.mxu0
    %v3855 = vadd.f32 %v3806, %v3854
    %v3856 = vpop.f32.mrf.mxu0
    %v3857 = vadd.f32 %v3808, %v3856
    %3858 = vmatmul.bf16.gmra.mxu0 %v2163
    %v3859 = vpop.f32.mrf.mxu0
    %v3860 = vadd.f32 %v3811, %v3859
    %v3861 = vpop.f32.mrf.mxu0
    %v3862 = vadd.f32 %v3813, %v3861
    %3863 = vmatmul.bf16.gmra.mxu0 %v2167
    %v3864 = vpop.f32.mrf.mxu0
    %v3865 = vadd.f32 %v3816, %v3864
    %v3866 = vpop.f32.mrf.mxu0
    %v3867 = vadd.f32 %v3818, %v3866
    %3868 = vmatmul.bf16.gmra.mxu0 %v2171
    %v3869 = vpop.f32.mrf.mxu0
    %v3870 = vadd.f32 %v3821, %v3869
    %v3871 = vpop.f32.mrf.mxu0
    %v3872 = vadd.f32 %v3823, %v3871
    %3873 = vmatmul.bf16.gmra.mxu0 %v2175
    %v3874 = vpop.f32.mrf.mxu0
    %v3875 = vadd.f32 %v3826, %v3874
    %v3876 = vpop.f32.mrf.mxu0
    %v3877 = vadd.f32 %v3828, %v3876
    %3878 = vmatmul.bf16.gmra.mxu0 %v2179
    %v3879 = vpop.f32.mrf.mxu0
    %v3880 = vadd.f32 %v3831, %v3879
    %v3881 = vpop.f32.mrf.mxu0
    %v3882 = vadd.f32 %v3833, %v3881
    %3883 = vdwg.mxu0
    %3884 = vmatpush.bf16.msra.mxu0 %v3038
    %3885 = vmatpush.bf16.msra.mxu0 %v3030
    %3886 = vmatpush.bf16.msra.mxu0 %v3022
    %3887 = vmatpush.bf16.msra.mxu0 %v3014
    %3888 = vmatpush.bf16.msra.mxu0 %v3006
    %3889 = vmatpush.bf16.msra.mxu0 %v2998
    %3890 = vmatpush.bf16.msra.mxu0 %v2990
    %3891 = vmatpush.bf16.msra.mxu0 %v2982
    %3892 = vmatmul.bf16.gmra.mxu0 %v2148
    %v3893 = vpop.f32.mrf.mxu0
    %v3894 = vadd.f32 %v2038, %v3893
    %v3895 = vpop.f32.mrf.mxu0
    %v3896 = vadd.f32 %v2038, %v3895
    %3897 = vmatmul.bf16.gmra.mxu0 %v2152
    %v3898 = vpop.f32.mrf.mxu0
    %v3899 = vadd.f32 %v2038, %v3898
    %v3900 = vpop.f32.mrf.mxu0
    %v3901 = vadd.f32 %v2038, %v3900
    %3902 = vmatmul.bf16.gmra.mxu0 %v2156
    %v3903 = vpop.f32.mrf.mxu0
    %v3904 = vadd.f32 %v2038, %v3903
    %v3905 = vpop.f32.mrf.mxu0
    %v3906 = vadd.f32 %v2038, %v3905
    %3907 = vmatmul.bf16.gmra.mxu0 %v2160
    %v3908 = vpop.f32.mrf.mxu0
    %v3909 = vadd.f32 %v2038, %v3908
    %v3910 = vpop.f32.mrf.mxu0
    %v3911 = vadd.f32 %v2038, %v3910
    %3912 = vmatmul.bf16.gmra.mxu0 %v2164
    %v3913 = vpop.f32.mrf.mxu0
    %v3914 = vadd.f32 %v2038, %v3913
    %v3915 = vpop.f32.mrf.mxu0
    %v3916 = vadd.f32 %v2038, %v3915
    %3917 = vmatmul.bf16.gmra.mxu0 %v2168
    %v3918 = vpop.f32.mrf.mxu0
    %v3919 = vadd.f32 %v2038, %v3918
    %v3920 = vpop.f32.mrf.mxu0
    %v3921 = vadd.f32 %v2038, %v3920
    %3922 = vmatmul.bf16.gmra.mxu0 %v2172
    %v3923 = vpop.f32.mrf.mxu0
    %v3924 = vadd.f32 %v2038, %v3923
    %v3925 = vpop.f32.mrf.mxu0
    %v3926 = vadd.f32 %v2038, %v3925
    %3927 = vmatmul.bf16.gmra.mxu0 %v2176
    %v3928 = vpop.f32.mrf.mxu0
    %v3929 = vadd.f32 %v2038, %v3928
    %v3930 = vpop.f32.mrf.mxu0
    %v3931 = vadd.f32 %v2038, %v3930
    %3932 = vdwg.mxu0
    %3933 = vmatpush.bf16.msra.mxu0 %v3102
    %3934 = vmatpush.bf16.msra.mxu0 %v3094
    %3935 = vmatpush.bf16.msra.mxu0 %v3086
    %3936 = vmatpush.bf16.msra.mxu0 %v3078
    %3937 = vmatpush.bf16.msra.mxu0 %v3070
    %3938 = vmatpush.bf16.msra.mxu0 %v3062
    %3939 = vmatpush.bf16.msra.mxu0 %v3054
    %3940 = vmatpush.bf16.msra.mxu0 %v3046
    %3941 = vmatmul.bf16.gmra.mxu0 %v2149
    %v3942 = vpop.f32.mrf.mxu0
    %v3943 = vadd.f32 %v3894, %v3942
    %v3944 = vpop.f32.mrf.mxu0
    %v3945 = vadd.f32 %v3896, %v3944
    %3946 = vmatmul.bf16.gmra.mxu0 %v2153
    %v3947 = vpop.f32.mrf.mxu0
    %v3948 = vadd.f32 %v3899, %v3947
    %v3949 = vpop.f32.mrf.mxu0
    %v3950 = vadd.f32 %v3901, %v3949
    %3951 = vmatmul.bf16.gmra.mxu0 %v2157
    %v3952 = vpop.f32.mrf.mxu0
    %v3953 = vadd.f32 %v3904, %v3952
    %v3954 = vpop.f32.mrf.mxu0
    %v3955 = vadd.f32 %v3906, %v3954
    %3956 = vmatmul.bf16.gmra.mxu0 %v2161
    %v3957 = vpop.f32.mrf.mxu0
    %v3958 = vadd.f32 %v3909, %v3957
    %v3959 = vpop.f32.mrf.mxu0
    %v3960 = vadd.f32 %v3911, %v3959
    %3961 = vmatmul.bf16.gmra.mxu0 %v2165
    %v3962 = vpop.f32.mrf.mxu0
    %v3963 = vadd.f32 %v3914, %v3962
    %v3964 = vpop.f32.mrf.mxu0
    %v3965 = vadd.f32 %v3916, %v3964
    %3966 = vmatmul.bf16.gmra.mxu0 %v2169
    %v3967 = vpop.f32.mrf.mxu0
    %v3968 = vadd.f32 %v3919, %v3967
    %v3969 = vpop.f32.mrf.mxu0
    %v3970 = vadd.f32 %v3921, %v3969
    %3971 = vmatmul.bf16.gmra.mxu0 %v2173
    %v3972 = vpop.f32.mrf.mxu0
    %v3973 = vadd.f32 %v3924, %v3972
    %v3974 = vpop.f32.mrf.mxu0
    %v3975 = vadd.f32 %v3926, %v3974
    %3976 = vmatmul.bf16.gmra.mxu0 %v2177
    %v3977 = vpop.f32.mrf.mxu0
    %v3978 = vadd.f32 %v3929, %v3977
    %v3979 = vpop.f32.mrf.mxu0
    %v3980 = vadd.f32 %v3931, %v3979
    %3981 = vdwg.mxu0
    %3982 = vmatpush.bf16.msra.mxu0 %v3166
    %3983 = vmatpush.bf16.msra.mxu0 %v3158
    %3984 = vmatpush.bf16.msra.mxu0 %v3150
    %3985 = vmatpush.bf16.msra.mxu0 %v3142
    %3986 = vmatpush.bf16.msra.mxu0 %v3134
    %3987 = vmatpush.bf16.msra.mxu0 %v3126
    %3988 = vmatpush.bf16.msra.mxu0 %v3118
    %3989 = vmatpush.bf16.msra.mxu0 %v3110
    %3990 = vmatmul.bf16.gmra.mxu0 %v2150
    %v3991 = vpop.f32.mrf.mxu0
    %v3992 = vadd.f32 %v3943, %v3991
    %v3993 = vpop.f32.mrf.mxu0
    %v3994 = vadd.f32 %v3945, %v3993
    %3995 = vmatmul.bf16.gmra.mxu0 %v2154
    %v3996 = vpop.f32.mrf.mxu0
    %v3997 = vadd.f32 %v3948, %v3996
    %v3998 = vpop.f32.mrf.mxu0
    %v3999 = vadd.f32 %v3950, %v3998
    %4000 = vmatmul.bf16.gmra.mxu0 %v2158
    %v4001 = vpop.f32.mrf.mxu0
    %v4002 = vadd.f32 %v3953, %v4001
    %v4003 = vpop.f32.mrf.mxu0
    %v4004 = vadd.f32 %v3955, %v4003
    %4005 = vmatmul.bf16.gmra.mxu0 %v2162
    %v4006 = vpop.f32.mrf.mxu0
    %v4007 = vadd.f32 %v3958, %v4006
    %v4008 = vpop.f32.mrf.mxu0
    %v4009 = vadd.f32 %v3960, %v4008
    %4010 = vmatmul.bf16.gmra.mxu0 %v2166
    %v4011 = vpop.f32.mrf.mxu0
    %v4012 = vadd.f32 %v3963, %v4011
    %v4013 = vpop.f32.mrf.mxu0
    %v4014 = vadd.f32 %v3965, %v4013
    %4015 = vmatmul.bf16.gmra.mxu0 %v2170
    %v4016 = vpop.f32.mrf.mxu0
    %v4017 = vadd.f32 %v3968, %v4016
    %v4018 = vpop.f32.mrf.mxu0
    %v4019 = vadd.f32 %v3970, %v4018
    %4020 = vmatmul.bf16.gmra.mxu0 %v2174
    %v4021 = vpop.f32.mrf.mxu0
    %v4022 = vadd.f32 %v3973, %v4021
    %v4023 = vpop.f32.mrf.mxu0
    %v4024 = vadd.f32 %v3975, %v4023
    %4025 = vmatmul.bf16.gmra.mxu0 %v2178
    %v4026 = vpop.f32.mrf.mxu0
    %v4027 = vadd.f32 %v3978, %v4026
    %v4028 = vpop.f32.mrf.mxu0
    %v4029 = vadd.f32 %v3980, %v4028
    %4030 = vdwg.mxu0
    %4031 = vmatpush.bf16.msra.mxu0 %v3230
    %4032 = vmatpush.bf16.msra.mxu0 %v3222
    %4033 = vmatpush.bf16.msra.mxu0 %v3214
    %4034 = vmatpush.bf16.msra.mxu0 %v3206
    %4035 = vmatpush.bf16.msra.mxu0 %v3198
    %4036 = vmatpush.bf16.msra.mxu0 %v3190
    %4037 = vmatpush.bf16.msra.mxu0 %v3182
    %4038 = vmatpush.bf16.msra.mxu0 %v3174
    %4039 = vmatmul.bf16.gmra.mxu0 %v2151
    %v4040 = vpop.f32.mrf.mxu0
    %v4041 = vadd.f32 %v3992, %v4040
    %v4042 = vpop.f32.mrf.mxu0
    %v4043 = vadd.f32 %v3994, %v4042
    %4044 = vmatmul.bf16.gmra.mxu0 %v2155
    %v4045 = vpop.f32.mrf.mxu0
    %v4046 = vadd.f32 %v3997, %v4045
    %v4047 = vpop.f32.mrf.mxu0
    %v4048 = vadd.f32 %v3999, %v4047
    %4049 = vmatmul.bf16.gmra.mxu0 %v2159
    %v4050 = vpop.f32.mrf.mxu0
    %v4051 = vadd.f32 %v4002, %v4050
    %v4052 = vpop.f32.mrf.mxu0
    %v4053 = vadd.f32 %v4004, %v4052
    %4054 = vmatmul.bf16.gmra.mxu0 %v2163
    %v4055 = vpop.f32.mrf.mxu0
    %v4056 = vadd.f32 %v4007, %v4055
    %v4057 = vpop.f32.mrf.mxu0
    %v4058 = vadd.f32 %v4009, %v4057
    %4059 = vmatmul.bf16.gmra.mxu0 %v2167
    %v4060 = vpop.f32.mrf.mxu0
    %v4061 = vadd.f32 %v4012, %v4060
    %v4062 = vpop.f32.mrf.mxu0
    %v4063 = vadd.f32 %v4014, %v4062
    %4064 = vmatmul.bf16.gmra.mxu0 %v2171
    %v4065 = vpop.f32.mrf.mxu0
    %v4066 = vadd.f32 %v4017, %v4065
    %v4067 = vpop.f32.mrf.mxu0
    %v4068 = vadd.f32 %v4019, %v4067
    %4069 = vmatmul.bf16.gmra.mxu0 %v2175
    %v4070 = vpop.f32.mrf.mxu0
    %v4071 = vadd.f32 %v4022, %v4070
    %v4072 = vpop.f32.mrf.mxu0
    %v4073 = vadd.f32 %v4024, %v4072
    %4074 = vmatmul.bf16.gmra.mxu0 %v2179
    %v4075 = vpop.f32.mrf.mxu0
    %v4076 = vadd.f32 %v4027, %v4075
    %v4077 = vpop.f32.mrf.mxu0
    %v4078 = vadd.f32 %v4029, %v4077
    %4079 = vdwg.mxu0
    %4080 = vmatpush.bf16.msra.mxu0 %v3039
    %4081 = vmatpush.bf16.msra.mxu0 %v3031
    %4082 = vmatpush.bf16.msra.mxu0 %v3023
    %4083 = vmatpush.bf16.msra.mxu0 %v3015
    %4084 = vmatpush.bf16.msra.mxu0 %v3007
    %4085 = vmatpush.bf16.msra.mxu0 %v2999
    %4086 = vmatpush.bf16.msra.mxu0 %v2991
    %4087 = vmatpush.bf16.msra.mxu0 %v2983
    %4088 = vmatmul.bf16.gmra.mxu0 %v2148
    %v4089 = vpop.f32.mrf.mxu0
    %v4090 = vadd.f32 %v2039, %v4089
    %v4091 = vpop.f32.mrf.mxu0
    %v4092 = vadd.f32 %v2039, %v4091
    %4093 = vmatmul.bf16.gmra.mxu0 %v2152
    %v4094 = vpop.f32.mrf.mxu0
    %v4095 = vadd.f32 %v2039, %v4094
    %v4096 = vpop.f32.mrf.mxu0
    %v4097 = vadd.f32 %v2039, %v4096
    %4098 = vmatmul.bf16.gmra.mxu0 %v2156
    %v4099 = vpop.f32.mrf.mxu0
    %v4100 = vadd.f32 %v2039, %v4099
    %v4101 = vpop.f32.mrf.mxu0
    %v4102 = vadd.f32 %v2039, %v4101
    %4103 = vmatmul.bf16.gmra.mxu0 %v2160
    %v4104 = vpop.f32.mrf.mxu0
    %v4105 = vadd.f32 %v2039, %v4104
    %v4106 = vpop.f32.mrf.mxu0
    %v4107 = vadd.f32 %v2039, %v4106
    %4108 = vmatmul.bf16.gmra.mxu0 %v2164
    %v4109 = vpop.f32.mrf.mxu0
    %v4110 = vadd.f32 %v2039, %v4109
    %v4111 = vpop.f32.mrf.mxu0
    %v4112 = vadd.f32 %v2039, %v4111
    %4113 = vmatmul.bf16.gmra.mxu0 %v2168
    %v4114 = vpop.f32.mrf.mxu0
    %v4115 = vadd.f32 %v2039, %v4114
    %v4116 = vpop.f32.mrf.mxu0
    %v4117 = vadd.f32 %v2039, %v4116
    %4118 = vmatmul.bf16.gmra.mxu0 %v2172
    %v4119 = vpop.f32.mrf.mxu0
    %v4120 = vadd.f32 %v2039, %v4119
    %v4121 = vpop.f32.mrf.mxu0
    %v4122 = vadd.f32 %v2039, %v4121
    %4123 = vmatmul.bf16.gmra.mxu0 %v2176
    %v4124 = vpop.f32.mrf.mxu0
    %v4125 = vadd.f32 %v2039, %v4124
    %v4126 = vpop.f32.mrf.mxu0
    %v4127 = vadd.f32 %v2039, %v4126
    %4128 = vdwg.mxu0
    %4129 = vmatpush.bf16.msra.mxu0 %v3103
    %4130 = vmatpush.bf16.msra.mxu0 %v3095
    %4131 = vmatpush.bf16.msra.mxu0 %v3087
    %4132 = vmatpush.bf16.msra.mxu0 %v3079
    %4133 = vmatpush.bf16.msra.mxu0 %v3071
    %4134 = vmatpush.bf16.msra.mxu0 %v3063
    %4135 = vmatpush.bf16.msra.mxu0 %v3055
    %4136 = vmatpush.bf16.msra.mxu0 %v3047
    %4137 = vmatmul.bf16.gmra.mxu0 %v2149
    %v4138 = vpop.f32.mrf.mxu0
    %v4139 = vadd.f32 %v4090, %v4138
    %v4140 = vpop.f32.mrf.mxu0
    %v4141 = vadd.f32 %v4092, %v4140
    %4142 = vmatmul.bf16.gmra.mxu0 %v2153
    %v4143 = vpop.f32.mrf.mxu0
    %v4144 = vadd.f32 %v4095, %v4143
    %v4145 = vpop.f32.mrf.mxu0
    %v4146 = vadd.f32 %v4097, %v4145
    %4147 = vmatmul.bf16.gmra.mxu0 %v2157
    %v4148 = vpop.f32.mrf.mxu0
    %v4149 = vadd.f32 %v4100, %v4148
    %v4150 = vpop.f32.mrf.mxu0
    %v4151 = vadd.f32 %v4102, %v4150
    %4152 = vmatmul.bf16.gmra.mxu0 %v2161
    %v4153 = vpop.f32.mrf.mxu0
    %v4154 = vadd.f32 %v4105, %v4153
    %v4155 = vpop.f32.mrf.mxu0
    %v4156 = vadd.f32 %v4107, %v4155
    %4157 = vmatmul.bf16.gmra.mxu0 %v2165
    %v4158 = vpop.f32.mrf.mxu0
    %v4159 = vadd.f32 %v4110, %v4158
    %v4160 = vpop.f32.mrf.mxu0
    %v4161 = vadd.f32 %v4112, %v4160
    %4162 = vmatmul.bf16.gmra.mxu0 %v2169
    %v4163 = vpop.f32.mrf.mxu0
    %v4164 = vadd.f32 %v4115, %v4163
    %v4165 = vpop.f32.mrf.mxu0
    %v4166 = vadd.f32 %v4117, %v4165
    %4167 = vmatmul.bf16.gmra.mxu0 %v2173
    %v4168 = vpop.f32.mrf.mxu0
    %v4169 = vadd.f32 %v4120, %v4168
    %v4170 = vpop.f32.mrf.mxu0
    %v4171 = vadd.f32 %v4122, %v4170
    %4172 = vmatmul.bf16.gmra.mxu0 %v2177
    %v4173 = vpop.f32.mrf.mxu0
    %v4174 = vadd.f32 %v4125, %v4173
    %v4175 = vpop.f32.mrf.mxu0
    %v4176 = vadd.f32 %v4127, %v4175
    %4177 = vdwg.mxu0
    %4178 = vmatpush.bf16.msra.mxu0 %v3167
    %4179 = vmatpush.bf16.msra.mxu0 %v3159
    %4180 = vmatpush.bf16.msra.mxu0 %v3151
    %4181 = vmatpush.bf16.msra.mxu0 %v3143
    %4182 = vmatpush.bf16.msra.mxu0 %v3135
    %4183 = vmatpush.bf16.msra.mxu0 %v3127
    %4184 = vmatpush.bf16.msra.mxu0 %v3119
    %4185 = vmatpush.bf16.msra.mxu0 %v3111
    %4186 = vmatmul.bf16.gmra.mxu0 %v2150
    %v4187 = vpop.f32.mrf.mxu0
    %v4188 = vadd.f32 %v4139, %v4187
    %v4189 = vpop.f32.mrf.mxu0
    %v4190 = vadd.f32 %v4141, %v4189
    %4191 = vmatmul.bf16.gmra.mxu0 %v2154
    %v4192 = vpop.f32.mrf.mxu0
    %v4193 = vadd.f32 %v4144, %v4192
    %v4194 = vpop.f32.mrf.mxu0
    %v4195 = vadd.f32 %v4146, %v4194
    %4196 = vmatmul.bf16.gmra.mxu0 %v2158
    %v4197 = vpop.f32.mrf.mxu0
    %v4198 = vadd.f32 %v4149, %v4197
    %v4199 = vpop.f32.mrf.mxu0
    %v4200 = vadd.f32 %v4151, %v4199
    %4201 = vmatmul.bf16.gmra.mxu0 %v2162
    %v4202 = vpop.f32.mrf.mxu0
    %v4203 = vadd.f32 %v4154, %v4202
    %v4204 = vpop.f32.mrf.mxu0
    %v4205 = vadd.f32 %v4156, %v4204
    %4206 = vmatmul.bf16.gmra.mxu0 %v2166
    %v4207 = vpop.f32.mrf.mxu0
    %v4208 = vadd.f32 %v4159, %v4207
    %v4209 = vpop.f32.mrf.mxu0
    %v4210 = vadd.f32 %v4161, %v4209
    %4211 = vmatmul.bf16.gmra.mxu0 %v2170
    %v4212 = vpop.f32.mrf.mxu0
    %v4213 = vadd.f32 %v4164, %v4212
    %v4214 = vpop.f32.mrf.mxu0
    %v4215 = vadd.f32 %v4166, %v4214
    %4216 = vmatmul.bf16.gmra.mxu0 %v2174
    %v4217 = vpop.f32.mrf.mxu0
    %v4218 = vadd.f32 %v4169, %v4217
    %v4219 = vpop.f32.mrf.mxu0
    %v4220 = vadd.f32 %v4171, %v4219
    %4221 = vmatmul.bf16.gmra.mxu0 %v2178
    %v4222 = vpop.f32.mrf.mxu0
    %v4223 = vadd.f32 %v4174, %v4222
    %v4224 = vpop.f32.mrf.mxu0
    %v4225 = vadd.f32 %v4176, %v4224
    %4226 = vdwg.mxu0
    %4227 = vmatpush.bf16.msra.mxu0 %v3231
    %4228 = vmatpush.bf16.msra.mxu0 %v3223
    %4229 = vmatpush.bf16.msra.mxu0 %v3215
    %4230 = vmatpush.bf16.msra.mxu0 %v3207
    %4231 = vmatpush.bf16.msra.mxu0 %v3199
    %4232 = vmatpush.bf16.msra.mxu0 %v3191
    %4233 = vmatpush.bf16.msra.mxu0 %v3183
    %4234 = vmatpush.bf16.msra.mxu0 %v3175
    %4235 = vmatmul.bf16.gmra.mxu0 %v2151
    %v4236 = vpop.f32.mrf.mxu0
    %v4237 = vadd.f32 %v4188, %v4236
    %v4238 = vpop.f32.mrf.mxu0
    %v4239 = vadd.f32 %v4190, %v4238
    %4240 = vmatmul.bf16.gmra.mxu0 %v2155
    %v4241 = vpop.f32.mrf.mxu0
    %v4242 = vadd.f32 %v4193, %v4241
    %v4243 = vpop.f32.mrf.mxu0
    %v4244 = vadd.f32 %v4195, %v4243
    %4245 = vmatmul.bf16.gmra.mxu0 %v2159
    %v4246 = vpop.f32.mrf.mxu0
    %v4247 = vadd.f32 %v4198, %v4246
    %v4248 = vpop.f32.mrf.mxu0
    %v4249 = vadd.f32 %v4200, %v4248
    %4250 = vmatmul.bf16.gmra.mxu0 %v2163
    %v4251 = vpop.f32.mrf.mxu0
    %v4252 = vadd.f32 %v4203, %v4251
    %v4253 = vpop.f32.mrf.mxu0
    %v4254 = vadd.f32 %v4205, %v4253
    %4255 = vmatmul.bf16.gmra.mxu0 %v2167
    %v4256 = vpop.f32.mrf.mxu0
    %v4257 = vadd.f32 %v4208, %v4256
    %v4258 = vpop.f32.mrf.mxu0
    %v4259 = vadd.f32 %v4210, %v4258
    %4260 = vmatmul.bf16.gmra.mxu0 %v2171
    %v4261 = vpop.f32.mrf.mxu0
    %v4262 = vadd.f32 %v4213, %v4261
    %v4263 = vpop.f32.mrf.mxu0
    %v4264 = vadd.f32 %v4215, %v4263
    %4265 = vmatmul.bf16.gmra.mxu0 %v2175
    %v4266 = vpop.f32.mrf.mxu0
    %v4267 = vadd.f32 %v4218, %v4266
    %v4268 = vpop.f32.mrf.mxu0
    %v4269 = vadd.f32 %v4220, %v4268
    %4270 = vmatmul.bf16.gmra.mxu0 %v2179
    %v4271 = vpop.f32.mrf.mxu0
    %v4272 = vadd.f32 %v4223, %v4271
    %v4273 = vpop.f32.mrf.mxu0
    %v4274 = vadd.f32 %v4225, %v4273
    %4275 = vdwg.mxu0
    %4276 = vmatpush.bf16.msra.mxu0 %v3040
    %4277 = vmatpush.bf16.msra.mxu0 %v3032
    %4278 = vmatpush.bf16.msra.mxu0 %v3024
    %4279 = vmatpush.bf16.msra.mxu0 %v3016
    %4280 = vmatpush.bf16.msra.mxu0 %v3008
    %4281 = vmatpush.bf16.msra.mxu0 %v3000
    %4282 = vmatpush.bf16.msra.mxu0 %v2992
    %4283 = vmatpush.bf16.msra.mxu0 %v2984
    %4284 = vmatmul.bf16.gmra.mxu0 %v2148
    %v4285 = vpop.f32.mrf.mxu0
    %v4286 = vadd.f32 %v2040, %v4285
    %v4287 = vpop.f32.mrf.mxu0
    %v4288 = vadd.f32 %v2040, %v4287
    %4289 = vmatmul.bf16.gmra.mxu0 %v2152
    %v4290 = vpop.f32.mrf.mxu0
    %v4291 = vadd.f32 %v2040, %v4290
    %v4292 = vpop.f32.mrf.mxu0
    %v4293 = vadd.f32 %v2040, %v4292
    %4294 = vmatmul.bf16.gmra.mxu0 %v2156
    %v4295 = vpop.f32.mrf.mxu0
    %v4296 = vadd.f32 %v2040, %v4295
    %v4297 = vpop.f32.mrf.mxu0
    %v4298 = vadd.f32 %v2040, %v4297
    %4299 = vmatmul.bf16.gmra.mxu0 %v2160
    %v4300 = vpop.f32.mrf.mxu0
    %v4301 = vadd.f32 %v2040, %v4300
    %v4302 = vpop.f32.mrf.mxu0
    %v4303 = vadd.f32 %v2040, %v4302
    %4304 = vmatmul.bf16.gmra.mxu0 %v2164
    %v4305 = vpop.f32.mrf.mxu0
    %v4306 = vadd.f32 %v2040, %v4305
    %v4307 = vpop.f32.mrf.mxu0
    %v4308 = vadd.f32 %v2040, %v4307
    %4309 = vmatmul.bf16.gmra.mxu0 %v2168
    %v4310 = vpop.f32.mrf.mxu0
    %v4311 = vadd.f32 %v2040, %v4310
    %v4312 = vpop.f32.mrf.mxu0
    %v4313 = vadd.f32 %v2040, %v4312
    %4314 = vmatmul.bf16.gmra.mxu0 %v2172
    %v4315 = vpop.f32.mrf.mxu0
    %v4316 = vadd.f32 %v2040, %v4315
    %v4317 = vpop.f32.mrf.mxu0
    %v4318 = vadd.f32 %v2040, %v4317
    %4319 = vmatmul.bf16.gmra.mxu0 %v2176
    %v4320 = vpop.f32.mrf.mxu0
    %v4321 = vadd.f32 %v2040, %v4320
    %v4322 = vpop.f32.mrf.mxu0
    %v4323 = vadd.f32 %v2040, %v4322
    %4324 = vdwg.mxu0
    %4325 = vmatpush.bf16.msra.mxu0 %v3104
    %4326 = vmatpush.bf16.msra.mxu0 %v3096
    %4327 = vmatpush.bf16.msra.mxu0 %v3088
    %4328 = vmatpush.bf16.msra.mxu0 %v3080
    %4329 = vmatpush.bf16.msra.mxu0 %v3072
    %4330 = vmatpush.bf16.msra.mxu0 %v3064
    %4331 = vmatpush.bf16.msra.mxu0 %v3056
    %4332 = vmatpush.bf16.msra.mxu0 %v3048
    %4333 = vmatmul.bf16.gmra.mxu0 %v2149
    %v4334 = vpop.f32.mrf.mxu0
    %v4335 = vadd.f32 %v4286, %v4334
    %v4336 = vpop.f32.mrf.mxu0
    %v4337 = vadd.f32 %v4288, %v4336
    %4338 = vmatmul.bf16.gmra.mxu0 %v2153
    %v4339 = vpop.f32.mrf.mxu0
    %v4340 = vadd.f32 %v4291, %v4339
    %v4341 = vpop.f32.mrf.mxu0
    %v4342 = vadd.f32 %v4293, %v4341
    %4343 = vmatmul.bf16.gmra.mxu0 %v2157
    %v4344 = vpop.f32.mrf.mxu0
    %v4345 = vadd.f32 %v4296, %v4344
    %v4346 = vpop.f32.mrf.mxu0
    %v4347 = vadd.f32 %v4298, %v4346
    %4348 = vmatmul.bf16.gmra.mxu0 %v2161
    %v4349 = vpop.f32.mrf.mxu0
    %v4350 = vadd.f32 %v4301, %v4349
    %v4351 = vpop.f32.mrf.mxu0
    %v4352 = vadd.f32 %v4303, %v4351
    %4353 = vmatmul.bf16.gmra.mxu0 %v2165
    %v4354 = vpop.f32.mrf.mxu0
    %v4355 = vadd.f32 %v4306, %v4354
    %v4356 = vpop.f32.mrf.mxu0
    %v4357 = vadd.f32 %v4308, %v4356
    %4358 = vmatmul.bf16.gmra.mxu0 %v2169
    %v4359 = vpop.f32.mrf.mxu0
    %v4360 = vadd.f32 %v4311, %v4359
    %v4361 = vpop.f32.mrf.mxu0
    %v4362 = vadd.f32 %v4313, %v4361
    %4363 = vmatmul.bf16.gmra.mxu0 %v2173
    %v4364 = vpop.f32.mrf.mxu0
    %v4365 = vadd.f32 %v4316, %v4364
    %v4366 = vpop.f32.mrf.mxu0
    %v4367 = vadd.f32 %v4318, %v4366
    %4368 = vmatmul.bf16.gmra.mxu0 %v2177
    %v4369 = vpop.f32.mrf.mxu0
    %v4370 = vadd.f32 %v4321, %v4369
    %v4371 = vpop.f32.mrf.mxu0
    %v4372 = vadd.f32 %v4323, %v4371
    %4373 = vdwg.mxu0
    %4374 = vmatpush.bf16.msra.mxu0 %v3168
    %4375 = vmatpush.bf16.msra.mxu0 %v3160
    %4376 = vmatpush.bf16.msra.mxu0 %v3152
    %4377 = vmatpush.bf16.msra.mxu0 %v3144
    %4378 = vmatpush.bf16.msra.mxu0 %v3136
    %4379 = vmatpush.bf16.msra.mxu0 %v3128
    %4380 = vmatpush.bf16.msra.mxu0 %v3120
    %4381 = vmatpush.bf16.msra.mxu0 %v3112
    %4382 = vmatmul.bf16.gmra.mxu0 %v2150
    %v4383 = vpop.f32.mrf.mxu0
    %v4384 = vadd.f32 %v4335, %v4383
    %v4385 = vpop.f32.mrf.mxu0
    %v4386 = vadd.f32 %v4337, %v4385
    %4387 = vmatmul.bf16.gmra.mxu0 %v2154
    %v4388 = vpop.f32.mrf.mxu0
    %v4389 = vadd.f32 %v4340, %v4388
    %v4390 = vpop.f32.mrf.mxu0
    %v4391 = vadd.f32 %v4342, %v4390
    %4392 = vmatmul.bf16.gmra.mxu0 %v2158
    %v4393 = vpop.f32.mrf.mxu0
    %v4394 = vadd.f32 %v4345, %v4393
    %v4395 = vpop.f32.mrf.mxu0
    %v4396 = vadd.f32 %v4347, %v4395
    %4397 = vmatmul.bf16.gmra.mxu0 %v2162
    %v4398 = vpop.f32.mrf.mxu0
    %v4399 = vadd.f32 %v4350, %v4398
    %v4400 = vpop.f32.mrf.mxu0
    %v4401 = vadd.f32 %v4352, %v4400
    %4402 = vmatmul.bf16.gmra.mxu0 %v2166
    %v4403 = vpop.f32.mrf.mxu0
    %v4404 = vadd.f32 %v4355, %v4403
    %v4405 = vpop.f32.mrf.mxu0
    %v4406 = vadd.f32 %v4357, %v4405
    %4407 = vmatmul.bf16.gmra.mxu0 %v2170
    %v4408 = vpop.f32.mrf.mxu0
    %v4409 = vadd.f32 %v4360, %v4408
    %v4410 = vpop.f32.mrf.mxu0
    %v4411 = vadd.f32 %v4362, %v4410
    %4412 = vmatmul.bf16.gmra.mxu0 %v2174
    %v4413 = vpop.f32.mrf.mxu0
    %v4414 = vadd.f32 %v4365, %v4413
    %v4415 = vpop.f32.mrf.mxu0
    %v4416 = vadd.f32 %v4367, %v4415
    %4417 = vmatmul.bf16.gmra.mxu0 %v2178
    %v4418 = vpop.f32.mrf.mxu0
    %v4419 = vadd.f32 %v4370, %v4418
    %v4420 = vpop.f32.mrf.mxu0
    %v4421 = vadd.f32 %v4372, %v4420
    %4422 = vdwg.mxu0
    %4423 = vmatpush.bf16.msra.mxu0 %v3232
    %4424 = vmatpush.bf16.msra.mxu0 %v3224
    %4425 = vmatpush.bf16.msra.mxu0 %v3216
    %4426 = vmatpush.bf16.msra.mxu0 %v3208
    %4427 = vmatpush.bf16.msra.mxu0 %v3200
    %4428 = vmatpush.bf16.msra.mxu0 %v3192
    %4429 = vmatpush.bf16.msra.mxu0 %v3184
    %4430 = vmatpush.bf16.msra.mxu0 %v3176
    %4431 = vmatmul.bf16.gmra.mxu0 %v2151
    %v4432 = vpop.f32.mrf.mxu0
    %v4433 = vadd.f32 %v4384, %v4432
    %v4434 = vpop.f32.mrf.mxu0
    %v4435 = vadd.f32 %v4386, %v4434
    %4436 = vmatmul.bf16.gmra.mxu0 %v2155
    %v4437 = vpop.f32.mrf.mxu0
    %v4438 = vadd.f32 %v4389, %v4437
    %v4439 = vpop.f32.mrf.mxu0
    %v4440 = vadd.f32 %v4391, %v4439
    %4441 = vmatmul.bf16.gmra.mxu0 %v2159
    %v4442 = vpop.f32.mrf.mxu0
    %v4443 = vadd.f32 %v4394, %v4442
    %v4444 = vpop.f32.mrf.mxu0
    %v4445 = vadd.f32 %v4396, %v4444
    %4446 = vmatmul.bf16.gmra.mxu0 %v2163
    %v4447 = vpop.f32.mrf.mxu0
    %v4448 = vadd.f32 %v4399, %v4447
    %v4449 = vpop.f32.mrf.mxu0
    %v4450 = vadd.f32 %v4401, %v4449
    %4451 = vmatmul.bf16.gmra.mxu0 %v2167
    %v4452 = vpop.f32.mrf.mxu0
    %v4453 = vadd.f32 %v4404, %v4452
    %v4454 = vpop.f32.mrf.mxu0
    %v4455 = vadd.f32 %v4406, %v4454
    %4456 = vmatmul.bf16.gmra.mxu0 %v2171
    %v4457 = vpop.f32.mrf.mxu0
    %v4458 = vadd.f32 %v4409, %v4457
    %v4459 = vpop.f32.mrf.mxu0
    %v4460 = vadd.f32 %v4411, %v4459
    %4461 = vmatmul.bf16.gmra.mxu0 %v2175
    %v4462 = vpop.f32.mrf.mxu0
    %v4463 = vadd.f32 %v4414, %v4462
    %v4464 = vpop.f32.mrf.mxu0
    %v4465 = vadd.f32 %v4416, %v4464
    %4466 = vmatmul.bf16.gmra.mxu0 %v2179
    %v4467 = vpop.f32.mrf.mxu0
    %v4468 = vadd.f32 %v4419, %v4467
    %v4469 = vpop.f32.mrf.mxu0
    %v4470 = vadd.f32 %v4421, %v4469
    %4471 = vdwg.mxu0
    %4472 = vmatpush.bf16.msra.mxu0 %v3041
    %4473 = vmatpush.bf16.msra.mxu0 %v3033
    %4474 = vmatpush.bf16.msra.mxu0 %v3025
    %4475 = vmatpush.bf16.msra.mxu0 %v3017
    %4476 = vmatpush.bf16.msra.mxu0 %v3009
    %4477 = vmatpush.bf16.msra.mxu0 %v3001
    %4478 = vmatpush.bf16.msra.mxu0 %v2993
    %4479 = vmatpush.bf16.msra.mxu0 %v2985
    %4480 = vmatmul.bf16.gmra.mxu0 %v2148
    %v4481 = vpop.f32.mrf.mxu0
    %v4482 = vadd.f32 %v2041, %v4481
    %v4483 = vpop.f32.mrf.mxu0
    %v4484 = vadd.f32 %v2041, %v4483
    %4485 = vmatmul.bf16.gmra.mxu0 %v2152
    %v4486 = vpop.f32.mrf.mxu0
    %v4487 = vadd.f32 %v2041, %v4486
    %v4488 = vpop.f32.mrf.mxu0
    %v4489 = vadd.f32 %v2041, %v4488
    %4490 = vmatmul.bf16.gmra.mxu0 %v2156
    %v4491 = vpop.f32.mrf.mxu0
    %v4492 = vadd.f32 %v2041, %v4491
    %v4493 = vpop.f32.mrf.mxu0
    %v4494 = vadd.f32 %v2041, %v4493
    %4495 = vmatmul.bf16.gmra.mxu0 %v2160
    %v4496 = vpop.f32.mrf.mxu0
    %v4497 = vadd.f32 %v2041, %v4496
    %v4498 = vpop.f32.mrf.mxu0
    %v4499 = vadd.f32 %v2041, %v4498
    %4500 = vmatmul.bf16.gmra.mxu0 %v2164
    %v4501 = vpop.f32.mrf.mxu0
    %v4502 = vadd.f32 %v2041, %v4501
    %v4503 = vpop.f32.mrf.mxu0
    %v4504 = vadd.f32 %v2041, %v4503
    %4505 = vmatmul.bf16.gmra.mxu0 %v2168
    %v4506 = vpop.f32.mrf.mxu0
    %v4507 = vadd.f32 %v2041, %v4506
    %v4508 = vpop.f32.mrf.mxu0
    %v4509 = vadd.f32 %v2041, %v4508
    %4510 = vmatmul.bf16.gmra.mxu0 %v2172
    %v4511 = vpop.f32.mrf.mxu0
    %v4512 = vadd.f32 %v2041, %v4511
    %v4513 = vpop.f32.mrf.mxu0
    %v4514 = vadd.f32 %v2041, %v4513
    %4515 = vmatmul.bf16.gmra.mxu0 %v2176
    %v4516 = vpop.f32.mrf.mxu0
    %v4517 = vadd.f32 %v2041, %v4516
    %v4518 = vpop.f32.mrf.mxu0
    %v4519 = vadd.f32 %v2041, %v4518
    %4520 = vdwg.mxu0
    %4521 = vmatpush.bf16.msra.mxu0 %v3105
    %4522 = vmatpush.bf16.msra.mxu0 %v3097
    %4523 = vmatpush.bf16.msra.mxu0 %v3089
    %4524 = vmatpush.bf16.msra.mxu0 %v3081
    %4525 = vmatpush.bf16.msra.mxu0 %v3073
    %4526 = vmatpush.bf16.msra.mxu0 %v3065
    %4527 = vmatpush.bf16.msra.mxu0 %v3057
    %4528 = vmatpush.bf16.msra.mxu0 %v3049
    %4529 = vmatmul.bf16.gmra.mxu0 %v2149
    %v4530 = vpop.f32.mrf.mxu0
    %v4531 = vadd.f32 %v4482, %v4530
    %v4532 = vpop.f32.mrf.mxu0
    %v4533 = vadd.f32 %v4484, %v4532
    %4534 = vmatmul.bf16.gmra.mxu0 %v2153
    %v4535 = vpop.f32.mrf.mxu0
    %v4536 = vadd.f32 %v4487, %v4535
    %v4537 = vpop.f32.mrf.mxu0
    %v4538 = vadd.f32 %v4489, %v4537
    %4539 = vmatmul.bf16.gmra.mxu0 %v2157
    %v4540 = vpop.f32.mrf.mxu0
    %v4541 = vadd.f32 %v4492, %v4540
    %v4542 = vpop.f32.mrf.mxu0
    %v4543 = vadd.f32 %v4494, %v4542
    %4544 = vmatmul.bf16.gmra.mxu0 %v2161
    %v4545 = vpop.f32.mrf.mxu0
    %v4546 = vadd.f32 %v4497, %v4545
    %v4547 = vpop.f32.mrf.mxu0
    %v4548 = vadd.f32 %v4499, %v4547
    %4549 = vmatmul.bf16.gmra.mxu0 %v2165
    %v4550 = vpop.f32.mrf.mxu0
    %v4551 = vadd.f32 %v4502, %v4550
    %v4552 = vpop.f32.mrf.mxu0
    %v4553 = vadd.f32 %v4504, %v4552
    %4554 = vmatmul.bf16.gmra.mxu0 %v2169
    %v4555 = vpop.f32.mrf.mxu0
    %v4556 = vadd.f32 %v4507, %v4555
    %v4557 = vpop.f32.mrf.mxu0
    %v4558 = vadd.f32 %v4509, %v4557
    %4559 = vmatmul.bf16.gmra.mxu0 %v2173
    %v4560 = vpop.f32.mrf.mxu0
    %v4561 = vadd.f32 %v4512, %v4560
    %v4562 = vpop.f32.mrf.mxu0
    %v4563 = vadd.f32 %v4514, %v4562
    %4564 = vmatmul.bf16.gmra.mxu0 %v2177
    %v4565 = vpop.f32.mrf.mxu0
    %v4566 = vadd.f32 %v4517, %v4565
    %v4567 = vpop.f32.mrf.mxu0
    %v4568 = vadd.f32 %v4519, %v4567
    %4569 = vdwg.mxu0
    %4570 = vmatpush.bf16.msra.mxu0 %v3169
    %4571 = vmatpush.bf16.msra.mxu0 %v3161
    %4572 = vmatpush.bf16.msra.mxu0 %v3153
    %4573 = vmatpush.bf16.msra.mxu0 %v3145
    %4574 = vmatpush.bf16.msra.mxu0 %v3137
    %4575 = vmatpush.bf16.msra.mxu0 %v3129
    %4576 = vmatpush.bf16.msra.mxu0 %v3121
    %4577 = vmatpush.bf16.msra.mxu0 %v3113
    %4578 = vmatmul.bf16.gmra.mxu0 %v2150
    %v4579 = vpop.f32.mrf.mxu0
    %v4580 = vadd.f32 %v4531, %v4579
    %v4581 = vpop.f32.mrf.mxu0
    %v4582 = vadd.f32 %v4533, %v4581
    %4583 = vmatmul.bf16.gmra.mxu0 %v2154
    %v4584 = vpop.f32.mrf.mxu0
    %v4585 = vadd.f32 %v4536, %v4584
    %v4586 = vpop.f32.mrf.mxu0
    %v4587 = vadd.f32 %v4538, %v4586
    %4588 = vmatmul.bf16.gmra.mxu0 %v2158
    %v4589 = vpop.f32.mrf.mxu0
    %v4590 = vadd.f32 %v4541, %v4589
    %v4591 = vpop.f32.mrf.mxu0
    %v4592 = vadd.f32 %v4543, %v4591
    %4593 = vmatmul.bf16.gmra.mxu0 %v2162
    %v4594 = vpop.f32.mrf.mxu0
    %v4595 = vadd.f32 %v4546, %v4594
    %v4596 = vpop.f32.mrf.mxu0
    %v4597 = vadd.f32 %v4548, %v4596
    %4598 = vmatmul.bf16.gmra.mxu0 %v2166
    %v4599 = vpop.f32.mrf.mxu0
    %v4600 = vadd.f32 %v4551, %v4599
    %v4601 = vpop.f32.mrf.mxu0
    %v4602 = vadd.f32 %v4553, %v4601
    %4603 = vmatmul.bf16.gmra.mxu0 %v2170
    %v4604 = vpop.f32.mrf.mxu0
    %v4605 = vadd.f32 %v4556, %v4604
    %v4606 = vpop.f32.mrf.mxu0
    %v4607 = vadd.f32 %v4558, %v4606
    %4608 = vmatmul.bf16.gmra.mxu0 %v2174
    %v4609 = vpop.f32.mrf.mxu0
    %v4610 = vadd.f32 %v4561, %v4609
    %v4611 = vpop.f32.mrf.mxu0
    %v4612 = vadd.f32 %v4563, %v4611
    %4613 = vmatmul.bf16.gmra.mxu0 %v2178
    %v4614 = vpop.f32.mrf.mxu0
    %v4615 = vadd.f32 %v4566, %v4614
    %v4616 = vpop.f32.mrf.mxu0
    %v4617 = vadd.f32 %v4568, %v4616
    %4618 = vdwg.mxu0
    %4619 = vmatpush.bf16.msra.mxu0 %v3233
    %4620 = vmatpush.bf16.msra.mxu0 %v3225
    %4621 = vmatpush.bf16.msra.mxu0 %v3217
    %4622 = vmatpush.bf16.msra.mxu0 %v3209
    %4623 = vmatpush.bf16.msra.mxu0 %v3201
    %4624 = vmatpush.bf16.msra.mxu0 %v3193
    %4625 = vmatpush.bf16.msra.mxu0 %v3185
    %4626 = vmatpush.bf16.msra.mxu0 %v3177
    %4627 = vmatmul.bf16.gmra.mxu0 %v2151
    %v4628 = vpop.f32.mrf.mxu0
    %v4629 = vadd.f32 %v4580, %v4628
    %v4630 = vpop.f32.mrf.mxu0
    %v4631 = vadd.f32 %v4582, %v4630
    %4632 = vmatmul.bf16.gmra.mxu0 %v2155
    %v4633 = vpop.f32.mrf.mxu0
    %v4634 = vadd.f32 %v4585, %v4633
    %v4635 = vpop.f32.mrf.mxu0
    %v4636 = vadd.f32 %v4587, %v4635
    %4637 = vmatmul.bf16.gmra.mxu0 %v2159
    %v4638 = vpop.f32.mrf.mxu0
    %v4639 = vadd.f32 %v4590, %v4638
    %v4640 = vpop.f32.mrf.mxu0
    %v4641 = vadd.f32 %v4592, %v4640
    %4642 = vmatmul.bf16.gmra.mxu0 %v2163
    %v4643 = vpop.f32.mrf.mxu0
    %v4644 = vadd.f32 %v4595, %v4643
    %v4645 = vpop.f32.mrf.mxu0
    %v4646 = vadd.f32 %v4597, %v4645
    %4647 = vmatmul.bf16.gmra.mxu0 %v2167
    %v4648 = vpop.f32.mrf.mxu0
    %v4649 = vadd.f32 %v4600, %v4648
    %v4650 = vpop.f32.mrf.mxu0
    %v4651 = vadd.f32 %v4602, %v4650
    %4652 = vmatmul.bf16.gmra.mxu0 %v2171
    %v4653 = vpop.f32.mrf.mxu0
    %v4654 = vadd.f32 %v4605, %v4653
    %v4655 = vpop.f32.mrf.mxu0
    %v4656 = vadd.f32 %v4607, %v4655
    %4657 = vmatmul.bf16.gmra.mxu0 %v2175
    %v4658 = vpop.f32.mrf.mxu0
    %v4659 = vadd.f32 %v4610, %v4658
    %v4660 = vpop.f32.mrf.mxu0
    %v4661 = vadd.f32 %v4612, %v4660
    %4662 = vmatmul.bf16.gmra.mxu0 %v2179
    %v4663 = vpop.f32.mrf.mxu0
    %v4664 = vadd.f32 %v4615, %v4663
    %v4665 = vpop.f32.mrf.mxu0
    %v4666 = vadd.f32 %v4617, %v4665
    %4667 = vdwg.mxu0
    %4668 = vmatpush.bf16.msra.mxu0 %v3042
    %4669 = vmatpush.bf16.msra.mxu0 %v3034
    %4670 = vmatpush.bf16.msra.mxu0 %v3026
    %4671 = vmatpush.bf16.msra.mxu0 %v3018
    %4672 = vmatpush.bf16.msra.mxu0 %v3010
    %4673 = vmatpush.bf16.msra.mxu0 %v3002
    %4674 = vmatpush.bf16.msra.mxu0 %v2994
    %4675 = vmatpush.bf16.msra.mxu0 %v2986
    %4676 = vmatmul.bf16.gmra.mxu0 %v2148
    %v4677 = vpop.f32.mrf.mxu0
    %v4678 = vadd.f32 %v2042, %v4677
    %v4679 = vpop.f32.mrf.mxu0
    %v4680 = vadd.f32 %v2042, %v4679
    %4681 = vmatmul.bf16.gmra.mxu0 %v2152
    %v4682 = vpop.f32.mrf.mxu0
    %v4683 = vadd.f32 %v2042, %v4682
    %v4684 = vpop.f32.mrf.mxu0
    %v4685 = vadd.f32 %v2042, %v4684
    %4686 = vmatmul.bf16.gmra.mxu0 %v2156
    %v4687 = vpop.f32.mrf.mxu0
    %v4688 = vadd.f32 %v2042, %v4687
    %v4689 = vpop.f32.mrf.mxu0
    %v4690 = vadd.f32 %v2042, %v4689
    %4691 = vmatmul.bf16.gmra.mxu0 %v2160
    %v4692 = vpop.f32.mrf.mxu0
    %v4693 = vadd.f32 %v2042, %v4692
    %v4694 = vpop.f32.mrf.mxu0
    %v4695 = vadd.f32 %v2042, %v4694
    %4696 = vmatmul.bf16.gmra.mxu0 %v2164
    %v4697 = vpop.f32.mrf.mxu0
    %v4698 = vadd.f32 %v2042, %v4697
    %v4699 = vpop.f32.mrf.mxu0
    %v4700 = vadd.f32 %v2042, %v4699
    %4701 = vmatmul.bf16.gmra.mxu0 %v2168
    %v4702 = vpop.f32.mrf.mxu0
    %v4703 = vadd.f32 %v2042, %v4702
    %v4704 = vpop.f32.mrf.mxu0
    %v4705 = vadd.f32 %v2042, %v4704
    %4706 = vmatmul.bf16.gmra.mxu0 %v2172
    %v4707 = vpop.f32.mrf.mxu0
    %v4708 = vadd.f32 %v2042, %v4707
    %v4709 = vpop.f32.mrf.mxu0
    %v4710 = vadd.f32 %v2042, %v4709
    %4711 = vmatmul.bf16.gmra.mxu0 %v2176
    %v4712 = vpop.f32.mrf.mxu0
    %v4713 = vadd.f32 %v2042, %v4712
    %v4714 = vpop.f32.mrf.mxu0
    %v4715 = vadd.f32 %v2042, %v4714
    %4716 = vdwg.mxu0
    %4717 = vmatpush.bf16.msra.mxu0 %v3106
    %4718 = vmatpush.bf16.msra.mxu0 %v3098
    %4719 = vmatpush.bf16.msra.mxu0 %v3090
    %4720 = vmatpush.bf16.msra.mxu0 %v3082
    %4721 = vmatpush.bf16.msra.mxu0 %v3074
    %4722 = vmatpush.bf16.msra.mxu0 %v3066
    %4723 = vmatpush.bf16.msra.mxu0 %v3058
    %4724 = vmatpush.bf16.msra.mxu0 %v3050
    %4725 = vmatmul.bf16.gmra.mxu0 %v2149
    %v4726 = vpop.f32.mrf.mxu0
    %v4727 = vadd.f32 %v4678, %v4726
    %v4728 = vpop.f32.mrf.mxu0
    %v4729 = vadd.f32 %v4680, %v4728
    %4730 = vmatmul.bf16.gmra.mxu0 %v2153
    %v4731 = vpop.f32.mrf.mxu0
    %v4732 = vadd.f32 %v4683, %v4731
    %v4733 = vpop.f32.mrf.mxu0
    %v4734 = vadd.f32 %v4685, %v4733
    %4735 = vmatmul.bf16.gmra.mxu0 %v2157
    %v4736 = vpop.f32.mrf.mxu0
    %v4737 = vadd.f32 %v4688, %v4736
    %v4738 = vpop.f32.mrf.mxu0
    %v4739 = vadd.f32 %v4690, %v4738
    %4740 = vmatmul.bf16.gmra.mxu0 %v2161
    %v4741 = vpop.f32.mrf.mxu0
    %v4742 = vadd.f32 %v4693, %v4741
    %v4743 = vpop.f32.mrf.mxu0
    %v4744 = vadd.f32 %v4695, %v4743
    %4745 = vmatmul.bf16.gmra.mxu0 %v2165
    %v4746 = vpop.f32.mrf.mxu0
    %v4747 = vadd.f32 %v4698, %v4746
    %v4748 = vpop.f32.mrf.mxu0
    %v4749 = vadd.f32 %v4700, %v4748
    %4750 = vmatmul.bf16.gmra.mxu0 %v2169
    %v4751 = vpop.f32.mrf.mxu0
    %v4752 = vadd.f32 %v4703, %v4751
    %v4753 = vpop.f32.mrf.mxu0
    %v4754 = vadd.f32 %v4705, %v4753
    %4755 = vmatmul.bf16.gmra.mxu0 %v2173
    %v4756 = vpop.f32.mrf.mxu0
    %v4757 = vadd.f32 %v4708, %v4756
    %v4758 = vpop.f32.mrf.mxu0
    %v4759 = vadd.f32 %v4710, %v4758
    %4760 = vmatmul.bf16.gmra.mxu0 %v2177
    %v4761 = vpop.f32.mrf.mxu0
    %v4762 = vadd.f32 %v4713, %v4761
    %v4763 = vpop.f32.mrf.mxu0
    %v4764 = vadd.f32 %v4715, %v4763
    %4765 = vdwg.mxu0
    %4766 = vmatpush.bf16.msra.mxu0 %v3170
    %4767 = vmatpush.bf16.msra.mxu0 %v3162
    %4768 = vmatpush.bf16.msra.mxu0 %v3154
    %4769 = vmatpush.bf16.msra.mxu0 %v3146
    %4770 = vmatpush.bf16.msra.mxu0 %v3138
    %4771 = vmatpush.bf16.msra.mxu0 %v3130
    %4772 = vmatpush.bf16.msra.mxu0 %v3122
    %4773 = vmatpush.bf16.msra.mxu0 %v3114
    %4774 = vmatmul.bf16.gmra.mxu0 %v2150
    %v4775 = vpop.f32.mrf.mxu0
    %v4776 = vadd.f32 %v4727, %v4775
    %v4777 = vpop.f32.mrf.mxu0
    %v4778 = vadd.f32 %v4729, %v4777
    %4779 = vmatmul.bf16.gmra.mxu0 %v2154
    %v4780 = vpop.f32.mrf.mxu0
    %v4781 = vadd.f32 %v4732, %v4780
    %v4782 = vpop.f32.mrf.mxu0
    %v4783 = vadd.f32 %v4734, %v4782
    %4784 = vmatmul.bf16.gmra.mxu0 %v2158
    %v4785 = vpop.f32.mrf.mxu0
    %v4786 = vadd.f32 %v4737, %v4785
    %v4787 = vpop.f32.mrf.mxu0
    %v4788 = vadd.f32 %v4739, %v4787
    %4789 = vmatmul.bf16.gmra.mxu0 %v2162
    %v4790 = vpop.f32.mrf.mxu0
    %v4791 = vadd.f32 %v4742, %v4790
    %v4792 = vpop.f32.mrf.mxu0
    %v4793 = vadd.f32 %v4744, %v4792
    %4794 = vmatmul.bf16.gmra.mxu0 %v2166
    %v4795 = vpop.f32.mrf.mxu0
    %v4796 = vadd.f32 %v4747, %v4795
    %v4797 = vpop.f32.mrf.mxu0
    %v4798 = vadd.f32 %v4749, %v4797
    %4799 = vmatmul.bf16.gmra.mxu0 %v2170
    %v4800 = vpop.f32.mrf.mxu0
    %v4801 = vadd.f32 %v4752, %v4800
    %v4802 = vpop.f32.mrf.mxu0
    %v4803 = vadd.f32 %v4754, %v4802
    %4804 = vmatmul.bf16.gmra.mxu0 %v2174
    %v4805 = vpop.f32.mrf.mxu0
    %v4806 = vadd.f32 %v4757, %v4805
    %v4807 = vpop.f32.mrf.mxu0
    %v4808 = vadd.f32 %v4759, %v4807
    %4809 = vmatmul.bf16.gmra.mxu0 %v2178
    %v4810 = vpop.f32.mrf.mxu0
    %v4811 = vadd.f32 %v4762, %v4810
    %v4812 = vpop.f32.mrf.mxu0
    %v4813 = vadd.f32 %v4764, %v4812
    %4814 = vdwg.mxu0
    %4815 = vmatpush.bf16.msra.mxu0 %v3234
    %4816 = vmatpush.bf16.msra.mxu0 %v3226
    %4817 = vmatpush.bf16.msra.mxu0 %v3218
    %4818 = vmatpush.bf16.msra.mxu0 %v3210
    %4819 = vmatpush.bf16.msra.mxu0 %v3202
    %4820 = vmatpush.bf16.msra.mxu0 %v3194
    %4821 = vmatpush.bf16.msra.mxu0 %v3186
    %4822 = vmatpush.bf16.msra.mxu0 %v3178
    %4823 = vmatmul.bf16.gmra.mxu0 %v2151
    %v4824 = vpop.f32.mrf.mxu0
    %v4825 = vadd.f32 %v4776, %v4824
    %v4826 = vpop.f32.mrf.mxu0
    %v4827 = vadd.f32 %v4778, %v4826
    %4828 = vmatmul.bf16.gmra.mxu0 %v2155
    %v4829 = vpop.f32.mrf.mxu0
    %v4830 = vadd.f32 %v4781, %v4829
    %v4831 = vpop.f32.mrf.mxu0
    %v4832 = vadd.f32 %v4783, %v4831
    %4833 = vmatmul.bf16.gmra.mxu0 %v2159
    %v4834 = vpop.f32.mrf.mxu0
    %v4835 = vadd.f32 %v4786, %v4834
    %v4836 = vpop.f32.mrf.mxu0
    %v4837 = vadd.f32 %v4788, %v4836
    %4838 = vmatmul.bf16.gmra.mxu0 %v2163
    %v4839 = vpop.f32.mrf.mxu0
    %v4840 = vadd.f32 %v4791, %v4839
    %v4841 = vpop.f32.mrf.mxu0
    %v4842 = vadd.f32 %v4793, %v4841
    %4843 = vmatmul.bf16.gmra.mxu0 %v2167
    %v4844 = vpop.f32.mrf.mxu0
    %v4845 = vadd.f32 %v4796, %v4844
    %v4846 = vpop.f32.mrf.mxu0
    %v4847 = vadd.f32 %v4798, %v4846
    %4848 = vmatmul.bf16.gmra.mxu0 %v2171
    %v4849 = vpop.f32.mrf.mxu0
    %v4850 = vadd.f32 %v4801, %v4849
    %v4851 = vpop.f32.mrf.mxu0
    %v4852 = vadd.f32 %v4803, %v4851
    %4853 = vmatmul.bf16.gmra.mxu0 %v2175
    %v4854 = vpop.f32.mrf.mxu0
    %v4855 = vadd.f32 %v4806, %v4854
    %v4856 = vpop.f32.mrf.mxu0
    %v4857 = vadd.f32 %v4808, %v4856
    %4858 = vmatmul.bf16.gmra.mxu0 %v2179
    %v4859 = vpop.f32.mrf.mxu0
    %v4860 = vadd.f32 %v4811, %v4859
    %v4861 = vpop.f32.mrf.mxu0
    %v4862 = vadd.f32 %v4813, %v4861
    %4863 = vdwg.mxu0
    %4864 = vmatpush.bf16.msra.mxu0 %v3043
    %4865 = vmatpush.bf16.msra.mxu0 %v3035
    %4866 = vmatpush.bf16.msra.mxu0 %v3027
    %4867 = vmatpush.bf16.msra.mxu0 %v3019
    %4868 = vmatpush.bf16.msra.mxu0 %v3011
    %4869 = vmatpush.bf16.msra.mxu0 %v3003
    %4870 = vmatpush.bf16.msra.mxu0 %v2995
    %4871 = vmatpush.bf16.msra.mxu0 %v2987
    %4872 = vmatmul.bf16.gmra.mxu0 %v2148
    %v4873 = vpop.f32.mrf.mxu0
    %v4874 = vadd.f32 %v2043, %v4873
    %v4875 = vpop.f32.mrf.mxu0
    %v4876 = vadd.f32 %v2043, %v4875
    %4877 = vmatmul.bf16.gmra.mxu0 %v2152
    %v4878 = vpop.f32.mrf.mxu0
    %v4879 = vadd.f32 %v2043, %v4878
    %v4880 = vpop.f32.mrf.mxu0
    %v4881 = vadd.f32 %v2043, %v4880
    %4882 = vmatmul.bf16.gmra.mxu0 %v2156
    %v4883 = vpop.f32.mrf.mxu0
    %v4884 = vadd.f32 %v2043, %v4883
    %v4885 = vpop.f32.mrf.mxu0
    %v4886 = vadd.f32 %v2043, %v4885
    %4887 = vmatmul.bf16.gmra.mxu0 %v2160
    %v4888 = vpop.f32.mrf.mxu0
    %v4889 = vadd.f32 %v2043, %v4888
    %v4890 = vpop.f32.mrf.mxu0
    %v4891 = vadd.f32 %v2043, %v4890
    %4892 = vmatmul.bf16.gmra.mxu0 %v2164
    %v4893 = vpop.f32.mrf.mxu0
    %v4894 = vadd.f32 %v2043, %v4893
    %v4895 = vpop.f32.mrf.mxu0
    %v4896 = vadd.f32 %v2043, %v4895
    %4897 = vmatmul.bf16.gmra.mxu0 %v2168
    %v4898 = vpop.f32.mrf.mxu0
    %v4899 = vadd.f32 %v2043, %v4898
    %v4900 = vpop.f32.mrf.mxu0
    %v4901 = vadd.f32 %v2043, %v4900
    %4902 = vmatmul.bf16.gmra.mxu0 %v2172
    %v4903 = vpop.f32.mrf.mxu0
    %v4904 = vadd.f32 %v2043, %v4903
    %v4905 = vpop.f32.mrf.mxu0
    %v4906 = vadd.f32 %v2043, %v4905
    %4907 = vmatmul.bf16.gmra.mxu0 %v2176
    %v4908 = vpop.f32.mrf.mxu0
    %v4909 = vadd.f32 %v2043, %v4908
    %v4910 = vpop.f32.mrf.mxu0
    %v4911 = vadd.f32 %v2043, %v4910
    %4912 = vdwg.mxu0
    %4913 = vmatpush.bf16.msra.mxu0 %v3107
    %4914 = vmatpush.bf16.msra.mxu0 %v3099
    %4915 = vmatpush.bf16.msra.mxu0 %v3091
    %4916 = vmatpush.bf16.msra.mxu0 %v3083
    %4917 = vmatpush.bf16.msra.mxu0 %v3075
    %4918 = vmatpush.bf16.msra.mxu0 %v3067
    %4919 = vmatpush.bf16.msra.mxu0 %v3059
    %4920 = vmatpush.bf16.msra.mxu0 %v3051
    %4921 = vmatmul.bf16.gmra.mxu0 %v2149
    %v4922 = vpop.f32.mrf.mxu0
    %v4923 = vadd.f32 %v4874, %v4922
    %v4924 = vpop.f32.mrf.mxu0
    %v4925 = vadd.f32 %v4876, %v4924
    %4926 = vmatmul.bf16.gmra.mxu0 %v2153
    %v4927 = vpop.f32.mrf.mxu0
    %v4928 = vadd.f32 %v4879, %v4927
    %v4929 = vpop.f32.mrf.mxu0
    %v4930 = vadd.f32 %v4881, %v4929
    %4931 = vmatmul.bf16.gmra.mxu0 %v2157
    %v4932 = vpop.f32.mrf.mxu0
    %v4933 = vadd.f32 %v4884, %v4932
    %v4934 = vpop.f32.mrf.mxu0
    %v4935 = vadd.f32 %v4886, %v4934
    %4936 = vmatmul.bf16.gmra.mxu0 %v2161
    %v4937 = vpop.f32.mrf.mxu0
    %v4938 = vadd.f32 %v4889, %v4937
    %v4939 = vpop.f32.mrf.mxu0
    %v4940 = vadd.f32 %v4891, %v4939
    %4941 = vmatmul.bf16.gmra.mxu0 %v2165
    %v4942 = vpop.f32.mrf.mxu0
    %v4943 = vadd.f32 %v4894, %v4942
    %v4944 = vpop.f32.mrf.mxu0
    %v4945 = vadd.f32 %v4896, %v4944
    %4946 = vmatmul.bf16.gmra.mxu0 %v2169
    %v4947 = vpop.f32.mrf.mxu0
    %v4948 = vadd.f32 %v4899, %v4947
    %v4949 = vpop.f32.mrf.mxu0
    %v4950 = vadd.f32 %v4901, %v4949
    %4951 = vmatmul.bf16.gmra.mxu0 %v2173
    %v4952 = vpop.f32.mrf.mxu0
    %v4953 = vadd.f32 %v4904, %v4952
    %v4954 = vpop.f32.mrf.mxu0
    %v4955 = vadd.f32 %v4906, %v4954
    %4956 = vmatmul.bf16.gmra.mxu0 %v2177
    %v4957 = vpop.f32.mrf.mxu0
    %v4958 = vadd.f32 %v4909, %v4957
    %v4959 = vpop.f32.mrf.mxu0
    %v4960 = vadd.f32 %v4911, %v4959
    %4961 = vdwg.mxu0
    %4962 = vmatpush.bf16.msra.mxu0 %v3171
    %4963 = vmatpush.bf16.msra.mxu0 %v3163
    %4964 = vmatpush.bf16.msra.mxu0 %v3155
    %4965 = vmatpush.bf16.msra.mxu0 %v3147
    %4966 = vmatpush.bf16.msra.mxu0 %v3139
    %4967 = vmatpush.bf16.msra.mxu0 %v3131
    %4968 = vmatpush.bf16.msra.mxu0 %v3123
    %4969 = vmatpush.bf16.msra.mxu0 %v3115
    %4970 = vmatmul.bf16.gmra.mxu0 %v2150
    %v4971 = vpop.f32.mrf.mxu0
    %v4972 = vadd.f32 %v4923, %v4971
    %v4973 = vpop.f32.mrf.mxu0
    %v4974 = vadd.f32 %v4925, %v4973
    %4975 = vmatmul.bf16.gmra.mxu0 %v2154
    %v4976 = vpop.f32.mrf.mxu0
    %v4977 = vadd.f32 %v4928, %v4976
    %v4978 = vpop.f32.mrf.mxu0
    %v4979 = vadd.f32 %v4930, %v4978
    %4980 = vmatmul.bf16.gmra.mxu0 %v2158
    %v4981 = vpop.f32.mrf.mxu0
    %v4982 = vadd.f32 %v4933, %v4981
    %v4983 = vpop.f32.mrf.mxu0
    %v4984 = vadd.f32 %v4935, %v4983
    %4985 = vmatmul.bf16.gmra.mxu0 %v2162
    %v4986 = vpop.f32.mrf.mxu0
    %v4987 = vadd.f32 %v4938, %v4986
    %v4988 = vpop.f32.mrf.mxu0
    %v4989 = vadd.f32 %v4940, %v4988
    %4990 = vmatmul.bf16.gmra.mxu0 %v2166
    %v4991 = vpop.f32.mrf.mxu0
    %v4992 = vadd.f32 %v4943, %v4991
    %v4993 = vpop.f32.mrf.mxu0
    %v4994 = vadd.f32 %v4945, %v4993
    %4995 = vmatmul.bf16.gmra.mxu0 %v2170
    %v4996 = vpop.f32.mrf.mxu0
    %v4997 = vadd.f32 %v4948, %v4996
    %v4998 = vpop.f32.mrf.mxu0
    %v4999 = vadd.f32 %v4950, %v4998
    %5000 = vmatmul.bf16.gmra.mxu0 %v2174
    %v5001 = vpop.f32.mrf.mxu0
    %v5002 = vadd.f32 %v4953, %v5001
    %v5003 = vpop.f32.mrf.mxu0
    %v5004 = vadd.f32 %v4955, %v5003
    %5005 = vmatmul.bf16.gmra.mxu0 %v2178
    %v5006 = vpop.f32.mrf.mxu0
    %v5007 = vadd.f32 %v4958, %v5006
    %v5008 = vpop.f32.mrf.mxu0
    %v5009 = vadd.f32 %v4960, %v5008
    %5010 = vdwg.mxu0
    %5011 = vmatpush.bf16.msra.mxu0 %v3235
    %5012 = vmatpush.bf16.msra.mxu0 %v3227
    %5013 = vmatpush.bf16.msra.mxu0 %v3219
    %5014 = vmatpush.bf16.msra.mxu0 %v3211
    %5015 = vmatpush.bf16.msra.mxu0 %v3203
    %5016 = vmatpush.bf16.msra.mxu0 %v3195
    %5017 = vmatpush.bf16.msra.mxu0 %v3187
    %5018 = vmatpush.bf16.msra.mxu0 %v3179
    %5019 = vmatmul.bf16.gmra.mxu0 %v2151
    %v5020 = vpop.f32.mrf.mxu0
    %v5021 = vadd.f32 %v4972, %v5020
    %v5022 = vpop.f32.mrf.mxu0
    %v5023 = vadd.f32 %v4974, %v5022
    %5024 = vmatmul.bf16.gmra.mxu0 %v2155
    %v5025 = vpop.f32.mrf.mxu0
    %v5026 = vadd.f32 %v4977, %v5025
    %v5027 = vpop.f32.mrf.mxu0
    %v5028 = vadd.f32 %v4979, %v5027
    %5029 = vmatmul.bf16.gmra.mxu0 %v2159
    %v5030 = vpop.f32.mrf.mxu0
    %v5031 = vadd.f32 %v4982, %v5030
    %v5032 = vpop.f32.mrf.mxu0
    %v5033 = vadd.f32 %v4984, %v5032
    %5034 = vmatmul.bf16.gmra.mxu0 %v2163
    %v5035 = vpop.f32.mrf.mxu0
    %v5036 = vadd.f32 %v4987, %v5035
    %v5037 = vpop.f32.mrf.mxu0
    %v5038 = vadd.f32 %v4989, %v5037
    %5039 = vmatmul.bf16.gmra.mxu0 %v2167
    %v5040 = vpop.f32.mrf.mxu0
    %v5041 = vadd.f32 %v4992, %v5040
    %v5042 = vpop.f32.mrf.mxu0
    %v5043 = vadd.f32 %v4994, %v5042
    %5044 = vmatmul.bf16.gmra.mxu0 %v2171
    %v5045 = vpop.f32.mrf.mxu0
    %v5046 = vadd.f32 %v4997, %v5045
    %v5047 = vpop.f32.mrf.mxu0
    %v5048 = vadd.f32 %v4999, %v5047
    %5049 = vmatmul.bf16.gmra.mxu0 %v2175
    %v5050 = vpop.f32.mrf.mxu0
    %v5051 = vadd.f32 %v5002, %v5050
    %v5052 = vpop.f32.mrf.mxu0
    %v5053 = vadd.f32 %v5004, %v5052
    %5054 = vmatmul.bf16.gmra.mxu0 %v2179
    %v5055 = vpop.f32.mrf.mxu0
    %v5056 = vadd.f32 %v5007, %v5055
    %v5057 = vpop.f32.mrf.mxu0
    %v5058 = vadd.f32 %v5009, %v5057
    %5059 = vdwg.mxu0
    %v5060 = vpack.c.bf16 %v3845, %v3649
    %v5061 = vpack.c.bf16 %v4237, %v4041
    %v5062 = vpack.c.bf16 %v4629, %v4433
    %v5063 = vpack.c.bf16 %v5021, %v4825
    %v5064 = vpack.c.bf16 %v3847, %v3651
    %v5065 = vpack.c.bf16 %v4239, %v4043
    %v5066 = vpack.c.bf16 %v4631, %v4435
    %v5067 = vpack.c.bf16 %v5023, %v4827
    %v5068 = vpack.c.bf16 %v3850, %v3654
    %v5069 = vpack.c.bf16 %v4242, %v4046
    %v5070 = vpack.c.bf16 %v4634, %v4438
    %v5071 = vpack.c.bf16 %v5026, %v4830
    %v5072 = vpack.c.bf16 %v3852, %v3656
    %v5073 = vpack.c.bf16 %v4244, %v4048
    %v5074 = vpack.c.bf16 %v4636, %v4440
    %v5075 = vpack.c.bf16 %v5028, %v4832
    %v5076 = vpack.c.bf16 %v3855, %v3659
    %v5077 = vpack.c.bf16 %v4247, %v4051
    %v5078 = vpack.c.bf16 %v4639, %v4443
    %v5079 = vpack.c.bf16 %v5031, %v4835
    %v5080 = vpack.c.bf16 %v3857, %v3661
    %v5081 = vpack.c.bf16 %v4249, %v4053
    %v5082 = vpack.c.bf16 %v4641, %v4445
    %v5083 = vpack.c.bf16 %v5033, %v4837
    %v5084 = vpack.c.bf16 %v3860, %v3664
    %v5085 = vpack.c.bf16 %v4252, %v4056
    %v5086 = vpack.c.bf16 %v4644, %v4448
    %v5087 = vpack.c.bf16 %v5036, %v4840
    %v5088 = vpack.c.bf16 %v3862, %v3666
    %v5089 = vpack.c.bf16 %v4254, %v4058
    %v5090 = vpack.c.bf16 %v4646, %v4450
    %v5091 = vpack.c.bf16 %v5038, %v4842
    %v5092 = vpack.c.bf16 %v3865, %v3669
    %v5093 = vpack.c.bf16 %v4257, %v4061
    %v5094 = vpack.c.bf16 %v4649, %v4453
    %v5095 = vpack.c.bf16 %v5041, %v4845
    %v5096 = vpack.c.bf16 %v3867, %v3671
    %v5097 = vpack.c.bf16 %v4259, %v4063
    %v5098 = vpack.c.bf16 %v4651, %v4455
    %v5099 = vpack.c.bf16 %v5043, %v4847
    %v5100 = vpack.c.bf16 %v3870, %v3674
    %v5101 = vpack.c.bf16 %v4262, %v4066
    %v5102 = vpack.c.bf16 %v4654, %v4458
    %v5103 = vpack.c.bf16 %v5046, %v4850
    %v5104 = vpack.c.bf16 %v3872, %v3676
    %v5105 = vpack.c.bf16 %v4264, %v4068
    %v5106 = vpack.c.bf16 %v4656, %v4460
    %v5107 = vpack.c.bf16 %v5048, %v4852
    %v5108 = vpack.c.bf16 %v3875, %v3679
    %v5109 = vpack.c.bf16 %v4267, %v4071
    %v5110 = vpack.c.bf16 %v4659, %v4463
    %v5111 = vpack.c.bf16 %v5051, %v4855
    %v5112 = vpack.c.bf16 %v3877, %v3681
    %v5113 = vpack.c.bf16 %v4269, %v4073
    %v5114 = vpack.c.bf16 %v4661, %v4465
    %v5115 = vpack.c.bf16 %v5053, %v4857
    %v5116 = vpack.c.bf16 %v3880, %v3684
    %v5117 = vpack.c.bf16 %v4272, %v4076
    %v5118 = vpack.c.bf16 %v4664, %v4468
    %v5119 = vpack.c.bf16 %v5056, %v4860
    %v5120 = vpack.c.bf16 %v3882, %v3686
    %v5121 = vpack.c.bf16 %v4274, %v4078
    %v5122 = vpack.c.bf16 %v4666, %v4470
    %v5123 = vpack.c.bf16 %v5058, %v4862
    %v5124 = vunpack.c.l.bf16 %v5060
    %v5125 = vunpack.c.h.bf16 %v5060
    %v5126 = vunpack.c.l.bf16 %v5061
    %v5127 = vunpack.c.h.bf16 %v5061
    %v5128 = vunpack.c.l.bf16 %v5062
    %v5129 = vunpack.c.h.bf16 %v5062
    %v5130 = vunpack.c.l.bf16 %v5063
    %v5131 = vunpack.c.h.bf16 %v5063
    %v5132 = vunpack.c.l.bf16 %v5064
    %v5133 = vunpack.c.h.bf16 %v5064
    %v5134 = vunpack.c.l.bf16 %v5065
    %v5135 = vunpack.c.h.bf16 %v5065
    %v5136 = vunpack.c.l.bf16 %v5066
    %v5137 = vunpack.c.h.bf16 %v5066
    %v5138 = vunpack.c.l.bf16 %v5067
    %v5139 = vunpack.c.h.bf16 %v5067
    %v5140 = vunpack.c.l.bf16 %v5068
    %v5141 = vunpack.c.h.bf16 %v5068
    %v5142 = vunpack.c.l.bf16 %v5069
    %v5143 = vunpack.c.h.bf16 %v5069
    %v5144 = vunpack.c.l.bf16 %v5070
    %v5145 = vunpack.c.h.bf16 %v5070
    %v5146 = vunpack.c.l.bf16 %v5071
    %v5147 = vunpack.c.h.bf16 %v5071
    %v5148 = vunpack.c.l.bf16 %v5072
    %v5149 = vunpack.c.h.bf16 %v5072
    %v5150 = vunpack.c.l.bf16 %v5073
    %v5151 = vunpack.c.h.bf16 %v5073
    %v5152 = vunpack.c.l.bf16 %v5074
    %v5153 = vunpack.c.h.bf16 %v5074
    %v5154 = vunpack.c.l.bf16 %v5075
    %v5155 = vunpack.c.h.bf16 %v5075
    %v5156 = vunpack.c.l.bf16 %v5076
    %v5157 = vunpack.c.h.bf16 %v5076
    %v5158 = vunpack.c.l.bf16 %v5077
    %v5159 = vunpack.c.h.bf16 %v5077
    %v5160 = vunpack.c.l.bf16 %v5078
    %v5161 = vunpack.c.h.bf16 %v5078
    %v5162 = vunpack.c.l.bf16 %v5079
    %v5163 = vunpack.c.h.bf16 %v5079
    %v5164 = vunpack.c.l.bf16 %v5080
    %v5165 = vunpack.c.h.bf16 %v5080
    %v5166 = vunpack.c.l.bf16 %v5081
    %v5167 = vunpack.c.h.bf16 %v5081
    %v5168 = vunpack.c.l.bf16 %v5082
    %v5169 = vunpack.c.h.bf16 %v5082
    %v5170 = vunpack.c.l.bf16 %v5083
    %v5171 = vunpack.c.h.bf16 %v5083
    %v5172 = vunpack.c.l.bf16 %v5084
    %v5173 = vunpack.c.h.bf16 %v5084
    %v5174 = vunpack.c.l.bf16 %v5085
    %v5175 = vunpack.c.h.bf16 %v5085
    %v5176 = vunpack.c.l.bf16 %v5086
    %v5177 = vunpack.c.h.bf16 %v5086
    %v5178 = vunpack.c.l.bf16 %v5087
    %v5179 = vunpack.c.h.bf16 %v5087
    %v5180 = vunpack.c.l.bf16 %v5088
    %v5181 = vunpack.c.h.bf16 %v5088
    %v5182 = vunpack.c.l.bf16 %v5089
    %v5183 = vunpack.c.h.bf16 %v5089
    %v5184 = vunpack.c.l.bf16 %v5090
    %v5185 = vunpack.c.h.bf16 %v5090
    %v5186 = vunpack.c.l.bf16 %v5091
    %v5187 = vunpack.c.h.bf16 %v5091
    %v5188 = vunpack.c.l.bf16 %v5092
    %v5189 = vunpack.c.h.bf16 %v5092
    %v5190 = vunpack.c.l.bf16 %v5093
    %v5191 = vunpack.c.h.bf16 %v5093
    %v5192 = vunpack.c.l.bf16 %v5094
    %v5193 = vunpack.c.h.bf16 %v5094
    %v5194 = vunpack.c.l.bf16 %v5095
    %v5195 = vunpack.c.h.bf16 %v5095
    %v5196 = vunpack.c.l.bf16 %v5096
    %v5197 = vunpack.c.h.bf16 %v5096
    %v5198 = vunpack.c.l.bf16 %v5097
    %v5199 = vunpack.c.h.bf16 %v5097
    %v5200 = vunpack.c.l.bf16 %v5098
    %v5201 = vunpack.c.h.bf16 %v5098
    %v5202 = vunpack.c.l.bf16 %v5099
    %v5203 = vunpack.c.h.bf16 %v5099
    %v5204 = vunpack.c.l.bf16 %v5100
    %v5205 = vunpack.c.h.bf16 %v5100
    %v5206 = vunpack.c.l.bf16 %v5101
    %v5207 = vunpack.c.h.bf16 %v5101
    %v5208 = vunpack.c.l.bf16 %v5102
    %v5209 = vunpack.c.h.bf16 %v5102
    %v5210 = vunpack.c.l.bf16 %v5103
    %v5211 = vunpack.c.h.bf16 %v5103
    %v5212 = vunpack.c.l.bf16 %v5104
    %v5213 = vunpack.c.h.bf16 %v5104
    %v5214 = vunpack.c.l.bf16 %v5105
    %v5215 = vunpack.c.h.bf16 %v5105
    %v5216 = vunpack.c.l.bf16 %v5106
    %v5217 = vunpack.c.h.bf16 %v5106
    %v5218 = vunpack.c.l.bf16 %v5107
    %v5219 = vunpack.c.h.bf16 %v5107
    %v5220 = vunpack.c.l.bf16 %v5108
    %v5221 = vunpack.c.h.bf16 %v5108
    %v5222 = vunpack.c.l.bf16 %v5109
    %v5223 = vunpack.c.h.bf16 %v5109
    %v5224 = vunpack.c.l.bf16 %v5110
    %v5225 = vunpack.c.h.bf16 %v5110
    %v5226 = vunpack.c.l.bf16 %v5111
    %v5227 = vunpack.c.h.bf16 %v5111
    %v5228 = vunpack.c.l.bf16 %v5112
    %v5229 = vunpack.c.h.bf16 %v5112
    %v5230 = vunpack.c.l.bf16 %v5113
    %v5231 = vunpack.c.h.bf16 %v5113
    %v5232 = vunpack.c.l.bf16 %v5114
    %v5233 = vunpack.c.h.bf16 %v5114
    %v5234 = vunpack.c.l.bf16 %v5115
    %v5235 = vunpack.c.h.bf16 %v5115
    %v5236 = vunpack.c.l.bf16 %v5116
    %v5237 = vunpack.c.h.bf16 %v5116
    %v5238 = vunpack.c.l.bf16 %v5117
    %v5239 = vunpack.c.h.bf16 %v5117
    %v5240 = vunpack.c.l.bf16 %v5118
    %v5241 = vunpack.c.h.bf16 %v5118
    %v5242 = vunpack.c.l.bf16 %v5119
    %v5243 = vunpack.c.h.bf16 %v5119
    %v5244 = vunpack.c.l.bf16 %v5120
    %v5245 = vunpack.c.h.bf16 %v5120
    %v5246 = vunpack.c.l.bf16 %v5121
    %v5247 = vunpack.c.h.bf16 %v5121
    %v5248 = vunpack.c.l.bf16 %v5122
    %v5249 = vunpack.c.h.bf16 %v5122
    %v5250 = vunpack.c.l.bf16 %v5123
    %v5251 = vunpack.c.h.bf16 %v5123
    %vm5252 = vcmp.gt.f32.partialorder %v5124, 0.0
    %vm5253 = vcmp.gt.f32.partialorder %v5125, 0.0
    %vm5254 = vcmp.gt.f32.partialorder %v5126, 0.0
    %vm5255 = vcmp.gt.f32.partialorder %v5127, 0.0
    %vm5256 = vcmp.gt.f32.partialorder %v5128, 0.0
    %vm5257 = vcmp.gt.f32.partialorder %v5129, 0.0
    %vm5258 = vcmp.gt.f32.partialorder %v5130, 0.0
    %vm5259 = vcmp.gt.f32.partialorder %v5131, 0.0
    %vm5260 = vcmp.gt.f32.partialorder %v5132, 0.0
    %vm5261 = vcmp.gt.f32.partialorder %v5133, 0.0
    %vm5262 = vcmp.gt.f32.partialorder %v5134, 0.0
    %vm5263 = vcmp.gt.f32.partialorder %v5135, 0.0
    %vm5264 = vcmp.gt.f32.partialorder %v5136, 0.0
    %vm5265 = vcmp.gt.f32.partialorder %v5137, 0.0
    %vm5266 = vcmp.gt.f32.partialorder %v5138, 0.0
    %vm5267 = vcmp.gt.f32.partialorder %v5139, 0.0
    %vm5268 = vcmp.gt.f32.partialorder %v5140, 0.0
    %vm5269 = vcmp.gt.f32.partialorder %v5141, 0.0
    %vm5270 = vcmp.gt.f32.partialorder %v5142, 0.0
    %vm5271 = vcmp.gt.f32.partialorder %v5143, 0.0
    %vm5272 = vcmp.gt.f32.partialorder %v5144, 0.0
    %vm5273 = vcmp.gt.f32.partialorder %v5145, 0.0
    %vm5274 = vcmp.gt.f32.partialorder %v5146, 0.0
    %vm5275 = vcmp.gt.f32.partialorder %v5147, 0.0
    %vm5276 = vcmp.gt.f32.partialorder %v5148, 0.0
    %vm5277 = vcmp.gt.f32.partialorder %v5149, 0.0
    %vm5278 = vcmp.gt.f32.partialorder %v5150, 0.0
    %vm5279 = vcmp.gt.f32.partialorder %v5151, 0.0
    %vm5280 = vcmp.gt.f32.partialorder %v5152, 0.0
    %vm5281 = vcmp.gt.f32.partialorder %v5153, 0.0
    %vm5282 = vcmp.gt.f32.partialorder %v5154, 0.0
    %vm5283 = vcmp.gt.f32.partialorder %v5155, 0.0
    %vm5284 = vcmp.gt.f32.partialorder %v5156, 0.0
    %vm5285 = vcmp.gt.f32.partialorder %v5157, 0.0
    %vm5286 = vcmp.gt.f32.partialorder %v5158, 0.0
    %vm5287 = vcmp.gt.f32.partialorder %v5159, 0.0
    %vm5288 = vcmp.gt.f32.partialorder %v5160, 0.0
    %vm5289 = vcmp.gt.f32.partialorder %v5161, 0.0
    %vm5290 = vcmp.gt.f32.partialorder %v5162, 0.0
    %vm5291 = vcmp.gt.f32.partialorder %v5163, 0.0
    %vm5292 = vcmp.gt.f32.partialorder %v5164, 0.0
    %vm5293 = vcmp.gt.f32.partialorder %v5165, 0.0
    %vm5294 = vcmp.gt.f32.partialorder %v5166, 0.0
    %vm5295 = vcmp.gt.f32.partialorder %v5167, 0.0
    %vm5296 = vcmp.gt.f32.partialorder %v5168, 0.0
    %vm5297 = vcmp.gt.f32.partialorder %v5169, 0.0
    %vm5298 = vcmp.gt.f32.partialorder %v5170, 0.0
    %vm5299 = vcmp.gt.f32.partialorder %v5171, 0.0
    %vm5300 = vcmp.gt.f32.partialorder %v5172, 0.0
    %vm5301 = vcmp.gt.f32.partialorder %v5173, 0.0
    %vm5302 = vcmp.gt.f32.partialorder %v5174, 0.0
    %vm5303 = vcmp.gt.f32.partialorder %v5175, 0.0
    %vm5304 = vcmp.gt.f32.partialorder %v5176, 0.0
    %vm5305 = vcmp.gt.f32.partialorder %v5177, 0.0
    %vm5306 = vcmp.gt.f32.partialorder %v5178, 0.0
    %vm5307 = vcmp.gt.f32.partialorder %v5179, 0.0
    %vm5308 = vcmp.gt.f32.partialorder %v5180, 0.0
    %vm5309 = vcmp.gt.f32.partialorder %v5181, 0.0
    %vm5310 = vcmp.gt.f32.partialorder %v5182, 0.0
    %vm5311 = vcmp.gt.f32.partialorder %v5183, 0.0
    %vm5312 = vcmp.gt.f32.partialorder %v5184, 0.0
    %vm5313 = vcmp.gt.f32.partialorder %v5185, 0.0
    %vm5314 = vcmp.gt.f32.partialorder %v5186, 0.0
    %vm5315 = vcmp.gt.f32.partialorder %v5187, 0.0
    %vm5316 = vcmp.gt.f32.partialorder %v5188, 0.0
    %vm5317 = vcmp.gt.f32.partialorder %v5189, 0.0
    %vm5318 = vcmp.gt.f32.partialorder %v5190, 0.0
    %vm5319 = vcmp.gt.f32.partialorder %v5191, 0.0
    %vm5320 = vcmp.gt.f32.partialorder %v5192, 0.0
    %vm5321 = vcmp.gt.f32.partialorder %v5193, 0.0
    %vm5322 = vcmp.gt.f32.partialorder %v5194, 0.0
    %vm5323 = vcmp.gt.f32.partialorder %v5195, 0.0
    %vm5324 = vcmp.gt.f32.partialorder %v5196, 0.0
    %vm5325 = vcmp.gt.f32.partialorder %v5197, 0.0
    %vm5326 = vcmp.gt.f32.partialorder %v5198, 0.0
    %vm5327 = vcmp.gt.f32.partialorder %v5199, 0.0
    %vm5328 = vcmp.gt.f32.partialorder %v5200, 0.0
    %vm5329 = vcmp.gt.f32.partialorder %v5201, 0.0
    %vm5330 = vcmp.gt.f32.partialorder %v5202, 0.0
    %vm5331 = vcmp.gt.f32.partialorder %v5203, 0.0
    %vm5332 = vcmp.gt.f32.partialorder %v5204, 0.0
    %vm5333 = vcmp.gt.f32.partialorder %v5205, 0.0
    %vm5334 = vcmp.gt.f32.partialorder %v5206, 0.0
    %vm5335 = vcmp.gt.f32.partialorder %v5207, 0.0
    %vm5336 = vcmp.gt.f32.partialorder %v5208, 0.0
    %vm5337 = vcmp.gt.f32.partialorder %v5209, 0.0
    %vm5338 = vcmp.gt.f32.partialorder %v5210, 0.0
    %vm5339 = vcmp.gt.f32.partialorder %v5211, 0.0
    %vm5340 = vcmp.gt.f32.partialorder %v5212, 0.0
    %vm5341 = vcmp.gt.f32.partialorder %v5213, 0.0
    %vm5342 = vcmp.gt.f32.partialorder %v5214, 0.0
    %vm5343 = vcmp.gt.f32.partialorder %v5215, 0.0
    %vm5344 = vcmp.gt.f32.partialorder %v5216, 0.0
    %vm5345 = vcmp.gt.f32.partialorder %v5217, 0.0
    %vm5346 = vcmp.gt.f32.partialorder %v5218, 0.0
    %vm5347 = vcmp.gt.f32.partialorder %v5219, 0.0
    %vm5348 = vcmp.gt.f32.partialorder %v5220, 0.0
    %vm5349 = vcmp.gt.f32.partialorder %v5221, 0.0
    %vm5350 = vcmp.gt.f32.partialorder %v5222, 0.0
    %vm5351 = vcmp.gt.f32.partialorder %v5223, 0.0
    %vm5352 = vcmp.gt.f32.partialorder %v5224, 0.0
    %vm5353 = vcmp.gt.f32.partialorder %v5225, 0.0
    %vm5354 = vcmp.gt.f32.partialorder %v5226, 0.0
    %vm5355 = vcmp.gt.f32.partialorder %v5227, 0.0
    %vm5356 = vcmp.gt.f32.partialorder %v5228, 0.0
    %vm5357 = vcmp.gt.f32.partialorder %v5229, 0.0
    %vm5358 = vcmp.gt.f32.partialorder %v5230, 0.0
    %vm5359 = vcmp.gt.f32.partialorder %v5231, 0.0
    %vm5360 = vcmp.gt.f32.partialorder %v5232, 0.0
    %vm5361 = vcmp.gt.f32.partialorder %v5233, 0.0
    %vm5362 = vcmp.gt.f32.partialorder %v5234, 0.0
    %vm5363 = vcmp.gt.f32.partialorder %v5235, 0.0
    %vm5364 = vcmp.gt.f32.partialorder %v5236, 0.0
    %vm5365 = vcmp.gt.f32.partialorder %v5237, 0.0
    %vm5366 = vcmp.gt.f32.partialorder %v5238, 0.0
    %vm5367 = vcmp.gt.f32.partialorder %v5239, 0.0
    %vm5368 = vcmp.gt.f32.partialorder %v5240, 0.0
    %vm5369 = vcmp.gt.f32.partialorder %v5241, 0.0
    %vm5370 = vcmp.gt.f32.partialorder %v5242, 0.0
    %vm5371 = vcmp.gt.f32.partialorder %v5243, 0.0
    %vm5372 = vcmp.gt.f32.partialorder %v5244, 0.0
    %vm5373 = vcmp.gt.f32.partialorder %v5245, 0.0
    %vm5374 = vcmp.gt.f32.partialorder %v5246, 0.0
    %vm5375 = vcmp.gt.f32.partialorder %v5247, 0.0
    %vm5376 = vcmp.gt.f32.partialorder %v5248, 0.0
    %vm5377 = vcmp.gt.f32.partialorder %v5249, 0.0
    %vm5378 = vcmp.gt.f32.partialorder %v5250, 0.0
    %vm5379 = vcmp.gt.f32.partialorder %v5251, 0.0
    %v5380 = vmul.f32 %v5124, 0.20019531
    %v5381 = vmul.f32 %v5125, 0.20019531
    %v5382 = vmul.f32 %v5126, 0.20019531
    %v5383 = vmul.f32 %v5127, 0.20019531
    %v5384 = vmul.f32 %v5128, 0.20019531
    %v5385 = vmul.f32 %v5129, 0.20019531
    %v5386 = vmul.f32 %v5130, 0.20019531
    %v5387 = vmul.f32 %v5131, 0.20019531
    %v5388 = vmul.f32 %v5132, 0.20019531
    %v5389 = vmul.f32 %v5133, 0.20019531
    %v5390 = vmul.f32 %v5134, 0.20019531
    %v5391 = vmul.f32 %v5135, 0.20019531
    %v5392 = vmul.f32 %v5136, 0.20019531
    %v5393 = vmul.f32 %v5137, 0.20019531
    %v5394 = vmul.f32 %v5138, 0.20019531
    %v5395 = vmul.f32 %v5139, 0.20019531
    %v5396 = vmul.f32 %v5140, 0.20019531
    %v5397 = vmul.f32 %v5141, 0.20019531
    %v5398 = vmul.f32 %v5142, 0.20019531
    %v5399 = vmul.f32 %v5143, 0.20019531
    %v5400 = vmul.f32 %v5144, 0.20019531
    %v5401 = vmul.f32 %v5145, 0.20019531
    %v5402 = vmul.f32 %v5146, 0.20019531
    %v5403 = vmul.f32 %v5147, 0.20019531
    %v5404 = vmul.f32 %v5148, 0.20019531
    %v5405 = vmul.f32 %v5149, 0.20019531
    %v5406 = vmul.f32 %v5150, 0.20019531
    %v5407 = vmul.f32 %v5151, 0.20019531
    %v5408 = vmul.f32 %v5152, 0.20019531
    %v5409 = vmul.f32 %v5153, 0.20019531
    %v5410 = vmul.f32 %v5154, 0.20019531
    %v5411 = vmul.f32 %v5155, 0.20019531
    %v5412 = vmul.f32 %v5156, 0.20019531
    %v5413 = vmul.f32 %v5157, 0.20019531
    %v5414 = vmul.f32 %v5158, 0.20019531
    %v5415 = vmul.f32 %v5159, 0.20019531
    %v5416 = vmul.f32 %v5160, 0.20019531
    %v5417 = vmul.f32 %v5161, 0.20019531
    %v5418 = vmul.f32 %v5162, 0.20019531
    %v5419 = vmul.f32 %v5163, 0.20019531
    %v5420 = vmul.f32 %v5164, 0.20019531
    %v5421 = vmul.f32 %v5165, 0.20019531
    %v5422 = vmul.f32 %v5166, 0.20019531
    %v5423 = vmul.f32 %v5167, 0.20019531
    %v5424 = vmul.f32 %v5168, 0.20019531
    %v5425 = vmul.f32 %v5169, 0.20019531
    %v5426 = vmul.f32 %v5170, 0.20019531
    %v5427 = vmul.f32 %v5171, 0.20019531
    %v5428 = vmul.f32 %v5172, 0.20019531
    %v5429 = vmul.f32 %v5173, 0.20019531
    %v5430 = vmul.f32 %v5174, 0.20019531
    %v5431 = vmul.f32 %v5175, 0.20019531
    %v5432 = vmul.f32 %v5176, 0.20019531
    %v5433 = vmul.f32 %v5177, 0.20019531
    %v5434 = vmul.f32 %v5178, 0.20019531
    %v5435 = vmul.f32 %v5179, 0.20019531
    %v5436 = vmul.f32 %v5180, 0.20019531
    %v5437 = vmul.f32 %v5181, 0.20019531
    %v5438 = vmul.f32 %v5182, 0.20019531
    %v5439 = vmul.f32 %v5183, 0.20019531
    %v5440 = vmul.f32 %v5184, 0.20019531
    %v5441 = vmul.f32 %v5185, 0.20019531
    %v5442 = vmul.f32 %v5186, 0.20019531
    %v5443 = vmul.f32 %v5187, 0.20019531
    %v5444 = vmul.f32 %v5188, 0.20019531
    %v5445 = vmul.f32 %v5189, 0.20019531
    %v5446 = vmul.f32 %v5190, 0.20019531
    %v5447 = vmul.f32 %v5191, 0.20019531
    %v5448 = vmul.f32 %v5192, 0.20019531
    %v5449 = vmul.f32 %v5193, 0.20019531
    %v5450 = vmul.f32 %v5194, 0.20019531
    %v5451 = vmul.f32 %v5195, 0.20019531
    %v5452 = vmul.f32 %v5196, 0.20019531
    %v5453 = vmul.f32 %v5197, 0.20019531
    %v5454 = vmul.f32 %v5198, 0.20019531
    %v5455 = vmul.f32 %v5199, 0.20019531
    %v5456 = vmul.f32 %v5200, 0.20019531
    %v5457 = vmul.f32 %v5201, 0.20019531
    %v5458 = vmul.f32 %v5202, 0.20019531
    %v5459 = vmul.f32 %v5203, 0.20019531
    %v5460 = vmul.f32 %v5204, 0.20019531
    %v5461 = vmul.f32 %v5205, 0.20019531
    %v5462 = vmul.f32 %v5206, 0.20019531
    %v5463 = vmul.f32 %v5207, 0.20019531
    %v5464 = vmul.f32 %v5208, 0.20019531
    %v5465 = vmul.f32 %v5209, 0.20019531
    %v5466 = vmul.f32 %v5210, 0.20019531
    %v5467 = vmul.f32 %v5211, 0.20019531
    %v5468 = vmul.f32 %v5212, 0.20019531
    %v5469 = vmul.f32 %v5213, 0.20019531
    %v5470 = vmul.f32 %v5214, 0.20019531
    %v5471 = vmul.f32 %v5215, 0.20019531
    %v5472 = vmul.f32 %v5216, 0.20019531
    %v5473 = vmul.f32 %v5217, 0.20019531
    %v5474 = vmul.f32 %v5218, 0.20019531
    %v5475 = vmul.f32 %v5219, 0.20019531
    %v5476 = vmul.f32 %v5220, 0.20019531
    %v5477 = vmul.f32 %v5221, 0.20019531
    %v5478 = vmul.f32 %v5222, 0.20019531
    %v5479 = vmul.f32 %v5223, 0.20019531
    %v5480 = vmul.f32 %v5224, 0.20019531
    %v5481 = vmul.f32 %v5225, 0.20019531
    %v5482 = vmul.f32 %v5226, 0.20019531
    %v5483 = vmul.f32 %v5227, 0.20019531
    %v5484 = vmul.f32 %v5228, 0.20019531
    %v5485 = vmul.f32 %v5229, 0.20019531
    %v5486 = vmul.f32 %v5230, 0.20019531
    %v5487 = vmul.f32 %v5231, 0.20019531
    %v5488 = vmul.f32 %v5232, 0.20019531
    %v5489 = vmul.f32 %v5233, 0.20019531
    %v5490 = vmul.f32 %v5234, 0.20019531
    %v5491 = vmul.f32 %v5235, 0.20019531
    %v5492 = vmul.f32 %v5236, 0.20019531
    %v5493 = vmul.f32 %v5237, 0.20019531
    %v5494 = vmul.f32 %v5238, 0.20019531
    %v5495 = vmul.f32 %v5239, 0.20019531
    %v5496 = vmul.f32 %v5240, 0.20019531
    %v5497 = vmul.f32 %v5241, 0.20019531
    %v5498 = vmul.f32 %v5242, 0.20019531
    %v5499 = vmul.f32 %v5243, 0.20019531
    %v5500 = vmul.f32 %v5244, 0.20019531
    %v5501 = vmul.f32 %v5245, 0.20019531
    %v5502 = vmul.f32 %v5246, 0.20019531
    %v5503 = vmul.f32 %v5247, 0.20019531
    %v5504 = vmul.f32 %v5248, 0.20019531
    %v5505 = vmul.f32 %v5249, 0.20019531
    %v5506 = vmul.f32 %v5250, 0.20019531
    %v5507 = vmul.f32 %v5251, 0.20019531
    %v5508 = vpack.c.bf16 %v5381, %v5380
    %v5509 = vpack.c.bf16 %v5383, %v5382
    %v5510 = vpack.c.bf16 %v5385, %v5384
    %v5511 = vpack.c.bf16 %v5387, %v5386
    %v5512 = vpack.c.bf16 %v5389, %v5388
    %v5513 = vpack.c.bf16 %v5391, %v5390
    %v5514 = vpack.c.bf16 %v5393, %v5392
    %v5515 = vpack.c.bf16 %v5395, %v5394
    %v5516 = vpack.c.bf16 %v5397, %v5396
    %v5517 = vpack.c.bf16 %v5399, %v5398
    %v5518 = vpack.c.bf16 %v5401, %v5400
    %v5519 = vpack.c.bf16 %v5403, %v5402
    %v5520 = vpack.c.bf16 %v5405, %v5404
    %v5521 = vpack.c.bf16 %v5407, %v5406
    %v5522 = vpack.c.bf16 %v5409, %v5408
    %v5523 = vpack.c.bf16 %v5411, %v5410
    %v5524 = vpack.c.bf16 %v5413, %v5412
    %v5525 = vpack.c.bf16 %v5415, %v5414
    %v5526 = vpack.c.bf16 %v5417, %v5416
    %v5527 = vpack.c.bf16 %v5419, %v5418
    %v5528 = vpack.c.bf16 %v5421, %v5420
    %v5529 = vpack.c.bf16 %v5423, %v5422
    %v5530 = vpack.c.bf16 %v5425, %v5424
    %v5531 = vpack.c.bf16 %v5427, %v5426
    %v5532 = vpack.c.bf16 %v5429, %v5428
    %v5533 = vpack.c.bf16 %v5431, %v5430
    %v5534 = vpack.c.bf16 %v5433, %v5432
    %v5535 = vpack.c.bf16 %v5435, %v5434
    %v5536 = vpack.c.bf16 %v5437, %v5436
    %v5537 = vpack.c.bf16 %v5439, %v5438
    %v5538 = vpack.c.bf16 %v5441, %v5440
    %v5539 = vpack.c.bf16 %v5443, %v5442
    %v5540 = vpack.c.bf16 %v5445, %v5444
    %v5541 = vpack.c.bf16 %v5447, %v5446
    %v5542 = vpack.c.bf16 %v5449, %v5448
    %v5543 = vpack.c.bf16 %v5451, %v5450
    %v5544 = vpack.c.bf16 %v5453, %v5452
    %v5545 = vpack.c.bf16 %v5455, %v5454
    %v5546 = vpack.c.bf16 %v5457, %v5456
    %v5547 = vpack.c.bf16 %v5459, %v5458
    %v5548 = vpack.c.bf16 %v5461, %v5460
    %v5549 = vpack.c.bf16 %v5463, %v5462
    %v5550 = vpack.c.bf16 %v5465, %v5464
    %v5551 = vpack.c.bf16 %v5467, %v5466
    %v5552 = vpack.c.bf16 %v5469, %v5468
    %v5553 = vpack.c.bf16 %v5471, %v5470
    %v5554 = vpack.c.bf16 %v5473, %v5472
    %v5555 = vpack.c.bf16 %v5475, %v5474
    %v5556 = vpack.c.bf16 %v5477, %v5476
    %v5557 = vpack.c.bf16 %v5479, %v5478
    %v5558 = vpack.c.bf16 %v5481, %v5480
    %v5559 = vpack.c.bf16 %v5483, %v5482
    %v5560 = vpack.c.bf16 %v5485, %v5484
    %v5561 = vpack.c.bf16 %v5487, %v5486
    %v5562 = vpack.c.bf16 %v5489, %v5488
    %v5563 = vpack.c.bf16 %v5491, %v5490
    %v5564 = vpack.c.bf16 %v5493, %v5492
    %v5565 = vpack.c.bf16 %v5495, %v5494
    %v5566 = vpack.c.bf16 %v5497, %v5496
    %v5567 = vpack.c.bf16 %v5499, %v5498
    %v5568 = vpack.c.bf16 %v5501, %v5500
    %v5569 = vpack.c.bf16 %v5503, %v5502
    %v5570 = vpack.c.bf16 %v5505, %v5504
    %v5571 = vpack.c.bf16 %v5507, %v5506
    %vm5572 = vmpackc.low %vm5253, %vm5252
    %vm5573 = vmpackc.low %vm5255, %vm5254
    %vm5574 = vmpackc.low %vm5257, %vm5256
    %vm5575 = vmpackc.low %vm5259, %vm5258
    %vm5576 = vmpackc.low %vm5261, %vm5260
    %vm5577 = vmpackc.low %vm5263, %vm5262
    %vm5578 = vmpackc.low %vm5265, %vm5264
    %vm5579 = vmpackc.low %vm5267, %vm5266
    %vm5580 = vmpackc.low %vm5269, %vm5268
    %vm5581 = vmpackc.low %vm5271, %vm5270
    %vm5582 = vmpackc.low %vm5273, %vm5272
    %vm5583 = vmpackc.low %vm5275, %vm5274
    %vm5584 = vmpackc.low %vm5277, %vm5276
    %vm5585 = vmpackc.low %vm5279, %vm5278
    %vm5586 = vmpackc.low %vm5281, %vm5280
    %vm5587 = vmpackc.low %vm5283, %vm5282
    %vm5588 = vmpackc.low %vm5285, %vm5284
    %vm5589 = vmpackc.low %vm5287, %vm5286
    %vm5590 = vmpackc.low %vm5289, %vm5288
    %vm5591 = vmpackc.low %vm5291, %vm5290
    %vm5592 = vmpackc.low %vm5293, %vm5292
    %vm5593 = vmpackc.low %vm5295, %vm5294
    %vm5594 = vmpackc.low %vm5297, %vm5296
    %vm5595 = vmpackc.low %vm5299, %vm5298
    %vm5596 = vmpackc.low %vm5301, %vm5300
    %vm5597 = vmpackc.low %vm5303, %vm5302
    %vm5598 = vmpackc.low %vm5305, %vm5304
    %vm5599 = vmpackc.low %vm5307, %vm5306
    %vm5600 = vmpackc.low %vm5309, %vm5308
    %vm5601 = vmpackc.low %vm5311, %vm5310
    %vm5602 = vmpackc.low %vm5313, %vm5312
    %vm5603 = vmpackc.low %vm5315, %vm5314
    %vm5604 = vmpackc.low %vm5317, %vm5316
    %vm5605 = vmpackc.low %vm5319, %vm5318
    %vm5606 = vmpackc.low %vm5321, %vm5320
    %vm5607 = vmpackc.low %vm5323, %vm5322
    %vm5608 = vmpackc.low %vm5325, %vm5324
    %vm5609 = vmpackc.low %vm5327, %vm5326
    %vm5610 = vmpackc.low %vm5329, %vm5328
    %vm5611 = vmpackc.low %vm5331, %vm5330
    %vm5612 = vmpackc.low %vm5333, %vm5332
    %vm5613 = vmpackc.low %vm5335, %vm5334
    %vm5614 = vmpackc.low %vm5337, %vm5336
    %vm5615 = vmpackc.low %vm5339, %vm5338
    %vm5616 = vmpackc.low %vm5341, %vm5340
    %vm5617 = vmpackc.low %vm5343, %vm5342
    %vm5618 = vmpackc.low %vm5345, %vm5344
    %vm5619 = vmpackc.low %vm5347, %vm5346
    %vm5620 = vmpackc.low %vm5349, %vm5348
    %vm5621 = vmpackc.low %vm5351, %vm5350
    %vm5622 = vmpackc.low %vm5353, %vm5352
    %vm5623 = vmpackc.low %vm5355, %vm5354
    %vm5624 = vmpackc.low %vm5357, %vm5356
    %vm5625 = vmpackc.low %vm5359, %vm5358
    %vm5626 = vmpackc.low %vm5361, %vm5360
    %vm5627 = vmpackc.low %vm5363, %vm5362
    %vm5628 = vmpackc.low %vm5365, %vm5364
    %vm5629 = vmpackc.low %vm5367, %vm5366
    %vm5630 = vmpackc.low %vm5369, %vm5368
    %vm5631 = vmpackc.low %vm5371, %vm5370
    %vm5632 = vmpackc.low %vm5373, %vm5372
    %vm5633 = vmpackc.low %vm5375, %vm5374
    %vm5634 = vmpackc.low %vm5377, %vm5376
    %vm5635 = vmpackc.low %vm5379, %vm5378
    %v5636 = vsel %vm5572, %v5060, %v5508
    %v5637 = vsel %vm5573, %v5061, %v5509
    %v5638 = vsel %vm5574, %v5062, %v5510
    %v5639 = vsel %vm5575, %v5063, %v5511
    %v5640 = vsel %vm5576, %v5064, %v5512
    %v5641 = vsel %vm5577, %v5065, %v5513
    %v5642 = vsel %vm5578, %v5066, %v5514
    %v5643 = vsel %vm5579, %v5067, %v5515
    %v5644 = vsel %vm5580, %v5068, %v5516
    %v5645 = vsel %vm5581, %v5069, %v5517
    %v5646 = vsel %vm5582, %v5070, %v5518
    %v5647 = vsel %vm5583, %v5071, %v5519
    %v5648 = vsel %vm5584, %v5072, %v5520
    %v5649 = vsel %vm5585, %v5073, %v5521
    %v5650 = vsel %vm5586, %v5074, %v5522
    %v5651 = vsel %vm5587, %v5075, %v5523
    %v5652 = vsel %vm5588, %v5076, %v5524
    %v5653 = vsel %vm5589, %v5077, %v5525
    %v5654 = vsel %vm5590, %v5078, %v5526
    %v5655 = vsel %vm5591, %v5079, %v5527
    %v5656 = vsel %vm5592, %v5080, %v5528
    %v5657 = vsel %vm5593, %v5081, %v5529
    %v5658 = vsel %vm5594, %v5082, %v5530
    %v5659 = vsel %vm5595, %v5083, %v5531
    %v5660 = vsel %vm5596, %v5084, %v5532
    %v5661 = vsel %vm5597, %v5085, %v5533
    %v5662 = vsel %vm5598, %v5086, %v5534
    %v5663 = vsel %vm5599, %v5087, %v5535
    %v5664 = vsel %vm5600, %v5088, %v5536
    %v5665 = vsel %vm5601, %v5089, %v5537
    %v5666 = vsel %vm5602, %v5090, %v5538
    %v5667 = vsel %vm5603, %v5091, %v5539
    %v5668 = vsel %vm5604, %v5092, %v5540
    %v5669 = vsel %vm5605, %v5093, %v5541
    %v5670 = vsel %vm5606, %v5094, %v5542
    %v5671 = vsel %vm5607, %v5095, %v5543
    %v5672 = vsel %vm5608, %v5096, %v5544
    %v5673 = vsel %vm5609, %v5097, %v5545
    %v5674 = vsel %vm5610, %v5098, %v5546
    %v5675 = vsel %vm5611, %v5099, %v5547
    %v5676 = vsel %vm5612, %v5100, %v5548
    %v5677 = vsel %vm5613, %v5101, %v5549
    %v5678 = vsel %vm5614, %v5102, %v5550
    %v5679 = vsel %vm5615, %v5103, %v5551
    %v5680 = vsel %vm5616, %v5104, %v5552
    %v5681 = vsel %vm5617, %v5105, %v5553
    %v5682 = vsel %vm5618, %v5106, %v5554
    %v5683 = vsel %vm5619, %v5107, %v5555
    %v5684 = vsel %vm5620, %v5108, %v5556
    %v5685 = vsel %vm5621, %v5109, %v5557
    %v5686 = vsel %vm5622, %v5110, %v5558
    %v5687 = vsel %vm5623, %v5111, %v5559
    %v5688 = vsel %vm5624, %v5112, %v5560
    %v5689 = vsel %vm5625, %v5113, %v5561
    %v5690 = vsel %vm5626, %v5114, %v5562
    %v5691 = vsel %vm5627, %v5115, %v5563
    %v5692 = vsel %vm5628, %v5116, %v5564
    %v5693 = vsel %vm5629, %v5117, %v5565
    %v5694 = vsel %vm5630, %v5118, %v5566
    %v5695 = vsel %vm5631, %v5119, %v5567
    %v5696 = vsel %vm5632, %v5120, %v5568
    %v5697 = vsel %vm5633, %v5121, %v5569
    %v5698 = vsel %vm5634, %v5122, %v5570
    %v5699 = vsel %vm5635, %v5123, %v5571
    %v5700 = vld [vmem:[#allocation10] sm:$0xff]
    %v5701 = vld [vmem:[#allocation10 + $0x8] sm:$0xff]
    %v5702 = vld [vmem:[#allocation10 + $0x10] sm:$0xff]
    %v5703 = vld [vmem:[#allocation10 + $0x18] sm:$0xf]
    %v5704 = vld [vmem:[#allocation10 + $0x1c] sm:$0xff]
    %v5705 = vld [vmem:[#allocation10 + $0x24] sm:$0xff]
    %v5706 = vld [vmem:[#allocation10 + $0x2c] sm:$0xff]
    %v5707 = vld [vmem:[#allocation10 + $0x34] sm:$0xf]
    %v5708 = vld [vmem:[#allocation10 + $0x38] sm:$0xff]
    %v5709 = vld [vmem:[#allocation10 + $0x40] sm:$0xff]
    %v5710 = vld [vmem:[#allocation10 + $0x48] sm:$0xff]
    %v5711 = vld [vmem:[#allocation10 + $0x50] sm:$0xf]
    %v5712 = vld [vmem:[#allocation10 + $0x54] sm:$0xff]
    %v5713 = vld [vmem:[#allocation10 + $0x5c] sm:$0xff]
    %v5714 = vld [vmem:[#allocation10 + $0x64] sm:$0xff]
    %v5715 = vld [vmem:[#allocation10 + $0x6c] sm:$0xf]
    %v5716 = vld [vmem:[#allocation10 + $0x70] sm:$0xff]
    %v5717 = vld [vmem:[#allocation10 + $0x78] sm:$0xff]
    %v5718 = vld [vmem:[#allocation10 + $0x80] sm:$0xff]
    %v5719 = vld [vmem:[#allocation10 + $0x88] sm:$0xf]
    %v5720 = vld [vmem:[#allocation10 + $0x8c] sm:$0xff]
    %v5721 = vld [vmem:[#allocation10 + $0x94] sm:$0xff]
    %v5722 = vld [vmem:[#allocation10 + $0x9c] sm:$0xff]
    %v5723 = vld [vmem:[#allocation10 + $0xa4] sm:$0xf]
    %v5724 = vld [vmem:[#allocation10 + $0xa8] sm:$0xff]
    %v5725 = vld [vmem:[#allocation10 + $0xb0] sm:$0xff]
    %v5726 = vld [vmem:[#allocation10 + $0xb8] sm:$0xff]
    %v5727 = vld [vmem:[#allocation10 + $0xc0] sm:$0xf]
    %v5728 = vld [vmem:[#allocation10 + $0xc4] sm:$0xff]
    %v5729 = vld [vmem:[#allocation10 + $0xcc] sm:$0xff]
    %v5730 = vld [vmem:[#allocation10 + $0xd4] sm:$0xff]
    %v5731 = vld [vmem:[#allocation10 + $0xdc] sm:$0xf]
    %v5732 = vld [vmem:[#allocation10 + $0xe0] sm:$0xff]
    %v5733 = vld [vmem:[#allocation10 + $0xe8] sm:$0xff]
    %v5734 = vld [vmem:[#allocation10 + $0xf0] sm:$0xff]
    %v5735 = vld [vmem:[#allocation10 + $0xf8] sm:$0xf]
    %v5736 = vld [vmem:[#allocation10 + $0xfc] sm:$0xff]
    %v5737 = vld [vmem:[#allocation10 + $0x104] sm:$0xff]
    %v5738 = vld [vmem:[#allocation10 + $0x10c] sm:$0xff]
    %v5739 = vld [vmem:[#allocation10 + $0x114] sm:$0xf]
    %v5740 = vld [vmem:[#allocation10 + $0x118] sm:$0xff]
    %v5741 = vld [vmem:[#allocation10 + $0x120] sm:$0xff]
    %v5742 = vld [vmem:[#allocation10 + $0x128] sm:$0xff]
    %v5743 = vld [vmem:[#allocation10 + $0x130] sm:$0xf]
    %v5744 = vld [vmem:[#allocation10 + $0x134] sm:$0xff]
    %v5745 = vld [vmem:[#allocation10 + $0x13c] sm:$0xff]
    %v5746 = vld [vmem:[#allocation10 + $0x144] sm:$0xff]
    %v5747 = vld [vmem:[#allocation10 + $0x14c] sm:$0xf]
    %v5748 = vld [vmem:[#allocation10 + $0x150] sm:$0xff]
    %v5749 = vld [vmem:[#allocation10 + $0x158] sm:$0xff]
    %v5750 = vld [vmem:[#allocation10 + $0x160] sm:$0xff]
    %v5751 = vld [vmem:[#allocation10 + $0x168] sm:$0xf]
    %v5752 = vld [vmem:[#allocation10 + $0x16c] sm:$0xff]
    %v5753 = vld [vmem:[#allocation10 + $0x174] sm:$0xff]
    %v5754 = vld [vmem:[#allocation10 + $0x17c] sm:$0xff]
    %v5755 = vld [vmem:[#allocation10 + $0x184] sm:$0xf]
    %v5756 = vld [vmem:[#allocation10 + $0x188] sm:$0xff]
    %v5757 = vld [vmem:[#allocation10 + $0x190] sm:$0xff]
    %v5758 = vld [vmem:[#allocation10 + $0x198] sm:$0xff]
    %v5759 = vld [vmem:[#allocation10 + $0x1a0] sm:$0xf]
    %v5760 = vld [vmem:[#allocation10 + $0x1a4] sm:$0xff]
    %v5761 = vld [vmem:[#allocation10 + $0x1ac] sm:$0xff]
    %v5762 = vld [vmem:[#allocation10 + $0x1b4] sm:$0xff]
    %v5763 = vld [vmem:[#allocation10 + $0x1bc] sm:$0xf]
    %v5764 = vld [vmem:[#allocation10 + $0x1c0] sm:$0xff]
    %v5765 = vld [vmem:[#allocation10 + $0x1c8] sm:$0xff]
    %v5766 = vld [vmem:[#allocation10 + $0x1d0] sm:$0xff]
    %v5767 = vld [vmem:[#allocation10 + $0x1d8] sm:$0xf]
    %v5768 = vld [vmem:[#allocation10 + $0x1dc] sm:$0xff]
    %v5769 = vld [vmem:[#allocation10 + $0x1e4] sm:$0xff]
    %v5770 = vld [vmem:[#allocation10 + $0x1ec] sm:$0xff]
    %v5771 = vld [vmem:[#allocation10 + $0x1f4] sm:$0xf]
    %v5772 = vld [vmem:[#allocation10 + $0x1f8] sm:$0xff]
    %v5773 = vld [vmem:[#allocation10 + $0x200] sm:$0xff]
    %v5774 = vld [vmem:[#allocation10 + $0x208] sm:$0xff]
    %v5775 = vld [vmem:[#allocation10 + $0x210] sm:$0xf]
    %v5776 = vld [vmem:[#allocation10 + $0x214] sm:$0xff]
    %v5777 = vld [vmem:[#allocation10 + $0x21c] sm:$0xff]
    %v5778 = vld [vmem:[#allocation10 + $0x224] sm:$0xff]
    %v5779 = vld [vmem:[#allocation10 + $0x22c] sm:$0xf]
    %v5780 = vld [vmem:[#allocation10 + $0x230] sm:$0xff]
    %v5781 = vld [vmem:[#allocation10 + $0x238] sm:$0xff]
    %v5782 = vld [vmem:[#allocation10 + $0x240] sm:$0xff]
    %v5783 = vld [vmem:[#allocation10 + $0x248] sm:$0xf]
    %v5784 = vld [vmem:[#allocation10 + $0x24c] sm:$0xff]
    %v5785 = vld [vmem:[#allocation10 + $0x254] sm:$0xff]
    %v5786 = vld [vmem:[#allocation10 + $0x25c] sm:$0xff]
    %v5787 = vld [vmem:[#allocation10 + $0x264] sm:$0xf]
    %v5788 = vld [vmem:[#allocation10 + $0x268] sm:$0xff]
    %v5789 = vld [vmem:[#allocation10 + $0x270] sm:$0xff]
    %v5790 = vld [vmem:[#allocation10 + $0x278] sm:$0xff]
    %v5791 = vld [vmem:[#allocation10 + $0x280] sm:$0xf]
    %v5792 = vld [vmem:[#allocation10 + $0x284] sm:$0xff]
    %v5793 = vld [vmem:[#allocation10 + $0x28c] sm:$0xff]
    %v5794 = vld [vmem:[#allocation10 + $0x294] sm:$0xff]
    %v5795 = vld [vmem:[#allocation10 + $0x29c] sm:$0xf]
    %v5796 = vld [vmem:[#allocation10 + $0x2a0] sm:$0xff]
    %v5797 = vld [vmem:[#allocation10 + $0x2a8] sm:$0xff]
    %v5798 = vld [vmem:[#allocation10 + $0x2b0] sm:$0xff]
    %v5799 = vld [vmem:[#allocation10 + $0x2b8] sm:$0xf]
    %v5800 = vld [vmem:[#allocation10 + $0x2bc] sm:$0xff]
    %v5801 = vld [vmem:[#allocation10 + $0x2c4] sm:$0xff]
    %v5802 = vld [vmem:[#allocation10 + $0x2cc] sm:$0xff]
    %v5803 = vld [vmem:[#allocation10 + $0x2d4] sm:$0xf]
    %v5804 = vld [vmem:[#allocation10 + $0x2d8] sm:$0xff]
    %v5805 = vld [vmem:[#allocation10 + $0x2e0] sm:$0xff]
    %v5806 = vld [vmem:[#allocation10 + $0x2e8] sm:$0xff]
    %v5807 = vld [vmem:[#allocation10 + $0x2f0] sm:$0xf]
    %v5808 = vld [vmem:[#allocation10 + $0x2f4] sm:$0xff]
    %v5809 = vld [vmem:[#allocation10 + $0x2fc] sm:$0xff]
    %v5810 = vld [vmem:[#allocation10 + $0x304] sm:$0xff]
    %v5811 = vld [vmem:[#allocation10 + $0x30c] sm:$0xf]
    %v5812 = vld [vmem:[#allocation10 + $0x310] sm:$0xff]
    %v5813 = vld [vmem:[#allocation10 + $0x318] sm:$0xff]
    %v5814 = vld [vmem:[#allocation10 + $0x320] sm:$0xff]
    %v5815 = vld [vmem:[#allocation10 + $0x328] sm:$0xf]
    %v5816 = vld [vmem:[#allocation10 + $0x32c] sm:$0xff]
    %v5817 = vld [vmem:[#allocation10 + $0x334] sm:$0xff]
    %v5818 = vld [vmem:[#allocation10 + $0x33c] sm:$0xff]
    %v5819 = vld [vmem:[#allocation10 + $0x344] sm:$0xf]
    %v5820 = vld [vmem:[#allocation10 + $0x348] sm:$0xff]
    %v5821 = vld [vmem:[#allocation10 + $0x350] sm:$0xff]
    %v5822 = vld [vmem:[#allocation10 + $0x358] sm:$0xff]
    %v5823 = vld [vmem:[#allocation10 + $0x360] sm:$0xf]
    %v5824 = vld [vmem:[#allocation10 + $0x364] sm:$0xff]
    %v5825 = vld [vmem:[#allocation10 + $0x36c] sm:$0xff]
    %v5826 = vld [vmem:[#allocation10 + $0x374] sm:$0xff]
    %v5827 = vld [vmem:[#allocation10 + $0x37c] sm:$0xf]
    %v5828 = vld [vmem:[#allocation10 + $0x380] sm:$0xff]
    %v5829 = vld [vmem:[#allocation10 + $0x388] sm:$0xff]
    %v5830 = vld [vmem:[#allocation10 + $0x390] sm:$0xff]
    %v5831 = vld [vmem:[#allocation10 + $0x398] sm:$0xf]
    %v5832 = vld [vmem:[#allocation10 + $0x39c] sm:$0xff]
    %v5833 = vld [vmem:[#allocation10 + $0x3a4] sm:$0xff]
    %v5834 = vld [vmem:[#allocation10 + $0x3ac] sm:$0xff]
    %v5835 = vld [vmem:[#allocation10 + $0x3b4] sm:$0xf]
    %v5836 = vld [vmem:[#allocation10 + $0x3b8] sm:$0xff]
    %v5837 = vld [vmem:[#allocation10 + $0x3c0] sm:$0xff]
    %v5838 = vld [vmem:[#allocation10 + $0x3c8] sm:$0xff]
    %v5839 = vld [vmem:[#allocation10 + $0x3d0] sm:$0xf]
    %v5840 = vld [vmem:[#allocation10 + $0x3d4] sm:$0xff]
    %v5841 = vld [vmem:[#allocation10 + $0x3dc] sm:$0xff]
    %v5842 = vld [vmem:[#allocation10 + $0x3e4] sm:$0xff]
    %v5843 = vld [vmem:[#allocation10 + $0x3ec] sm:$0xf]
    %v5844 = vld [vmem:[#allocation10 + $0x3f0] sm:$0xff]
    %v5845 = vld [vmem:[#allocation10 + $0x3f8] sm:$0xff]
    %v5846 = vld [vmem:[#allocation10 + $0x400] sm:$0xff]
    %v5847 = vld [vmem:[#allocation10 + $0x408] sm:$0xf]
    %v5848 = vld [vmem:[#allocation10 + $0x40c] sm:$0xff]
    %v5849 = vld [vmem:[#allocation10 + $0x414] sm:$0xff]
    %v5850 = vld [vmem:[#allocation10 + $0x41c] sm:$0xff]
    %v5851 = vld [vmem:[#allocation10 + $0x424] sm:$0xf]
    %v5852 = vld [vmem:[#allocation10 + $0x428] sm:$0xff]
    %v5853 = vld [vmem:[#allocation10 + $0x430] sm:$0xff]
    %v5854 = vld [vmem:[#allocation10 + $0x438] sm:$0xff]
    %v5855 = vld [vmem:[#allocation10 + $0x440] sm:$0xf]
    %v5856 = vld [vmem:[#allocation10 + $0x444] sm:$0xff]
    %v5857 = vld [vmem:[#allocation10 + $0x44c] sm:$0xff]
    %v5858 = vld [vmem:[#allocation10 + $0x454] sm:$0xff]
    %v5859 = vld [vmem:[#allocation10 + $0x45c] sm:$0xf]
    %v5860 = vld [vmem:[#allocation10 + $0x460] sm:$0xff]
    %v5861 = vld [vmem:[#allocation10 + $0x468] sm:$0xff]
    %v5862 = vld [vmem:[#allocation10 + $0x470] sm:$0xff]
    %v5863 = vld [vmem:[#allocation10 + $0x478] sm:$0xf]
    %v5864 = vld [vmem:[#allocation10 + $0x47c] sm:$0xff]
    %v5865 = vld [vmem:[#allocation10 + $0x484] sm:$0xff]
    %v5866 = vld [vmem:[#allocation10 + $0x48c] sm:$0xff]
    %v5867 = vld [vmem:[#allocation10 + $0x494] sm:$0xf]
    %v5868 = vld [vmem:[#allocation10 + $0x498] sm:$0xff]
    %v5869 = vld [vmem:[#allocation10 + $0x4a0] sm:$0xff]
    %v5870 = vld [vmem:[#allocation10 + $0x4a8] sm:$0xff]
    %v5871 = vld [vmem:[#allocation10 + $0x4b0] sm:$0xf]
    %v5872 = vld [vmem:[#allocation10 + $0x4b4] sm:$0xff]
    %v5873 = vld [vmem:[#allocation10 + $0x4bc] sm:$0xff]
    %v5874 = vld [vmem:[#allocation10 + $0x4c4] sm:$0xff]
    %v5875 = vld [vmem:[#allocation10 + $0x4cc] sm:$0xf]
    %v5876 = vld [vmem:[#allocation10 + $0x4d0] sm:$0xff]
    %v5877 = vld [vmem:[#allocation10 + $0x4d8] sm:$0xff]
    %v5878 = vld [vmem:[#allocation10 + $0x4e0] sm:$0xff]
    %v5879 = vld [vmem:[#allocation10 + $0x4e8] sm:$0xf]
    %v5880 = vld [vmem:[#allocation10 + $0x4ec] sm:$0xff]
    %v5881 = vld [vmem:[#allocation10 + $0x4f4] sm:$0xff]
    %v5882 = vld [vmem:[#allocation10 + $0x4fc] sm:$0xff]
    %v5883 = vld [vmem:[#allocation10 + $0x504] sm:$0xf]
    %v5884 = vld [vmem:[#allocation10 + $0x508] sm:$0xff]
    %v5885 = vld [vmem:[#allocation10 + $0x510] sm:$0xff]
    %v5886 = vld [vmem:[#allocation10 + $0x518] sm:$0xff]
    %v5887 = vld [vmem:[#allocation10 + $0x520] sm:$0xf]
    %v5888 = vld [vmem:[#allocation10 + $0x524] sm:$0xff]
    %v5889 = vld [vmem:[#allocation10 + $0x52c] sm:$0xff]
    %v5890 = vld [vmem:[#allocation10 + $0x534] sm:$0xff]
    %v5891 = vld [vmem:[#allocation10 + $0x53c] sm:$0xf]
    %v5892 = vld [vmem:[#allocation10 + $0x540] sm:$0xff]
    %v5893 = vld [vmem:[#allocation10 + $0x548] sm:$0xff]
    %v5894 = vld [vmem:[#allocation10 + $0x550] sm:$0xff]
    %v5895 = vld [vmem:[#allocation10 + $0x558] sm:$0xf]
    %v5896 = vld [vmem:[#allocation10 + $0x55c] sm:$0xff]
    %v5897 = vld [vmem:[#allocation10 + $0x564] sm:$0xff]
    %v5898 = vld [vmem:[#allocation10 + $0x56c] sm:$0xff]
    %v5899 = vld [vmem:[#allocation10 + $0x574] sm:$0xf]
    %v5900 = vld [vmem:[#allocation10 + $0x578] sm:$0xff]
    %v5901 = vld [vmem:[#allocation10 + $0x580] sm:$0xff]
    %v5902 = vld [vmem:[#allocation10 + $0x588] sm:$0xff]
    %v5903 = vld [vmem:[#allocation10 + $0x590] sm:$0xf]
    %v5904 = vld [vmem:[#allocation10 + $0x594] sm:$0xff]
    %v5905 = vld [vmem:[#allocation10 + $0x59c] sm:$0xff]
    %v5906 = vld [vmem:[#allocation10 + $0x5a4] sm:$0xff]
    %v5907 = vld [vmem:[#allocation10 + $0x5ac] sm:$0xf]
    %v5908 = vld [vmem:[#allocation10 + $0x5b0] sm:$0xff]
    %v5909 = vld [vmem:[#allocation10 + $0x5b8] sm:$0xff]
    %v5910 = vld [vmem:[#allocation10 + $0x5c0] sm:$0xff]
    %v5911 = vld [vmem:[#allocation10 + $0x5c8] sm:$0xf]
    %v5912 = vld [vmem:[#allocation10 + $0x5cc] sm:$0xff]
    %v5913 = vld [vmem:[#allocation10 + $0x5d4] sm:$0xff]
    %v5914 = vld [vmem:[#allocation10 + $0x5dc] sm:$0xff]
    %v5915 = vld [vmem:[#allocation10 + $0x5e4] sm:$0xf]
    %v5916 = vld [vmem:[#allocation10 + $0x5e8] sm:$0xff]
    %v5917 = vld [vmem:[#allocation10 + $0x5f0] sm:$0xff]
    %v5918 = vld [vmem:[#allocation10 + $0x5f8] sm:$0xff]
    %v5919 = vld [vmem:[#allocation10 + $0x600] sm:$0xf]
    %v5920 = vld [vmem:[#allocation10 + $0x604] sm:$0xff]
    %v5921 = vld [vmem:[#allocation10 + $0x60c] sm:$0xff]
    %v5922 = vld [vmem:[#allocation10 + $0x614] sm:$0xff]
    %v5923 = vld [vmem:[#allocation10 + $0x61c] sm:$0xf]
    %v5924 = vld [vmem:[#allocation10 + $0x620] sm:$0xff]
    %v5925 = vld [vmem:[#allocation10 + $0x628] sm:$0xff]
    %v5926 = vld [vmem:[#allocation10 + $0x630] sm:$0xff]
    %v5927 = vld [vmem:[#allocation10 + $0x638] sm:$0xf]
    %v5928 = vld [vmem:[#allocation10 + $0x63c] sm:$0xff]
    %v5929 = vld [vmem:[#allocation10 + $0x644] sm:$0xff]
    %v5930 = vld [vmem:[#allocation10 + $0x64c] sm:$0xff]
    %v5931 = vld [vmem:[#allocation10 + $0x654] sm:$0xf]
    %v5932 = vld [vmem:[#allocation10 + $0x658] sm:$0xff]
    %v5933 = vld [vmem:[#allocation10 + $0x660] sm:$0xff]
    %v5934 = vld [vmem:[#allocation10 + $0x668] sm:$0xff]
    %v5935 = vld [vmem:[#allocation10 + $0x670] sm:$0xf]
    %v5936 = vld [vmem:[#allocation10 + $0x674] sm:$0xff]
    %v5937 = vld [vmem:[#allocation10 + $0x67c] sm:$0xff]
    %v5938 = vld [vmem:[#allocation10 + $0x684] sm:$0xff]
    %v5939 = vld [vmem:[#allocation10 + $0x68c] sm:$0xf]
    %v5940 = vld [vmem:[#allocation10 + $0x690] sm:$0xff]
    %v5941 = vld [vmem:[#allocation10 + $0x698] sm:$0xff]
    %v5942 = vld [vmem:[#allocation10 + $0x6a0] sm:$0xff]
    %v5943 = vld [vmem:[#allocation10 + $0x6a8] sm:$0xf]
    %v5944 = vld [vmem:[#allocation10 + $0x6ac] sm:$0xff]
    %v5945 = vld [vmem:[#allocation10 + $0x6b4] sm:$0xff]
    %v5946 = vld [vmem:[#allocation10 + $0x6bc] sm:$0xff]
    %v5947 = vld [vmem:[#allocation10 + $0x6c4] sm:$0xf]
    %v5948 = vld [vmem:[#allocation10 + $0x6c8] sm:$0xff]
    %v5949 = vld [vmem:[#allocation10 + $0x6d0] sm:$0xff]
    %v5950 = vld [vmem:[#allocation10 + $0x6d8] sm:$0xff]
    %v5951 = vld [vmem:[#allocation10 + $0x6e0] sm:$0xf]
    %v5952 = vld [vmem:[#allocation10 + $0x6e4] sm:$0xff]
    %v5953 = vld [vmem:[#allocation10 + $0x6ec] sm:$0xff]
    %v5954 = vld [vmem:[#allocation10 + $0x6f4] sm:$0xff]
    %v5955 = vld [vmem:[#allocation10 + $0x6fc] sm:$0xf]
    %v5956 = vld [vmem:[#allocation10 + $0x700] sm:$0xff]
    %v5957 = vld [vmem:[#allocation10 + $0x708] sm:$0xff]
    %v5958 = vld [vmem:[#allocation10 + $0x710] sm:$0xff]
    %v5959 = vld [vmem:[#allocation10 + $0x718] sm:$0xf]
    %v5960 = vld [vmem:[#allocation10 + $0x71c] sm:$0xff]
    %v5961 = vld [vmem:[#allocation10 + $0x724] sm:$0xff]
    %v5962 = vld [vmem:[#allocation10 + $0x72c] sm:$0xff]
    %v5963 = vld [vmem:[#allocation10 + $0x734] sm:$0xf]
    %v5964 = vld [vmem:[#allocation10 + $0x738] sm:$0xff]
    %v5965 = vld [vmem:[#allocation10 + $0x740] sm:$0xff]
    %v5966 = vld [vmem:[#allocation10 + $0x748] sm:$0xff]
    %v5967 = vld [vmem:[#allocation10 + $0x750] sm:$0xf]
    %v5968 = vld [vmem:[#allocation10 + $0x754] sm:$0xff]
    %v5969 = vld [vmem:[#allocation10 + $0x75c] sm:$0xff]
    %v5970 = vld [vmem:[#allocation10 + $0x764] sm:$0xff]
    %v5971 = vld [vmem:[#allocation10 + $0x76c] sm:$0xf]
    %v5972 = vld [vmem:[#allocation10 + $0x770] sm:$0xff]
    %v5973 = vld [vmem:[#allocation10 + $0x778] sm:$0xff]
    %v5974 = vld [vmem:[#allocation10 + $0x780] sm:$0xff]
    %v5975 = vld [vmem:[#allocation10 + $0x788] sm:$0xf]
    %v5976 = vld [vmem:[#allocation10 + $0x78c] sm:$0xff]
    %v5977 = vld [vmem:[#allocation10 + $0x794] sm:$0xff]
    %v5978 = vld [vmem:[#allocation10 + $0x79c] sm:$0xff]
    %v5979 = vld [vmem:[#allocation10 + $0x7a4] sm:$0xf]
    %v5980 = vld [vmem:[#allocation10 + $0x7a8] sm:$0xff]
    %v5981 = vld [vmem:[#allocation10 + $0x7b0] sm:$0xff]
    %v5982 = vld [vmem:[#allocation10 + $0x7b8] sm:$0xff]
    %v5983 = vld [vmem:[#allocation10 + $0x7c0] sm:$0xf]
    %v5984 = vld [vmem:[#allocation10 + $0x7c4] sm:$0xff]
    %v5985 = vld [vmem:[#allocation10 + $0x7cc] sm:$0xff]
    %v5986 = vld [vmem:[#allocation10 + $0x7d4] sm:$0xff]
    %v5987 = vld [vmem:[#allocation10 + $0x7dc] sm:$0xf]
    %v5988 = vld [vmem:[#allocation10 + $0x7e0] sm:$0xff]
    %v5989 = vld [vmem:[#allocation10 + $0x7e8] sm:$0xff]
    %v5990 = vld [vmem:[#allocation10 + $0x7f0] sm:$0xff]
    %v5991 = vld [vmem:[#allocation10 + $0x7f8] sm:$0xf]
    %v5992 = vld [vmem:[#allocation10 + $0x7fc] sm:$0xff]
    %v5993 = vld [vmem:[#allocation10 + $0x804] sm:$0xff]
    %v5994 = vld [vmem:[#allocation10 + $0x80c] sm:$0xff]
    %v5995 = vld [vmem:[#allocation10 + $0x814] sm:$0xf]
    %v5996 = vld [vmem:[#allocation10 + $0x818] sm:$0xff]
    %v5997 = vld [vmem:[#allocation10 + $0x820] sm:$0xff]
    %v5998 = vld [vmem:[#allocation10 + $0x828] sm:$0xff]
    %v5999 = vld [vmem:[#allocation10 + $0x830] sm:$0xf]
    %v6000 = vld [vmem:[#allocation10 + $0x834] sm:$0xff]
    %v6001 = vld [vmem:[#allocation10 + $0x83c] sm:$0xff]
    %v6002 = vld [vmem:[#allocation10 + $0x844] sm:$0xff]
    %v6003 = vld [vmem:[#allocation10 + $0x84c] sm:$0xf]
    %v6004 = vld [vmem:[#allocation10 + $0x850] sm:$0xff]
    %v6005 = vld [vmem:[#allocation10 + $0x858] sm:$0xff]
    %v6006 = vld [vmem:[#allocation10 + $0x860] sm:$0xff]
    %v6007 = vld [vmem:[#allocation10 + $0x868] sm:$0xf]
    %v6008 = vld [vmem:[#allocation10 + $0x86c] sm:$0xff]
    %v6009 = vld [vmem:[#allocation10 + $0x874] sm:$0xff]
    %v6010 = vld [vmem:[#allocation10 + $0x87c] sm:$0xff]
    %v6011 = vld [vmem:[#allocation10 + $0x884] sm:$0xf]
    %v6012 = vld [vmem:[#allocation10 + $0x888] sm:$0xff]
    %v6013 = vld [vmem:[#allocation10 + $0x890] sm:$0xff]
    %v6014 = vld [vmem:[#allocation10 + $0x898] sm:$0xff]
    %v6015 = vld [vmem:[#allocation10 + $0x8a0] sm:$0xf]
    %v6016 = vld [vmem:[#allocation10 + $0x8a4] sm:$0xff]
    %v6017 = vld [vmem:[#allocation10 + $0x8ac] sm:$0xff]
    %v6018 = vld [vmem:[#allocation10 + $0x8b4] sm:$0xff]
    %v6019 = vld [vmem:[#allocation10 + $0x8bc] sm:$0xf]
    %v6020 = vld [vmem:[#allocation10 + $0x8c0] sm:$0xff]
    %v6021 = vld [vmem:[#allocation10 + $0x8c8] sm:$0xff]
    %v6022 = vld [vmem:[#allocation10 + $0x8d0] sm:$0xff]
    %v6023 = vld [vmem:[#allocation10 + $0x8d8] sm:$0xf]
    %v6024 = vld [vmem:[#allocation10 + $0x8dc] sm:$0xff]
    %v6025 = vld [vmem:[#allocation10 + $0x8e4] sm:$0xff]
    %v6026 = vld [vmem:[#allocation10 + $0x8ec] sm:$0xff]
    %v6027 = vld [vmem:[#allocation10 + $0x8f4] sm:$0xf]
    %v6028 = vld [vmem:[#allocation10 + $0x8f8] sm:$0xff]
    %v6029 = vld [vmem:[#allocation10 + $0x900] sm:$0xff]
    %v6030 = vld [vmem:[#allocation10 + $0x908] sm:$0xff]
    %v6031 = vld [vmem:[#allocation10 + $0x910] sm:$0xf]
    %v6032 = vld [vmem:[#allocation10 + $0x914] sm:$0xff]
    %v6033 = vld [vmem:[#allocation10 + $0x91c] sm:$0xff]
    %v6034 = vld [vmem:[#allocation10 + $0x924] sm:$0xff]
    %v6035 = vld [vmem:[#allocation10 + $0x92c] sm:$0xf]
    %v6036 = vld [vmem:[#allocation10 + $0x930] sm:$0xff]
    %v6037 = vld [vmem:[#allocation10 + $0x938] sm:$0xff]
    %v6038 = vld [vmem:[#allocation10 + $0x940] sm:$0xff]
    %v6039 = vld [vmem:[#allocation10 + $0x948] sm:$0xf]
    %v6040 = vld [vmem:[#allocation10 + $0x94c] sm:$0xff]
    %v6041 = vld [vmem:[#allocation10 + $0x954] sm:$0xff]
    %v6042 = vld [vmem:[#allocation10 + $0x95c] sm:$0xff]
    %v6043 = vld [vmem:[#allocation10 + $0x964] sm:$0xf]
    %v6044 = vld [vmem:[#allocation10 + $0x968] sm:$0xff]
    %v6045 = vld [vmem:[#allocation10 + $0x970] sm:$0xff]
    %v6046 = vld [vmem:[#allocation10 + $0x978] sm:$0xff]
    %v6047 = vld [vmem:[#allocation10 + $0x980] sm:$0xf]
    %v6048 = vld [vmem:[#allocation10 + $0x984] sm:$0xff]
    %v6049 = vld [vmem:[#allocation10 + $0x98c] sm:$0xff]
    %v6050 = vld [vmem:[#allocation10 + $0x994] sm:$0xff]
    %v6051 = vld [vmem:[#allocation10 + $0x99c] sm:$0xf]
    %v6052 = vld [vmem:[#allocation10 + $0x9a0] sm:$0xff]
    %v6053 = vld [vmem:[#allocation10 + $0x9a8] sm:$0xff]
    %v6054 = vld [vmem:[#allocation10 + $0x9b0] sm:$0xff]
    %v6055 = vld [vmem:[#allocation10 + $0x9b8] sm:$0xf]
    %v6056 = vld [vmem:[#allocation10 + $0x9bc] sm:$0xff]
    %v6057 = vld [vmem:[#allocation10 + $0x9c4] sm:$0xff]
    %v6058 = vld [vmem:[#allocation10 + $0x9cc] sm:$0xff]
    %v6059 = vld [vmem:[#allocation10 + $0x9d4] sm:$0xf]
    %v6060 = vld [vmem:[#allocation10 + $0x9d8] sm:$0xff]
    %v6061 = vld [vmem:[#allocation10 + $0x9e0] sm:$0xff]
    %v6062 = vld [vmem:[#allocation10 + $0x9e8] sm:$0xff]
    %v6063 = vld [vmem:[#allocation10 + $0x9f0] sm:$0xf]
    %v6064 = vld [vmem:[#allocation10 + $0x9f4] sm:$0xff]
    %v6065 = vld [vmem:[#allocation10 + $0x9fc] sm:$0xff]
    %v6066 = vld [vmem:[#allocation10 + $0xa04] sm:$0xff]
    %v6067 = vld [vmem:[#allocation10 + $0xa0c] sm:$0xf]
    %v6068 = vld [vmem:[#allocation10 + $0xa10] sm:$0xff]
    %v6069 = vld [vmem:[#allocation10 + $0xa18] sm:$0xff]
    %v6070 = vld [vmem:[#allocation10 + $0xa20] sm:$0xff]
    %v6071 = vld [vmem:[#allocation10 + $0xa28] sm:$0xf]
    %v6072 = vld [vmem:[#allocation10 + $0xa2c] sm:$0xff]
    %v6073 = vld [vmem:[#allocation10 + $0xa34] sm:$0xff]
    %v6074 = vld [vmem:[#allocation10 + $0xa3c] sm:$0xff]
    %v6075 = vld [vmem:[#allocation10 + $0xa44] sm:$0xf]
    %v6076 = vld [vmem:[#allocation10 + $0xa48] sm:$0xff]
    %v6077 = vld [vmem:[#allocation10 + $0xa50] sm:$0xff]
    %v6078 = vld [vmem:[#allocation10 + $0xa58] sm:$0xff]
    %v6079 = vld [vmem:[#allocation10 + $0xa60] sm:$0xf]
    %v6080 = vld [vmem:[#allocation10 + $0xa64] sm:$0xff]
    %v6081 = vld [vmem:[#allocation10 + $0xa6c] sm:$0xff]
    %v6082 = vld [vmem:[#allocation10 + $0xa74] sm:$0xff]
    %v6083 = vld [vmem:[#allocation10 + $0xa7c] sm:$0xf]
    %v6084 = vld [vmem:[#allocation10 + $0xa80] sm:$0xff]
    %v6085 = vld [vmem:[#allocation10 + $0xa88] sm:$0xff]
    %v6086 = vld [vmem:[#allocation10 + $0xa90] sm:$0xff]
    %v6087 = vld [vmem:[#allocation10 + $0xa98] sm:$0xf]
    %v6088 = vld [vmem:[#allocation10 + $0xa9c] sm:$0xff]
    %v6089 = vld [vmem:[#allocation10 + $0xaa4] sm:$0xff]
    %v6090 = vld [vmem:[#allocation10 + $0xaac] sm:$0xff]
    %v6091 = vld [vmem:[#allocation10 + $0xab4] sm:$0xf]
    %v6092 = vld [vmem:[#allocation10 + $0xab8] sm:$0xff]
    %v6093 = vld [vmem:[#allocation10 + $0xac0] sm:$0xff]
    %v6094 = vld [vmem:[#allocation10 + $0xac8] sm:$0xff]
    %v6095 = vld [vmem:[#allocation10 + $0xad0] sm:$0xf]
    %v6096 = vld [vmem:[#allocation10 + $0xad4] sm:$0xff]
    %v6097 = vld [vmem:[#allocation10 + $0xadc] sm:$0xff]
    %v6098 = vld [vmem:[#allocation10 + $0xae4] sm:$0xff]
    %v6099 = vld [vmem:[#allocation10 + $0xaec] sm:$0xf]
    %v6100 = vld [vmem:[#allocation10 + $0xaf0] sm:$0xff]
    %v6101 = vld [vmem:[#allocation10 + $0xaf8] sm:$0xff]
    %v6102 = vld [vmem:[#allocation10 + $0xb00] sm:$0xff]
    %v6103 = vld [vmem:[#allocation10 + $0xb08] sm:$0xf]
    %v6104 = vld [vmem:[#allocation10 + $0xb0c] sm:$0xff]
    %v6105 = vld [vmem:[#allocation10 + $0xb14] sm:$0xff]
    %v6106 = vld [vmem:[#allocation10 + $0xb1c] sm:$0xff]
    %v6107 = vld [vmem:[#allocation10 + $0xb24] sm:$0xf]
    %v6108 = vld [vmem:[#allocation10 + $0xb28] sm:$0xff]
    %v6109 = vld [vmem:[#allocation10 + $0xb30] sm:$0xff]
    %v6110 = vld [vmem:[#allocation10 + $0xb38] sm:$0xff]
    %v6111 = vld [vmem:[#allocation10 + $0xb40] sm:$0xf]
    %v6112 = vld [vmem:[#allocation10 + $0xb44] sm:$0xff]
    %v6113 = vld [vmem:[#allocation10 + $0xb4c] sm:$0xff]
    %v6114 = vld [vmem:[#allocation10 + $0xb54] sm:$0xff]
    %v6115 = vld [vmem:[#allocation10 + $0xb5c] sm:$0xf]
    %v6116 = vld [vmem:[#allocation10 + $0xb60] sm:$0xff]
    %v6117 = vld [vmem:[#allocation10 + $0xb68] sm:$0xff]
    %v6118 = vld [vmem:[#allocation10 + $0xb70] sm:$0xff]
    %v6119 = vld [vmem:[#allocation10 + $0xb78] sm:$0xf]
    %v6120 = vld [vmem:[#allocation10 + $0xb7c] sm:$0xff]
    %v6121 = vld [vmem:[#allocation10 + $0xb84] sm:$0xff]
    %v6122 = vld [vmem:[#allocation10 + $0xb8c] sm:$0xff]
    %v6123 = vld [vmem:[#allocation10 + $0xb94] sm:$0xf]
    %v6124 = vld [vmem:[#allocation10 + $0xb98] sm:$0xff]
    %v6125 = vld [vmem:[#allocation10 + $0xba0] sm:$0xff]
    %v6126 = vld [vmem:[#allocation10 + $0xba8] sm:$0xff]
    %v6127 = vld [vmem:[#allocation10 + $0xbb0] sm:$0xf]
    %v6128 = vld [vmem:[#allocation10 + $0xbb4] sm:$0xff]
    %v6129 = vld [vmem:[#allocation10 + $0xbbc] sm:$0xff]
    %v6130 = vld [vmem:[#allocation10 + $0xbc4] sm:$0xff]
    %v6131 = vld [vmem:[#allocation10 + $0xbcc] sm:$0xf]
    %v6132 = vld [vmem:[#allocation10 + $0xbd0] sm:$0xff]
    %v6133 = vld [vmem:[#allocation10 + $0xbd8] sm:$0xff]
    %v6134 = vld [vmem:[#allocation10 + $0xbe0] sm:$0xff]
    %v6135 = vld [vmem:[#allocation10 + $0xbe8] sm:$0xf]
    %v6136 = vld [vmem:[#allocation10 + $0xbec] sm:$0xff]
    %v6137 = vld [vmem:[#allocation10 + $0xbf4] sm:$0xff]
    %v6138 = vld [vmem:[#allocation10 + $0xbfc] sm:$0xff]
    %v6139 = vld [vmem:[#allocation10 + $0xc04] sm:$0xf]
    %v6140 = vld [vmem:[#allocation10 + $0xc08] sm:$0xff]
    %v6141 = vld [vmem:[#allocation10 + $0xc10] sm:$0xff]
    %v6142 = vld [vmem:[#allocation10 + $0xc18] sm:$0xff]
    %v6143 = vld [vmem:[#allocation10 + $0xc20] sm:$0xf]
    %v6144 = vld [vmem:[#allocation10 + $0xc24] sm:$0xff]
    %v6145 = vld [vmem:[#allocation10 + $0xc2c] sm:$0xff]
    %v6146 = vld [vmem:[#allocation10 + $0xc34] sm:$0xff]
    %v6147 = vld [vmem:[#allocation10 + $0xc3c] sm:$0xf]
    %v6148 = vld [vmem:[#allocation10 + $0xc40] sm:$0xff]
    %v6149 = vld [vmem:[#allocation10 + $0xc48] sm:$0xff]
    %v6150 = vld [vmem:[#allocation10 + $0xc50] sm:$0xff]
    %v6151 = vld [vmem:[#allocation10 + $0xc58] sm:$0xf]
    %v6152 = vld [vmem:[#allocation10 + $0xc5c] sm:$0xff]
    %v6153 = vld [vmem:[#allocation10 + $0xc64] sm:$0xff]
    %v6154 = vld [vmem:[#allocation10 + $0xc6c] sm:$0xff]
    %v6155 = vld [vmem:[#allocation10 + $0xc74] sm:$0xf]
    %v6156 = vld [vmem:[#allocation10 + $0xc78] sm:$0xff]
    %v6157 = vld [vmem:[#allocation10 + $0xc80] sm:$0xff]
    %v6158 = vld [vmem:[#allocation10 + $0xc88] sm:$0xff]
    %v6159 = vld [vmem:[#allocation10 + $0xc90] sm:$0xf]
    %v6160 = vld [vmem:[#allocation10 + $0xc94] sm:$0xff]
    %v6161 = vld [vmem:[#allocation10 + $0xc9c] sm:$0xff]
    %v6162 = vld [vmem:[#allocation10 + $0xca4] sm:$0xff]
    %v6163 = vld [vmem:[#allocation10 + $0xcac] sm:$0xf]
    %v6164 = vld [vmem:[#allocation10 + $0xcb0] sm:$0xff]
    %v6165 = vld [vmem:[#allocation10 + $0xcb8] sm:$0xff]
    %v6166 = vld [vmem:[#allocation10 + $0xcc0] sm:$0xff]
    %v6167 = vld [vmem:[#allocation10 + $0xcc8] sm:$0xf]
    %v6168 = vld [vmem:[#allocation10 + $0xccc] sm:$0xff]
    %v6169 = vld [vmem:[#allocation10 + $0xcd4] sm:$0xff]
    %v6170 = vld [vmem:[#allocation10 + $0xcdc] sm:$0xff]
    %v6171 = vld [vmem:[#allocation10 + $0xce4] sm:$0xf]
    %v6172 = vld [vmem:[#allocation10 + $0xce8] sm:$0xff]
    %v6173 = vld [vmem:[#allocation10 + $0xcf0] sm:$0xff]
    %v6174 = vld [vmem:[#allocation10 + $0xcf8] sm:$0xff]
    %v6175 = vld [vmem:[#allocation10 + $0xd00] sm:$0xf]
    %v6176 = vld [vmem:[#allocation10 + $0xd04] sm:$0xff]
    %v6177 = vld [vmem:[#allocation10 + $0xd0c] sm:$0xff]
    %v6178 = vld [vmem:[#allocation10 + $0xd14] sm:$0xff]
    %v6179 = vld [vmem:[#allocation10 + $0xd1c] sm:$0xf]
    %v6180 = vld [vmem:[#allocation10 + $0xd20] sm:$0xff]
    %v6181 = vld [vmem:[#allocation10 + $0xd28] sm:$0xff]
    %v6182 = vld [vmem:[#allocation10 + $0xd30] sm:$0xff]
    %v6183 = vld [vmem:[#allocation10 + $0xd38] sm:$0xf]
    %v6184 = vld [vmem:[#allocation10 + $0xd3c] sm:$0xff]
    %v6185 = vld [vmem:[#allocation10 + $0xd44] sm:$0xff]
    %v6186 = vld [vmem:[#allocation10 + $0xd4c] sm:$0xff]
    %v6187 = vld [vmem:[#allocation10 + $0xd54] sm:$0xf]
    %v6188 = vld [vmem:[#allocation10 + $0xd58] sm:$0xff]
    %v6189 = vld [vmem:[#allocation10 + $0xd60] sm:$0xff]
    %v6190 = vld [vmem:[#allocation10 + $0xd68] sm:$0xff]
    %v6191 = vld [vmem:[#allocation10 + $0xd70] sm:$0xf]
    %v6192 = vld [vmem:[#allocation10 + $0xd74] sm:$0xff]
    %v6193 = vld [vmem:[#allocation10 + $0xd7c] sm:$0xff]
    %v6194 = vld [vmem:[#allocation10 + $0xd84] sm:$0xff]
    %v6195 = vld [vmem:[#allocation10 + $0xd8c] sm:$0xf]
    %v6196 = vld [vmem:[#allocation10 + $0xd90] sm:$0xff]
    %v6197 = vld [vmem:[#allocation10 + $0xd98] sm:$0xff]
    %v6198 = vld [vmem:[#allocation10 + $0xda0] sm:$0xff]
    %v6199 = vld [vmem:[#allocation10 + $0xda8] sm:$0xf]
    %v6200 = vld [vmem:[#allocation10 + $0xdac] sm:$0xff]
    %v6201 = vld [vmem:[#allocation10 + $0xdb4] sm:$0xff]
    %v6202 = vld [vmem:[#allocation10 + $0xdbc] sm:$0xff]
    %v6203 = vld [vmem:[#allocation10 + $0xdc4] sm:$0xf]
    %v6204 = vld [vmem:[#allocation10 + $0xdc8] sm:$0xff]
    %v6205 = vld [vmem:[#allocation10 + $0xdd0] sm:$0xff]
    %v6206 = vld [vmem:[#allocation10 + $0xdd8] sm:$0xff]
    %v6207 = vld [vmem:[#allocation10 + $0xde0] sm:$0xf]
    %v6208 = vld [vmem:[#allocation10 + $0xde4] sm:$0xff]
    %v6209 = vld [vmem:[#allocation10 + $0xdec] sm:$0xff]
    %v6210 = vld [vmem:[#allocation10 + $0xdf4] sm:$0xff]
    %v6211 = vld [vmem:[#allocation10 + $0xdfc] sm:$0xf]
    %v6212 = vld [vmem:[#allocation12] sm:$0xff]
    %v6214 = vperm.slane %v6212, 0
    %v6215 = vperm.slane %v6212, 1
    %v6216 = vperm.slane %v6212, 2
    %v6217 = vperm.slane %v6212, 3
    %v6218 = vperm.slane %v6212, 4
    %v6219 = vperm.slane %v6212, 5
    %v6220 = vperm.slane %v6212, 6
    %v6292 = vunpack.c.l.b16 %v5636
    %v6293 = vunpack.c.h.b16 %v5636
    %v6294 = vunpack.c.l.b16 %v5637
    %v6295 = vunpack.c.h.b16 %v5637
    %v6296 = vunpack.c.l.b16 %v5638
    %v6297 = vunpack.c.h.b16 %v5638
    %v6298 = vunpack.c.l.b16 %v5639
    %v6299 = vunpack.c.h.b16 %v5639
    %v6300 = vunpack.c.l.b16 %v5640
    %v6301 = vunpack.c.h.b16 %v5640
    %v6302 = vunpack.c.l.b16 %v5641
    %v6303 = vunpack.c.h.b16 %v5641
    %v6304 = vunpack.c.l.b16 %v5642
    %v6305 = vunpack.c.h.b16 %v5642
    %v6306 = vunpack.c.l.b16 %v5643
    %v6307 = vunpack.c.h.b16 %v5643
    %v6308 = vunpack.c.l.b16 %v5644
    %v6309 = vunpack.c.h.b16 %v5644
    %v6310 = vunpack.c.l.b16 %v5645
    %v6311 = vunpack.c.h.b16 %v5645
    %v6312 = vunpack.c.l.b16 %v5646
    %v6313 = vunpack.c.h.b16 %v5646
    %v6314 = vunpack.c.l.b16 %v5647
    %v6315 = vunpack.c.h.b16 %v5647
    %v6316 = vunpack.c.l.b16 %v5648
    %v6317 = vunpack.c.h.b16 %v5648
    %v6318 = vunpack.c.l.b16 %v5649
    %v6319 = vunpack.c.h.b16 %v5649
    %v6320 = vunpack.c.l.b16 %v5650
    %v6321 = vunpack.c.h.b16 %v5650
    %v6322 = vunpack.c.l.b16 %v5651
    %v6323 = vunpack.c.h.b16 %v5651
    %v6324 = vunpack.c.l.b16 %v5652
    %v6325 = vunpack.c.h.b16 %v5652
    %v6326 = vunpack.c.l.b16 %v5653
    %v6327 = vunpack.c.h.b16 %v5653
    %v6328 = vunpack.c.l.b16 %v5654
    %v6329 = vunpack.c.h.b16 %v5654
    %v6330 = vunpack.c.l.b16 %v5655
    %v6331 = vunpack.c.h.b16 %v5655
    %v6332 = vunpack.c.l.b16 %v5656
    %v6333 = vunpack.c.h.b16 %v5656
    %v6334 = vunpack.c.l.b16 %v5657
    %v6335 = vunpack.c.h.b16 %v5657
    %v6336 = vunpack.c.l.b16 %v5658
    %v6337 = vunpack.c.h.b16 %v5658
    %v6338 = vunpack.c.l.b16 %v5659
    %v6339 = vunpack.c.h.b16 %v5659
    %v6340 = vunpack.c.l.b16 %v5660
    %v6341 = vunpack.c.h.b16 %v5660
    %v6342 = vunpack.c.l.b16 %v5661
    %v6343 = vunpack.c.h.b16 %v5661
    %v6344 = vunpack.c.l.b16 %v5662
    %v6345 = vunpack.c.h.b16 %v5662
    %v6346 = vunpack.c.l.b16 %v5663
    %v6347 = vunpack.c.h.b16 %v5663
    %v6348 = vunpack.c.l.b16 %v5664
    %v6349 = vunpack.c.h.b16 %v5664
    %v6350 = vunpack.c.l.b16 %v5665
    %v6351 = vunpack.c.h.b16 %v5665
    %v6352 = vunpack.c.l.b16 %v5666
    %v6353 = vunpack.c.h.b16 %v5666
    %v6354 = vunpack.c.l.b16 %v5667
    %v6355 = vunpack.c.h.b16 %v5667
    %v6356 = vunpack.c.l.b16 %v5668
    %v6357 = vunpack.c.h.b16 %v5668
    %v6358 = vunpack.c.l.b16 %v5669
    %v6359 = vunpack.c.h.b16 %v5669
    %v6360 = vunpack.c.l.b16 %v5670
    %v6361 = vunpack.c.h.b16 %v5670
    %v6362 = vunpack.c.l.b16 %v5671
    %v6363 = vunpack.c.h.b16 %v5671
    %v6364 = vunpack.c.l.b16 %v5672
    %v6365 = vunpack.c.h.b16 %v5672
    %v6366 = vunpack.c.l.b16 %v5673
    %v6367 = vunpack.c.h.b16 %v5673
    %v6368 = vunpack.c.l.b16 %v5674
    %v6369 = vunpack.c.h.b16 %v5674
    %v6370 = vunpack.c.l.b16 %v5675
    %v6371 = vunpack.c.h.b16 %v5675
    %v6372 = vunpack.c.l.b16 %v5676
    %v6373 = vunpack.c.h.b16 %v5676
    %v6374 = vunpack.c.l.b16 %v5677
    %v6375 = vunpack.c.h.b16 %v5677
    %v6376 = vunpack.c.l.b16 %v5678
    %v6377 = vunpack.c.h.b16 %v5678
    %v6378 = vunpack.c.l.b16 %v5679
    %v6379 = vunpack.c.h.b16 %v5679
    %v6380 = vunpack.c.l.b16 %v5680
    %v6381 = vunpack.c.h.b16 %v5680
    %v6382 = vunpack.c.l.b16 %v5681
    %v6383 = vunpack.c.h.b16 %v5681
    %v6384 = vunpack.c.l.b16 %v5682
    %v6385 = vunpack.c.h.b16 %v5682
    %v6386 = vunpack.c.l.b16 %v5683
    %v6387 = vunpack.c.h.b16 %v5683
    %v6388 = vunpack.c.l.b16 %v5684
    %v6389 = vunpack.c.h.b16 %v5684
    %v6390 = vunpack.c.l.b16 %v5685
    %v6391 = vunpack.c.h.b16 %v5685
    %v6392 = vunpack.c.l.b16 %v5686
    %v6393 = vunpack.c.h.b16 %v5686
    %v6394 = vunpack.c.l.b16 %v5687
    %v6395 = vunpack.c.h.b16 %v5687
    %v6396 = vunpack.c.l.b16 %v5688
    %v6397 = vunpack.c.h.b16 %v5688
    %v6398 = vunpack.c.l.b16 %v5689
    %v6399 = vunpack.c.h.b16 %v5689
    %v6400 = vunpack.c.l.b16 %v5690
    %v6401 = vunpack.c.h.b16 %v5690
    %v6402 = vunpack.c.l.b16 %v5691
    %v6403 = vunpack.c.h.b16 %v5691
    %v6404 = vunpack.c.l.b16 %v5692
    %v6405 = vunpack.c.h.b16 %v5692
    %v6406 = vunpack.c.l.b16 %v5693
    %v6407 = vunpack.c.h.b16 %v5693
    %v6408 = vunpack.c.l.b16 %v5694
    %v6409 = vunpack.c.h.b16 %v5694
    %v6410 = vunpack.c.l.b16 %v5695
    %v6411 = vunpack.c.h.b16 %v5695
    %v6412 = vunpack.c.l.b16 %v5696
    %v6413 = vunpack.c.h.b16 %v5696
    %v6414 = vunpack.c.l.b16 %v5697
    %v6415 = vunpack.c.h.b16 %v5697
    %v6416 = vunpack.c.l.b16 %v5698
    %v6417 = vunpack.c.h.b16 %v5698
    %v6418 = vunpack.c.l.b16 %v5699
    %v6419 = vunpack.c.h.b16 %v5699
    %v6420 = vpack.c.b16 %v6300, %v6292
    %v6421 = vpack.c.b16 %v6301, %v6293
    %v6422 = vpack.c.b16 %v6302, %v6294
    %v6423 = vpack.c.b16 %v6303, %v6295
    %v6424 = vpack.c.b16 %v6304, %v6296
    %v6425 = vpack.c.b16 %v6305, %v6297
    %v6426 = vpack.c.b16 %v6306, %v6298
    %v6427 = vpack.c.b16 %v6307, %v6299
    %v6428 = vpack.c.b16 %v6316, %v6308
    %v6429 = vpack.c.b16 %v6317, %v6309
    %v6430 = vpack.c.b16 %v6318, %v6310
    %v6431 = vpack.c.b16 %v6319, %v6311
    %v6432 = vpack.c.b16 %v6320, %v6312
    %v6433 = vpack.c.b16 %v6321, %v6313
    %v6434 = vpack.c.b16 %v6322, %v6314
    %v6435 = vpack.c.b16 %v6323, %v6315
    %v6436 = vpack.c.b16 %v6332, %v6324
    %v6437 = vpack.c.b16 %v6333, %v6325
    %v6438 = vpack.c.b16 %v6334, %v6326
    %v6439 = vpack.c.b16 %v6335, %v6327
    %v6440 = vpack.c.b16 %v6336, %v6328
    %v6441 = vpack.c.b16 %v6337, %v6329
    %v6442 = vpack.c.b16 %v6338, %v6330
    %v6443 = vpack.c.b16 %v6339, %v6331
    %v6444 = vpack.c.b16 %v6348, %v6340
    %v6445 = vpack.c.b16 %v6349, %v6341
    %v6446 = vpack.c.b16 %v6350, %v6342
    %v6447 = vpack.c.b16 %v6351, %v6343
    %v6448 = vpack.c.b16 %v6352, %v6344
    %v6449 = vpack.c.b16 %v6353, %v6345
    %v6450 = vpack.c.b16 %v6354, %v6346
    %v6451 = vpack.c.b16 %v6355, %v6347
    %v6452 = vpack.c.b16 %v6364, %v6356
    %v6453 = vpack.c.b16 %v6365, %v6357
    %v6454 = vpack.c.b16 %v6366, %v6358
    %v6455 = vpack.c.b16 %v6367, %v6359
    %v6456 = vpack.c.b16 %v6368, %v6360
    %v6457 = vpack.c.b16 %v6369, %v6361
    %v6458 = vpack.c.b16 %v6370, %v6362
    %v6459 = vpack.c.b16 %v6371, %v6363
    %v6460 = vpack.c.b16 %v6380, %v6372
    %v6461 = vpack.c.b16 %v6381, %v6373
    %v6462 = vpack.c.b16 %v6382, %v6374
    %v6463 = vpack.c.b16 %v6383, %v6375
    %v6464 = vpack.c.b16 %v6384, %v6376
    %v6465 = vpack.c.b16 %v6385, %v6377
    %v6466 = vpack.c.b16 %v6386, %v6378
    %v6467 = vpack.c.b16 %v6387, %v6379
    %v6468 = vpack.c.b16 %v6396, %v6388
    %v6469 = vpack.c.b16 %v6397, %v6389
    %v6470 = vpack.c.b16 %v6398, %v6390
    %v6471 = vpack.c.b16 %v6399, %v6391
    %v6472 = vpack.c.b16 %v6400, %v6392
    %v6473 = vpack.c.b16 %v6401, %v6393
    %v6474 = vpack.c.b16 %v6402, %v6394
    %v6475 = vpack.c.b16 %v6403, %v6395
    %v6476 = vpack.c.b16 %v6412, %v6404
    %v6477 = vpack.c.b16 %v6413, %v6405
    %v6478 = vpack.c.b16 %v6414, %v6406
    %v6479 = vpack.c.b16 %v6415, %v6407
    %v6480 = vpack.c.b16 %v6416, %v6408
    %v6481 = vpack.c.b16 %v6417, %v6409
    %v6482 = vpack.c.b16 %v6418, %v6410
    %v6483 = vpack.c.b16 %v6419, %v6411
    %v7060 = vunpack.c.l.b16 %v5700
    %v7061 = vunpack.c.h.b16 %v5700
    %v7062 = vunpack.c.l.b16 %v5701
    %v7063 = vunpack.c.h.b16 %v5701
    %v7064 = vunpack.c.l.b16 %v5702
    %v7065 = vunpack.c.h.b16 %v5702
    %v7066 = vunpack.c.l.b16 %v5703
    %v7067 = vunpack.c.l.b16 %v5704
    %v7068 = vunpack.c.h.b16 %v5704
    %v7069 = vunpack.c.l.b16 %v5705
    %v7070 = vunpack.c.h.b16 %v5705
    %v7071 = vunpack.c.l.b16 %v5706
    %v7072 = vunpack.c.h.b16 %v5706
    %v7073 = vunpack.c.l.b16 %v5707
    %v7074 = vunpack.c.l.b16 %v5708
    %v7075 = vunpack.c.h.b16 %v5708
    %v7076 = vunpack.c.l.b16 %v5709
    %v7077 = vunpack.c.h.b16 %v5709
    %v7078 = vunpack.c.l.b16 %v5710
    %v7079 = vunpack.c.h.b16 %v5710
    %v7080 = vunpack.c.l.b16 %v5711
    %v7081 = vunpack.c.l.b16 %v5712
    %v7082 = vunpack.c.h.b16 %v5712
    %v7083 = vunpack.c.l.b16 %v5713
    %v7084 = vunpack.c.h.b16 %v5713
    %v7085 = vunpack.c.l.b16 %v5714
    %v7086 = vunpack.c.h.b16 %v5714
    %v7087 = vunpack.c.l.b16 %v5715
    %v7088 = vunpack.c.l.b16 %v5716
    %v7089 = vunpack.c.h.b16 %v5716
    %v7090 = vunpack.c.l.b16 %v5717
    %v7091 = vunpack.c.h.b16 %v5717
    %v7092 = vunpack.c.l.b16 %v5718
    %v7093 = vunpack.c.h.b16 %v5718
    %v7094 = vunpack.c.l.b16 %v5719
    %v7095 = vunpack.c.l.b16 %v5720
    %v7096 = vunpack.c.h.b16 %v5720
    %v7097 = vunpack.c.l.b16 %v5721
    %v7098 = vunpack.c.h.b16 %v5721
    %v7099 = vunpack.c.l.b16 %v5722
    %v7100 = vunpack.c.h.b16 %v5722
    %v7101 = vunpack.c.l.b16 %v5723
    %v7102 = vunpack.c.l.b16 %v5724
    %v7103 = vunpack.c.h.b16 %v5724
    %v7104 = vunpack.c.l.b16 %v5725
    %v7105 = vunpack.c.h.b16 %v5725
    %v7106 = vunpack.c.l.b16 %v5726
    %v7107 = vunpack.c.h.b16 %v5726
    %v7108 = vunpack.c.l.b16 %v5727
    %v7109 = vunpack.c.l.b16 %v5728
    %v7110 = vunpack.c.h.b16 %v5728
    %v7111 = vunpack.c.l.b16 %v5729
    %v7112 = vunpack.c.h.b16 %v5729
    %v7113 = vunpack.c.l.b16 %v5730
    %v7114 = vunpack.c.h.b16 %v5730
    %v7115 = vunpack.c.l.b16 %v5731
    %v7116 = vunpack.c.l.b16 %v5732
    %v7117 = vunpack.c.h.b16 %v5732
    %v7118 = vunpack.c.l.b16 %v5733
    %v7119 = vunpack.c.h.b16 %v5733
    %v7120 = vunpack.c.l.b16 %v5734
    %v7121 = vunpack.c.h.b16 %v5734
    %v7122 = vunpack.c.l.b16 %v5735
    %v7123 = vunpack.c.l.b16 %v5736
    %v7124 = vunpack.c.h.b16 %v5736
    %v7125 = vunpack.c.l.b16 %v5737
    %v7126 = vunpack.c.h.b16 %v5737
    %v7127 = vunpack.c.l.b16 %v5738
    %v7128 = vunpack.c.h.b16 %v5738
    %v7129 = vunpack.c.l.b16 %v5739
    %v7130 = vunpack.c.l.b16 %v5740
    %v7131 = vunpack.c.h.b16 %v5740
    %v7132 = vunpack.c.l.b16 %v5741
    %v7133 = vunpack.c.h.b16 %v5741
    %v7134 = vunpack.c.l.b16 %v5742
    %v7135 = vunpack.c.h.b16 %v5742
    %v7136 = vunpack.c.l.b16 %v5743
    %v7137 = vunpack.c.l.b16 %v5744
    %v7138 = vunpack.c.h.b16 %v5744
    %v7139 = vunpack.c.l.b16 %v5745
    %v7140 = vunpack.c.h.b16 %v5745
    %v7141 = vunpack.c.l.b16 %v5746
    %v7142 = vunpack.c.h.b16 %v5746
    %v7143 = vunpack.c.l.b16 %v5747
    %v7144 = vunpack.c.l.b16 %v5748
    %v7145 = vunpack.c.h.b16 %v5748
    %v7146 = vunpack.c.l.b16 %v5749
    %v7147 = vunpack.c.h.b16 %v5749
    %v7148 = vunpack.c.l.b16 %v5750
    %v7149 = vunpack.c.h.b16 %v5750
    %v7150 = vunpack.c.l.b16 %v5751
    %v7151 = vunpack.c.l.b16 %v5752
    %v7152 = vunpack.c.h.b16 %v5752
    %v7153 = vunpack.c.l.b16 %v5753
    %v7154 = vunpack.c.h.b16 %v5753
    %v7155 = vunpack.c.l.b16 %v5754
    %v7156 = vunpack.c.h.b16 %v5754
    %v7157 = vunpack.c.l.b16 %v5755
    %v7158 = vunpack.c.l.b16 %v5756
    %v7159 = vunpack.c.h.b16 %v5756
    %v7160 = vunpack.c.l.b16 %v5757
    %v7161 = vunpack.c.h.b16 %v5757
    %v7162 = vunpack.c.l.b16 %v5758
    %v7163 = vunpack.c.h.b16 %v5758
    %v7164 = vunpack.c.l.b16 %v5759
    %v7165 = vunpack.c.l.b16 %v5760
    %v7166 = vunpack.c.h.b16 %v5760
    %v7167 = vunpack.c.l.b16 %v5761
    %v7168 = vunpack.c.h.b16 %v5761
    %v7169 = vunpack.c.l.b16 %v5762
    %v7170 = vunpack.c.h.b16 %v5762
    %v7171 = vunpack.c.l.b16 %v5763
    %v7172 = vunpack.c.l.b16 %v5764
    %v7173 = vunpack.c.h.b16 %v5764
    %v7174 = vunpack.c.l.b16 %v5765
    %v7175 = vunpack.c.h.b16 %v5765
    %v7176 = vunpack.c.l.b16 %v5766
    %v7177 = vunpack.c.h.b16 %v5766
    %v7178 = vunpack.c.l.b16 %v5767
    %v7179 = vunpack.c.l.b16 %v5768
    %v7180 = vunpack.c.h.b16 %v5768
    %v7181 = vunpack.c.l.b16 %v5769
    %v7182 = vunpack.c.h.b16 %v5769
    %v7183 = vunpack.c.l.b16 %v5770
    %v7184 = vunpack.c.h.b16 %v5770
    %v7185 = vunpack.c.l.b16 %v5771
    %v7186 = vunpack.c.l.b16 %v5772
    %v7187 = vunpack.c.h.b16 %v5772
    %v7188 = vunpack.c.l.b16 %v5773
    %v7189 = vunpack.c.h.b16 %v5773
    %v7190 = vunpack.c.l.b16 %v5774
    %v7191 = vunpack.c.h.b16 %v5774
    %v7192 = vunpack.c.l.b16 %v5775
    %v7193 = vunpack.c.l.b16 %v5776
    %v7194 = vunpack.c.h.b16 %v5776
    %v7195 = vunpack.c.l.b16 %v5777
    %v7196 = vunpack.c.h.b16 %v5777
    %v7197 = vunpack.c.l.b16 %v5778
    %v7198 = vunpack.c.h.b16 %v5778
    %v7199 = vunpack.c.l.b16 %v5779
    %v7200 = vunpack.c.l.b16 %v5780
    %v7201 = vunpack.c.h.b16 %v5780
    %v7202 = vunpack.c.l.b16 %v5781
    %v7203 = vunpack.c.h.b16 %v5781
    %v7204 = vunpack.c.l.b16 %v5782
    %v7205 = vunpack.c.h.b16 %v5782
    %v7206 = vunpack.c.l.b16 %v5783
    %v7207 = vunpack.c.l.b16 %v5784
    %v7208 = vunpack.c.h.b16 %v5784
    %v7209 = vunpack.c.l.b16 %v5785
    %v7210 = vunpack.c.h.b16 %v5785
    %v7211 = vunpack.c.l.b16 %v5786
    %v7212 = vunpack.c.h.b16 %v5786
    %v7213 = vunpack.c.l.b16 %v5787
    %v7214 = vunpack.c.l.b16 %v5788
    %v7215 = vunpack.c.h.b16 %v5788
    %v7216 = vunpack.c.l.b16 %v5789
    %v7217 = vunpack.c.h.b16 %v5789
    %v7218 = vunpack.c.l.b16 %v5790
    %v7219 = vunpack.c.h.b16 %v5790
    %v7220 = vunpack.c.l.b16 %v5791
    %v7221 = vunpack.c.l.b16 %v5792
    %v7222 = vunpack.c.h.b16 %v5792
    %v7223 = vunpack.c.l.b16 %v5793
    %v7224 = vunpack.c.h.b16 %v5793
    %v7225 = vunpack.c.l.b16 %v5794
    %v7226 = vunpack.c.h.b16 %v5794
    %v7227 = vunpack.c.l.b16 %v5795
    %v7228 = vunpack.c.l.b16 %v5796
    %v7229 = vunpack.c.h.b16 %v5796
    %v7230 = vunpack.c.l.b16 %v5797
    %v7231 = vunpack.c.h.b16 %v5797
    %v7232 = vunpack.c.l.b16 %v5798
    %v7233 = vunpack.c.h.b16 %v5798
    %v7234 = vunpack.c.l.b16 %v5799
    %v7235 = vunpack.c.l.b16 %v5800
    %v7236 = vunpack.c.h.b16 %v5800
    %v7237 = vunpack.c.l.b16 %v5801
    %v7238 = vunpack.c.h.b16 %v5801
    %v7239 = vunpack.c.l.b16 %v5802
    %v7240 = vunpack.c.h.b16 %v5802
    %v7241 = vunpack.c.l.b16 %v5803
    %v7242 = vunpack.c.l.b16 %v5804
    %v7243 = vunpack.c.h.b16 %v5804
    %v7244 = vunpack.c.l.b16 %v5805
    %v7245 = vunpack.c.h.b16 %v5805
    %v7246 = vunpack.c.l.b16 %v5806
    %v7247 = vunpack.c.h.b16 %v5806
    %v7248 = vunpack.c.l.b16 %v5807
    %v7249 = vunpack.c.l.b16 %v5808
    %v7250 = vunpack.c.h.b16 %v5808
    %v7251 = vunpack.c.l.b16 %v5809
    %v7252 = vunpack.c.h.b16 %v5809
    %v7253 = vunpack.c.l.b16 %v5810
    %v7254 = vunpack.c.h.b16 %v5810
    %v7255 = vunpack.c.l.b16 %v5811
    %v7256 = vunpack.c.l.b16 %v5812
    %v7257 = vunpack.c.h.b16 %v5812
    %v7258 = vunpack.c.l.b16 %v5813
    %v7259 = vunpack.c.h.b16 %v5813
    %v7260 = vunpack.c.l.b16 %v5814
    %v7261 = vunpack.c.h.b16 %v5814
    %v7262 = vunpack.c.l.b16 %v5815
    %v7263 = vunpack.c.l.b16 %v5816
    %v7264 = vunpack.c.h.b16 %v5816
    %v7265 = vunpack.c.l.b16 %v5817
    %v7266 = vunpack.c.h.b16 %v5817
    %v7267 = vunpack.c.l.b16 %v5818
    %v7268 = vunpack.c.h.b16 %v5818
    %v7269 = vunpack.c.l.b16 %v5819
    %v7270 = vunpack.c.l.b16 %v5820
    %v7271 = vunpack.c.h.b16 %v5820
    %v7272 = vunpack.c.l.b16 %v5821
    %v7273 = vunpack.c.h.b16 %v5821
    %v7274 = vunpack.c.l.b16 %v5822
    %v7275 = vunpack.c.h.b16 %v5822
    %v7276 = vunpack.c.l.b16 %v5823
    %v7277 = vunpack.c.l.b16 %v5824
    %v7278 = vunpack.c.h.b16 %v5824
    %v7279 = vunpack.c.l.b16 %v5825
    %v7280 = vunpack.c.h.b16 %v5825
    %v7281 = vunpack.c.l.b16 %v5826
    %v7282 = vunpack.c.h.b16 %v5826
    %v7283 = vunpack.c.l.b16 %v5827
    %v7284 = vunpack.c.l.b16 %v5828
    %v7285 = vunpack.c.h.b16 %v5828
    %v7286 = vunpack.c.l.b16 %v5829
    %v7287 = vunpack.c.h.b16 %v5829
    %v7288 = vunpack.c.l.b16 %v5830
    %v7289 = vunpack.c.h.b16 %v5830
    %v7290 = vunpack.c.l.b16 %v5831
    %v7291 = vunpack.c.l.b16 %v5832
    %v7292 = vunpack.c.h.b16 %v5832
    %v7293 = vunpack.c.l.b16 %v5833
    %v7294 = vunpack.c.h.b16 %v5833
    %v7295 = vunpack.c.l.b16 %v5834
    %v7296 = vunpack.c.h.b16 %v5834
    %v7297 = vunpack.c.l.b16 %v5835
    %v7298 = vunpack.c.l.b16 %v5836
    %v7299 = vunpack.c.h.b16 %v5836
    %v7300 = vunpack.c.l.b16 %v5837
    %v7301 = vunpack.c.h.b16 %v5837
    %v7302 = vunpack.c.l.b16 %v5838
    %v7303 = vunpack.c.h.b16 %v5838
    %v7304 = vunpack.c.l.b16 %v5839
    %v7305 = vunpack.c.l.b16 %v5840
    %v7306 = vunpack.c.h.b16 %v5840
    %v7307 = vunpack.c.l.b16 %v5841
    %v7308 = vunpack.c.h.b16 %v5841
    %v7309 = vunpack.c.l.b16 %v5842
    %v7310 = vunpack.c.h.b16 %v5842
    %v7311 = vunpack.c.l.b16 %v5843
    %v7312 = vunpack.c.l.b16 %v5844
    %v7313 = vunpack.c.h.b16 %v5844
    %v7314 = vunpack.c.l.b16 %v5845
    %v7315 = vunpack.c.h.b16 %v5845
    %v7316 = vunpack.c.l.b16 %v5846
    %v7317 = vunpack.c.h.b16 %v5846
    %v7318 = vunpack.c.l.b16 %v5847
    %v7319 = vunpack.c.l.b16 %v5848
    %v7320 = vunpack.c.h.b16 %v5848
    %v7321 = vunpack.c.l.b16 %v5849
    %v7322 = vunpack.c.h.b16 %v5849
    %v7323 = vunpack.c.l.b16 %v5850
    %v7324 = vunpack.c.h.b16 %v5850
    %v7325 = vunpack.c.l.b16 %v5851
    %v7326 = vunpack.c.l.b16 %v5852
    %v7327 = vunpack.c.h.b16 %v5852
    %v7328 = vunpack.c.l.b16 %v5853
    %v7329 = vunpack.c.h.b16 %v5853
    %v7330 = vunpack.c.l.b16 %v5854
    %v7331 = vunpack.c.h.b16 %v5854
    %v7332 = vunpack.c.l.b16 %v5855
    %v7333 = vunpack.c.l.b16 %v5856
    %v7334 = vunpack.c.h.b16 %v5856
    %v7335 = vunpack.c.l.b16 %v5857
    %v7336 = vunpack.c.h.b16 %v5857
    %v7337 = vunpack.c.l.b16 %v5858
    %v7338 = vunpack.c.h.b16 %v5858
    %v7339 = vunpack.c.l.b16 %v5859
    %v7340 = vunpack.c.l.b16 %v5860
    %v7341 = vunpack.c.h.b16 %v5860
    %v7342 = vunpack.c.l.b16 %v5861
    %v7343 = vunpack.c.h.b16 %v5861
    %v7344 = vunpack.c.l.b16 %v5862
    %v7345 = vunpack.c.h.b16 %v5862
    %v7346 = vunpack.c.l.b16 %v5863
    %v7347 = vunpack.c.l.b16 %v5864
    %v7348 = vunpack.c.h.b16 %v5864
    %v7349 = vunpack.c.l.b16 %v5865
    %v7350 = vunpack.c.h.b16 %v5865
    %v7351 = vunpack.c.l.b16 %v5866
    %v7352 = vunpack.c.h.b16 %v5866
    %v7353 = vunpack.c.l.b16 %v5867
    %v7354 = vunpack.c.l.b16 %v5868
    %v7355 = vunpack.c.h.b16 %v5868
    %v7356 = vunpack.c.l.b16 %v5869
    %v7357 = vunpack.c.h.b16 %v5869
    %v7358 = vunpack.c.l.b16 %v5870
    %v7359 = vunpack.c.h.b16 %v5870
    %v7360 = vunpack.c.l.b16 %v5871
    %v7361 = vunpack.c.l.b16 %v5872
    %v7362 = vunpack.c.h.b16 %v5872
    %v7363 = vunpack.c.l.b16 %v5873
    %v7364 = vunpack.c.h.b16 %v5873
    %v7365 = vunpack.c.l.b16 %v5874
    %v7366 = vunpack.c.h.b16 %v5874
    %v7367 = vunpack.c.l.b16 %v5875
    %v7368 = vunpack.c.l.b16 %v5876
    %v7369 = vunpack.c.h.b16 %v5876
    %v7370 = vunpack.c.l.b16 %v5877
    %v7371 = vunpack.c.h.b16 %v5877
    %v7372 = vunpack.c.l.b16 %v5878
    %v7373 = vunpack.c.h.b16 %v5878
    %v7374 = vunpack.c.l.b16 %v5879
    %v7375 = vunpack.c.l.b16 %v5880
    %v7376 = vunpack.c.h.b16 %v5880
    %v7377 = vunpack.c.l.b16 %v5881
    %v7378 = vunpack.c.h.b16 %v5881
    %v7379 = vunpack.c.l.b16 %v5882
    %v7380 = vunpack.c.h.b16 %v5882
    %v7381 = vunpack.c.l.b16 %v5883
    %v7382 = vunpack.c.l.b16 %v5884
    %v7383 = vunpack.c.h.b16 %v5884
    %v7384 = vunpack.c.l.b16 %v5885
    %v7385 = vunpack.c.h.b16 %v5885
    %v7386 = vunpack.c.l.b16 %v5886
    %v7387 = vunpack.c.h.b16 %v5886
    %v7388 = vunpack.c.l.b16 %v5887
    %v7389 = vunpack.c.l.b16 %v5888
    %v7390 = vunpack.c.h.b16 %v5888
    %v7391 = vunpack.c.l.b16 %v5889
    %v7392 = vunpack.c.h.b16 %v5889
    %v7393 = vunpack.c.l.b16 %v5890
    %v7394 = vunpack.c.h.b16 %v5890
    %v7395 = vunpack.c.l.b16 %v5891
    %v7396 = vunpack.c.l.b16 %v5892
    %v7397 = vunpack.c.h.b16 %v5892
    %v7398 = vunpack.c.l.b16 %v5893
    %v7399 = vunpack.c.h.b16 %v5893
    %v7400 = vunpack.c.l.b16 %v5894
    %v7401 = vunpack.c.h.b16 %v5894
    %v7402 = vunpack.c.l.b16 %v5895
    %v7403 = vunpack.c.l.b16 %v5896
    %v7404 = vunpack.c.h.b16 %v5896
    %v7405 = vunpack.c.l.b16 %v5897
    %v7406 = vunpack.c.h.b16 %v5897
    %v7407 = vunpack.c.l.b16 %v5898
    %v7408 = vunpack.c.h.b16 %v5898
    %v7409 = vunpack.c.l.b16 %v5899
    %v7410 = vunpack.c.l.b16 %v5900
    %v7411 = vunpack.c.h.b16 %v5900
    %v7412 = vunpack.c.l.b16 %v5901
    %v7413 = vunpack.c.h.b16 %v5901
    %v7414 = vunpack.c.l.b16 %v5902
    %v7415 = vunpack.c.h.b16 %v5902
    %v7416 = vunpack.c.l.b16 %v5903
    %v7417 = vunpack.c.l.b16 %v5904
    %v7418 = vunpack.c.h.b16 %v5904
    %v7419 = vunpack.c.l.b16 %v5905
    %v7420 = vunpack.c.h.b16 %v5905
    %v7421 = vunpack.c.l.b16 %v5906
    %v7422 = vunpack.c.h.b16 %v5906
    %v7423 = vunpack.c.l.b16 %v5907
    %v7424 = vunpack.c.l.b16 %v5908
    %v7425 = vunpack.c.h.b16 %v5908
    %v7426 = vunpack.c.l.b16 %v5909
    %v7427 = vunpack.c.h.b16 %v5909
    %v7428 = vunpack.c.l.b16 %v5910
    %v7429 = vunpack.c.h.b16 %v5910
    %v7430 = vunpack.c.l.b16 %v5911
    %v7431 = vunpack.c.l.b16 %v5912
    %v7432 = vunpack.c.h.b16 %v5912
    %v7433 = vunpack.c.l.b16 %v5913
    %v7434 = vunpack.c.h.b16 %v5913
    %v7435 = vunpack.c.l.b16 %v5914
    %v7436 = vunpack.c.h.b16 %v5914
    %v7437 = vunpack.c.l.b16 %v5915
    %v7438 = vunpack.c.l.b16 %v5916
    %v7439 = vunpack.c.h.b16 %v5916
    %v7440 = vunpack.c.l.b16 %v5917
    %v7441 = vunpack.c.h.b16 %v5917
    %v7442 = vunpack.c.l.b16 %v5918
    %v7443 = vunpack.c.h.b16 %v5918
    %v7444 = vunpack.c.l.b16 %v5919
    %v7445 = vunpack.c.l.b16 %v5920
    %v7446 = vunpack.c.h.b16 %v5920
    %v7447 = vunpack.c.l.b16 %v5921
    %v7448 = vunpack.c.h.b16 %v5921
    %v7449 = vunpack.c.l.b16 %v5922
    %v7450 = vunpack.c.h.b16 %v5922
    %v7451 = vunpack.c.l.b16 %v5923
    %v7452 = vunpack.c.l.b16 %v5924
    %v7453 = vunpack.c.h.b16 %v5924
    %v7454 = vunpack.c.l.b16 %v5925
    %v7455 = vunpack.c.h.b16 %v5925
    %v7456 = vunpack.c.l.b16 %v5926
    %v7457 = vunpack.c.h.b16 %v5926
    %v7458 = vunpack.c.l.b16 %v5927
    %v7459 = vunpack.c.l.b16 %v5928
    %v7460 = vunpack.c.h.b16 %v5928
    %v7461 = vunpack.c.l.b16 %v5929
    %v7462 = vunpack.c.h.b16 %v5929
    %v7463 = vunpack.c.l.b16 %v5930
    %v7464 = vunpack.c.h.b16 %v5930
    %v7465 = vunpack.c.l.b16 %v5931
    %v7466 = vunpack.c.l.b16 %v5932
    %v7467 = vunpack.c.h.b16 %v5932
    %v7468 = vunpack.c.l.b16 %v5933
    %v7469 = vunpack.c.h.b16 %v5933
    %v7470 = vunpack.c.l.b16 %v5934
    %v7471 = vunpack.c.h.b16 %v5934
    %v7472 = vunpack.c.l.b16 %v5935
    %v7473 = vunpack.c.l.b16 %v5936
    %v7474 = vunpack.c.h.b16 %v5936
    %v7475 = vunpack.c.l.b16 %v5937
    %v7476 = vunpack.c.h.b16 %v5937
    %v7477 = vunpack.c.l.b16 %v5938
    %v7478 = vunpack.c.h.b16 %v5938
    %v7479 = vunpack.c.l.b16 %v5939
    %v7480 = vunpack.c.l.b16 %v5940
    %v7481 = vunpack.c.h.b16 %v5940
    %v7482 = vunpack.c.l.b16 %v5941
    %v7483 = vunpack.c.h.b16 %v5941
    %v7484 = vunpack.c.l.b16 %v5942
    %v7485 = vunpack.c.h.b16 %v5942
    %v7486 = vunpack.c.l.b16 %v5943
    %v7487 = vunpack.c.l.b16 %v5944
    %v7488 = vunpack.c.h.b16 %v5944
    %v7489 = vunpack.c.l.b16 %v5945
    %v7490 = vunpack.c.h.b16 %v5945
    %v7491 = vunpack.c.l.b16 %v5946
    %v7492 = vunpack.c.h.b16 %v5946
    %v7493 = vunpack.c.l.b16 %v5947
    %v7494 = vunpack.c.l.b16 %v5948
    %v7495 = vunpack.c.h.b16 %v5948
    %v7496 = vunpack.c.l.b16 %v5949
    %v7497 = vunpack.c.h.b16 %v5949
    %v7498 = vunpack.c.l.b16 %v5950
    %v7499 = vunpack.c.h.b16 %v5950
    %v7500 = vunpack.c.l.b16 %v5951
    %v7501 = vunpack.c.l.b16 %v5952
    %v7502 = vunpack.c.h.b16 %v5952
    %v7503 = vunpack.c.l.b16 %v5953
    %v7504 = vunpack.c.h.b16 %v5953
    %v7505 = vunpack.c.l.b16 %v5954
    %v7506 = vunpack.c.h.b16 %v5954
    %v7507 = vunpack.c.l.b16 %v5955
    %v7508 = vunpack.c.l.b16 %v5956
    %v7509 = vunpack.c.h.b16 %v5956
    %v7510 = vunpack.c.l.b16 %v5957
    %v7511 = vunpack.c.h.b16 %v5957
    %v7512 = vunpack.c.l.b16 %v5958
    %v7513 = vunpack.c.h.b16 %v5958
    %v7514 = vunpack.c.l.b16 %v5959
    %v7515 = vunpack.c.l.b16 %v5960
    %v7516 = vunpack.c.h.b16 %v5960
    %v7517 = vunpack.c.l.b16 %v5961
    %v7518 = vunpack.c.h.b16 %v5961
    %v7519 = vunpack.c.l.b16 %v5962
    %v7520 = vunpack.c.h.b16 %v5962
    %v7521 = vunpack.c.l.b16 %v5963
    %v7522 = vunpack.c.l.b16 %v5964
    %v7523 = vunpack.c.h.b16 %v5964
    %v7524 = vunpack.c.l.b16 %v5965
    %v7525 = vunpack.c.h.b16 %v5965
    %v7526 = vunpack.c.l.b16 %v5966
    %v7527 = vunpack.c.h.b16 %v5966
    %v7528 = vunpack.c.l.b16 %v5967
    %v7529 = vunpack.c.l.b16 %v5968
    %v7530 = vunpack.c.h.b16 %v5968
    %v7531 = vunpack.c.l.b16 %v5969
    %v7532 = vunpack.c.h.b16 %v5969
    %v7533 = vunpack.c.l.b16 %v5970
    %v7534 = vunpack.c.h.b16 %v5970
    %v7535 = vunpack.c.l.b16 %v5971
    %v7536 = vunpack.c.l.b16 %v5972
    %v7537 = vunpack.c.h.b16 %v5972
    %v7538 = vunpack.c.l.b16 %v5973
    %v7539 = vunpack.c.h.b16 %v5973
    %v7540 = vunpack.c.l.b16 %v5974
    %v7541 = vunpack.c.h.b16 %v5974
    %v7542 = vunpack.c.l.b16 %v5975
    %v7543 = vunpack.c.l.b16 %v5976
    %v7544 = vunpack.c.h.b16 %v5976
    %v7545 = vunpack.c.l.b16 %v5977
    %v7546 = vunpack.c.h.b16 %v5977
    %v7547 = vunpack.c.l.b16 %v5978
    %v7548 = vunpack.c.h.b16 %v5978
    %v7549 = vunpack.c.l.b16 %v5979
    %v7550 = vunpack.c.l.b16 %v5980
    %v7551 = vunpack.c.h.b16 %v5980
    %v7552 = vunpack.c.l.b16 %v5981
    %v7553 = vunpack.c.h.b16 %v5981
    %v7554 = vunpack.c.l.b16 %v5982
    %v7555 = vunpack.c.h.b16 %v5982
    %v7556 = vunpack.c.l.b16 %v5983
    %v7557 = vunpack.c.l.b16 %v5984
    %v7558 = vunpack.c.h.b16 %v5984
    %v7559 = vunpack.c.l.b16 %v5985
    %v7560 = vunpack.c.h.b16 %v5985
    %v7561 = vunpack.c.l.b16 %v5986
    %v7562 = vunpack.c.h.b16 %v5986
    %v7563 = vunpack.c.l.b16 %v5987
    %v7564 = vunpack.c.l.b16 %v5988
    %v7565 = vunpack.c.h.b16 %v5988
    %v7566 = vunpack.c.l.b16 %v5989
    %v7567 = vunpack.c.h.b16 %v5989
    %v7568 = vunpack.c.l.b16 %v5990
    %v7569 = vunpack.c.h.b16 %v5990
    %v7570 = vunpack.c.l.b16 %v5991
    %v7571 = vunpack.c.l.b16 %v5992
    %v7572 = vunpack.c.h.b16 %v5992
    %v7573 = vunpack.c.l.b16 %v5993
    %v7574 = vunpack.c.h.b16 %v5993
    %v7575 = vunpack.c.l.b16 %v5994
    %v7576 = vunpack.c.h.b16 %v5994
    %v7577 = vunpack.c.l.b16 %v5995
    %v7578 = vunpack.c.l.b16 %v5996
    %v7579 = vunpack.c.h.b16 %v5996
    %v7580 = vunpack.c.l.b16 %v5997
    %v7581 = vunpack.c.h.b16 %v5997
    %v7582 = vunpack.c.l.b16 %v5998
    %v7583 = vunpack.c.h.b16 %v5998
    %v7584 = vunpack.c.l.b16 %v5999
    %v7585 = vunpack.c.l.b16 %v6000
    %v7586 = vunpack.c.h.b16 %v6000
    %v7587 = vunpack.c.l.b16 %v6001
    %v7588 = vunpack.c.h.b16 %v6001
    %v7589 = vunpack.c.l.b16 %v6002
    %v7590 = vunpack.c.h.b16 %v6002
    %v7591 = vunpack.c.l.b16 %v6003
    %v7592 = vunpack.c.l.b16 %v6004
    %v7593 = vunpack.c.h.b16 %v6004
    %v7594 = vunpack.c.l.b16 %v6005
    %v7595 = vunpack.c.h.b16 %v6005
    %v7596 = vunpack.c.l.b16 %v6006
    %v7597 = vunpack.c.h.b16 %v6006
    %v7598 = vunpack.c.l.b16 %v6007
    %v7599 = vunpack.c.l.b16 %v6008
    %v7600 = vunpack.c.h.b16 %v6008
    %v7601 = vunpack.c.l.b16 %v6009
    %v7602 = vunpack.c.h.b16 %v6009
    %v7603 = vunpack.c.l.b16 %v6010
    %v7604 = vunpack.c.h.b16 %v6010
    %v7605 = vunpack.c.l.b16 %v6011
    %v7606 = vunpack.c.l.b16 %v6012
    %v7607 = vunpack.c.h.b16 %v6012
    %v7608 = vunpack.c.l.b16 %v6013
    %v7609 = vunpack.c.h.b16 %v6013
    %v7610 = vunpack.c.l.b16 %v6014
    %v7611 = vunpack.c.h.b16 %v6014
    %v7612 = vunpack.c.l.b16 %v6015
    %v7613 = vunpack.c.l.b16 %v6016
    %v7614 = vunpack.c.h.b16 %v6016
    %v7615 = vunpack.c.l.b16 %v6017
    %v7616 = vunpack.c.h.b16 %v6017
    %v7617 = vunpack.c.l.b16 %v6018
    %v7618 = vunpack.c.h.b16 %v6018
    %v7619 = vunpack.c.l.b16 %v6019
    %v7620 = vunpack.c.l.b16 %v6020
    %v7621 = vunpack.c.h.b16 %v6020
    %v7622 = vunpack.c.l.b16 %v6021
    %v7623 = vunpack.c.h.b16 %v6021
    %v7624 = vunpack.c.l.b16 %v6022
    %v7625 = vunpack.c.h.b16 %v6022
    %v7626 = vunpack.c.l.b16 %v6023
    %v7627 = vunpack.c.l.b16 %v6024
    %v7628 = vunpack.c.h.b16 %v6024
    %v7629 = vunpack.c.l.b16 %v6025
    %v7630 = vunpack.c.h.b16 %v6025
    %v7631 = vunpack.c.l.b16 %v6026
    %v7632 = vunpack.c.h.b16 %v6026
    %v7633 = vunpack.c.l.b16 %v6027
    %v7634 = vunpack.c.l.b16 %v6028
    %v7635 = vunpack.c.h.b16 %v6028
    %v7636 = vunpack.c.l.b16 %v6029
    %v7637 = vunpack.c.h.b16 %v6029
    %v7638 = vunpack.c.l.b16 %v6030
    %v7639 = vunpack.c.h.b16 %v6030
    %v7640 = vunpack.c.l.b16 %v6031
    %v7641 = vunpack.c.l.b16 %v6032
    %v7642 = vunpack.c.h.b16 %v6032
    %v7643 = vunpack.c.l.b16 %v6033
    %v7644 = vunpack.c.h.b16 %v6033
    %v7645 = vunpack.c.l.b16 %v6034
    %v7646 = vunpack.c.h.b16 %v6034
    %v7647 = vunpack.c.l.b16 %v6035
    %v7648 = vunpack.c.l.b16 %v6036
    %v7649 = vunpack.c.h.b16 %v6036
    %v7650 = vunpack.c.l.b16 %v6037
    %v7651 = vunpack.c.h.b16 %v6037
    %v7652 = vunpack.c.l.b16 %v6038
    %v7653 = vunpack.c.h.b16 %v6038
    %v7654 = vunpack.c.l.b16 %v6039
    %v7655 = vunpack.c.l.b16 %v6040
    %v7656 = vunpack.c.h.b16 %v6040
    %v7657 = vunpack.c.l.b16 %v6041
    %v7658 = vunpack.c.h.b16 %v6041
    %v7659 = vunpack.c.l.b16 %v6042
    %v7660 = vunpack.c.h.b16 %v6042
    %v7661 = vunpack.c.l.b16 %v6043
    %v7662 = vunpack.c.l.b16 %v6044
    %v7663 = vunpack.c.h.b16 %v6044
    %v7664 = vunpack.c.l.b16 %v6045
    %v7665 = vunpack.c.h.b16 %v6045
    %v7666 = vunpack.c.l.b16 %v6046
    %v7667 = vunpack.c.h.b16 %v6046
    %v7668 = vunpack.c.l.b16 %v6047
    %v7669 = vunpack.c.l.b16 %v6048
    %v7670 = vunpack.c.h.b16 %v6048
    %v7671 = vunpack.c.l.b16 %v6049
    %v7672 = vunpack.c.h.b16 %v6049
    %v7673 = vunpack.c.l.b16 %v6050
    %v7674 = vunpack.c.h.b16 %v6050
    %v7675 = vunpack.c.l.b16 %v6051
    %v7676 = vunpack.c.l.b16 %v6052
    %v7677 = vunpack.c.h.b16 %v6052
    %v7678 = vunpack.c.l.b16 %v6053
    %v7679 = vunpack.c.h.b16 %v6053
    %v7680 = vunpack.c.l.b16 %v6054
    %v7681 = vunpack.c.h.b16 %v6054
    %v7682 = vunpack.c.l.b16 %v6055
    %v7683 = vunpack.c.l.b16 %v6056
    %v7684 = vunpack.c.h.b16 %v6056
    %v7685 = vunpack.c.l.b16 %v6057
    %v7686 = vunpack.c.h.b16 %v6057
    %v7687 = vunpack.c.l.b16 %v6058
    %v7688 = vunpack.c.h.b16 %v6058
    %v7689 = vunpack.c.l.b16 %v6059
    %v7690 = vunpack.c.l.b16 %v6060
    %v7691 = vunpack.c.h.b16 %v6060
    %v7692 = vunpack.c.l.b16 %v6061
    %v7693 = vunpack.c.h.b16 %v6061
    %v7694 = vunpack.c.l.b16 %v6062
    %v7695 = vunpack.c.h.b16 %v6062
    %v7696 = vunpack.c.l.b16 %v6063
    %v7697 = vunpack.c.l.b16 %v6064
    %v7698 = vunpack.c.h.b16 %v6064
    %v7699 = vunpack.c.l.b16 %v6065
    %v7700 = vunpack.c.h.b16 %v6065
    %v7701 = vunpack.c.l.b16 %v6066
    %v7702 = vunpack.c.h.b16 %v6066
    %v7703 = vunpack.c.l.b16 %v6067
    %v7704 = vunpack.c.l.b16 %v6068
    %v7705 = vunpack.c.h.b16 %v6068
    %v7706 = vunpack.c.l.b16 %v6069
    %v7707 = vunpack.c.h.b16 %v6069
    %v7708 = vunpack.c.l.b16 %v6070
    %v7709 = vunpack.c.h.b16 %v6070
    %v7710 = vunpack.c.l.b16 %v6071
    %v7711 = vunpack.c.l.b16 %v6072
    %v7712 = vunpack.c.h.b16 %v6072
    %v7713 = vunpack.c.l.b16 %v6073
    %v7714 = vunpack.c.h.b16 %v6073
    %v7715 = vunpack.c.l.b16 %v6074
    %v7716 = vunpack.c.h.b16 %v6074
    %v7717 = vunpack.c.l.b16 %v6075
    %v7718 = vunpack.c.l.b16 %v6076
    %v7719 = vunpack.c.h.b16 %v6076
    %v7720 = vunpack.c.l.b16 %v6077
    %v7721 = vunpack.c.h.b16 %v6077
    %v7722 = vunpack.c.l.b16 %v6078
    %v7723 = vunpack.c.h.b16 %v6078
    %v7724 = vunpack.c.l.b16 %v6079
    %v7725 = vunpack.c.l.b16 %v6080
    %v7726 = vunpack.c.h.b16 %v6080
    %v7727 = vunpack.c.l.b16 %v6081
    %v7728 = vunpack.c.h.b16 %v6081
    %v7729 = vunpack.c.l.b16 %v6082
    %v7730 = vunpack.c.h.b16 %v6082
    %v7731 = vunpack.c.l.b16 %v6083
    %v7732 = vunpack.c.l.b16 %v6084
    %v7733 = vunpack.c.h.b16 %v6084
    %v7734 = vunpack.c.l.b16 %v6085
    %v7735 = vunpack.c.h.b16 %v6085
    %v7736 = vunpack.c.l.b16 %v6086
    %v7737 = vunpack.c.h.b16 %v6086
    %v7738 = vunpack.c.l.b16 %v6087
    %v7739 = vunpack.c.l.b16 %v6088
    %v7740 = vunpack.c.h.b16 %v6088
    %v7741 = vunpack.c.l.b16 %v6089
    %v7742 = vunpack.c.h.b16 %v6089
    %v7743 = vunpack.c.l.b16 %v6090
    %v7744 = vunpack.c.h.b16 %v6090
    %v7745 = vunpack.c.l.b16 %v6091
    %v7746 = vunpack.c.l.b16 %v6092
    %v7747 = vunpack.c.h.b16 %v6092
    %v7748 = vunpack.c.l.b16 %v6093
    %v7749 = vunpack.c.h.b16 %v6093
    %v7750 = vunpack.c.l.b16 %v6094
    %v7751 = vunpack.c.h.b16 %v6094
    %v7752 = vunpack.c.l.b16 %v6095
    %v7753 = vunpack.c.l.b16 %v6096
    %v7754 = vunpack.c.h.b16 %v6096
    %v7755 = vunpack.c.l.b16 %v6097
    %v7756 = vunpack.c.h.b16 %v6097
    %v7757 = vunpack.c.l.b16 %v6098
    %v7758 = vunpack.c.h.b16 %v6098
    %v7759 = vunpack.c.l.b16 %v6099
    %v7760 = vunpack.c.l.b16 %v6100
    %v7761 = vunpack.c.h.b16 %v6100
    %v7762 = vunpack.c.l.b16 %v6101
    %v7763 = vunpack.c.h.b16 %v6101
    %v7764 = vunpack.c.l.b16 %v6102
    %v7765 = vunpack.c.h.b16 %v6102
    %v7766 = vunpack.c.l.b16 %v6103
    %v7767 = vunpack.c.l.b16 %v6104
    %v7768 = vunpack.c.h.b16 %v6104
    %v7769 = vunpack.c.l.b16 %v6105
    %v7770 = vunpack.c.h.b16 %v6105
    %v7771 = vunpack.c.l.b16 %v6106
    %v7772 = vunpack.c.h.b16 %v6106
    %v7773 = vunpack.c.l.b16 %v6107
    %v7774 = vunpack.c.l.b16 %v6108
    %v7775 = vunpack.c.h.b16 %v6108
    %v7776 = vunpack.c.l.b16 %v6109
    %v7777 = vunpack.c.h.b16 %v6109
    %v7778 = vunpack.c.l.b16 %v6110
    %v7779 = vunpack.c.h.b16 %v6110
    %v7780 = vunpack.c.l.b16 %v6111
    %v7781 = vunpack.c.l.b16 %v6112
    %v7782 = vunpack.c.h.b16 %v6112
    %v7783 = vunpack.c.l.b16 %v6113
    %v7784 = vunpack.c.h.b16 %v6113
    %v7785 = vunpack.c.l.b16 %v6114
    %v7786 = vunpack.c.h.b16 %v6114
    %v7787 = vunpack.c.l.b16 %v6115
    %v7788 = vunpack.c.l.b16 %v6116
    %v7789 = vunpack.c.h.b16 %v6116
    %v7790 = vunpack.c.l.b16 %v6117
    %v7791 = vunpack.c.h.b16 %v6117
    %v7792 = vunpack.c.l.b16 %v6118
    %v7793 = vunpack.c.h.b16 %v6118
    %v7794 = vunpack.c.l.b16 %v6119
    %v7795 = vunpack.c.l.b16 %v6120
    %v7796 = vunpack.c.h.b16 %v6120
    %v7797 = vunpack.c.l.b16 %v6121
    %v7798 = vunpack.c.h.b16 %v6121
    %v7799 = vunpack.c.l.b16 %v6122
    %v7800 = vunpack.c.h.b16 %v6122
    %v7801 = vunpack.c.l.b16 %v6123
    %v7802 = vunpack.c.l.b16 %v6124
    %v7803 = vunpack.c.h.b16 %v6124
    %v7804 = vunpack.c.l.b16 %v6125
    %v7805 = vunpack.c.h.b16 %v6125
    %v7806 = vunpack.c.l.b16 %v6126
    %v7807 = vunpack.c.h.b16 %v6126
    %v7808 = vunpack.c.l.b16 %v6127
    %v7809 = vunpack.c.l.b16 %v6128
    %v7810 = vunpack.c.h.b16 %v6128
    %v7811 = vunpack.c.l.b16 %v6129
    %v7812 = vunpack.c.h.b16 %v6129
    %v7813 = vunpack.c.l.b16 %v6130
    %v7814 = vunpack.c.h.b16 %v6130
    %v7815 = vunpack.c.l.b16 %v6131
    %v7816 = vunpack.c.l.b16 %v6132
    %v7817 = vunpack.c.h.b16 %v6132
    %v7818 = vunpack.c.l.b16 %v6133
    %v7819 = vunpack.c.h.b16 %v6133
    %v7820 = vunpack.c.l.b16 %v6134
    %v7821 = vunpack.c.h.b16 %v6134
    %v7822 = vunpack.c.l.b16 %v6135
    %v7823 = vunpack.c.l.b16 %v6136
    %v7824 = vunpack.c.h.b16 %v6136
    %v7825 = vunpack.c.l.b16 %v6137
    %v7826 = vunpack.c.h.b16 %v6137
    %v7827 = vunpack.c.l.b16 %v6138
    %v7828 = vunpack.c.h.b16 %v6138
    %v7829 = vunpack.c.l.b16 %v6139
    %v7830 = vunpack.c.l.b16 %v6140
    %v7831 = vunpack.c.h.b16 %v6140
    %v7832 = vunpack.c.l.b16 %v6141
    %v7833 = vunpack.c.h.b16 %v6141
    %v7834 = vunpack.c.l.b16 %v6142
    %v7835 = vunpack.c.h.b16 %v6142
    %v7836 = vunpack.c.l.b16 %v6143
    %v7837 = vunpack.c.l.b16 %v6144
    %v7838 = vunpack.c.h.b16 %v6144
    %v7839 = vunpack.c.l.b16 %v6145
    %v7840 = vunpack.c.h.b16 %v6145
    %v7841 = vunpack.c.l.b16 %v6146
    %v7842 = vunpack.c.h.b16 %v6146
    %v7843 = vunpack.c.l.b16 %v6147
    %v7844 = vunpack.c.l.b16 %v6148
    %v7845 = vunpack.c.h.b16 %v6148
    %v7846 = vunpack.c.l.b16 %v6149
    %v7847 = vunpack.c.h.b16 %v6149
    %v7848 = vunpack.c.l.b16 %v6150
    %v7849 = vunpack.c.h.b16 %v6150
    %v7850 = vunpack.c.l.b16 %v6151
    %v7851 = vunpack.c.l.b16 %v6152
    %v7852 = vunpack.c.h.b16 %v6152
    %v7853 = vunpack.c.l.b16 %v6153
    %v7854 = vunpack.c.h.b16 %v6153
    %v7855 = vunpack.c.l.b16 %v6154
    %v7856 = vunpack.c.h.b16 %v6154
    %v7857 = vunpack.c.l.b16 %v6155
    %v7858 = vunpack.c.l.b16 %v6156
    %v7859 = vunpack.c.h.b16 %v6156
    %v7860 = vunpack.c.l.b16 %v6157
    %v7861 = vunpack.c.h.b16 %v6157
    %v7862 = vunpack.c.l.b16 %v6158
    %v7863 = vunpack.c.h.b16 %v6158
    %v7864 = vunpack.c.l.b16 %v6159
    %v7865 = vunpack.c.l.b16 %v6160
    %v7866 = vunpack.c.h.b16 %v6160
    %v7867 = vunpack.c.l.b16 %v6161
    %v7868 = vunpack.c.h.b16 %v6161
    %v7869 = vunpack.c.l.b16 %v6162
    %v7870 = vunpack.c.h.b16 %v6162
    %v7871 = vunpack.c.l.b16 %v6163
    %v7872 = vunpack.c.l.b16 %v6164
    %v7873 = vunpack.c.h.b16 %v6164
    %v7874 = vunpack.c.l.b16 %v6165
    %v7875 = vunpack.c.h.b16 %v6165
    %v7876 = vunpack.c.l.b16 %v6166
    %v7877 = vunpack.c.h.b16 %v6166
    %v7878 = vunpack.c.l.b16 %v6167
    %v7879 = vunpack.c.l.b16 %v6168
    %v7880 = vunpack.c.h.b16 %v6168
    %v7881 = vunpack.c.l.b16 %v6169
    %v7882 = vunpack.c.h.b16 %v6169
    %v7883 = vunpack.c.l.b16 %v6170
    %v7884 = vunpack.c.h.b16 %v6170
    %v7885 = vunpack.c.l.b16 %v6171
    %v7886 = vunpack.c.l.b16 %v6172
    %v7887 = vunpack.c.h.b16 %v6172
    %v7888 = vunpack.c.l.b16 %v6173
    %v7889 = vunpack.c.h.b16 %v6173
    %v7890 = vunpack.c.l.b16 %v6174
    %v7891 = vunpack.c.h.b16 %v6174
    %v7892 = vunpack.c.l.b16 %v6175
    %v7893 = vunpack.c.l.b16 %v6176
    %v7894 = vunpack.c.h.b16 %v6176
    %v7895 = vunpack.c.l.b16 %v6177
    %v7896 = vunpack.c.h.b16 %v6177
    %v7897 = vunpack.c.l.b16 %v6178
    %v7898 = vunpack.c.h.b16 %v6178
    %v7899 = vunpack.c.l.b16 %v6179
    %v7900 = vunpack.c.l.b16 %v6180
    %v7901 = vunpack.c.h.b16 %v6180
    %v7902 = vunpack.c.l.b16 %v6181
    %v7903 = vunpack.c.h.b16 %v6181
    %v7904 = vunpack.c.l.b16 %v6182
    %v7905 = vunpack.c.h.b16 %v6182
    %v7906 = vunpack.c.l.b16 %v6183
    %v7907 = vunpack.c.l.b16 %v6184
    %v7908 = vunpack.c.h.b16 %v6184
    %v7909 = vunpack.c.l.b16 %v6185
    %v7910 = vunpack.c.h.b16 %v6185
    %v7911 = vunpack.c.l.b16 %v6186
    %v7912 = vunpack.c.h.b16 %v6186
    %v7913 = vunpack.c.l.b16 %v6187
    %v7914 = vunpack.c.l.b16 %v6188
    %v7915 = vunpack.c.h.b16 %v6188
    %v7916 = vunpack.c.l.b16 %v6189
    %v7917 = vunpack.c.h.b16 %v6189
    %v7918 = vunpack.c.l.b16 %v6190
    %v7919 = vunpack.c.h.b16 %v6190
    %v7920 = vunpack.c.l.b16 %v6191
    %v7921 = vunpack.c.l.b16 %v6192
    %v7922 = vunpack.c.h.b16 %v6192
    %v7923 = vunpack.c.l.b16 %v6193
    %v7924 = vunpack.c.h.b16 %v6193
    %v7925 = vunpack.c.l.b16 %v6194
    %v7926 = vunpack.c.h.b16 %v6194
    %v7927 = vunpack.c.l.b16 %v6195
    %v7928 = vunpack.c.l.b16 %v6196
    %v7929 = vunpack.c.h.b16 %v6196
    %v7930 = vunpack.c.l.b16 %v6197
    %v7931 = vunpack.c.h.b16 %v6197
    %v7932 = vunpack.c.l.b16 %v6198
    %v7933 = vunpack.c.h.b16 %v6198
    %v7934 = vunpack.c.l.b16 %v6199
    %v7935 = vunpack.c.l.b16 %v6200
    %v7936 = vunpack.c.h.b16 %v6200
    %v7937 = vunpack.c.l.b16 %v6201
    %v7938 = vunpack.c.h.b16 %v6201
    %v7939 = vunpack.c.l.b16 %v6202
    %v7940 = vunpack.c.h.b16 %v6202
    %v7941 = vunpack.c.l.b16 %v6203
    %v7942 = vunpack.c.l.b16 %v6204
    %v7943 = vunpack.c.h.b16 %v6204
    %v7944 = vunpack.c.l.b16 %v6205
    %v7945 = vunpack.c.h.b16 %v6205
    %v7946 = vunpack.c.l.b16 %v6206
    %v7947 = vunpack.c.h.b16 %v6206
    %v7948 = vunpack.c.l.b16 %v6207
    %v7949 = vunpack.c.l.b16 %v6208
    %v7950 = vunpack.c.h.b16 %v6208
    %v7951 = vunpack.c.l.b16 %v6209
    %v7952 = vunpack.c.h.b16 %v6209
    %v7953 = vunpack.c.l.b16 %v6210
    %v7954 = vunpack.c.h.b16 %v6210
    %v7955 = vunpack.c.l.b16 %v6211
    %v7956 = vpack.c.b16 %v7067, %v7060
    %v7957 = vpack.c.b16 %v7068, %v7061
    %v7958 = vpack.c.b16 %v7069, %v7062
    %v7959 = vpack.c.b16 %v7070, %v7063
    %v7960 = vpack.c.b16 %v7071, %v7064
    %v7961 = vpack.c.b16 %v7072, %v7065
    %v7962 = vpack.c.b16 %v7073, %v7066
    %v7963 = vpack.c.b16 %v7081, %v7074
    %v7964 = vpack.c.b16 %v7082, %v7075
    %v7965 = vpack.c.b16 %v7083, %v7076
    %v7966 = vpack.c.b16 %v7084, %v7077
    %v7967 = vpack.c.b16 %v7085, %v7078
    %v7968 = vpack.c.b16 %v7086, %v7079
    %v7969 = vpack.c.b16 %v7087, %v7080
    %v7970 = vpack.c.b16 %v7095, %v7088
    %v7971 = vpack.c.b16 %v7096, %v7089
    %v7972 = vpack.c.b16 %v7097, %v7090
    %v7973 = vpack.c.b16 %v7098, %v7091
    %v7974 = vpack.c.b16 %v7099, %v7092
    %v7975 = vpack.c.b16 %v7100, %v7093
    %v7976 = vpack.c.b16 %v7101, %v7094
    %v7977 = vpack.c.b16 %v7109, %v7102
    %v7978 = vpack.c.b16 %v7110, %v7103
    %v7979 = vpack.c.b16 %v7111, %v7104
    %v7980 = vpack.c.b16 %v7112, %v7105
    %v7981 = vpack.c.b16 %v7113, %v7106
    %v7982 = vpack.c.b16 %v7114, %v7107
    %v7983 = vpack.c.b16 %v7115, %v7108
    %v7984 = vpack.c.b16 %v7123, %v7116
    %v7985 = vpack.c.b16 %v7124, %v7117
    %v7986 = vpack.c.b16 %v7125, %v7118
    %v7987 = vpack.c.b16 %v7126, %v7119
    %v7988 = vpack.c.b16 %v7127, %v7120
    %v7989 = vpack.c.b16 %v7128, %v7121
    %v7990 = vpack.c.b16 %v7129, %v7122
    %v7991 = vpack.c.b16 %v7137, %v7130
    %v7992 = vpack.c.b16 %v7138, %v7131
    %v7993 = vpack.c.b16 %v7139, %v7132
    %v7994 = vpack.c.b16 %v7140, %v7133
    %v7995 = vpack.c.b16 %v7141, %v7134
    %v7996 = vpack.c.b16 %v7142, %v7135
    %v7997 = vpack.c.b16 %v7143, %v7136
    %v7998 = vpack.c.b16 %v7151, %v7144
    %v7999 = vpack.c.b16 %v7152, %v7145
    %v8000 = vpack.c.b16 %v7153, %v7146
    %v8001 = vpack.c.b16 %v7154, %v7147
    %v8002 = vpack.c.b16 %v7155, %v7148
    %v8003 = vpack.c.b16 %v7156, %v7149
    %v8004 = vpack.c.b16 %v7157, %v7150
    %v8005 = vpack.c.b16 %v7165, %v7158
    %v8006 = vpack.c.b16 %v7166, %v7159
    %v8007 = vpack.c.b16 %v7167, %v7160
    %v8008 = vpack.c.b16 %v7168, %v7161
    %v8009 = vpack.c.b16 %v7169, %v7162
    %v8010 = vpack.c.b16 %v7170, %v7163
    %v8011 = vpack.c.b16 %v7171, %v7164
    %v8012 = vpack.c.b16 %v7179, %v7172
    %v8013 = vpack.c.b16 %v7180, %v7173
    %v8014 = vpack.c.b16 %v7181, %v7174
    %v8015 = vpack.c.b16 %v7182, %v7175
    %v8016 = vpack.c.b16 %v7183, %v7176
    %v8017 = vpack.c.b16 %v7184, %v7177
    %v8018 = vpack.c.b16 %v7185, %v7178
    %v8019 = vpack.c.b16 %v7193, %v7186
    %v8020 = vpack.c.b16 %v7194, %v7187
    %v8021 = vpack.c.b16 %v7195, %v7188
    %v8022 = vpack.c.b16 %v7196, %v7189
    %v8023 = vpack.c.b16 %v7197, %v7190
    %v8024 = vpack.c.b16 %v7198, %v7191
    %v8025 = vpack.c.b16 %v7199, %v7192
    %v8026 = vpack.c.b16 %v7207, %v7200
    %v8027 = vpack.c.b16 %v7208, %v7201
    %v8028 = vpack.c.b16 %v7209, %v7202
    %v8029 = vpack.c.b16 %v7210, %v7203
    %v8030 = vpack.c.b16 %v7211, %v7204
    %v8031 = vpack.c.b16 %v7212, %v7205
    %v8032 = vpack.c.b16 %v7213, %v7206
    %v8033 = vpack.c.b16 %v7221, %v7214
    %v8034 = vpack.c.b16 %v7222, %v7215
    %v8035 = vpack.c.b16 %v7223, %v7216
    %v8036 = vpack.c.b16 %v7224, %v7217
    %v8037 = vpack.c.b16 %v7225, %v7218
    %v8038 = vpack.c.b16 %v7226, %v7219
    %v8039 = vpack.c.b16 %v7227, %v7220
    %v8040 = vpack.c.b16 %v7235, %v7228
    %v8041 = vpack.c.b16 %v7236, %v7229
    %v8042 = vpack.c.b16 %v7237, %v7230
    %v8043 = vpack.c.b16 %v7238, %v7231
    %v8044 = vpack.c.b16 %v7239, %v7232
    %v8045 = vpack.c.b16 %v7240, %v7233
    %v8046 = vpack.c.b16 %v7241, %v7234
    %v8047 = vpack.c.b16 %v7249, %v7242
    %v8048 = vpack.c.b16 %v7250, %v7243
    %v8049 = vpack.c.b16 %v7251, %v7244
    %v8050 = vpack.c.b16 %v7252, %v7245
    %v8051 = vpack.c.b16 %v7253, %v7246
    %v8052 = vpack.c.b16 %v7254, %v7247
    %v8053 = vpack.c.b16 %v7255, %v7248
    %v8054 = vpack.c.b16 %v7263, %v7256
    %v8055 = vpack.c.b16 %v7264, %v7257
    %v8056 = vpack.c.b16 %v7265, %v7258
    %v8057 = vpack.c.b16 %v7266, %v7259
    %v8058 = vpack.c.b16 %v7267, %v7260
    %v8059 = vpack.c.b16 %v7268, %v7261
    %v8060 = vpack.c.b16 %v7269, %v7262
    %v8061 = vpack.c.b16 %v7277, %v7270
    %v8062 = vpack.c.b16 %v7278, %v7271
    %v8063 = vpack.c.b16 %v7279, %v7272
    %v8064 = vpack.c.b16 %v7280, %v7273
    %v8065 = vpack.c.b16 %v7281, %v7274
    %v8066 = vpack.c.b16 %v7282, %v7275
    %v8067 = vpack.c.b16 %v7283, %v7276
    %v8068 = vpack.c.b16 %v7291, %v7284
    %v8069 = vpack.c.b16 %v7292, %v7285
    %v8070 = vpack.c.b16 %v7293, %v7286
    %v8071 = vpack.c.b16 %v7294, %v7287
    %v8072 = vpack.c.b16 %v7295, %v7288
    %v8073 = vpack.c.b16 %v7296, %v7289
    %v8074 = vpack.c.b16 %v7297, %v7290
    %v8075 = vpack.c.b16 %v7305, %v7298
    %v8076 = vpack.c.b16 %v7306, %v7299
    %v8077 = vpack.c.b16 %v7307, %v7300
    %v8078 = vpack.c.b16 %v7308, %v7301
    %v8079 = vpack.c.b16 %v7309, %v7302
    %v8080 = vpack.c.b16 %v7310, %v7303
    %v8081 = vpack.c.b16 %v7311, %v7304
    %v8082 = vpack.c.b16 %v7319, %v7312
    %v8083 = vpack.c.b16 %v7320, %v7313
    %v8084 = vpack.c.b16 %v7321, %v7314
    %v8085 = vpack.c.b16 %v7322, %v7315
    %v8086 = vpack.c.b16 %v7323, %v7316
    %v8087 = vpack.c.b16 %v7324, %v7317
    %v8088 = vpack.c.b16 %v7325, %v7318
    %v8089 = vpack.c.b16 %v7333, %v7326
    %v8090 = vpack.c.b16 %v7334, %v7327
    %v8091 = vpack.c.b16 %v7335, %v7328
    %v8092 = vpack.c.b16 %v7336, %v7329
    %v8093 = vpack.c.b16 %v7337, %v7330
    %v8094 = vpack.c.b16 %v7338, %v7331
    %v8095 = vpack.c.b16 %v7339, %v7332
    %v8096 = vpack.c.b16 %v7347, %v7340
    %v8097 = vpack.c.b16 %v7348, %v7341
    %v8098 = vpack.c.b16 %v7349, %v7342
    %v8099 = vpack.c.b16 %v7350, %v7343
    %v8100 = vpack.c.b16 %v7351, %v7344
    %v8101 = vpack.c.b16 %v7352, %v7345
    %v8102 = vpack.c.b16 %v7353, %v7346
    %v8103 = vpack.c.b16 %v7361, %v7354
    %v8104 = vpack.c.b16 %v7362, %v7355
    %v8105 = vpack.c.b16 %v7363, %v7356
    %v8106 = vpack.c.b16 %v7364, %v7357
    %v8107 = vpack.c.b16 %v7365, %v7358
    %v8108 = vpack.c.b16 %v7366, %v7359
    %v8109 = vpack.c.b16 %v7367, %v7360
    %v8110 = vpack.c.b16 %v7375, %v7368
    %v8111 = vpack.c.b16 %v7376, %v7369
    %v8112 = vpack.c.b16 %v7377, %v7370
    %v8113 = vpack.c.b16 %v7378, %v7371
    %v8114 = vpack.c.b16 %v7379, %v7372
    %v8115 = vpack.c.b16 %v7380, %v7373
    %v8116 = vpack.c.b16 %v7381, %v7374
    %v8117 = vpack.c.b16 %v7389, %v7382
    %v8118 = vpack.c.b16 %v7390, %v7383
    %v8119 = vpack.c.b16 %v7391, %v7384
    %v8120 = vpack.c.b16 %v7392, %v7385
    %v8121 = vpack.c.b16 %v7393, %v7386
    %v8122 = vpack.c.b16 %v7394, %v7387
    %v8123 = vpack.c.b16 %v7395, %v7388
    %v8124 = vpack.c.b16 %v7403, %v7396
    %v8125 = vpack.c.b16 %v7404, %v7397
    %v8126 = vpack.c.b16 %v7405, %v7398
    %v8127 = vpack.c.b16 %v7406, %v7399
    %v8128 = vpack.c.b16 %v7407, %v7400
    %v8129 = vpack.c.b16 %v7408, %v7401
    %v8130 = vpack.c.b16 %v7409, %v7402
    %v8131 = vpack.c.b16 %v7417, %v7410
    %v8132 = vpack.c.b16 %v7418, %v7411
    %v8133 = vpack.c.b16 %v7419, %v7412
    %v8134 = vpack.c.b16 %v7420, %v7413
    %v8135 = vpack.c.b16 %v7421, %v7414
    %v8136 = vpack.c.b16 %v7422, %v7415
    %v8137 = vpack.c.b16 %v7423, %v7416
    %v8138 = vpack.c.b16 %v7431, %v7424
    %v8139 = vpack.c.b16 %v7432, %v7425
    %v8140 = vpack.c.b16 %v7433, %v7426
    %v8141 = vpack.c.b16 %v7434, %v7427
    %v8142 = vpack.c.b16 %v7435, %v7428
    %v8143 = vpack.c.b16 %v7436, %v7429
    %v8144 = vpack.c.b16 %v7437, %v7430
    %v8145 = vpack.c.b16 %v7445, %v7438
    %v8146 = vpack.c.b16 %v7446, %v7439
    %v8147 = vpack.c.b16 %v7447, %v7440
    %v8148 = vpack.c.b16 %v7448, %v7441
    %v8149 = vpack.c.b16 %v7449, %v7442
    %v8150 = vpack.c.b16 %v7450, %v7443
    %v8151 = vpack.c.b16 %v7451, %v7444
    %v8152 = vpack.c.b16 %v7459, %v7452
    %v8153 = vpack.c.b16 %v7460, %v7453
    %v8154 = vpack.c.b16 %v7461, %v7454
    %v8155 = vpack.c.b16 %v7462, %v7455
    %v8156 = vpack.c.b16 %v7463, %v7456
    %v8157 = vpack.c.b16 %v7464, %v7457
    %v8158 = vpack.c.b16 %v7465, %v7458
    %v8159 = vpack.c.b16 %v7473, %v7466
    %v8160 = vpack.c.b16 %v7474, %v7467
    %v8161 = vpack.c.b16 %v7475, %v7468
    %v8162 = vpack.c.b16 %v7476, %v7469
    %v8163 = vpack.c.b16 %v7477, %v7470
    %v8164 = vpack.c.b16 %v7478, %v7471
    %v8165 = vpack.c.b16 %v7479, %v7472
    %v8166 = vpack.c.b16 %v7487, %v7480
    %v8167 = vpack.c.b16 %v7488, %v7481
    %v8168 = vpack.c.b16 %v7489, %v7482
    %v8169 = vpack.c.b16 %v7490, %v7483
    %v8170 = vpack.c.b16 %v7491, %v7484
    %v8171 = vpack.c.b16 %v7492, %v7485
    %v8172 = vpack.c.b16 %v7493, %v7486
    %v8173 = vpack.c.b16 %v7501, %v7494
    %v8174 = vpack.c.b16 %v7502, %v7495
    %v8175 = vpack.c.b16 %v7503, %v7496
    %v8176 = vpack.c.b16 %v7504, %v7497
    %v8177 = vpack.c.b16 %v7505, %v7498
    %v8178 = vpack.c.b16 %v7506, %v7499
    %v8179 = vpack.c.b16 %v7507, %v7500
    %v8180 = vpack.c.b16 %v7515, %v7508
    %v8181 = vpack.c.b16 %v7516, %v7509
    %v8182 = vpack.c.b16 %v7517, %v7510
    %v8183 = vpack.c.b16 %v7518, %v7511
    %v8184 = vpack.c.b16 %v7519, %v7512
    %v8185 = vpack.c.b16 %v7520, %v7513
    %v8186 = vpack.c.b16 %v7521, %v7514
    %v8187 = vpack.c.b16 %v7529, %v7522
    %v8188 = vpack.c.b16 %v7530, %v7523
    %v8189 = vpack.c.b16 %v7531, %v7524
    %v8190 = vpack.c.b16 %v7532, %v7525
    %v8191 = vpack.c.b16 %v7533, %v7526
    %v8192 = vpack.c.b16 %v7534, %v7527
    %v8193 = vpack.c.b16 %v7535, %v7528
    %v8194 = vpack.c.b16 %v7543, %v7536
    %v8195 = vpack.c.b16 %v7544, %v7537
    %v8196 = vpack.c.b16 %v7545, %v7538
    %v8197 = vpack.c.b16 %v7546, %v7539
    %v8198 = vpack.c.b16 %v7547, %v7540
    %v8199 = vpack.c.b16 %v7548, %v7541
    %v8200 = vpack.c.b16 %v7549, %v7542
    %v8201 = vpack.c.b16 %v7557, %v7550
    %v8202 = vpack.c.b16 %v7558, %v7551
    %v8203 = vpack.c.b16 %v7559, %v7552
    %v8204 = vpack.c.b16 %v7560, %v7553
    %v8205 = vpack.c.b16 %v7561, %v7554
    %v8206 = vpack.c.b16 %v7562, %v7555
    %v8207 = vpack.c.b16 %v7563, %v7556
    %v8208 = vpack.c.b16 %v7571, %v7564
    %v8209 = vpack.c.b16 %v7572, %v7565
    %v8210 = vpack.c.b16 %v7573, %v7566
    %v8211 = vpack.c.b16 %v7574, %v7567
    %v8212 = vpack.c.b16 %v7575, %v7568
    %v8213 = vpack.c.b16 %v7576, %v7569
    %v8214 = vpack.c.b16 %v7577, %v7570
    %v8215 = vpack.c.b16 %v7585, %v7578
    %v8216 = vpack.c.b16 %v7586, %v7579
    %v8217 = vpack.c.b16 %v7587, %v7580
    %v8218 = vpack.c.b16 %v7588, %v7581
    %v8219 = vpack.c.b16 %v7589, %v7582
    %v8220 = vpack.c.b16 %v7590, %v7583
    %v8221 = vpack.c.b16 %v7591, %v7584
    %v8222 = vpack.c.b16 %v7599, %v7592
    %v8223 = vpack.c.b16 %v7600, %v7593
    %v8224 = vpack.c.b16 %v7601, %v7594
    %v8225 = vpack.c.b16 %v7602, %v7595
    %v8226 = vpack.c.b16 %v7603, %v7596
    %v8227 = vpack.c.b16 %v7604, %v7597
    %v8228 = vpack.c.b16 %v7605, %v7598
    %v8229 = vpack.c.b16 %v7613, %v7606
    %v8230 = vpack.c.b16 %v7614, %v7607
    %v8231 = vpack.c.b16 %v7615, %v7608
    %v8232 = vpack.c.b16 %v7616, %v7609
    %v8233 = vpack.c.b16 %v7617, %v7610
    %v8234 = vpack.c.b16 %v7618, %v7611
    %v8235 = vpack.c.b16 %v7619, %v7612
    %v8236 = vpack.c.b16 %v7627, %v7620
    %v8237 = vpack.c.b16 %v7628, %v7621
    %v8238 = vpack.c.b16 %v7629, %v7622
    %v8239 = vpack.c.b16 %v7630, %v7623
    %v8240 = vpack.c.b16 %v7631, %v7624
    %v8241 = vpack.c.b16 %v7632, %v7625
    %v8242 = vpack.c.b16 %v7633, %v7626
    %v8243 = vpack.c.b16 %v7641, %v7634
    %v8244 = vpack.c.b16 %v7642, %v7635
    %v8245 = vpack.c.b16 %v7643, %v7636
    %v8246 = vpack.c.b16 %v7644, %v7637
    %v8247 = vpack.c.b16 %v7645, %v7638
    %v8248 = vpack.c.b16 %v7646, %v7639
    %v8249 = vpack.c.b16 %v7647, %v7640
    %v8250 = vpack.c.b16 %v7655, %v7648
    %v8251 = vpack.c.b16 %v7656, %v7649
    %v8252 = vpack.c.b16 %v7657, %v7650
    %v8253 = vpack.c.b16 %v7658, %v7651
    %v8254 = vpack.c.b16 %v7659, %v7652
    %v8255 = vpack.c.b16 %v7660, %v7653
    %v8256 = vpack.c.b16 %v7661, %v7654
    %v8257 = vpack.c.b16 %v7669, %v7662
    %v8258 = vpack.c.b16 %v7670, %v7663
    %v8259 = vpack.c.b16 %v7671, %v7664
    %v8260 = vpack.c.b16 %v7672, %v7665
    %v8261 = vpack.c.b16 %v7673, %v7666
    %v8262 = vpack.c.b16 %v7674, %v7667
    %v8263 = vpack.c.b16 %v7675, %v7668
    %v8264 = vpack.c.b16 %v7683, %v7676
    %v8265 = vpack.c.b16 %v7684, %v7677
    %v8266 = vpack.c.b16 %v7685, %v7678
    %v8267 = vpack.c.b16 %v7686, %v7679
    %v8268 = vpack.c.b16 %v7687, %v7680
    %v8269 = vpack.c.b16 %v7688, %v7681
    %v8270 = vpack.c.b16 %v7689, %v7682
    %v8271 = vpack.c.b16 %v7697, %v7690
    %v8272 = vpack.c.b16 %v7698, %v7691
    %v8273 = vpack.c.b16 %v7699, %v7692
    %v8274 = vpack.c.b16 %v7700, %v7693
    %v8275 = vpack.c.b16 %v7701, %v7694
    %v8276 = vpack.c.b16 %v7702, %v7695
    %v8277 = vpack.c.b16 %v7703, %v7696
    %v8278 = vpack.c.b16 %v7711, %v7704
    %v8279 = vpack.c.b16 %v7712, %v7705
    %v8280 = vpack.c.b16 %v7713, %v7706
    %v8281 = vpack.c.b16 %v7714, %v7707
    %v8282 = vpack.c.b16 %v7715, %v7708
    %v8283 = vpack.c.b16 %v7716, %v7709
    %v8284 = vpack.c.b16 %v7717, %v7710
    %v8285 = vpack.c.b16 %v7725, %v7718
    %v8286 = vpack.c.b16 %v7726, %v7719
    %v8287 = vpack.c.b16 %v7727, %v7720
    %v8288 = vpack.c.b16 %v7728, %v7721
    %v8289 = vpack.c.b16 %v7729, %v7722
    %v8290 = vpack.c.b16 %v7730, %v7723
    %v8291 = vpack.c.b16 %v7731, %v7724
    %v8292 = vpack.c.b16 %v7739, %v7732
    %v8293 = vpack.c.b16 %v7740, %v7733
    %v8294 = vpack.c.b16 %v7741, %v7734
    %v8295 = vpack.c.b16 %v7742, %v7735
    %v8296 = vpack.c.b16 %v7743, %v7736
    %v8297 = vpack.c.b16 %v7744, %v7737
    %v8298 = vpack.c.b16 %v7745, %v7738
    %v8299 = vpack.c.b16 %v7753, %v7746
    %v8300 = vpack.c.b16 %v7754, %v7747
    %v8301 = vpack.c.b16 %v7755, %v7748
    %v8302 = vpack.c.b16 %v7756, %v7749
    %v8303 = vpack.c.b16 %v7757, %v7750
    %v8304 = vpack.c.b16 %v7758, %v7751
    %v8305 = vpack.c.b16 %v7759, %v7752
    %v8306 = vpack.c.b16 %v7767, %v7760
    %v8307 = vpack.c.b16 %v7768, %v7761
    %v8308 = vpack.c.b16 %v7769, %v7762
    %v8309 = vpack.c.b16 %v7770, %v7763
    %v8310 = vpack.c.b16 %v7771, %v7764
    %v8311 = vpack.c.b16 %v7772, %v7765
    %v8312 = vpack.c.b16 %v7773, %v7766
    %v8313 = vpack.c.b16 %v7781, %v7774
    %v8314 = vpack.c.b16 %v7782, %v7775
    %v8315 = vpack.c.b16 %v7783, %v7776
    %v8316 = vpack.c.b16 %v7784, %v7777
    %v8317 = vpack.c.b16 %v7785, %v7778
    %v8318 = vpack.c.b16 %v7786, %v7779
    %v8319 = vpack.c.b16 %v7787, %v7780
    %v8320 = vpack.c.b16 %v7795, %v7788
    %v8321 = vpack.c.b16 %v7796, %v7789
    %v8322 = vpack.c.b16 %v7797, %v7790
    %v8323 = vpack.c.b16 %v7798, %v7791
    %v8324 = vpack.c.b16 %v7799, %v7792
    %v8325 = vpack.c.b16 %v7800, %v7793
    %v8326 = vpack.c.b16 %v7801, %v7794
    %v8327 = vpack.c.b16 %v7809, %v7802
    %v8328 = vpack.c.b16 %v7810, %v7803
    %v8329 = vpack.c.b16 %v7811, %v7804
    %v8330 = vpack.c.b16 %v7812, %v7805
    %v8331 = vpack.c.b16 %v7813, %v7806
    %v8332 = vpack.c.b16 %v7814, %v7807
    %v8333 = vpack.c.b16 %v7815, %v7808
    %v8334 = vpack.c.b16 %v7823, %v7816
    %v8335 = vpack.c.b16 %v7824, %v7817
    %v8336 = vpack.c.b16 %v7825, %v7818
    %v8337 = vpack.c.b16 %v7826, %v7819
    %v8338 = vpack.c.b16 %v7827, %v7820
    %v8339 = vpack.c.b16 %v7828, %v7821
    %v8340 = vpack.c.b16 %v7829, %v7822
    %v8341 = vpack.c.b16 %v7837, %v7830
    %v8342 = vpack.c.b16 %v7838, %v7831
    %v8343 = vpack.c.b16 %v7839, %v7832
    %v8344 = vpack.c.b16 %v7840, %v7833
    %v8345 = vpack.c.b16 %v7841, %v7834
    %v8346 = vpack.c.b16 %v7842, %v7835
    %v8347 = vpack.c.b16 %v7843, %v7836
    %v8348 = vpack.c.b16 %v7851, %v7844
    %v8349 = vpack.c.b16 %v7852, %v7845
    %v8350 = vpack.c.b16 %v7853, %v7846
    %v8351 = vpack.c.b16 %v7854, %v7847
    %v8352 = vpack.c.b16 %v7855, %v7848
    %v8353 = vpack.c.b16 %v7856, %v7849
    %v8354 = vpack.c.b16 %v7857, %v7850
    %v8355 = vpack.c.b16 %v7865, %v7858
    %v8356 = vpack.c.b16 %v7866, %v7859
    %v8357 = vpack.c.b16 %v7867, %v7860
    %v8358 = vpack.c.b16 %v7868, %v7861
    %v8359 = vpack.c.b16 %v7869, %v7862
    %v8360 = vpack.c.b16 %v7870, %v7863
    %v8361 = vpack.c.b16 %v7871, %v7864
    %v8362 = vpack.c.b16 %v7879, %v7872
    %v8363 = vpack.c.b16 %v7880, %v7873
    %v8364 = vpack.c.b16 %v7881, %v7874
    %v8365 = vpack.c.b16 %v7882, %v7875
    %v8366 = vpack.c.b16 %v7883, %v7876
    %v8367 = vpack.c.b16 %v7884, %v7877
    %v8368 = vpack.c.b16 %v7885, %v7878
    %v8369 = vpack.c.b16 %v7893, %v7886
    %v8370 = vpack.c.b16 %v7894, %v7887
    %v8371 = vpack.c.b16 %v7895, %v7888
    %v8372 = vpack.c.b16 %v7896, %v7889
    %v8373 = vpack.c.b16 %v7897, %v7890
    %v8374 = vpack.c.b16 %v7898, %v7891
    %v8375 = vpack.c.b16 %v7899, %v7892
    %v8376 = vpack.c.b16 %v7907, %v7900
    %v8377 = vpack.c.b16 %v7908, %v7901
    %v8378 = vpack.c.b16 %v7909, %v7902
    %v8379 = vpack.c.b16 %v7910, %v7903
    %v8380 = vpack.c.b16 %v7911, %v7904
    %v8381 = vpack.c.b16 %v7912, %v7905
    %v8382 = vpack.c.b16 %v7913, %v7906
    %v8383 = vpack.c.b16 %v7921, %v7914
    %v8384 = vpack.c.b16 %v7922, %v7915
    %v8385 = vpack.c.b16 %v7923, %v7916
    %v8386 = vpack.c.b16 %v7924, %v7917
    %v8387 = vpack.c.b16 %v7925, %v7918
    %v8388 = vpack.c.b16 %v7926, %v7919
    %v8389 = vpack.c.b16 %v7927, %v7920
    %v8390 = vpack.c.b16 %v7935, %v7928
    %v8391 = vpack.c.b16 %v7936, %v7929
    %v8392 = vpack.c.b16 %v7937, %v7930
    %v8393 = vpack.c.b16 %v7938, %v7931
    %v8394 = vpack.c.b16 %v7939, %v7932
    %v8395 = vpack.c.b16 %v7940, %v7933
    %v8396 = vpack.c.b16 %v7941, %v7934
    %v8397 = vpack.c.b16 %v7949, %v7942
    %v8398 = vpack.c.b16 %v7950, %v7943
    %v8399 = vpack.c.b16 %v7951, %v7944
    %v8400 = vpack.c.b16 %v7952, %v7945
    %v8401 = vpack.c.b16 %v7953, %v7946
    %v8402 = vpack.c.b16 %v7954, %v7947
    %v8403 = vpack.c.b16 %v7955, %v7948
    %8852 = vmatpush.bf16.msra.mxu0 %v8005
    %8853 = vmatpush.bf16.msra.mxu0 %v7998
    %8854 = vmatpush.bf16.msra.mxu0 %v7991
    %8855 = vmatpush.bf16.msra.mxu0 %v7984
    %8856 = vmatpush.bf16.msra.mxu0 %v7977
    %8857 = vmatpush.bf16.msra.mxu0 %v7970
    %8858 = vmatpush.bf16.msra.mxu0 %v7963
    %8859 = vmatpush.bf16.msra.mxu0 %v7956
    %8860 = vmatmul.bf16.gmra.mxu0 %v6420
    %v8861 = vpop.f32.mrf.mxu0
    %v8862 = vadd.f32 %v6214, %v8861
    %v8863 = vpop.f32.mrf.mxu0
    %v8864 = vadd.f32 %v6214, %v8863
    %8865 = vmatmul.bf16.gmra.mxu0 %v6428
    %v8866 = vpop.f32.mrf.mxu0
    %v8867 = vadd.f32 %v6214, %v8866
    %v8868 = vpop.f32.mrf.mxu0
    %v8869 = vadd.f32 %v6214, %v8868
    %8870 = vmatmul.bf16.gmra.mxu0 %v6436
    %v8871 = vpop.f32.mrf.mxu0
    %v8872 = vadd.f32 %v6214, %v8871
    %v8873 = vpop.f32.mrf.mxu0
    %v8874 = vadd.f32 %v6214, %v8873
    %8875 = vmatmul.bf16.gmra.mxu0 %v6444
    %v8876 = vpop.f32.mrf.mxu0
    %v8877 = vadd.f32 %v6214, %v8876
    %v8878 = vpop.f32.mrf.mxu0
    %v8879 = vadd.f32 %v6214, %v8878
    %8880 = vmatmul.bf16.gmra.mxu0 %v6452
    %v8881 = vpop.f32.mrf.mxu0
    %v8882 = vadd.f32 %v6214, %v8881
    %v8883 = vpop.f32.mrf.mxu0
    %v8884 = vadd.f32 %v6214, %v8883
    %8885 = vmatmul.bf16.gmra.mxu0 %v6460
    %v8886 = vpop.f32.mrf.mxu0
    %v8887 = vadd.f32 %v6214, %v8886
    %v8888 = vpop.f32.mrf.mxu0
    %v8889 = vadd.f32 %v6214, %v8888
    %8890 = vmatmul.bf16.gmra.mxu0 %v6468
    %v8891 = vpop.f32.mrf.mxu0
    %v8892 = vadd.f32 %v6214, %v8891
    %v8893 = vpop.f32.mrf.mxu0
    %v8894 = vadd.f32 %v6214, %v8893
    %8895 = vmatmul.bf16.gmra.mxu0 %v6476
    %v8896 = vpop.f32.mrf.mxu0
    %v8897 = vadd.f32 %v6214, %v8896
    %v8898 = vpop.f32.mrf.mxu0
    %v8899 = vadd.f32 %v6214, %v8898
    %8900 = vdwg.mxu0
    %8901 = vmatpush.bf16.msra.mxu0 %v8061
    %8902 = vmatpush.bf16.msra.mxu0 %v8054
    %8903 = vmatpush.bf16.msra.mxu0 %v8047
    %8904 = vmatpush.bf16.msra.mxu0 %v8040
    %8905 = vmatpush.bf16.msra.mxu0 %v8033
    %8906 = vmatpush.bf16.msra.mxu0 %v8026
    %8907 = vmatpush.bf16.msra.mxu0 %v8019
    %8908 = vmatpush.bf16.msra.mxu0 %v8012
    %8909 = vmatmul.bf16.gmra.mxu0 %v6421
    %v8910 = vpop.f32.mrf.mxu0
    %v8911 = vadd.f32 %v8862, %v8910
    %v8912 = vpop.f32.mrf.mxu0
    %v8913 = vadd.f32 %v8864, %v8912
    %8914 = vmatmul.bf16.gmra.mxu0 %v6429
    %v8915 = vpop.f32.mrf.mxu0
    %v8916 = vadd.f32 %v8867, %v8915
    %v8917 = vpop.f32.mrf.mxu0
    %v8918 = vadd.f32 %v8869, %v8917
    %8919 = vmatmul.bf16.gmra.mxu0 %v6437
    %v8920 = vpop.f32.mrf.mxu0
    %v8921 = vadd.f32 %v8872, %v8920
    %v8922 = vpop.f32.mrf.mxu0
    %v8923 = vadd.f32 %v8874, %v8922
    %8924 = vmatmul.bf16.gmra.mxu0 %v6445
    %v8925 = vpop.f32.mrf.mxu0
    %v8926 = vadd.f32 %v8877, %v8925
    %v8927 = vpop.f32.mrf.mxu0
    %v8928 = vadd.f32 %v8879, %v8927
    %8929 = vmatmul.bf16.gmra.mxu0 %v6453
    %v8930 = vpop.f32.mrf.mxu0
    %v8931 = vadd.f32 %v8882, %v8930
    %v8932 = vpop.f32.mrf.mxu0
    %v8933 = vadd.f32 %v8884, %v8932
    %8934 = vmatmul.bf16.gmra.mxu0 %v6461
    %v8935 = vpop.f32.mrf.mxu0
    %v8936 = vadd.f32 %v8887, %v8935
    %v8937 = vpop.f32.mrf.mxu0
    %v8938 = vadd.f32 %v8889, %v8937
    %8939 = vmatmul.bf16.gmra.mxu0 %v6469
    %v8940 = vpop.f32.mrf.mxu0
    %v8941 = vadd.f32 %v8892, %v8940
    %v8942 = vpop.f32.mrf.mxu0
    %v8943 = vadd.f32 %v8894, %v8942
    %8944 = vmatmul.bf16.gmra.mxu0 %v6477
    %v8945 = vpop.f32.mrf.mxu0
    %v8946 = vadd.f32 %v8897, %v8945
    %v8947 = vpop.f32.mrf.mxu0
    %v8948 = vadd.f32 %v8899, %v8947
    %8949 = vdwg.mxu0
    %8950 = vmatpush.bf16.msra.mxu0 %v8117
    %8951 = vmatpush.bf16.msra.mxu0 %v8110
    %8952 = vmatpush.bf16.msra.mxu0 %v8103
    %8953 = vmatpush.bf16.msra.mxu0 %v8096
    %8954 = vmatpush.bf16.msra.mxu0 %v8089
    %8955 = vmatpush.bf16.msra.mxu0 %v8082
    %8956 = vmatpush.bf16.msra.mxu0 %v8075
    %8957 = vmatpush.bf16.msra.mxu0 %v8068
    %8958 = vmatmul.bf16.gmra.mxu0 %v6422
    %v8959 = vpop.f32.mrf.mxu0
    %v8960 = vadd.f32 %v8911, %v8959
    %v8961 = vpop.f32.mrf.mxu0
    %v8962 = vadd.f32 %v8913, %v8961
    %8963 = vmatmul.bf16.gmra.mxu0 %v6430
    %v8964 = vpop.f32.mrf.mxu0
    %v8965 = vadd.f32 %v8916, %v8964
    %v8966 = vpop.f32.mrf.mxu0
    %v8967 = vadd.f32 %v8918, %v8966
    %8968 = vmatmul.bf16.gmra.mxu0 %v6438
    %v8969 = vpop.f32.mrf.mxu0
    %v8970 = vadd.f32 %v8921, %v8969
    %v8971 = vpop.f32.mrf.mxu0
    %v8972 = vadd.f32 %v8923, %v8971
    %8973 = vmatmul.bf16.gmra.mxu0 %v6446
    %v8974 = vpop.f32.mrf.mxu0
    %v8975 = vadd.f32 %v8926, %v8974
    %v8976 = vpop.f32.mrf.mxu0
    %v8977 = vadd.f32 %v8928, %v8976
    %8978 = vmatmul.bf16.gmra.mxu0 %v6454
    %v8979 = vpop.f32.mrf.mxu0
    %v8980 = vadd.f32 %v8931, %v8979
    %v8981 = vpop.f32.mrf.mxu0
    %v8982 = vadd.f32 %v8933, %v8981
    %8983 = vmatmul.bf16.gmra.mxu0 %v6462
    %v8984 = vpop.f32.mrf.mxu0
    %v8985 = vadd.f32 %v8936, %v8984
    %v8986 = vpop.f32.mrf.mxu0
    %v8987 = vadd.f32 %v8938, %v8986
    %8988 = vmatmul.bf16.gmra.mxu0 %v6470
    %v8989 = vpop.f32.mrf.mxu0
    %v8990 = vadd.f32 %v8941, %v8989
    %v8991 = vpop.f32.mrf.mxu0
    %v8992 = vadd.f32 %v8943, %v8991
    %8993 = vmatmul.bf16.gmra.mxu0 %v6478
    %v8994 = vpop.f32.mrf.mxu0
    %v8995 = vadd.f32 %v8946, %v8994
    %v8996 = vpop.f32.mrf.mxu0
    %v8997 = vadd.f32 %v8948, %v8996
    %8998 = vdwg.mxu0
    %8999 = vmatpush.bf16.msra.mxu0 %v8173
    %9000 = vmatpush.bf16.msra.mxu0 %v8166
    %9001 = vmatpush.bf16.msra.mxu0 %v8159
    %9002 = vmatpush.bf16.msra.mxu0 %v8152
    %9003 = vmatpush.bf16.msra.mxu0 %v8145
    %9004 = vmatpush.bf16.msra.mxu0 %v8138
    %9005 = vmatpush.bf16.msra.mxu0 %v8131
    %9006 = vmatpush.bf16.msra.mxu0 %v8124
    %9007 = vmatmul.bf16.gmra.mxu0 %v6423
    %v9008 = vpop.f32.mrf.mxu0
    %v9009 = vadd.f32 %v8960, %v9008
    %v9010 = vpop.f32.mrf.mxu0
    %v9011 = vadd.f32 %v8962, %v9010
    %9012 = vmatmul.bf16.gmra.mxu0 %v6431
    %v9013 = vpop.f32.mrf.mxu0
    %v9014 = vadd.f32 %v8965, %v9013
    %v9015 = vpop.f32.mrf.mxu0
    %v9016 = vadd.f32 %v8967, %v9015
    %9017 = vmatmul.bf16.gmra.mxu0 %v6439
    %v9018 = vpop.f32.mrf.mxu0
    %v9019 = vadd.f32 %v8970, %v9018
    %v9020 = vpop.f32.mrf.mxu0
    %v9021 = vadd.f32 %v8972, %v9020
    %9022 = vmatmul.bf16.gmra.mxu0 %v6447
    %v9023 = vpop.f32.mrf.mxu0
    %v9024 = vadd.f32 %v8975, %v9023
    %v9025 = vpop.f32.mrf.mxu0
    %v9026 = vadd.f32 %v8977, %v9025
    %9027 = vmatmul.bf16.gmra.mxu0 %v6455
    %v9028 = vpop.f32.mrf.mxu0
    %v9029 = vadd.f32 %v8980, %v9028
    %v9030 = vpop.f32.mrf.mxu0
    %v9031 = vadd.f32 %v8982, %v9030
    %9032 = vmatmul.bf16.gmra.mxu0 %v6463
    %v9033 = vpop.f32.mrf.mxu0
    %v9034 = vadd.f32 %v8985, %v9033
    %v9035 = vpop.f32.mrf.mxu0
    %v9036 = vadd.f32 %v8987, %v9035
    %9037 = vmatmul.bf16.gmra.mxu0 %v6471
    %v9038 = vpop.f32.mrf.mxu0
    %v9039 = vadd.f32 %v8990, %v9038
    %v9040 = vpop.f32.mrf.mxu0
    %v9041 = vadd.f32 %v8992, %v9040
    %9042 = vmatmul.bf16.gmra.mxu0 %v6479
    %v9043 = vpop.f32.mrf.mxu0
    %v9044 = vadd.f32 %v8995, %v9043
    %v9045 = vpop.f32.mrf.mxu0
    %v9046 = vadd.f32 %v8997, %v9045
    %9047 = vdwg.mxu0
    %9048 = vmatpush.bf16.msra.mxu0 %v8229
    %9049 = vmatpush.bf16.msra.mxu0 %v8222
    %9050 = vmatpush.bf16.msra.mxu0 %v8215
    %9051 = vmatpush.bf16.msra.mxu0 %v8208
    %9052 = vmatpush.bf16.msra.mxu0 %v8201
    %9053 = vmatpush.bf16.msra.mxu0 %v8194
    %9054 = vmatpush.bf16.msra.mxu0 %v8187
    %9055 = vmatpush.bf16.msra.mxu0 %v8180
    %9056 = vmatmul.bf16.gmra.mxu0 %v6424
    %v9057 = vpop.f32.mrf.mxu0
    %v9058 = vadd.f32 %v9009, %v9057
    %v9059 = vpop.f32.mrf.mxu0
    %v9060 = vadd.f32 %v9011, %v9059
    %9061 = vmatmul.bf16.gmra.mxu0 %v6432
    %v9062 = vpop.f32.mrf.mxu0
    %v9063 = vadd.f32 %v9014, %v9062
    %v9064 = vpop.f32.mrf.mxu0
    %v9065 = vadd.f32 %v9016, %v9064
    %9066 = vmatmul.bf16.gmra.mxu0 %v6440
    %v9067 = vpop.f32.mrf.mxu0
    %v9068 = vadd.f32 %v9019, %v9067
    %v9069 = vpop.f32.mrf.mxu0
    %v9070 = vadd.f32 %v9021, %v9069
    %9071 = vmatmul.bf16.gmra.mxu0 %v6448
    %v9072 = vpop.f32.mrf.mxu0
    %v9073 = vadd.f32 %v9024, %v9072
    %v9074 = vpop.f32.mrf.mxu0
    %v9075 = vadd.f32 %v9026, %v9074
    %9076 = vmatmul.bf16.gmra.mxu0 %v6456
    %v9077 = vpop.f32.mrf.mxu0
    %v9078 = vadd.f32 %v9029, %v9077
    %v9079 = vpop.f32.mrf.mxu0
    %v9080 = vadd.f32 %v9031, %v9079
    %9081 = vmatmul.bf16.gmra.mxu0 %v6464
    %v9082 = vpop.f32.mrf.mxu0
    %v9083 = vadd.f32 %v9034, %v9082
    %v9084 = vpop.f32.mrf.mxu0
    %v9085 = vadd.f32 %v9036, %v9084
    %9086 = vmatmul.bf16.gmra.mxu0 %v6472
    %v9087 = vpop.f32.mrf.mxu0
    %v9088 = vadd.f32 %v9039, %v9087
    %v9089 = vpop.f32.mrf.mxu0
    %v9090 = vadd.f32 %v9041, %v9089
    %9091 = vmatmul.bf16.gmra.mxu0 %v6480
    %v9092 = vpop.f32.mrf.mxu0
    %v9093 = vadd.f32 %v9044, %v9092
    %v9094 = vpop.f32.mrf.mxu0
    %v9095 = vadd.f32 %v9046, %v9094
    %9096 = vdwg.mxu0
    %9097 = vmatpush.bf16.msra.mxu0 %v8285
    %9098 = vmatpush.bf16.msra.mxu0 %v8278
    %9099 = vmatpush.bf16.msra.mxu0 %v8271
    %9100 = vmatpush.bf16.msra.mxu0 %v8264
    %9101 = vmatpush.bf16.msra.mxu0 %v8257
    %9102 = vmatpush.bf16.msra.mxu0 %v8250
    %9103 = vmatpush.bf16.msra.mxu0 %v8243
    %9104 = vmatpush.bf16.msra.mxu0 %v8236
    %9105 = vmatmul.bf16.gmra.mxu0 %v6425
    %v9106 = vpop.f32.mrf.mxu0
    %v9107 = vadd.f32 %v9058, %v9106
    %v9108 = vpop.f32.mrf.mxu0
    %v9109 = vadd.f32 %v9060, %v9108
    %9110 = vmatmul.bf16.gmra.mxu0 %v6433
    %v9111 = vpop.f32.mrf.mxu0
    %v9112 = vadd.f32 %v9063, %v9111
    %v9113 = vpop.f32.mrf.mxu0
    %v9114 = vadd.f32 %v9065, %v9113
    %9115 = vmatmul.bf16.gmra.mxu0 %v6441
    %v9116 = vpop.f32.mrf.mxu0
    %v9117 = vadd.f32 %v9068, %v9116
    %v9118 = vpop.f32.mrf.mxu0
    %v9119 = vadd.f32 %v9070, %v9118
    %9120 = vmatmul.bf16.gmra.mxu0 %v6449
    %v9121 = vpop.f32.mrf.mxu0
    %v9122 = vadd.f32 %v9073, %v9121
    %v9123 = vpop.f32.mrf.mxu0
    %v9124 = vadd.f32 %v9075, %v9123
    %9125 = vmatmul.bf16.gmra.mxu0 %v6457
    %v9126 = vpop.f32.mrf.mxu0
    %v9127 = vadd.f32 %v9078, %v9126
    %v9128 = vpop.f32.mrf.mxu0
    %v9129 = vadd.f32 %v9080, %v9128
    %9130 = vmatmul.bf16.gmra.mxu0 %v6465
    %v9131 = vpop.f32.mrf.mxu0
    %v9132 = vadd.f32 %v9083, %v9131
    %v9133 = vpop.f32.mrf.mxu0
    %v9134 = vadd.f32 %v9085, %v9133
    %9135 = vmatmul.bf16.gmra.mxu0 %v6473
    %v9136 = vpop.f32.mrf.mxu0
    %v9137 = vadd.f32 %v9088, %v9136
    %v9138 = vpop.f32.mrf.mxu0
    %v9139 = vadd.f32 %v9090, %v9138
    %9140 = vmatmul.bf16.gmra.mxu0 %v6481
    %v9141 = vpop.f32.mrf.mxu0
    %v9142 = vadd.f32 %v9093, %v9141
    %v9143 = vpop.f32.mrf.mxu0
    %v9144 = vadd.f32 %v9095, %v9143
    %9145 = vdwg.mxu0
    %9146 = vmatpush.bf16.msra.mxu0 %v8341
    %9147 = vmatpush.bf16.msra.mxu0 %v8334
    %9148 = vmatpush.bf16.msra.mxu0 %v8327
    %9149 = vmatpush.bf16.msra.mxu0 %v8320
    %9150 = vmatpush.bf16.msra.mxu0 %v8313
    %9151 = vmatpush.bf16.msra.mxu0 %v8306
    %9152 = vmatpush.bf16.msra.mxu0 %v8299
    %9153 = vmatpush.bf16.msra.mxu0 %v8292
    %9154 = vmatmul.bf16.gmra.mxu0 %v6426
    %v9155 = vpop.f32.mrf.mxu0
    %v9156 = vadd.f32 %v9107, %v9155
    %v9157 = vpop.f32.mrf.mxu0
    %v9158 = vadd.f32 %v9109, %v9157
    %9159 = vmatmul.bf16.gmra.mxu0 %v6434
    %v9160 = vpop.f32.mrf.mxu0
    %v9161 = vadd.f32 %v9112, %v9160
    %v9162 = vpop.f32.mrf.mxu0
    %v9163 = vadd.f32 %v9114, %v9162
    %9164 = vmatmul.bf16.gmra.mxu0 %v6442
    %v9165 = vpop.f32.mrf.mxu0
    %v9166 = vadd.f32 %v9117, %v9165
    %v9167 = vpop.f32.mrf.mxu0
    %v9168 = vadd.f32 %v9119, %v9167
    %9169 = vmatmul.bf16.gmra.mxu0 %v6450
    %v9170 = vpop.f32.mrf.mxu0
    %v9171 = vadd.f32 %v9122, %v9170
    %v9172 = vpop.f32.mrf.mxu0
    %v9173 = vadd.f32 %v9124, %v9172
    %9174 = vmatmul.bf16.gmra.mxu0 %v6458
    %v9175 = vpop.f32.mrf.mxu0
    %v9176 = vadd.f32 %v9127, %v9175
    %v9177 = vpop.f32.mrf.mxu0
    %v9178 = vadd.f32 %v9129, %v9177
    %9179 = vmatmul.bf16.gmra.mxu0 %v6466
    %v9180 = vpop.f32.mrf.mxu0
    %v9181 = vadd.f32 %v9132, %v9180
    %v9182 = vpop.f32.mrf.mxu0
    %v9183 = vadd.f32 %v9134, %v9182
    %9184 = vmatmul.bf16.gmra.mxu0 %v6474
    %v9185 = vpop.f32.mrf.mxu0
    %v9186 = vadd.f32 %v9137, %v9185
    %v9187 = vpop.f32.mrf.mxu0
    %v9188 = vadd.f32 %v9139, %v9187
    %9189 = vmatmul.bf16.gmra.mxu0 %v6482
    %v9190 = vpop.f32.mrf.mxu0
    %v9191 = vadd.f32 %v9142, %v9190
    %v9192 = vpop.f32.mrf.mxu0
    %v9193 = vadd.f32 %v9144, %v9192
    %9194 = vdwg.mxu0
    %9195 = vmatpush.bf16.msra.mxu0 %v8397
    %9196 = vmatpush.bf16.msra.mxu0 %v8390
    %9197 = vmatpush.bf16.msra.mxu0 %v8383
    %9198 = vmatpush.bf16.msra.mxu0 %v8376
    %9199 = vmatpush.bf16.msra.mxu0 %v8369
    %9200 = vmatpush.bf16.msra.mxu0 %v8362
    %9201 = vmatpush.bf16.msra.mxu0 %v8355
    %9202 = vmatpush.bf16.msra.mxu0 %v8348
    %9203 = vmatmul.bf16.gmra.mxu0 %v6427
    %v9204 = vpop.f32.mrf.mxu0
    %v9205 = vadd.f32 %v9156, %v9204
    %v9206 = vpop.f32.mrf.mxu0
    %v9207 = vadd.f32 %v9158, %v9206
    %9208 = vmatmul.bf16.gmra.mxu0 %v6435
    %v9209 = vpop.f32.mrf.mxu0
    %v9210 = vadd.f32 %v9161, %v9209
    %v9211 = vpop.f32.mrf.mxu0
    %v9212 = vadd.f32 %v9163, %v9211
    %9213 = vmatmul.bf16.gmra.mxu0 %v6443
    %v9214 = vpop.f32.mrf.mxu0
    %v9215 = vadd.f32 %v9166, %v9214
    %v9216 = vpop.f32.mrf.mxu0
    %v9217 = vadd.f32 %v9168, %v9216
    %9218 = vmatmul.bf16.gmra.mxu0 %v6451
    %v9219 = vpop.f32.mrf.mxu0
    %v9220 = vadd.f32 %v9171, %v9219
    %v9221 = vpop.f32.mrf.mxu0
    %v9222 = vadd.f32 %v9173, %v9221
    %9223 = vmatmul.bf16.gmra.mxu0 %v6459
    %v9224 = vpop.f32.mrf.mxu0
    %v9225 = vadd.f32 %v9176, %v9224
    %v9226 = vpop.f32.mrf.mxu0
    %v9227 = vadd.f32 %v9178, %v9226
    %9228 = vmatmul.bf16.gmra.mxu0 %v6467
    %v9229 = vpop.f32.mrf.mxu0
    %v9230 = vadd.f32 %v9181, %v9229
    %v9231 = vpop.f32.mrf.mxu0
    %v9232 = vadd.f32 %v9183, %v9231
    %9233 = vmatmul.bf16.gmra.mxu0 %v6475
    %v9234 = vpop.f32.mrf.mxu0
    %v9235 = vadd.f32 %v9186, %v9234
    %v9236 = vpop.f32.mrf.mxu0
    %v9237 = vadd.f32 %v9188, %v9236
    %9238 = vmatmul.bf16.gmra.mxu0 %v6483
    %v9239 = vpop.f32.mrf.mxu0
    %v9240 = vadd.f32 %v9191, %v9239
    %v9241 = vpop.f32.mrf.mxu0
    %v9242 = vadd.f32 %v9193, %v9241
    %9243 = vdwg.mxu0
    %9244 = vmatpush.bf16.msra.mxu0 %v8006
    %9245 = vmatpush.bf16.msra.mxu0 %v7999
    %9246 = vmatpush.bf16.msra.mxu0 %v7992
    %9247 = vmatpush.bf16.msra.mxu0 %v7985
    %9248 = vmatpush.bf16.msra.mxu0 %v7978
    %9249 = vmatpush.bf16.msra.mxu0 %v7971
    %9250 = vmatpush.bf16.msra.mxu0 %v7964
    %9251 = vmatpush.bf16.msra.mxu0 %v7957
    %9252 = vmatmul.bf16.gmra.mxu0 %v6420
    %v9253 = vpop.f32.mrf.mxu0
    %v9254 = vadd.f32 %v6215, %v9253
    %v9255 = vpop.f32.mrf.mxu0
    %v9256 = vadd.f32 %v6215, %v9255
    %9257 = vmatmul.bf16.gmra.mxu0 %v6428
    %v9258 = vpop.f32.mrf.mxu0
    %v9259 = vadd.f32 %v6215, %v9258
    %v9260 = vpop.f32.mrf.mxu0
    %v9261 = vadd.f32 %v6215, %v9260
    %9262 = vmatmul.bf16.gmra.mxu0 %v6436
    %v9263 = vpop.f32.mrf.mxu0
    %v9264 = vadd.f32 %v6215, %v9263
    %v9265 = vpop.f32.mrf.mxu0
    %v9266 = vadd.f32 %v6215, %v9265
    %9267 = vmatmul.bf16.gmra.mxu0 %v6444
    %v9268 = vpop.f32.mrf.mxu0
    %v9269 = vadd.f32 %v6215, %v9268
    %v9270 = vpop.f32.mrf.mxu0
    %v9271 = vadd.f32 %v6215, %v9270
    %9272 = vmatmul.bf16.gmra.mxu0 %v6452
    %v9273 = vpop.f32.mrf.mxu0
    %v9274 = vadd.f32 %v6215, %v9273
    %v9275 = vpop.f32.mrf.mxu0
    %v9276 = vadd.f32 %v6215, %v9275
    %9277 = vmatmul.bf16.gmra.mxu0 %v6460
    %v9278 = vpop.f32.mrf.mxu0
    %v9279 = vadd.f32 %v6215, %v9278
    %v9280 = vpop.f32.mrf.mxu0
    %v9281 = vadd.f32 %v6215, %v9280
    %9282 = vmatmul.bf16.gmra.mxu0 %v6468
    %v9283 = vpop.f32.mrf.mxu0
    %v9284 = vadd.f32 %v6215, %v9283
    %v9285 = vpop.f32.mrf.mxu0
    %v9286 = vadd.f32 %v6215, %v9285
    %9287 = vmatmul.bf16.gmra.mxu0 %v6476
    %v9288 = vpop.f32.mrf.mxu0
    %v9289 = vadd.f32 %v6215, %v9288
    %v9290 = vpop.f32.mrf.mxu0
    %v9291 = vadd.f32 %v6215, %v9290
    %9292 = vdwg.mxu0
    %9293 = vmatpush.bf16.msra.mxu0 %v8062
    %9294 = vmatpush.bf16.msra.mxu0 %v8055
    %9295 = vmatpush.bf16.msra.mxu0 %v8048
    %9296 = vmatpush.bf16.msra.mxu0 %v8041
    %9297 = vmatpush.bf16.msra.mxu0 %v8034
    %9298 = vmatpush.bf16.msra.mxu0 %v8027
    %9299 = vmatpush.bf16.msra.mxu0 %v8020
    %9300 = vmatpush.bf16.msra.mxu0 %v8013
    %9301 = vmatmul.bf16.gmra.mxu0 %v6421
    %v9302 = vpop.f32.mrf.mxu0
    %v9303 = vadd.f32 %v9254, %v9302
    %v9304 = vpop.f32.mrf.mxu0
    %v9305 = vadd.f32 %v9256, %v9304
    %9306 = vmatmul.bf16.gmra.mxu0 %v6429
    %v9307 = vpop.f32.mrf.mxu0
    %v9308 = vadd.f32 %v9259, %v9307
    %v9309 = vpop.f32.mrf.mxu0
    %v9310 = vadd.f32 %v9261, %v9309
    %9311 = vmatmul.bf16.gmra.mxu0 %v6437
    %v9312 = vpop.f32.mrf.mxu0
    %v9313 = vadd.f32 %v9264, %v9312
    %v9314 = vpop.f32.mrf.mxu0
    %v9315 = vadd.f32 %v9266, %v9314
    %9316 = vmatmul.bf16.gmra.mxu0 %v6445
    %v9317 = vpop.f32.mrf.mxu0
    %v9318 = vadd.f32 %v9269, %v9317
    %v9319 = vpop.f32.mrf.mxu0
    %v9320 = vadd.f32 %v9271, %v9319
    %9321 = vmatmul.bf16.gmra.mxu0 %v6453
    %v9322 = vpop.f32.mrf.mxu0
    %v9323 = vadd.f32 %v9274, %v9322
    %v9324 = vpop.f32.mrf.mxu0
    %v9325 = vadd.f32 %v9276, %v9324
    %9326 = vmatmul.bf16.gmra.mxu0 %v6461
    %v9327 = vpop.f32.mrf.mxu0
    %v9328 = vadd.f32 %v9279, %v9327
    %v9329 = vpop.f32.mrf.mxu0
    %v9330 = vadd.f32 %v9281, %v9329
    %9331 = vmatmul.bf16.gmra.mxu0 %v6469
    %v9332 = vpop.f32.mrf.mxu0
    %v9333 = vadd.f32 %v9284, %v9332
    %v9334 = vpop.f32.mrf.mxu0
    %v9335 = vadd.f32 %v9286, %v9334
    %9336 = vmatmul.bf16.gmra.mxu0 %v6477
    %v9337 = vpop.f32.mrf.mxu0
    %v9338 = vadd.f32 %v9289, %v9337
    %v9339 = vpop.f32.mrf.mxu0
    %v9340 = vadd.f32 %v9291, %v9339
    %9341 = vdwg.mxu0
    %9342 = vmatpush.bf16.msra.mxu0 %v8118
    %9343 = vmatpush.bf16.msra.mxu0 %v8111
    %9344 = vmatpush.bf16.msra.mxu0 %v8104
    %9345 = vmatpush.bf16.msra.mxu0 %v8097
    %9346 = vmatpush.bf16.msra.mxu0 %v8090
    %9347 = vmatpush.bf16.msra.mxu0 %v8083
    %9348 = vmatpush.bf16.msra.mxu0 %v8076
    %9349 = vmatpush.bf16.msra.mxu0 %v8069
    %9350 = vmatmul.bf16.gmra.mxu0 %v6422
    %v9351 = vpop.f32.mrf.mxu0
    %v9352 = vadd.f32 %v9303, %v9351
    %v9353 = vpop.f32.mrf.mxu0
    %v9354 = vadd.f32 %v9305, %v9353
    %9355 = vmatmul.bf16.gmra.mxu0 %v6430
    %v9356 = vpop.f32.mrf.mxu0
    %v9357 = vadd.f32 %v9308, %v9356
    %v9358 = vpop.f32.mrf.mxu0
    %v9359 = vadd.f32 %v9310, %v9358
    %9360 = vmatmul.bf16.gmra.mxu0 %v6438
    %v9361 = vpop.f32.mrf.mxu0
    %v9362 = vadd.f32 %v9313, %v9361
    %v9363 = vpop.f32.mrf.mxu0
    %v9364 = vadd.f32 %v9315, %v9363
    %9365 = vmatmul.bf16.gmra.mxu0 %v6446
    %v9366 = vpop.f32.mrf.mxu0
    %v9367 = vadd.f32 %v9318, %v9366
    %v9368 = vpop.f32.mrf.mxu0
    %v9369 = vadd.f32 %v9320, %v9368
    %9370 = vmatmul.bf16.gmra.mxu0 %v6454
    %v9371 = vpop.f32.mrf.mxu0
    %v9372 = vadd.f32 %v9323, %v9371
    %v9373 = vpop.f32.mrf.mxu0
    %v9374 = vadd.f32 %v9325, %v9373
    %9375 = vmatmul.bf16.gmra.mxu0 %v6462
    %v9376 = vpop.f32.mrf.mxu0
    %v9377 = vadd.f32 %v9328, %v9376
    %v9378 = vpop.f32.mrf.mxu0
    %v9379 = vadd.f32 %v9330, %v9378
    %9380 = vmatmul.bf16.gmra.mxu0 %v6470
    %v9381 = vpop.f32.mrf.mxu0
    %v9382 = vadd.f32 %v9333, %v9381
    %v9383 = vpop.f32.mrf.mxu0
    %v9384 = vadd.f32 %v9335, %v9383
    %9385 = vmatmul.bf16.gmra.mxu0 %v6478
    %v9386 = vpop.f32.mrf.mxu0
    %v9387 = vadd.f32 %v9338, %v9386
    %v9388 = vpop.f32.mrf.mxu0
    %v9389 = vadd.f32 %v9340, %v9388
    %9390 = vdwg.mxu0
    %9391 = vmatpush.bf16.msra.mxu0 %v8174
    %9392 = vmatpush.bf16.msra.mxu0 %v8167
    %9393 = vmatpush.bf16.msra.mxu0 %v8160
    %9394 = vmatpush.bf16.msra.mxu0 %v8153
    %9395 = vmatpush.bf16.msra.mxu0 %v8146
    %9396 = vmatpush.bf16.msra.mxu0 %v8139
    %9397 = vmatpush.bf16.msra.mxu0 %v8132
    %9398 = vmatpush.bf16.msra.mxu0 %v8125
    %9399 = vmatmul.bf16.gmra.mxu0 %v6423
    %v9400 = vpop.f32.mrf.mxu0
    %v9401 = vadd.f32 %v9352, %v9400
    %v9402 = vpop.f32.mrf.mxu0
    %v9403 = vadd.f32 %v9354, %v9402
    %9404 = vmatmul.bf16.gmra.mxu0 %v6431
    %v9405 = vpop.f32.mrf.mxu0
    %v9406 = vadd.f32 %v9357, %v9405
    %v9407 = vpop.f32.mrf.mxu0
    %v9408 = vadd.f32 %v9359, %v9407
    %9409 = vmatmul.bf16.gmra.mxu0 %v6439
    %v9410 = vpop.f32.mrf.mxu0
    %v9411 = vadd.f32 %v9362, %v9410
    %v9412 = vpop.f32.mrf.mxu0
    %v9413 = vadd.f32 %v9364, %v9412
    %9414 = vmatmul.bf16.gmra.mxu0 %v6447
    %v9415 = vpop.f32.mrf.mxu0
    %v9416 = vadd.f32 %v9367, %v9415
    %v9417 = vpop.f32.mrf.mxu0
    %v9418 = vadd.f32 %v9369, %v9417
    %9419 = vmatmul.bf16.gmra.mxu0 %v6455
    %v9420 = vpop.f32.mrf.mxu0
    %v9421 = vadd.f32 %v9372, %v9420
    %v9422 = vpop.f32.mrf.mxu0
    %v9423 = vadd.f32 %v9374, %v9422
    %9424 = vmatmul.bf16.gmra.mxu0 %v6463
    %v9425 = vpop.f32.mrf.mxu0
    %v9426 = vadd.f32 %v9377, %v9425
    %v9427 = vpop.f32.mrf.mxu0
    %v9428 = vadd.f32 %v9379, %v9427
    %9429 = vmatmul.bf16.gmra.mxu0 %v6471
    %v9430 = vpop.f32.mrf.mxu0
    %v9431 = vadd.f32 %v9382, %v9430
    %v9432 = vpop.f32.mrf.mxu0
    %v9433 = vadd.f32 %v9384, %v9432
    %9434 = vmatmul.bf16.gmra.mxu0 %v6479
    %v9435 = vpop.f32.mrf.mxu0
    %v9436 = vadd.f32 %v9387, %v9435
    %v9437 = vpop.f32.mrf.mxu0
    %v9438 = vadd.f32 %v9389, %v9437
    %9439 = vdwg.mxu0
    %9440 = vmatpush.bf16.msra.mxu0 %v8230
    %9441 = vmatpush.bf16.msra.mxu0 %v8223
    %9442 = vmatpush.bf16.msra.mxu0 %v8216
    %9443 = vmatpush.bf16.msra.mxu0 %v8209
    %9444 = vmatpush.bf16.msra.mxu0 %v8202
    %9445 = vmatpush.bf16.msra.mxu0 %v8195
    %9446 = vmatpush.bf16.msra.mxu0 %v8188
    %9447 = vmatpush.bf16.msra.mxu0 %v8181
    %9448 = vmatmul.bf16.gmra.mxu0 %v6424
    %v9449 = vpop.f32.mrf.mxu0
    %v9450 = vadd.f32 %v9401, %v9449
    %v9451 = vpop.f32.mrf.mxu0
    %v9452 = vadd.f32 %v9403, %v9451
    %9453 = vmatmul.bf16.gmra.mxu0 %v6432
    %v9454 = vpop.f32.mrf.mxu0
    %v9455 = vadd.f32 %v9406, %v9454
    %v9456 = vpop.f32.mrf.mxu0
    %v9457 = vadd.f32 %v9408, %v9456
    %9458 = vmatmul.bf16.gmra.mxu0 %v6440
    %v9459 = vpop.f32.mrf.mxu0
    %v9460 = vadd.f32 %v9411, %v9459
    %v9461 = vpop.f32.mrf.mxu0
    %v9462 = vadd.f32 %v9413, %v9461
    %9463 = vmatmul.bf16.gmra.mxu0 %v6448
    %v9464 = vpop.f32.mrf.mxu0
    %v9465 = vadd.f32 %v9416, %v9464
    %v9466 = vpop.f32.mrf.mxu0
    %v9467 = vadd.f32 %v9418, %v9466
    %9468 = vmatmul.bf16.gmra.mxu0 %v6456
    %v9469 = vpop.f32.mrf.mxu0
    %v9470 = vadd.f32 %v9421, %v9469
    %v9471 = vpop.f32.mrf.mxu0
    %v9472 = vadd.f32 %v9423, %v9471
    %9473 = vmatmul.bf16.gmra.mxu0 %v6464
    %v9474 = vpop.f32.mrf.mxu0
    %v9475 = vadd.f32 %v9426, %v9474
    %v9476 = vpop.f32.mrf.mxu0
    %v9477 = vadd.f32 %v9428, %v9476
    %9478 = vmatmul.bf16.gmra.mxu0 %v6472
    %v9479 = vpop.f32.mrf.mxu0
    %v9480 = vadd.f32 %v9431, %v9479
    %v9481 = vpop.f32.mrf.mxu0
    %v9482 = vadd.f32 %v9433, %v9481
    %9483 = vmatmul.bf16.gmra.mxu0 %v6480
    %v9484 = vpop.f32.mrf.mxu0
    %v9485 = vadd.f32 %v9436, %v9484
    %v9486 = vpop.f32.mrf.mxu0
    %v9487 = vadd.f32 %v9438, %v9486
    %9488 = vdwg.mxu0
    %9489 = vmatpush.bf16.msra.mxu0 %v8286
    %9490 = vmatpush.bf16.msra.mxu0 %v8279
    %9491 = vmatpush.bf16.msra.mxu0 %v8272
    %9492 = vmatpush.bf16.msra.mxu0 %v8265
    %9493 = vmatpush.bf16.msra.mxu0 %v8258
    %9494 = vmatpush.bf16.msra.mxu0 %v8251
    %9495 = vmatpush.bf16.msra.mxu0 %v8244
    %9496 = vmatpush.bf16.msra.mxu0 %v8237
    %9497 = vmatmul.bf16.gmra.mxu0 %v6425
    %v9498 = vpop.f32.mrf.mxu0
    %v9499 = vadd.f32 %v9450, %v9498
    %v9500 = vpop.f32.mrf.mxu0
    %v9501 = vadd.f32 %v9452, %v9500
    %9502 = vmatmul.bf16.gmra.mxu0 %v6433
    %v9503 = vpop.f32.mrf.mxu0
    %v9504 = vadd.f32 %v9455, %v9503
    %v9505 = vpop.f32.mrf.mxu0
    %v9506 = vadd.f32 %v9457, %v9505
    %9507 = vmatmul.bf16.gmra.mxu0 %v6441
    %v9508 = vpop.f32.mrf.mxu0
    %v9509 = vadd.f32 %v9460, %v9508
    %v9510 = vpop.f32.mrf.mxu0
    %v9511 = vadd.f32 %v9462, %v9510
    %9512 = vmatmul.bf16.gmra.mxu0 %v6449
    %v9513 = vpop.f32.mrf.mxu0
    %v9514 = vadd.f32 %v9465, %v9513
    %v9515 = vpop.f32.mrf.mxu0
    %v9516 = vadd.f32 %v9467, %v9515
    %9517 = vmatmul.bf16.gmra.mxu0 %v6457
    %v9518 = vpop.f32.mrf.mxu0
    %v9519 = vadd.f32 %v9470, %v9518
    %v9520 = vpop.f32.mrf.mxu0
    %v9521 = vadd.f32 %v9472, %v9520
    %9522 = vmatmul.bf16.gmra.mxu0 %v6465
    %v9523 = vpop.f32.mrf.mxu0
    %v9524 = vadd.f32 %v9475, %v9523
    %v9525 = vpop.f32.mrf.mxu0
    %v9526 = vadd.f32 %v9477, %v9525
    %9527 = vmatmul.bf16.gmra.mxu0 %v6473
    %v9528 = vpop.f32.mrf.mxu0
    %v9529 = vadd.f32 %v9480, %v9528
    %v9530 = vpop.f32.mrf.mxu0
    %v9531 = vadd.f32 %v9482, %v9530
    %9532 = vmatmul.bf16.gmra.mxu0 %v6481
    %v9533 = vpop.f32.mrf.mxu0
    %v9534 = vadd.f32 %v9485, %v9533
    %v9535 = vpop.f32.mrf.mxu0
    %v9536 = vadd.f32 %v9487, %v9535
    %9537 = vdwg.mxu0
    %9538 = vmatpush.bf16.msra.mxu0 %v8342
    %9539 = vmatpush.bf16.msra.mxu0 %v8335
    %9540 = vmatpush.bf16.msra.mxu0 %v8328
    %9541 = vmatpush.bf16.msra.mxu0 %v8321
    %9542 = vmatpush.bf16.msra.mxu0 %v8314
    %9543 = vmatpush.bf16.msra.mxu0 %v8307
    %9544 = vmatpush.bf16.msra.mxu0 %v8300
    %9545 = vmatpush.bf16.msra.mxu0 %v8293
    %9546 = vmatmul.bf16.gmra.mxu0 %v6426
    %v9547 = vpop.f32.mrf.mxu0
    %v9548 = vadd.f32 %v9499, %v9547
    %v9549 = vpop.f32.mrf.mxu0
    %v9550 = vadd.f32 %v9501, %v9549
    %9551 = vmatmul.bf16.gmra.mxu0 %v6434
    %v9552 = vpop.f32.mrf.mxu0
    %v9553 = vadd.f32 %v9504, %v9552
    %v9554 = vpop.f32.mrf.mxu0
    %v9555 = vadd.f32 %v9506, %v9554
    %9556 = vmatmul.bf16.gmra.mxu0 %v6442
    %v9557 = vpop.f32.mrf.mxu0
    %v9558 = vadd.f32 %v9509, %v9557
    %v9559 = vpop.f32.mrf.mxu0
    %v9560 = vadd.f32 %v9511, %v9559
    %9561 = vmatmul.bf16.gmra.mxu0 %v6450
    %v9562 = vpop.f32.mrf.mxu0
    %v9563 = vadd.f32 %v9514, %v9562
    %v9564 = vpop.f32.mrf.mxu0
    %v9565 = vadd.f32 %v9516, %v9564
    %9566 = vmatmul.bf16.gmra.mxu0 %v6458
    %v9567 = vpop.f32.mrf.mxu0
    %v9568 = vadd.f32 %v9519, %v9567
    %v9569 = vpop.f32.mrf.mxu0
    %v9570 = vadd.f32 %v9521, %v9569
    %9571 = vmatmul.bf16.gmra.mxu0 %v6466
    %v9572 = vpop.f32.mrf.mxu0
    %v9573 = vadd.f32 %v9524, %v9572
    %v9574 = vpop.f32.mrf.mxu0
    %v9575 = vadd.f32 %v9526, %v9574
    %9576 = vmatmul.bf16.gmra.mxu0 %v6474
    %v9577 = vpop.f32.mrf.mxu0
    %v9578 = vadd.f32 %v9529, %v9577
    %v9579 = vpop.f32.mrf.mxu0
    %v9580 = vadd.f32 %v9531, %v9579
    %9581 = vmatmul.bf16.gmra.mxu0 %v6482
    %v9582 = vpop.f32.mrf.mxu0
    %v9583 = vadd.f32 %v9534, %v9582
    %v9584 = vpop.f32.mrf.mxu0
    %v9585 = vadd.f32 %v9536, %v9584
    %9586 = vdwg.mxu0
    %9587 = vmatpush.bf16.msra.mxu0 %v8398
    %9588 = vmatpush.bf16.msra.mxu0 %v8391
    %9589 = vmatpush.bf16.msra.mxu0 %v8384
    %9590 = vmatpush.bf16.msra.mxu0 %v8377
    %9591 = vmatpush.bf16.msra.mxu0 %v8370
    %9592 = vmatpush.bf16.msra.mxu0 %v8363
    %9593 = vmatpush.bf16.msra.mxu0 %v8356
    %9594 = vmatpush.bf16.msra.mxu0 %v8349
    %9595 = vmatmul.bf16.gmra.mxu0 %v6427
    %v9596 = vpop.f32.mrf.mxu0
    %v9597 = vadd.f32 %v9548, %v9596
    %v9598 = vpop.f32.mrf.mxu0
    %v9599 = vadd.f32 %v9550, %v9598
    %9600 = vmatmul.bf16.gmra.mxu0 %v6435
    %v9601 = vpop.f32.mrf.mxu0
    %v9602 = vadd.f32 %v9553, %v9601
    %v9603 = vpop.f32.mrf.mxu0
    %v9604 = vadd.f32 %v9555, %v9603
    %9605 = vmatmul.bf16.gmra.mxu0 %v6443
    %v9606 = vpop.f32.mrf.mxu0
    %v9607 = vadd.f32 %v9558, %v9606
    %v9608 = vpop.f32.mrf.mxu0
    %v9609 = vadd.f32 %v9560, %v9608
    %9610 = vmatmul.bf16.gmra.mxu0 %v6451
    %v9611 = vpop.f32.mrf.mxu0
    %v9612 = vadd.f32 %v9563, %v9611
    %v9613 = vpop.f32.mrf.mxu0
    %v9614 = vadd.f32 %v9565, %v9613
    %9615 = vmatmul.bf16.gmra.mxu0 %v6459
    %v9616 = vpop.f32.mrf.mxu0
    %v9617 = vadd.f32 %v9568, %v9616
    %v9618 = vpop.f32.mrf.mxu0
    %v9619 = vadd.f32 %v9570, %v9618
    %9620 = vmatmul.bf16.gmra.mxu0 %v6467
    %v9621 = vpop.f32.mrf.mxu0
    %v9622 = vadd.f32 %v9573, %v9621
    %v9623 = vpop.f32.mrf.mxu0
    %v9624 = vadd.f32 %v9575, %v9623
    %9625 = vmatmul.bf16.gmra.mxu0 %v6475
    %v9626 = vpop.f32.mrf.mxu0
    %v9627 = vadd.f32 %v9578, %v9626
    %v9628 = vpop.f32.mrf.mxu0
    %v9629 = vadd.f32 %v9580, %v9628
    %9630 = vmatmul.bf16.gmra.mxu0 %v6483
    %v9631 = vpop.f32.mrf.mxu0
    %v9632 = vadd.f32 %v9583, %v9631
    %v9633 = vpop.f32.mrf.mxu0
    %v9634 = vadd.f32 %v9585, %v9633
    %9635 = vdwg.mxu0
    %9636 = vmatpush.bf16.msra.mxu0 %v8007
    %9637 = vmatpush.bf16.msra.mxu0 %v8000
    %9638 = vmatpush.bf16.msra.mxu0 %v7993
    %9639 = vmatpush.bf16.msra.mxu0 %v7986
    %9640 = vmatpush.bf16.msra.mxu0 %v7979
    %9641 = vmatpush.bf16.msra.mxu0 %v7972
    %9642 = vmatpush.bf16.msra.mxu0 %v7965
    %9643 = vmatpush.bf16.msra.mxu0 %v7958
    %9644 = vmatmul.bf16.gmra.mxu0 %v6420
    %v9645 = vpop.f32.mrf.mxu0
    %v9646 = vadd.f32 %v6216, %v9645
    %v9647 = vpop.f32.mrf.mxu0
    %v9648 = vadd.f32 %v6216, %v9647
    %9649 = vmatmul.bf16.gmra.mxu0 %v6428
    %v9650 = vpop.f32.mrf.mxu0
    %v9651 = vadd.f32 %v6216, %v9650
    %v9652 = vpop.f32.mrf.mxu0
    %v9653 = vadd.f32 %v6216, %v9652
    %9654 = vmatmul.bf16.gmra.mxu0 %v6436
    %v9655 = vpop.f32.mrf.mxu0
    %v9656 = vadd.f32 %v6216, %v9655
    %v9657 = vpop.f32.mrf.mxu0
    %v9658 = vadd.f32 %v6216, %v9657
    %9659 = vmatmul.bf16.gmra.mxu0 %v6444
    %v9660 = vpop.f32.mrf.mxu0
    %v9661 = vadd.f32 %v6216, %v9660
    %v9662 = vpop.f32.mrf.mxu0
    %v9663 = vadd.f32 %v6216, %v9662
    %9664 = vmatmul.bf16.gmra.mxu0 %v6452
    %v9665 = vpop.f32.mrf.mxu0
    %v9666 = vadd.f32 %v6216, %v9665
    %v9667 = vpop.f32.mrf.mxu0
    %v9668 = vadd.f32 %v6216, %v9667
    %9669 = vmatmul.bf16.gmra.mxu0 %v6460
    %v9670 = vpop.f32.mrf.mxu0
    %v9671 = vadd.f32 %v6216, %v9670
    %v9672 = vpop.f32.mrf.mxu0
    %v9673 = vadd.f32 %v6216, %v9672
    %9674 = vmatmul.bf16.gmra.mxu0 %v6468
    %v9675 = vpop.f32.mrf.mxu0
    %v9676 = vadd.f32 %v6216, %v9675
    %v9677 = vpop.f32.mrf.mxu0
    %v9678 = vadd.f32 %v6216, %v9677
    %9679 = vmatmul.bf16.gmra.mxu0 %v6476
    %v9680 = vpop.f32.mrf.mxu0
    %v9681 = vadd.f32 %v6216, %v9680
    %v9682 = vpop.f32.mrf.mxu0
    %v9683 = vadd.f32 %v6216, %v9682
    %9684 = vdwg.mxu0
    %9685 = vmatpush.bf16.msra.mxu0 %v8063
    %9686 = vmatpush.bf16.msra.mxu0 %v8056
    %9687 = vmatpush.bf16.msra.mxu0 %v8049
    %9688 = vmatpush.bf16.msra.mxu0 %v8042
    %9689 = vmatpush.bf16.msra.mxu0 %v8035
    %9690 = vmatpush.bf16.msra.mxu0 %v8028
    %9691 = vmatpush.bf16.msra.mxu0 %v8021
    %9692 = vmatpush.bf16.msra.mxu0 %v8014
    %9693 = vmatmul.bf16.gmra.mxu0 %v6421
    %v9694 = vpop.f32.mrf.mxu0
    %v9695 = vadd.f32 %v9646, %v9694
    %v9696 = vpop.f32.mrf.mxu0
    %v9697 = vadd.f32 %v9648, %v9696
    %9698 = vmatmul.bf16.gmra.mxu0 %v6429
    %v9699 = vpop.f32.mrf.mxu0
    %v9700 = vadd.f32 %v9651, %v9699
    %v9701 = vpop.f32.mrf.mxu0
    %v9702 = vadd.f32 %v9653, %v9701
    %9703 = vmatmul.bf16.gmra.mxu0 %v6437
    %v9704 = vpop.f32.mrf.mxu0
    %v9705 = vadd.f32 %v9656, %v9704
    %v9706 = vpop.f32.mrf.mxu0
    %v9707 = vadd.f32 %v9658, %v9706
    %9708 = vmatmul.bf16.gmra.mxu0 %v6445
    %v9709 = vpop.f32.mrf.mxu0
    %v9710 = vadd.f32 %v9661, %v9709
    %v9711 = vpop.f32.mrf.mxu0
    %v9712 = vadd.f32 %v9663, %v9711
    %9713 = vmatmul.bf16.gmra.mxu0 %v6453
    %v9714 = vpop.f32.mrf.mxu0
    %v9715 = vadd.f32 %v9666, %v9714
    %v9716 = vpop.f32.mrf.mxu0
    %v9717 = vadd.f32 %v9668, %v9716
    %9718 = vmatmul.bf16.gmra.mxu0 %v6461
    %v9719 = vpop.f32.mrf.mxu0
    %v9720 = vadd.f32 %v9671, %v9719
    %v9721 = vpop.f32.mrf.mxu0
    %v9722 = vadd.f32 %v9673, %v9721
    %9723 = vmatmul.bf16.gmra.mxu0 %v6469
    %v9724 = vpop.f32.mrf.mxu0
    %v9725 = vadd.f32 %v9676, %v9724
    %v9726 = vpop.f32.mrf.mxu0
    %v9727 = vadd.f32 %v9678, %v9726
    %9728 = vmatmul.bf16.gmra.mxu0 %v6477
    %v9729 = vpop.f32.mrf.mxu0
    %v9730 = vadd.f32 %v9681, %v9729
    %v9731 = vpop.f32.mrf.mxu0
    %v9732 = vadd.f32 %v9683, %v9731
    %9733 = vdwg.mxu0
    %9734 = vmatpush.bf16.msra.mxu0 %v8119
    %9735 = vmatpush.bf16.msra.mxu0 %v8112
    %9736 = vmatpush.bf16.msra.mxu0 %v8105
    %9737 = vmatpush.bf16.msra.mxu0 %v8098
    %9738 = vmatpush.bf16.msra.mxu0 %v8091
    %9739 = vmatpush.bf16.msra.mxu0 %v8084
    %9740 = vmatpush.bf16.msra.mxu0 %v8077
    %9741 = vmatpush.bf16.msra.mxu0 %v8070
    %9742 = vmatmul.bf16.gmra.mxu0 %v6422
    %v9743 = vpop.f32.mrf.mxu0
    %v9744 = vadd.f32 %v9695, %v9743
    %v9745 = vpop.f32.mrf.mxu0
    %v9746 = vadd.f32 %v9697, %v9745
    %9747 = vmatmul.bf16.gmra.mxu0 %v6430
    %v9748 = vpop.f32.mrf.mxu0
    %v9749 = vadd.f32 %v9700, %v9748
    %v9750 = vpop.f32.mrf.mxu0
    %v9751 = vadd.f32 %v9702, %v9750
    %9752 = vmatmul.bf16.gmra.mxu0 %v6438
    %v9753 = vpop.f32.mrf.mxu0
    %v9754 = vadd.f32 %v9705, %v9753
    %v9755 = vpop.f32.mrf.mxu0
    %v9756 = vadd.f32 %v9707, %v9755
    %9757 = vmatmul.bf16.gmra.mxu0 %v6446
    %v9758 = vpop.f32.mrf.mxu0
    %v9759 = vadd.f32 %v9710, %v9758
    %v9760 = vpop.f32.mrf.mxu0
    %v9761 = vadd.f32 %v9712, %v9760
    %9762 = vmatmul.bf16.gmra.mxu0 %v6454
    %v9763 = vpop.f32.mrf.mxu0
    %v9764 = vadd.f32 %v9715, %v9763
    %v9765 = vpop.f32.mrf.mxu0
    %v9766 = vadd.f32 %v9717, %v9765
    %9767 = vmatmul.bf16.gmra.mxu0 %v6462
    %v9768 = vpop.f32.mrf.mxu0
    %v9769 = vadd.f32 %v9720, %v9768
    %v9770 = vpop.f32.mrf.mxu0
    %v9771 = vadd.f32 %v9722, %v9770
    %9772 = vmatmul.bf16.gmra.mxu0 %v6470
    %v9773 = vpop.f32.mrf.mxu0
    %v9774 = vadd.f32 %v9725, %v9773
    %v9775 = vpop.f32.mrf.mxu0
    %v9776 = vadd.f32 %v9727, %v9775
    %9777 = vmatmul.bf16.gmra.mxu0 %v6478
    %v9778 = vpop.f32.mrf.mxu0
    %v9779 = vadd.f32 %v9730, %v9778
    %v9780 = vpop.f32.mrf.mxu0
    %v9781 = vadd.f32 %v9732, %v9780
    %9782 = vdwg.mxu0
    %9783 = vmatpush.bf16.msra.mxu0 %v8175
    %9784 = vmatpush.bf16.msra.mxu0 %v8168
    %9785 = vmatpush.bf16.msra.mxu0 %v8161
    %9786 = vmatpush.bf16.msra.mxu0 %v8154
    %9787 = vmatpush.bf16.msra.mxu0 %v8147
    %9788 = vmatpush.bf16.msra.mxu0 %v8140
    %9789 = vmatpush.bf16.msra.mxu0 %v8133
    %9790 = vmatpush.bf16.msra.mxu0 %v8126
    %9791 = vmatmul.bf16.gmra.mxu0 %v6423
    %v9792 = vpop.f32.mrf.mxu0
    %v9793 = vadd.f32 %v9744, %v9792
    %v9794 = vpop.f32.mrf.mxu0
    %v9795 = vadd.f32 %v9746, %v9794
    %9796 = vmatmul.bf16.gmra.mxu0 %v6431
    %v9797 = vpop.f32.mrf.mxu0
    %v9798 = vadd.f32 %v9749, %v9797
    %v9799 = vpop.f32.mrf.mxu0
    %v9800 = vadd.f32 %v9751, %v9799
    %9801 = vmatmul.bf16.gmra.mxu0 %v6439
    %v9802 = vpop.f32.mrf.mxu0
    %v9803 = vadd.f32 %v9754, %v9802
    %v9804 = vpop.f32.mrf.mxu0
    %v9805 = vadd.f32 %v9756, %v9804
    %9806 = vmatmul.bf16.gmra.mxu0 %v6447
    %v9807 = vpop.f32.mrf.mxu0
    %v9808 = vadd.f32 %v9759, %v9807
    %v9809 = vpop.f32.mrf.mxu0
    %v9810 = vadd.f32 %v9761, %v9809
    %9811 = vmatmul.bf16.gmra.mxu0 %v6455
    %v9812 = vpop.f32.mrf.mxu0
    %v9813 = vadd.f32 %v9764, %v9812
    %v9814 = vpop.f32.mrf.mxu0
    %v9815 = vadd.f32 %v9766, %v9814
    %9816 = vmatmul.bf16.gmra.mxu0 %v6463
    %v9817 = vpop.f32.mrf.mxu0
    %v9818 = vadd.f32 %v9769, %v9817
    %v9819 = vpop.f32.mrf.mxu0
    %v9820 = vadd.f32 %v9771, %v9819
    %9821 = vmatmul.bf16.gmra.mxu0 %v6471
    %v9822 = vpop.f32.mrf.mxu0
    %v9823 = vadd.f32 %v9774, %v9822
    %v9824 = vpop.f32.mrf.mxu0
    %v9825 = vadd.f32 %v9776, %v9824
    %9826 = vmatmul.bf16.gmra.mxu0 %v6479
    %v9827 = vpop.f32.mrf.mxu0
    %v9828 = vadd.f32 %v9779, %v9827
    %v9829 = vpop.f32.mrf.mxu0
    %v9830 = vadd.f32 %v9781, %v9829
    %9831 = vdwg.mxu0
    %9832 = vmatpush.bf16.msra.mxu0 %v8231
    %9833 = vmatpush.bf16.msra.mxu0 %v8224
    %9834 = vmatpush.bf16.msra.mxu0 %v8217
    %9835 = vmatpush.bf16.msra.mxu0 %v8210
    %9836 = vmatpush.bf16.msra.mxu0 %v8203
    %9837 = vmatpush.bf16.msra.mxu0 %v8196
    %9838 = vmatpush.bf16.msra.mxu0 %v8189
    %9839 = vmatpush.bf16.msra.mxu0 %v8182
    %9840 = vmatmul.bf16.gmra.mxu0 %v6424
    %v9841 = vpop.f32.mrf.mxu0
    %v9842 = vadd.f32 %v9793, %v9841
    %v9843 = vpop.f32.mrf.mxu0
    %v9844 = vadd.f32 %v9795, %v9843
    %9845 = vmatmul.bf16.gmra.mxu0 %v6432
    %v9846 = vpop.f32.mrf.mxu0
    %v9847 = vadd.f32 %v9798, %v9846
    %v9848 = vpop.f32.mrf.mxu0
    %v9849 = vadd.f32 %v9800, %v9848
    %9850 = vmatmul.bf16.gmra.mxu0 %v6440
    %v9851 = vpop.f32.mrf.mxu0
    %v9852 = vadd.f32 %v9803, %v9851
    %v9853 = vpop.f32.mrf.mxu0
    %v9854 = vadd.f32 %v9805, %v9853
    %9855 = vmatmul.bf16.gmra.mxu0 %v6448
    %v9856 = vpop.f32.mrf.mxu0
    %v9857 = vadd.f32 %v9808, %v9856
    %v9858 = vpop.f32.mrf.mxu0
    %v9859 = vadd.f32 %v9810, %v9858
    %9860 = vmatmul.bf16.gmra.mxu0 %v6456
    %v9861 = vpop.f32.mrf.mxu0
    %v9862 = vadd.f32 %v9813, %v9861
    %v9863 = vpop.f32.mrf.mxu0
    %v9864 = vadd.f32 %v9815, %v9863
    %9865 = vmatmul.bf16.gmra.mxu0 %v6464
    %v9866 = vpop.f32.mrf.mxu0
    %v9867 = vadd.f32 %v9818, %v9866
    %v9868 = vpop.f32.mrf.mxu0
    %v9869 = vadd.f32 %v9820, %v9868
    %9870 = vmatmul.bf16.gmra.mxu0 %v6472
    %v9871 = vpop.f32.mrf.mxu0
    %v9872 = vadd.f32 %v9823, %v9871
    %v9873 = vpop.f32.mrf.mxu0
    %v9874 = vadd.f32 %v9825, %v9873
    %9875 = vmatmul.bf16.gmra.mxu0 %v6480
    %v9876 = vpop.f32.mrf.mxu0
    %v9877 = vadd.f32 %v9828, %v9876
    %v9878 = vpop.f32.mrf.mxu0
    %v9879 = vadd.f32 %v9830, %v9878
    %9880 = vdwg.mxu0
    %9881 = vmatpush.bf16.msra.mxu0 %v8287
    %9882 = vmatpush.bf16.msra.mxu0 %v8280
    %9883 = vmatpush.bf16.msra.mxu0 %v8273
    %9884 = vmatpush.bf16.msra.mxu0 %v8266
    %9885 = vmatpush.bf16.msra.mxu0 %v8259
    %9886 = vmatpush.bf16.msra.mxu0 %v8252
    %9887 = vmatpush.bf16.msra.mxu0 %v8245
    %9888 = vmatpush.bf16.msra.mxu0 %v8238
    %9889 = vmatmul.bf16.gmra.mxu0 %v6425
    %v9890 = vpop.f32.mrf.mxu0
    %v9891 = vadd.f32 %v9842, %v9890
    %v9892 = vpop.f32.mrf.mxu0
    %v9893 = vadd.f32 %v9844, %v9892
    %9894 = vmatmul.bf16.gmra.mxu0 %v6433
    %v9895 = vpop.f32.mrf.mxu0
    %v9896 = vadd.f32 %v9847, %v9895
    %v9897 = vpop.f32.mrf.mxu0
    %v9898 = vadd.f32 %v9849, %v9897
    %9899 = vmatmul.bf16.gmra.mxu0 %v6441
    %v9900 = vpop.f32.mrf.mxu0
    %v9901 = vadd.f32 %v9852, %v9900
    %v9902 = vpop.f32.mrf.mxu0
    %v9903 = vadd.f32 %v9854, %v9902
    %9904 = vmatmul.bf16.gmra.mxu0 %v6449
    %v9905 = vpop.f32.mrf.mxu0
    %v9906 = vadd.f32 %v9857, %v9905
    %v9907 = vpop.f32.mrf.mxu0
    %v9908 = vadd.f32 %v9859, %v9907
    %9909 = vmatmul.bf16.gmra.mxu0 %v6457
    %v9910 = vpop.f32.mrf.mxu0
    %v9911 = vadd.f32 %v9862, %v9910
    %v9912 = vpop.f32.mrf.mxu0
    %v9913 = vadd.f32 %v9864, %v9912
    %9914 = vmatmul.bf16.gmra.mxu0 %v6465
    %v9915 = vpop.f32.mrf.mxu0
    %v9916 = vadd.f32 %v9867, %v9915
    %v9917 = vpop.f32.mrf.mxu0
    %v9918 = vadd.f32 %v9869, %v9917
    %9919 = vmatmul.bf16.gmra.mxu0 %v6473
    %v9920 = vpop.f32.mrf.mxu0
    %v9921 = vadd.f32 %v9872, %v9920
    %v9922 = vpop.f32.mrf.mxu0
    %v9923 = vadd.f32 %v9874, %v9922
    %9924 = vmatmul.bf16.gmra.mxu0 %v6481
    %v9925 = vpop.f32.mrf.mxu0
    %v9926 = vadd.f32 %v9877, %v9925
    %v9927 = vpop.f32.mrf.mxu0
    %v9928 = vadd.f32 %v9879, %v9927
    %9929 = vdwg.mxu0
    %9930 = vmatpush.bf16.msra.mxu0 %v8343
    %9931 = vmatpush.bf16.msra.mxu0 %v8336
    %9932 = vmatpush.bf16.msra.mxu0 %v8329
    %9933 = vmatpush.bf16.msra.mxu0 %v8322
    %9934 = vmatpush.bf16.msra.mxu0 %v8315
    %9935 = vmatpush.bf16.msra.mxu0 %v8308
    %9936 = vmatpush.bf16.msra.mxu0 %v8301
    %9937 = vmatpush.bf16.msra.mxu0 %v8294
    %9938 = vmatmul.bf16.gmra.mxu0 %v6426
    %v9939 = vpop.f32.mrf.mxu0
    %v9940 = vadd.f32 %v9891, %v9939
    %v9941 = vpop.f32.mrf.mxu0
    %v9942 = vadd.f32 %v9893, %v9941
    %9943 = vmatmul.bf16.gmra.mxu0 %v6434
    %v9944 = vpop.f32.mrf.mxu0
    %v9945 = vadd.f32 %v9896, %v9944
    %v9946 = vpop.f32.mrf.mxu0
    %v9947 = vadd.f32 %v9898, %v9946
    %9948 = vmatmul.bf16.gmra.mxu0 %v6442
    %v9949 = vpop.f32.mrf.mxu0
    %v9950 = vadd.f32 %v9901, %v9949
    %v9951 = vpop.f32.mrf.mxu0
    %v9952 = vadd.f32 %v9903, %v9951
    %9953 = vmatmul.bf16.gmra.mxu0 %v6450
    %v9954 = vpop.f32.mrf.mxu0
    %v9955 = vadd.f32 %v9906, %v9954
    %v9956 = vpop.f32.mrf.mxu0
    %v9957 = vadd.f32 %v9908, %v9956
    %9958 = vmatmul.bf16.gmra.mxu0 %v6458
    %v9959 = vpop.f32.mrf.mxu0
    %v9960 = vadd.f32 %v9911, %v9959
    %v9961 = vpop.f32.mrf.mxu0
    %v9962 = vadd.f32 %v9913, %v9961
    %9963 = vmatmul.bf16.gmra.mxu0 %v6466
    %v9964 = vpop.f32.mrf.mxu0
    %v9965 = vadd.f32 %v9916, %v9964
    %v9966 = vpop.f32.mrf.mxu0
    %v9967 = vadd.f32 %v9918, %v9966
    %9968 = vmatmul.bf16.gmra.mxu0 %v6474
    %v9969 = vpop.f32.mrf.mxu0
    %v9970 = vadd.f32 %v9921, %v9969
    %v9971 = vpop.f32.mrf.mxu0
    %v9972 = vadd.f32 %v9923, %v9971
    %9973 = vmatmul.bf16.gmra.mxu0 %v6482
    %v9974 = vpop.f32.mrf.mxu0
    %v9975 = vadd.f32 %v9926, %v9974
    %v9976 = vpop.f32.mrf.mxu0
    %v9977 = vadd.f32 %v9928, %v9976
    %9978 = vdwg.mxu0
    %9979 = vmatpush.bf16.msra.mxu0 %v8399
    %9980 = vmatpush.bf16.msra.mxu0 %v8392
    %9981 = vmatpush.bf16.msra.mxu0 %v8385
    %9982 = vmatpush.bf16.msra.mxu0 %v8378
    %9983 = vmatpush.bf16.msra.mxu0 %v8371
    %9984 = vmatpush.bf16.msra.mxu0 %v8364
    %9985 = vmatpush.bf16.msra.mxu0 %v8357
    %9986 = vmatpush.bf16.msra.mxu0 %v8350
    %9987 = vmatmul.bf16.gmra.mxu0 %v6427
    %v9988 = vpop.f32.mrf.mxu0
    %v9989 = vadd.f32 %v9940, %v9988
    %v9990 = vpop.f32.mrf.mxu0
    %v9991 = vadd.f32 %v9942, %v9990
    %9992 = vmatmul.bf16.gmra.mxu0 %v6435
    %v9993 = vpop.f32.mrf.mxu0
    %v9994 = vadd.f32 %v9945, %v9993
    %v9995 = vpop.f32.mrf.mxu0
    %v9996 = vadd.f32 %v9947, %v9995
    %9997 = vmatmul.bf16.gmra.mxu0 %v6443
    %v9998 = vpop.f32.mrf.mxu0
    %v9999 = vadd.f32 %v9950, %v9998
    %v10000 = vpop.f32.mrf.mxu0
    %v10001 = vadd.f32 %v9952, %v10000
    %10002 = vmatmul.bf16.gmra.mxu0 %v6451
    %v10003 = vpop.f32.mrf.mxu0
    %v10004 = vadd.f32 %v9955, %v10003
    %v10005 = vpop.f32.mrf.mxu0
    %v10006 = vadd.f32 %v9957, %v10005
    %10007 = vmatmul.bf16.gmra.mxu0 %v6459
    %v10008 = vpop.f32.mrf.mxu0
    %v10009 = vadd.f32 %v9960, %v10008
    %v10010 = vpop.f32.mrf.mxu0
    %v10011 = vadd.f32 %v9962, %v10010
    %10012 = vmatmul.bf16.gmra.mxu0 %v6467
    %v10013 = vpop.f32.mrf.mxu0
    %v10014 = vadd.f32 %v9965, %v10013
    %v10015 = vpop.f32.mrf.mxu0
    %v10016 = vadd.f32 %v9967, %v10015
    %10017 = vmatmul.bf16.gmra.mxu0 %v6475
    %v10018 = vpop.f32.mrf.mxu0
    %v10019 = vadd.f32 %v9970, %v10018
    %v10020 = vpop.f32.mrf.mxu0
    %v10021 = vadd.f32 %v9972, %v10020
    %10022 = vmatmul.bf16.gmra.mxu0 %v6483
    %v10023 = vpop.f32.mrf.mxu0
    %v10024 = vadd.f32 %v9975, %v10023
    %v10025 = vpop.f32.mrf.mxu0
    %v10026 = vadd.f32 %v9977, %v10025
    %10027 = vdwg.mxu0
    %10028 = vmatpush.bf16.msra.mxu0 %v8008
    %10029 = vmatpush.bf16.msra.mxu0 %v8001
    %10030 = vmatpush.bf16.msra.mxu0 %v7994
    %10031 = vmatpush.bf16.msra.mxu0 %v7987
    %10032 = vmatpush.bf16.msra.mxu0 %v7980
    %10033 = vmatpush.bf16.msra.mxu0 %v7973
    %10034 = vmatpush.bf16.msra.mxu0 %v7966
    %10035 = vmatpush.bf16.msra.mxu0 %v7959
    %10036 = vmatmul.bf16.gmra.mxu0 %v6420
    %v10037 = vpop.f32.mrf.mxu0
    %v10038 = vadd.f32 %v6217, %v10037
    %v10039 = vpop.f32.mrf.mxu0
    %v10040 = vadd.f32 %v6217, %v10039
    %10041 = vmatmul.bf16.gmra.mxu0 %v6428
    %v10042 = vpop.f32.mrf.mxu0
    %v10043 = vadd.f32 %v6217, %v10042
    %v10044 = vpop.f32.mrf.mxu0
    %v10045 = vadd.f32 %v6217, %v10044
    %10046 = vmatmul.bf16.gmra.mxu0 %v6436
    %v10047 = vpop.f32.mrf.mxu0
    %v10048 = vadd.f32 %v6217, %v10047
    %v10049 = vpop.f32.mrf.mxu0
    %v10050 = vadd.f32 %v6217, %v10049
    %10051 = vmatmul.bf16.gmra.mxu0 %v6444
    %v10052 = vpop.f32.mrf.mxu0
    %v10053 = vadd.f32 %v6217, %v10052
    %v10054 = vpop.f32.mrf.mxu0
    %v10055 = vadd.f32 %v6217, %v10054
    %10056 = vmatmul.bf16.gmra.mxu0 %v6452
    %v10057 = vpop.f32.mrf.mxu0
    %v10058 = vadd.f32 %v6217, %v10057
    %v10059 = vpop.f32.mrf.mxu0
    %v10060 = vadd.f32 %v6217, %v10059
    %10061 = vmatmul.bf16.gmra.mxu0 %v6460
    %v10062 = vpop.f32.mrf.mxu0
    %v10063 = vadd.f32 %v6217, %v10062
    %v10064 = vpop.f32.mrf.mxu0
    %v10065 = vadd.f32 %v6217, %v10064
    %10066 = vmatmul.bf16.gmra.mxu0 %v6468
    %v10067 = vpop.f32.mrf.mxu0
    %v10068 = vadd.f32 %v6217, %v10067
    %v10069 = vpop.f32.mrf.mxu0
    %v10070 = vadd.f32 %v6217, %v10069
    %10071 = vmatmul.bf16.gmra.mxu0 %v6476
    %v10072 = vpop.f32.mrf.mxu0
    %v10073 = vadd.f32 %v6217, %v10072
    %v10074 = vpop.f32.mrf.mxu0
    %v10075 = vadd.f32 %v6217, %v10074
    %10076 = vdwg.mxu0
    %10077 = vmatpush.bf16.msra.mxu0 %v8064
    %10078 = vmatpush.bf16.msra.mxu0 %v8057
    %10079 = vmatpush.bf16.msra.mxu0 %v8050
    %10080 = vmatpush.bf16.msra.mxu0 %v8043
    %10081 = vmatpush.bf16.msra.mxu0 %v8036
    %10082 = vmatpush.bf16.msra.mxu0 %v8029
    %10083 = vmatpush.bf16.msra.mxu0 %v8022
    %10084 = vmatpush.bf16.msra.mxu0 %v8015
    %10085 = vmatmul.bf16.gmra.mxu0 %v6421
    %v10086 = vpop.f32.mrf.mxu0
    %v10087 = vadd.f32 %v10038, %v10086
    %v10088 = vpop.f32.mrf.mxu0
    %v10089 = vadd.f32 %v10040, %v10088
    %10090 = vmatmul.bf16.gmra.mxu0 %v6429
    %v10091 = vpop.f32.mrf.mxu0
    %v10092 = vadd.f32 %v10043, %v10091
    %v10093 = vpop.f32.mrf.mxu0
    %v10094 = vadd.f32 %v10045, %v10093
    %10095 = vmatmul.bf16.gmra.mxu0 %v6437
    %v10096 = vpop.f32.mrf.mxu0
    %v10097 = vadd.f32 %v10048, %v10096
    %v10098 = vpop.f32.mrf.mxu0
    %v10099 = vadd.f32 %v10050, %v10098
    %10100 = vmatmul.bf16.gmra.mxu0 %v6445
    %v10101 = vpop.f32.mrf.mxu0
    %v10102 = vadd.f32 %v10053, %v10101
    %v10103 = vpop.f32.mrf.mxu0
    %v10104 = vadd.f32 %v10055, %v10103
    %10105 = vmatmul.bf16.gmra.mxu0 %v6453
    %v10106 = vpop.f32.mrf.mxu0
    %v10107 = vadd.f32 %v10058, %v10106
    %v10108 = vpop.f32.mrf.mxu0
    %v10109 = vadd.f32 %v10060, %v10108
    %10110 = vmatmul.bf16.gmra.mxu0 %v6461
    %v10111 = vpop.f32.mrf.mxu0
    %v10112 = vadd.f32 %v10063, %v10111
    %v10113 = vpop.f32.mrf.mxu0
    %v10114 = vadd.f32 %v10065, %v10113
    %10115 = vmatmul.bf16.gmra.mxu0 %v6469
    %v10116 = vpop.f32.mrf.mxu0
    %v10117 = vadd.f32 %v10068, %v10116
    %v10118 = vpop.f32.mrf.mxu0
    %v10119 = vadd.f32 %v10070, %v10118
    %10120 = vmatmul.bf16.gmra.mxu0 %v6477
    %v10121 = vpop.f32.mrf.mxu0
    %v10122 = vadd.f32 %v10073, %v10121
    %v10123 = vpop.f32.mrf.mxu0
    %v10124 = vadd.f32 %v10075, %v10123
    %10125 = vdwg.mxu0
    %10126 = vmatpush.bf16.msra.mxu0 %v8120
    %10127 = vmatpush.bf16.msra.mxu0 %v8113
    %10128 = vmatpush.bf16.msra.mxu0 %v8106
    %10129 = vmatpush.bf16.msra.mxu0 %v8099
    %10130 = vmatpush.bf16.msra.mxu0 %v8092
    %10131 = vmatpush.bf16.msra.mxu0 %v8085
    %10132 = vmatpush.bf16.msra.mxu0 %v8078
    %10133 = vmatpush.bf16.msra.mxu0 %v8071
    %10134 = vmatmul.bf16.gmra.mxu0 %v6422
    %v10135 = vpop.f32.mrf.mxu0
    %v10136 = vadd.f32 %v10087, %v10135
    %v10137 = vpop.f32.mrf.mxu0
    %v10138 = vadd.f32 %v10089, %v10137
    %10139 = vmatmul.bf16.gmra.mxu0 %v6430
    %v10140 = vpop.f32.mrf.mxu0
    %v10141 = vadd.f32 %v10092, %v10140
    %v10142 = vpop.f32.mrf.mxu0
    %v10143 = vadd.f32 %v10094, %v10142
    %10144 = vmatmul.bf16.gmra.mxu0 %v6438
    %v10145 = vpop.f32.mrf.mxu0
    %v10146 = vadd.f32 %v10097, %v10145
    %v10147 = vpop.f32.mrf.mxu0
    %v10148 = vadd.f32 %v10099, %v10147
    %10149 = vmatmul.bf16.gmra.mxu0 %v6446
    %v10150 = vpop.f32.mrf.mxu0
    %v10151 = vadd.f32 %v10102, %v10150
    %v10152 = vpop.f32.mrf.mxu0
    %v10153 = vadd.f32 %v10104, %v10152
    %10154 = vmatmul.bf16.gmra.mxu0 %v6454
    %v10155 = vpop.f32.mrf.mxu0
    %v10156 = vadd.f32 %v10107, %v10155
    %v10157 = vpop.f32.mrf.mxu0
    %v10158 = vadd.f32 %v10109, %v10157
    %10159 = vmatmul.bf16.gmra.mxu0 %v6462
    %v10160 = vpop.f32.mrf.mxu0
    %v10161 = vadd.f32 %v10112, %v10160
    %v10162 = vpop.f32.mrf.mxu0
    %v10163 = vadd.f32 %v10114, %v10162
    %10164 = vmatmul.bf16.gmra.mxu0 %v6470
    %v10165 = vpop.f32.mrf.mxu0
    %v10166 = vadd.f32 %v10117, %v10165
    %v10167 = vpop.f32.mrf.mxu0
    %v10168 = vadd.f32 %v10119, %v10167
    %10169 = vmatmul.bf16.gmra.mxu0 %v6478
    %v10170 = vpop.f32.mrf.mxu0
    %v10171 = vadd.f32 %v10122, %v10170
    %v10172 = vpop.f32.mrf.mxu0
    %v10173 = vadd.f32 %v10124, %v10172
    %10174 = vdwg.mxu0
    %10175 = vmatpush.bf16.msra.mxu0 %v8176
    %10176 = vmatpush.bf16.msra.mxu0 %v8169
    %10177 = vmatpush.bf16.msra.mxu0 %v8162
    %10178 = vmatpush.bf16.msra.mxu0 %v8155
    %10179 = vmatpush.bf16.msra.mxu0 %v8148
    %10180 = vmatpush.bf16.msra.mxu0 %v8141
    %10181 = vmatpush.bf16.msra.mxu0 %v8134
    %10182 = vmatpush.bf16.msra.mxu0 %v8127
    %10183 = vmatmul.bf16.gmra.mxu0 %v6423
    %v10184 = vpop.f32.mrf.mxu0
    %v10185 = vadd.f32 %v10136, %v10184
    %v10186 = vpop.f32.mrf.mxu0
    %v10187 = vadd.f32 %v10138, %v10186
    %10188 = vmatmul.bf16.gmra.mxu0 %v6431
    %v10189 = vpop.f32.mrf.mxu0
    %v10190 = vadd.f32 %v10141, %v10189
    %v10191 = vpop.f32.mrf.mxu0
    %v10192 = vadd.f32 %v10143, %v10191
    %10193 = vmatmul.bf16.gmra.mxu0 %v6439
    %v10194 = vpop.f32.mrf.mxu0
    %v10195 = vadd.f32 %v10146, %v10194
    %v10196 = vpop.f32.mrf.mxu0
    %v10197 = vadd.f32 %v10148, %v10196
    %10198 = vmatmul.bf16.gmra.mxu0 %v6447
    %v10199 = vpop.f32.mrf.mxu0
    %v10200 = vadd.f32 %v10151, %v10199
    %v10201 = vpop.f32.mrf.mxu0
    %v10202 = vadd.f32 %v10153, %v10201
    %10203 = vmatmul.bf16.gmra.mxu0 %v6455
    %v10204 = vpop.f32.mrf.mxu0
    %v10205 = vadd.f32 %v10156, %v10204
    %v10206 = vpop.f32.mrf.mxu0
    %v10207 = vadd.f32 %v10158, %v10206
    %10208 = vmatmul.bf16.gmra.mxu0 %v6463
    %v10209 = vpop.f32.mrf.mxu0
    %v10210 = vadd.f32 %v10161, %v10209
    %v10211 = vpop.f32.mrf.mxu0
    %v10212 = vadd.f32 %v10163, %v10211
    %10213 = vmatmul.bf16.gmra.mxu0 %v6471
    %v10214 = vpop.f32.mrf.mxu0
    %v10215 = vadd.f32 %v10166, %v10214
    %v10216 = vpop.f32.mrf.mxu0
    %v10217 = vadd.f32 %v10168, %v10216
    %10218 = vmatmul.bf16.gmra.mxu0 %v6479
    %v10219 = vpop.f32.mrf.mxu0
    %v10220 = vadd.f32 %v10171, %v10219
    %v10221 = vpop.f32.mrf.mxu0
    %v10222 = vadd.f32 %v10173, %v10221
    %10223 = vdwg.mxu0
    %10224 = vmatpush.bf16.msra.mxu0 %v8232
    %10225 = vmatpush.bf16.msra.mxu0 %v8225
    %10226 = vmatpush.bf16.msra.mxu0 %v8218
    %10227 = vmatpush.bf16.msra.mxu0 %v8211
    %10228 = vmatpush.bf16.msra.mxu0 %v8204
    %10229 = vmatpush.bf16.msra.mxu0 %v8197
    %10230 = vmatpush.bf16.msra.mxu0 %v8190
    %10231 = vmatpush.bf16.msra.mxu0 %v8183
    %10232 = vmatmul.bf16.gmra.mxu0 %v6424
    %v10233 = vpop.f32.mrf.mxu0
    %v10234 = vadd.f32 %v10185, %v10233
    %v10235 = vpop.f32.mrf.mxu0
    %v10236 = vadd.f32 %v10187, %v10235
    %10237 = vmatmul.bf16.gmra.mxu0 %v6432
    %v10238 = vpop.f32.mrf.mxu0
    %v10239 = vadd.f32 %v10190, %v10238
    %v10240 = vpop.f32.mrf.mxu0
    %v10241 = vadd.f32 %v10192, %v10240
    %10242 = vmatmul.bf16.gmra.mxu0 %v6440
    %v10243 = vpop.f32.mrf.mxu0
    %v10244 = vadd.f32 %v10195, %v10243
    %v10245 = vpop.f32.mrf.mxu0
    %v10246 = vadd.f32 %v10197, %v10245
    %10247 = vmatmul.bf16.gmra.mxu0 %v6448
    %v10248 = vpop.f32.mrf.mxu0
    %v10249 = vadd.f32 %v10200, %v10248
    %v10250 = vpop.f32.mrf.mxu0
    %v10251 = vadd.f32 %v10202, %v10250
    %10252 = vmatmul.bf16.gmra.mxu0 %v6456
    %v10253 = vpop.f32.mrf.mxu0
    %v10254 = vadd.f32 %v10205, %v10253
    %v10255 = vpop.f32.mrf.mxu0
    %v10256 = vadd.f32 %v10207, %v10255
    %10257 = vmatmul.bf16.gmra.mxu0 %v6464
    %v10258 = vpop.f32.mrf.mxu0
    %v10259 = vadd.f32 %v10210, %v10258
    %v10260 = vpop.f32.mrf.mxu0
    %v10261 = vadd.f32 %v10212, %v10260
    %10262 = vmatmul.bf16.gmra.mxu0 %v6472
    %v10263 = vpop.f32.mrf.mxu0
    %v10264 = vadd.f32 %v10215, %v10263
    %v10265 = vpop.f32.mrf.mxu0
    %v10266 = vadd.f32 %v10217, %v10265
    %10267 = vmatmul.bf16.gmra.mxu0 %v6480
    %v10268 = vpop.f32.mrf.mxu0
    %v10269 = vadd.f32 %v10220, %v10268
    %v10270 = vpop.f32.mrf.mxu0
    %v10271 = vadd.f32 %v10222, %v10270
    %10272 = vdwg.mxu0
    %10273 = vmatpush.bf16.msra.mxu0 %v8288
    %10274 = vmatpush.bf16.msra.mxu0 %v8281
    %10275 = vmatpush.bf16.msra.mxu0 %v8274
    %10276 = vmatpush.bf16.msra.mxu0 %v8267
    %10277 = vmatpush.bf16.msra.mxu0 %v8260
    %10278 = vmatpush.bf16.msra.mxu0 %v8253
    %10279 = vmatpush.bf16.msra.mxu0 %v8246
    %10280 = vmatpush.bf16.msra.mxu0 %v8239
    %10281 = vmatmul.bf16.gmra.mxu0 %v6425
    %v10282 = vpop.f32.mrf.mxu0
    %v10283 = vadd.f32 %v10234, %v10282
    %v10284 = vpop.f32.mrf.mxu0
    %v10285 = vadd.f32 %v10236, %v10284
    %10286 = vmatmul.bf16.gmra.mxu0 %v6433
    %v10287 = vpop.f32.mrf.mxu0
    %v10288 = vadd.f32 %v10239, %v10287
    %v10289 = vpop.f32.mrf.mxu0
    %v10290 = vadd.f32 %v10241, %v10289
    %10291 = vmatmul.bf16.gmra.mxu0 %v6441
    %v10292 = vpop.f32.mrf.mxu0
    %v10293 = vadd.f32 %v10244, %v10292
    %v10294 = vpop.f32.mrf.mxu0
    %v10295 = vadd.f32 %v10246, %v10294
    %10296 = vmatmul.bf16.gmra.mxu0 %v6449
    %v10297 = vpop.f32.mrf.mxu0
    %v10298 = vadd.f32 %v10249, %v10297
    %v10299 = vpop.f32.mrf.mxu0
    %v10300 = vadd.f32 %v10251, %v10299
    %10301 = vmatmul.bf16.gmra.mxu0 %v6457
    %v10302 = vpop.f32.mrf.mxu0
    %v10303 = vadd.f32 %v10254, %v10302
    %v10304 = vpop.f32.mrf.mxu0
    %v10305 = vadd.f32 %v10256, %v10304
    %10306 = vmatmul.bf16.gmra.mxu0 %v6465
    %v10307 = vpop.f32.mrf.mxu0
    %v10308 = vadd.f32 %v10259, %v10307
    %v10309 = vpop.f32.mrf.mxu0
    %v10310 = vadd.f32 %v10261, %v10309
    %10311 = vmatmul.bf16.gmra.mxu0 %v6473
    %v10312 = vpop.f32.mrf.mxu0
    %v10313 = vadd.f32 %v10264, %v10312
    %v10314 = vpop.f32.mrf.mxu0
    %v10315 = vadd.f32 %v10266, %v10314
    %10316 = vmatmul.bf16.gmra.mxu0 %v6481
    %v10317 = vpop.f32.mrf.mxu0
    %v10318 = vadd.f32 %v10269, %v10317
    %v10319 = vpop.f32.mrf.mxu0
    %v10320 = vadd.f32 %v10271, %v10319
    %10321 = vdwg.mxu0
    %10322 = vmatpush.bf16.msra.mxu0 %v8344
    %10323 = vmatpush.bf16.msra.mxu0 %v8337
    %10324 = vmatpush.bf16.msra.mxu0 %v8330
    %10325 = vmatpush.bf16.msra.mxu0 %v8323
    %10326 = vmatpush.bf16.msra.mxu0 %v8316
    %10327 = vmatpush.bf16.msra.mxu0 %v8309
    %10328 = vmatpush.bf16.msra.mxu0 %v8302
    %10329 = vmatpush.bf16.msra.mxu0 %v8295
    %10330 = vmatmul.bf16.gmra.mxu0 %v6426
    %v10331 = vpop.f32.mrf.mxu0
    %v10332 = vadd.f32 %v10283, %v10331
    %v10333 = vpop.f32.mrf.mxu0
    %v10334 = vadd.f32 %v10285, %v10333
    %10335 = vmatmul.bf16.gmra.mxu0 %v6434
    %v10336 = vpop.f32.mrf.mxu0
    %v10337 = vadd.f32 %v10288, %v10336
    %v10338 = vpop.f32.mrf.mxu0
    %v10339 = vadd.f32 %v10290, %v10338
    %10340 = vmatmul.bf16.gmra.mxu0 %v6442
    %v10341 = vpop.f32.mrf.mxu0
    %v10342 = vadd.f32 %v10293, %v10341
    %v10343 = vpop.f32.mrf.mxu0
    %v10344 = vadd.f32 %v10295, %v10343
    %10345 = vmatmul.bf16.gmra.mxu0 %v6450
    %v10346 = vpop.f32.mrf.mxu0
    %v10347 = vadd.f32 %v10298, %v10346
    %v10348 = vpop.f32.mrf.mxu0
    %v10349 = vadd.f32 %v10300, %v10348
    %10350 = vmatmul.bf16.gmra.mxu0 %v6458
    %v10351 = vpop.f32.mrf.mxu0
    %v10352 = vadd.f32 %v10303, %v10351
    %v10353 = vpop.f32.mrf.mxu0
    %v10354 = vadd.f32 %v10305, %v10353
    %10355 = vmatmul.bf16.gmra.mxu0 %v6466
    %v10356 = vpop.f32.mrf.mxu0
    %v10357 = vadd.f32 %v10308, %v10356
    %v10358 = vpop.f32.mrf.mxu0
    %v10359 = vadd.f32 %v10310, %v10358
    %10360 = vmatmul.bf16.gmra.mxu0 %v6474
    %v10361 = vpop.f32.mrf.mxu0
    %v10362 = vadd.f32 %v10313, %v10361
    %v10363 = vpop.f32.mrf.mxu0
    %v10364 = vadd.f32 %v10315, %v10363
    %10365 = vmatmul.bf16.gmra.mxu0 %v6482
    %v10366 = vpop.f32.mrf.mxu0
    %v10367 = vadd.f32 %v10318, %v10366
    %v10368 = vpop.f32.mrf.mxu0
    %v10369 = vadd.f32 %v10320, %v10368
    %10370 = vdwg.mxu0
    %10371 = vmatpush.bf16.msra.mxu0 %v8400
    %10372 = vmatpush.bf16.msra.mxu0 %v8393
    %10373 = vmatpush.bf16.msra.mxu0 %v8386
    %10374 = vmatpush.bf16.msra.mxu0 %v8379
    %10375 = vmatpush.bf16.msra.mxu0 %v8372
    %10376 = vmatpush.bf16.msra.mxu0 %v8365
    %10377 = vmatpush.bf16.msra.mxu0 %v8358
    %10378 = vmatpush.bf16.msra.mxu0 %v8351
    %10379 = vmatmul.bf16.gmra.mxu0 %v6427
    %v10380 = vpop.f32.mrf.mxu0
    %v10381 = vadd.f32 %v10332, %v10380
    %v10382 = vpop.f32.mrf.mxu0
    %v10383 = vadd.f32 %v10334, %v10382
    %10384 = vmatmul.bf16.gmra.mxu0 %v6435
    %v10385 = vpop.f32.mrf.mxu0
    %v10386 = vadd.f32 %v10337, %v10385
    %v10387 = vpop.f32.mrf.mxu0
    %v10388 = vadd.f32 %v10339, %v10387
    %10389 = vmatmul.bf16.gmra.mxu0 %v6443
    %v10390 = vpop.f32.mrf.mxu0
    %v10391 = vadd.f32 %v10342, %v10390
    %v10392 = vpop.f32.mrf.mxu0
    %v10393 = vadd.f32 %v10344, %v10392
    %10394 = vmatmul.bf16.gmra.mxu0 %v6451
    %v10395 = vpop.f32.mrf.mxu0
    %v10396 = vadd.f32 %v10347, %v10395
    %v10397 = vpop.f32.mrf.mxu0
    %v10398 = vadd.f32 %v10349, %v10397
    %10399 = vmatmul.bf16.gmra.mxu0 %v6459
    %v10400 = vpop.f32.mrf.mxu0
    %v10401 = vadd.f32 %v10352, %v10400
    %v10402 = vpop.f32.mrf.mxu0
    %v10403 = vadd.f32 %v10354, %v10402
    %10404 = vmatmul.bf16.gmra.mxu0 %v6467
    %v10405 = vpop.f32.mrf.mxu0
    %v10406 = vadd.f32 %v10357, %v10405
    %v10407 = vpop.f32.mrf.mxu0
    %v10408 = vadd.f32 %v10359, %v10407
    %10409 = vmatmul.bf16.gmra.mxu0 %v6475
    %v10410 = vpop.f32.mrf.mxu0
    %v10411 = vadd.f32 %v10362, %v10410
    %v10412 = vpop.f32.mrf.mxu0
    %v10413 = vadd.f32 %v10364, %v10412
    %10414 = vmatmul.bf16.gmra.mxu0 %v6483
    %v10415 = vpop.f32.mrf.mxu0
    %v10416 = vadd.f32 %v10367, %v10415
    %v10417 = vpop.f32.mrf.mxu0
    %v10418 = vadd.f32 %v10369, %v10417
    %10419 = vdwg.mxu0
    %10420 = vmatpush.bf16.msra.mxu0 %v8009
    %10421 = vmatpush.bf16.msra.mxu0 %v8002
    %10422 = vmatpush.bf16.msra.mxu0 %v7995
    %10423 = vmatpush.bf16.msra.mxu0 %v7988
    %10424 = vmatpush.bf16.msra.mxu0 %v7981
    %10425 = vmatpush.bf16.msra.mxu0 %v7974
    %10426 = vmatpush.bf16.msra.mxu0 %v7967
    %10427 = vmatpush.bf16.msra.mxu0 %v7960
    %10428 = vmatmul.bf16.gmra.mxu0 %v6420
    %v10429 = vpop.f32.mrf.mxu0
    %v10430 = vadd.f32 %v6218, %v10429
    %v10431 = vpop.f32.mrf.mxu0
    %v10432 = vadd.f32 %v6218, %v10431
    %10433 = vmatmul.bf16.gmra.mxu0 %v6428
    %v10434 = vpop.f32.mrf.mxu0
    %v10435 = vadd.f32 %v6218, %v10434
    %v10436 = vpop.f32.mrf.mxu0
    %v10437 = vadd.f32 %v6218, %v10436
    %10438 = vmatmul.bf16.gmra.mxu0 %v6436
    %v10439 = vpop.f32.mrf.mxu0
    %v10440 = vadd.f32 %v6218, %v10439
    %v10441 = vpop.f32.mrf.mxu0
    %v10442 = vadd.f32 %v6218, %v10441
    %10443 = vmatmul.bf16.gmra.mxu0 %v6444
    %v10444 = vpop.f32.mrf.mxu0
    %v10445 = vadd.f32 %v6218, %v10444
    %v10446 = vpop.f32.mrf.mxu0
    %v10447 = vadd.f32 %v6218, %v10446
    %10448 = vmatmul.bf16.gmra.mxu0 %v6452
    %v10449 = vpop.f32.mrf.mxu0
    %v10450 = vadd.f32 %v6218, %v10449
    %v10451 = vpop.f32.mrf.mxu0
    %v10452 = vadd.f32 %v6218, %v10451
    %10453 = vmatmul.bf16.gmra.mxu0 %v6460
    %v10454 = vpop.f32.mrf.mxu0
    %v10455 = vadd.f32 %v6218, %v10454
    %v10456 = vpop.f32.mrf.mxu0
    %v10457 = vadd.f32 %v6218, %v10456
    %10458 = vmatmul.bf16.gmra.mxu0 %v6468
    %v10459 = vpop.f32.mrf.mxu0
    %v10460 = vadd.f32 %v6218, %v10459
    %v10461 = vpop.f32.mrf.mxu0
    %v10462 = vadd.f32 %v6218, %v10461
    %10463 = vmatmul.bf16.gmra.mxu0 %v6476
    %v10464 = vpop.f32.mrf.mxu0
    %v10465 = vadd.f32 %v6218, %v10464
    %v10466 = vpop.f32.mrf.mxu0
    %v10467 = vadd.f32 %v6218, %v10466
    %10468 = vdwg.mxu0
    %10469 = vmatpush.bf16.msra.mxu0 %v8065
    %10470 = vmatpush.bf16.msra.mxu0 %v8058
    %10471 = vmatpush.bf16.msra.mxu0 %v8051
    %10472 = vmatpush.bf16.msra.mxu0 %v8044
    %10473 = vmatpush.bf16.msra.mxu0 %v8037
    %10474 = vmatpush.bf16.msra.mxu0 %v8030
    %10475 = vmatpush.bf16.msra.mxu0 %v8023
    %10476 = vmatpush.bf16.msra.mxu0 %v8016
    %10477 = vmatmul.bf16.gmra.mxu0 %v6421
    %v10478 = vpop.f32.mrf.mxu0
    %v10479 = vadd.f32 %v10430, %v10478
    %v10480 = vpop.f32.mrf.mxu0
    %v10481 = vadd.f32 %v10432, %v10480
    %10482 = vmatmul.bf16.gmra.mxu0 %v6429
    %v10483 = vpop.f32.mrf.mxu0
    %v10484 = vadd.f32 %v10435, %v10483
    %v10485 = vpop.f32.mrf.mxu0
    %v10486 = vadd.f32 %v10437, %v10485
    %10487 = vmatmul.bf16.gmra.mxu0 %v6437
    %v10488 = vpop.f32.mrf.mxu0
    %v10489 = vadd.f32 %v10440, %v10488
    %v10490 = vpop.f32.mrf.mxu0
    %v10491 = vadd.f32 %v10442, %v10490
    %10492 = vmatmul.bf16.gmra.mxu0 %v6445
    %v10493 = vpop.f32.mrf.mxu0
    %v10494 = vadd.f32 %v10445, %v10493
    %v10495 = vpop.f32.mrf.mxu0
    %v10496 = vadd.f32 %v10447, %v10495
    %10497 = vmatmul.bf16.gmra.mxu0 %v6453
    %v10498 = vpop.f32.mrf.mxu0
    %v10499 = vadd.f32 %v10450, %v10498
    %v10500 = vpop.f32.mrf.mxu0
    %v10501 = vadd.f32 %v10452, %v10500
    %10502 = vmatmul.bf16.gmra.mxu0 %v6461
    %v10503 = vpop.f32.mrf.mxu0
    %v10504 = vadd.f32 %v10455, %v10503
    %v10505 = vpop.f32.mrf.mxu0
    %v10506 = vadd.f32 %v10457, %v10505
    %10507 = vmatmul.bf16.gmra.mxu0 %v6469
    %v10508 = vpop.f32.mrf.mxu0
    %v10509 = vadd.f32 %v10460, %v10508
    %v10510 = vpop.f32.mrf.mxu0
    %v10511 = vadd.f32 %v10462, %v10510
    %10512 = vmatmul.bf16.gmra.mxu0 %v6477
    %v10513 = vpop.f32.mrf.mxu0
    %v10514 = vadd.f32 %v10465, %v10513
    %v10515 = vpop.f32.mrf.mxu0
    %v10516 = vadd.f32 %v10467, %v10515
    %10517 = vdwg.mxu0
    %10518 = vmatpush.bf16.msra.mxu0 %v8121
    %10519 = vmatpush.bf16.msra.mxu0 %v8114
    %10520 = vmatpush.bf16.msra.mxu0 %v8107
    %10521 = vmatpush.bf16.msra.mxu0 %v8100
    %10522 = vmatpush.bf16.msra.mxu0 %v8093
    %10523 = vmatpush.bf16.msra.mxu0 %v8086
    %10524 = vmatpush.bf16.msra.mxu0 %v8079
    %10525 = vmatpush.bf16.msra.mxu0 %v8072
    %10526 = vmatmul.bf16.gmra.mxu0 %v6422
    %v10527 = vpop.f32.mrf.mxu0
    %v10528 = vadd.f32 %v10479, %v10527
    %v10529 = vpop.f32.mrf.mxu0
    %v10530 = vadd.f32 %v10481, %v10529
    %10531 = vmatmul.bf16.gmra.mxu0 %v6430
    %v10532 = vpop.f32.mrf.mxu0
    %v10533 = vadd.f32 %v10484, %v10532
    %v10534 = vpop.f32.mrf.mxu0
    %v10535 = vadd.f32 %v10486, %v10534
    %10536 = vmatmul.bf16.gmra.mxu0 %v6438
    %v10537 = vpop.f32.mrf.mxu0
    %v10538 = vadd.f32 %v10489, %v10537
    %v10539 = vpop.f32.mrf.mxu0
    %v10540 = vadd.f32 %v10491, %v10539
    %10541 = vmatmul.bf16.gmra.mxu0 %v6446
    %v10542 = vpop.f32.mrf.mxu0
    %v10543 = vadd.f32 %v10494, %v10542
    %v10544 = vpop.f32.mrf.mxu0
    %v10545 = vadd.f32 %v10496, %v10544
    %10546 = vmatmul.bf16.gmra.mxu0 %v6454
    %v10547 = vpop.f32.mrf.mxu0
    %v10548 = vadd.f32 %v10499, %v10547
    %v10549 = vpop.f32.mrf.mxu0
    %v10550 = vadd.f32 %v10501, %v10549
    %10551 = vmatmul.bf16.gmra.mxu0 %v6462
    %v10552 = vpop.f32.mrf.mxu0
    %v10553 = vadd.f32 %v10504, %v10552
    %v10554 = vpop.f32.mrf.mxu0
    %v10555 = vadd.f32 %v10506, %v10554
    %10556 = vmatmul.bf16.gmra.mxu0 %v6470
    %v10557 = vpop.f32.mrf.mxu0
    %v10558 = vadd.f32 %v10509, %v10557
    %v10559 = vpop.f32.mrf.mxu0
    %v10560 = vadd.f32 %v10511, %v10559
    %10561 = vmatmul.bf16.gmra.mxu0 %v6478
    %v10562 = vpop.f32.mrf.mxu0
    %v10563 = vadd.f32 %v10514, %v10562
    %v10564 = vpop.f32.mrf.mxu0
    %v10565 = vadd.f32 %v10516, %v10564
    %10566 = vdwg.mxu0
    %10567 = vmatpush.bf16.msra.mxu0 %v8177
    %10568 = vmatpush.bf16.msra.mxu0 %v8170
    %10569 = vmatpush.bf16.msra.mxu0 %v8163
    %10570 = vmatpush.bf16.msra.mxu0 %v8156
    %10571 = vmatpush.bf16.msra.mxu0 %v8149
    %10572 = vmatpush.bf16.msra.mxu0 %v8142
    %10573 = vmatpush.bf16.msra.mxu0 %v8135
    %10574 = vmatpush.bf16.msra.mxu0 %v8128
    %10575 = vmatmul.bf16.gmra.mxu0 %v6423
    %v10576 = vpop.f32.mrf.mxu0
    %v10577 = vadd.f32 %v10528, %v10576
    %v10578 = vpop.f32.mrf.mxu0
    %v10579 = vadd.f32 %v10530, %v10578
    %10580 = vmatmul.bf16.gmra.mxu0 %v6431
    %v10581 = vpop.f32.mrf.mxu0
    %v10582 = vadd.f32 %v10533, %v10581
    %v10583 = vpop.f32.mrf.mxu0
    %v10584 = vadd.f32 %v10535, %v10583
    %10585 = vmatmul.bf16.gmra.mxu0 %v6439
    %v10586 = vpop.f32.mrf.mxu0
    %v10587 = vadd.f32 %v10538, %v10586
    %v10588 = vpop.f32.mrf.mxu0
    %v10589 = vadd.f32 %v10540, %v10588
    %10590 = vmatmul.bf16.gmra.mxu0 %v6447
    %v10591 = vpop.f32.mrf.mxu0
    %v10592 = vadd.f32 %v10543, %v10591
    %v10593 = vpop.f32.mrf.mxu0
    %v10594 = vadd.f32 %v10545, %v10593
    %10595 = vmatmul.bf16.gmra.mxu0 %v6455
    %v10596 = vpop.f32.mrf.mxu0
    %v10597 = vadd.f32 %v10548, %v10596
    %v10598 = vpop.f32.mrf.mxu0
    %v10599 = vadd.f32 %v10550, %v10598
    %10600 = vmatmul.bf16.gmra.mxu0 %v6463
    %v10601 = vpop.f32.mrf.mxu0
    %v10602 = vadd.f32 %v10553, %v10601
    %v10603 = vpop.f32.mrf.mxu0
    %v10604 = vadd.f32 %v10555, %v10603
    %10605 = vmatmul.bf16.gmra.mxu0 %v6471
    %v10606 = vpop.f32.mrf.mxu0
    %v10607 = vadd.f32 %v10558, %v10606
    %v10608 = vpop.f32.mrf.mxu0
    %v10609 = vadd.f32 %v10560, %v10608
    %10610 = vmatmul.bf16.gmra.mxu0 %v6479
    %v10611 = vpop.f32.mrf.mxu0
    %v10612 = vadd.f32 %v10563, %v10611
    %v10613 = vpop.f32.mrf.mxu0
    %v10614 = vadd.f32 %v10565, %v10613
    %10615 = vdwg.mxu0
    %10616 = vmatpush.bf16.msra.mxu0 %v8233
    %10617 = vmatpush.bf16.msra.mxu0 %v8226
    %10618 = vmatpush.bf16.msra.mxu0 %v8219
    %10619 = vmatpush.bf16.msra.mxu0 %v8212
    %10620 = vmatpush.bf16.msra.mxu0 %v8205
    %10621 = vmatpush.bf16.msra.mxu0 %v8198
    %10622 = vmatpush.bf16.msra.mxu0 %v8191
    %10623 = vmatpush.bf16.msra.mxu0 %v8184
    %10624 = vmatmul.bf16.gmra.mxu0 %v6424
    %v10625 = vpop.f32.mrf.mxu0
    %v10626 = vadd.f32 %v10577, %v10625
    %v10627 = vpop.f32.mrf.mxu0
    %v10628 = vadd.f32 %v10579, %v10627
    %10629 = vmatmul.bf16.gmra.mxu0 %v6432
    %v10630 = vpop.f32.mrf.mxu0
    %v10631 = vadd.f32 %v10582, %v10630
    %v10632 = vpop.f32.mrf.mxu0
    %v10633 = vadd.f32 %v10584, %v10632
    %10634 = vmatmul.bf16.gmra.mxu0 %v6440
    %v10635 = vpop.f32.mrf.mxu0
    %v10636 = vadd.f32 %v10587, %v10635
    %v10637 = vpop.f32.mrf.mxu0
    %v10638 = vadd.f32 %v10589, %v10637
    %10639 = vmatmul.bf16.gmra.mxu0 %v6448
    %v10640 = vpop.f32.mrf.mxu0
    %v10641 = vadd.f32 %v10592, %v10640
    %v10642 = vpop.f32.mrf.mxu0
    %v10643 = vadd.f32 %v10594, %v10642
    %10644 = vmatmul.bf16.gmra.mxu0 %v6456
    %v10645 = vpop.f32.mrf.mxu0
    %v10646 = vadd.f32 %v10597, %v10645
    %v10647 = vpop.f32.mrf.mxu0
    %v10648 = vadd.f32 %v10599, %v10647
    %10649 = vmatmul.bf16.gmra.mxu0 %v6464
    %v10650 = vpop.f32.mrf.mxu0
    %v10651 = vadd.f32 %v10602, %v10650
    %v10652 = vpop.f32.mrf.mxu0
    %v10653 = vadd.f32 %v10604, %v10652
    %10654 = vmatmul.bf16.gmra.mxu0 %v6472
    %v10655 = vpop.f32.mrf.mxu0
    %v10656 = vadd.f32 %v10607, %v10655
    %v10657 = vpop.f32.mrf.mxu0
    %v10658 = vadd.f32 %v10609, %v10657
    %10659 = vmatmul.bf16.gmra.mxu0 %v6480
    %v10660 = vpop.f32.mrf.mxu0
    %v10661 = vadd.f32 %v10612, %v10660
    %v10662 = vpop.f32.mrf.mxu0
    %v10663 = vadd.f32 %v10614, %v10662
    %10664 = vdwg.mxu0
    %10665 = vmatpush.bf16.msra.mxu0 %v8289
    %10666 = vmatpush.bf16.msra.mxu0 %v8282
    %10667 = vmatpush.bf16.msra.mxu0 %v8275
    %10668 = vmatpush.bf16.msra.mxu0 %v8268
    %10669 = vmatpush.bf16.msra.mxu0 %v8261
    %10670 = vmatpush.bf16.msra.mxu0 %v8254
    %10671 = vmatpush.bf16.msra.mxu0 %v8247
    %10672 = vmatpush.bf16.msra.mxu0 %v8240
    %10673 = vmatmul.bf16.gmra.mxu0 %v6425
    %v10674 = vpop.f32.mrf.mxu0
    %v10675 = vadd.f32 %v10626, %v10674
    %v10676 = vpop.f32.mrf.mxu0
    %v10677 = vadd.f32 %v10628, %v10676
    %10678 = vmatmul.bf16.gmra.mxu0 %v6433
    %v10679 = vpop.f32.mrf.mxu0
    %v10680 = vadd.f32 %v10631, %v10679
    %v10681 = vpop.f32.mrf.mxu0
    %v10682 = vadd.f32 %v10633, %v10681
    %10683 = vmatmul.bf16.gmra.mxu0 %v6441
    %v10684 = vpop.f32.mrf.mxu0
    %v10685 = vadd.f32 %v10636, %v10684
    %v10686 = vpop.f32.mrf.mxu0
    %v10687 = vadd.f32 %v10638, %v10686
    %10688 = vmatmul.bf16.gmra.mxu0 %v6449
    %v10689 = vpop.f32.mrf.mxu0
    %v10690 = vadd.f32 %v10641, %v10689
    %v10691 = vpop.f32.mrf.mxu0
    %v10692 = vadd.f32 %v10643, %v10691
    %10693 = vmatmul.bf16.gmra.mxu0 %v6457
    %v10694 = vpop.f32.mrf.mxu0
    %v10695 = vadd.f32 %v10646, %v10694
    %v10696 = vpop.f32.mrf.mxu0
    %v10697 = vadd.f32 %v10648, %v10696
    %10698 = vmatmul.bf16.gmra.mxu0 %v6465
    %v10699 = vpop.f32.mrf.mxu0
    %v10700 = vadd.f32 %v10651, %v10699
    %v10701 = vpop.f32.mrf.mxu0
    %v10702 = vadd.f32 %v10653, %v10701
    %10703 = vmatmul.bf16.gmra.mxu0 %v6473
    %v10704 = vpop.f32.mrf.mxu0
    %v10705 = vadd.f32 %v10656, %v10704
    %v10706 = vpop.f32.mrf.mxu0
    %v10707 = vadd.f32 %v10658, %v10706
    %10708 = vmatmul.bf16.gmra.mxu0 %v6481
    %v10709 = vpop.f32.mrf.mxu0
    %v10710 = vadd.f32 %v10661, %v10709
    %v10711 = vpop.f32.mrf.mxu0
    %v10712 = vadd.f32 %v10663, %v10711
    %10713 = vdwg.mxu0
    %10714 = vmatpush.bf16.msra.mxu0 %v8345
    %10715 = vmatpush.bf16.msra.mxu0 %v8338
    %10716 = vmatpush.bf16.msra.mxu0 %v8331
    %10717 = vmatpush.bf16.msra.mxu0 %v8324
    %10718 = vmatpush.bf16.msra.mxu0 %v8317
    %10719 = vmatpush.bf16.msra.mxu0 %v8310
    %10720 = vmatpush.bf16.msra.mxu0 %v8303
    %10721 = vmatpush.bf16.msra.mxu0 %v8296
    %10722 = vmatmul.bf16.gmra.mxu0 %v6426
    %v10723 = vpop.f32.mrf.mxu0
    %v10724 = vadd.f32 %v10675, %v10723
    %v10725 = vpop.f32.mrf.mxu0
    %v10726 = vadd.f32 %v10677, %v10725
    %10727 = vmatmul.bf16.gmra.mxu0 %v6434
    %v10728 = vpop.f32.mrf.mxu0
    %v10729 = vadd.f32 %v10680, %v10728
    %v10730 = vpop.f32.mrf.mxu0
    %v10731 = vadd.f32 %v10682, %v10730
    %10732 = vmatmul.bf16.gmra.mxu0 %v6442
    %v10733 = vpop.f32.mrf.mxu0
    %v10734 = vadd.f32 %v10685, %v10733
    %v10735 = vpop.f32.mrf.mxu0
    %v10736 = vadd.f32 %v10687, %v10735
    %10737 = vmatmul.bf16.gmra.mxu0 %v6450
    %v10738 = vpop.f32.mrf.mxu0
    %v10739 = vadd.f32 %v10690, %v10738
    %v10740 = vpop.f32.mrf.mxu0
    %v10741 = vadd.f32 %v10692, %v10740
    %10742 = vmatmul.bf16.gmra.mxu0 %v6458
    %v10743 = vpop.f32.mrf.mxu0
    %v10744 = vadd.f32 %v10695, %v10743
    %v10745 = vpop.f32.mrf.mxu0
    %v10746 = vadd.f32 %v10697, %v10745
    %10747 = vmatmul.bf16.gmra.mxu0 %v6466
    %v10748 = vpop.f32.mrf.mxu0
    %v10749 = vadd.f32 %v10700, %v10748
    %v10750 = vpop.f32.mrf.mxu0
    %v10751 = vadd.f32 %v10702, %v10750
    %10752 = vmatmul.bf16.gmra.mxu0 %v6474
    %v10753 = vpop.f32.mrf.mxu0
    %v10754 = vadd.f32 %v10705, %v10753
    %v10755 = vpop.f32.mrf.mxu0
    %v10756 = vadd.f32 %v10707, %v10755
    %10757 = vmatmul.bf16.gmra.mxu0 %v6482
    %v10758 = vpop.f32.mrf.mxu0
    %v10759 = vadd.f32 %v10710, %v10758
    %v10760 = vpop.f32.mrf.mxu0
    %v10761 = vadd.f32 %v10712, %v10760
    %10762 = vdwg.mxu0
    %10763 = vmatpush.bf16.msra.mxu0 %v8401
    %10764 = vmatpush.bf16.msra.mxu0 %v8394
    %10765 = vmatpush.bf16.msra.mxu0 %v8387
    %10766 = vmatpush.bf16.msra.mxu0 %v8380
    %10767 = vmatpush.bf16.msra.mxu0 %v8373
    %10768 = vmatpush.bf16.msra.mxu0 %v8366
    %10769 = vmatpush.bf16.msra.mxu0 %v8359
    %10770 = vmatpush.bf16.msra.mxu0 %v8352
    %10771 = vmatmul.bf16.gmra.mxu0 %v6427
    %v10772 = vpop.f32.mrf.mxu0
    %v10773 = vadd.f32 %v10724, %v10772
    %v10774 = vpop.f32.mrf.mxu0
    %v10775 = vadd.f32 %v10726, %v10774
    %10776 = vmatmul.bf16.gmra.mxu0 %v6435
    %v10777 = vpop.f32.mrf.mxu0
    %v10778 = vadd.f32 %v10729, %v10777
    %v10779 = vpop.f32.mrf.mxu0
    %v10780 = vadd.f32 %v10731, %v10779
    %10781 = vmatmul.bf16.gmra.mxu0 %v6443
    %v10782 = vpop.f32.mrf.mxu0
    %v10783 = vadd.f32 %v10734, %v10782
    %v10784 = vpop.f32.mrf.mxu0
    %v10785 = vadd.f32 %v10736, %v10784
    %10786 = vmatmul.bf16.gmra.mxu0 %v6451
    %v10787 = vpop.f32.mrf.mxu0
    %v10788 = vadd.f32 %v10739, %v10787
    %v10789 = vpop.f32.mrf.mxu0
    %v10790 = vadd.f32 %v10741, %v10789
    %10791 = vmatmul.bf16.gmra.mxu0 %v6459
    %v10792 = vpop.f32.mrf.mxu0
    %v10793 = vadd.f32 %v10744, %v10792
    %v10794 = vpop.f32.mrf.mxu0
    %v10795 = vadd.f32 %v10746, %v10794
    %10796 = vmatmul.bf16.gmra.mxu0 %v6467
    %v10797 = vpop.f32.mrf.mxu0
    %v10798 = vadd.f32 %v10749, %v10797
    %v10799 = vpop.f32.mrf.mxu0
    %v10800 = vadd.f32 %v10751, %v10799
    %10801 = vmatmul.bf16.gmra.mxu0 %v6475
    %v10802 = vpop.f32.mrf.mxu0
    %v10803 = vadd.f32 %v10754, %v10802
    %v10804 = vpop.f32.mrf.mxu0
    %v10805 = vadd.f32 %v10756, %v10804
    %10806 = vmatmul.bf16.gmra.mxu0 %v6483
    %v10807 = vpop.f32.mrf.mxu0
    %v10808 = vadd.f32 %v10759, %v10807
    %v10809 = vpop.f32.mrf.mxu0
    %v10810 = vadd.f32 %v10761, %v10809
    %10811 = vdwg.mxu0
    %10812 = vmatpush.bf16.msra.mxu0 %v8010
    %10813 = vmatpush.bf16.msra.mxu0 %v8003
    %10814 = vmatpush.bf16.msra.mxu0 %v7996
    %10815 = vmatpush.bf16.msra.mxu0 %v7989
    %10816 = vmatpush.bf16.msra.mxu0 %v7982
    %10817 = vmatpush.bf16.msra.mxu0 %v7975
    %10818 = vmatpush.bf16.msra.mxu0 %v7968
    %10819 = vmatpush.bf16.msra.mxu0 %v7961
    %10820 = vmatmul.bf16.gmra.mxu0 %v6420
    %v10821 = vpop.f32.mrf.mxu0
    %v10822 = vadd.f32 %v6219, %v10821
    %v10823 = vpop.f32.mrf.mxu0
    %v10824 = vadd.f32 %v6219, %v10823
    %10825 = vmatmul.bf16.gmra.mxu0 %v6428
    %v10826 = vpop.f32.mrf.mxu0
    %v10827 = vadd.f32 %v6219, %v10826
    %v10828 = vpop.f32.mrf.mxu0
    %v10829 = vadd.f32 %v6219, %v10828
    %10830 = vmatmul.bf16.gmra.mxu0 %v6436
    %v10831 = vpop.f32.mrf.mxu0
    %v10832 = vadd.f32 %v6219, %v10831
    %v10833 = vpop.f32.mrf.mxu0
    %v10834 = vadd.f32 %v6219, %v10833
    %10835 = vmatmul.bf16.gmra.mxu0 %v6444
    %v10836 = vpop.f32.mrf.mxu0
    %v10837 = vadd.f32 %v6219, %v10836
    %v10838 = vpop.f32.mrf.mxu0
    %v10839 = vadd.f32 %v6219, %v10838
    %10840 = vmatmul.bf16.gmra.mxu0 %v6452
    %v10841 = vpop.f32.mrf.mxu0
    %v10842 = vadd.f32 %v6219, %v10841
    %v10843 = vpop.f32.mrf.mxu0
    %v10844 = vadd.f32 %v6219, %v10843
    %10845 = vmatmul.bf16.gmra.mxu0 %v6460
    %v10846 = vpop.f32.mrf.mxu0
    %v10847 = vadd.f32 %v6219, %v10846
    %v10848 = vpop.f32.mrf.mxu0
    %v10849 = vadd.f32 %v6219, %v10848
    %10850 = vmatmul.bf16.gmra.mxu0 %v6468
    %v10851 = vpop.f32.mrf.mxu0
    %v10852 = vadd.f32 %v6219, %v10851
    %v10853 = vpop.f32.mrf.mxu0
    %v10854 = vadd.f32 %v6219, %v10853
    %10855 = vmatmul.bf16.gmra.mxu0 %v6476
    %v10856 = vpop.f32.mrf.mxu0
    %v10857 = vadd.f32 %v6219, %v10856
    %v10858 = vpop.f32.mrf.mxu0
    %v10859 = vadd.f32 %v6219, %v10858
    %10860 = vdwg.mxu0
    %10861 = vmatpush.bf16.msra.mxu0 %v8066
    %10862 = vmatpush.bf16.msra.mxu0 %v8059
    %10863 = vmatpush.bf16.msra.mxu0 %v8052
    %10864 = vmatpush.bf16.msra.mxu0 %v8045
    %10865 = vmatpush.bf16.msra.mxu0 %v8038
    %10866 = vmatpush.bf16.msra.mxu0 %v8031
    %10867 = vmatpush.bf16.msra.mxu0 %v8024
    %10868 = vmatpush.bf16.msra.mxu0 %v8017
    %10869 = vmatmul.bf16.gmra.mxu0 %v6421
    %v10870 = vpop.f32.mrf.mxu0
    %v10871 = vadd.f32 %v10822, %v10870
    %v10872 = vpop.f32.mrf.mxu0
    %v10873 = vadd.f32 %v10824, %v10872
    %10874 = vmatmul.bf16.gmra.mxu0 %v6429
    %v10875 = vpop.f32.mrf.mxu0
    %v10876 = vadd.f32 %v10827, %v10875
    %v10877 = vpop.f32.mrf.mxu0
    %v10878 = vadd.f32 %v10829, %v10877
    %10879 = vmatmul.bf16.gmra.mxu0 %v6437
    %v10880 = vpop.f32.mrf.mxu0
    %v10881 = vadd.f32 %v10832, %v10880
    %v10882 = vpop.f32.mrf.mxu0
    %v10883 = vadd.f32 %v10834, %v10882
    %10884 = vmatmul.bf16.gmra.mxu0 %v6445
    %v10885 = vpop.f32.mrf.mxu0
    %v10886 = vadd.f32 %v10837, %v10885
    %v10887 = vpop.f32.mrf.mxu0
    %v10888 = vadd.f32 %v10839, %v10887
    %10889 = vmatmul.bf16.gmra.mxu0 %v6453
    %v10890 = vpop.f32.mrf.mxu0
    %v10891 = vadd.f32 %v10842, %v10890
    %v10892 = vpop.f32.mrf.mxu0
    %v10893 = vadd.f32 %v10844, %v10892
    %10894 = vmatmul.bf16.gmra.mxu0 %v6461
    %v10895 = vpop.f32.mrf.mxu0
    %v10896 = vadd.f32 %v10847, %v10895
    %v10897 = vpop.f32.mrf.mxu0
    %v10898 = vadd.f32 %v10849, %v10897
    %10899 = vmatmul.bf16.gmra.mxu0 %v6469
    %v10900 = vpop.f32.mrf.mxu0
    %v10901 = vadd.f32 %v10852, %v10900
    %v10902 = vpop.f32.mrf.mxu0
    %v10903 = vadd.f32 %v10854, %v10902
    %10904 = vmatmul.bf16.gmra.mxu0 %v6477
    %v10905 = vpop.f32.mrf.mxu0
    %v10906 = vadd.f32 %v10857, %v10905
    %v10907 = vpop.f32.mrf.mxu0
    %v10908 = vadd.f32 %v10859, %v10907
    %10909 = vdwg.mxu0
    %10910 = vmatpush.bf16.msra.mxu0 %v8122
    %10911 = vmatpush.bf16.msra.mxu0 %v8115
    %10912 = vmatpush.bf16.msra.mxu0 %v8108
    %10913 = vmatpush.bf16.msra.mxu0 %v8101
    %10914 = vmatpush.bf16.msra.mxu0 %v8094
    %10915 = vmatpush.bf16.msra.mxu0 %v8087
    %10916 = vmatpush.bf16.msra.mxu0 %v8080
    %10917 = vmatpush.bf16.msra.mxu0 %v8073
    %10918 = vmatmul.bf16.gmra.mxu0 %v6422
    %v10919 = vpop.f32.mrf.mxu0
    %v10920 = vadd.f32 %v10871, %v10919
    %v10921 = vpop.f32.mrf.mxu0
    %v10922 = vadd.f32 %v10873, %v10921
    %10923 = vmatmul.bf16.gmra.mxu0 %v6430
    %v10924 = vpop.f32.mrf.mxu0
    %v10925 = vadd.f32 %v10876, %v10924
    %v10926 = vpop.f32.mrf.mxu0
    %v10927 = vadd.f32 %v10878, %v10926
    %10928 = vmatmul.bf16.gmra.mxu0 %v6438
    %v10929 = vpop.f32.mrf.mxu0
    %v10930 = vadd.f32 %v10881, %v10929
    %v10931 = vpop.f32.mrf.mxu0
    %v10932 = vadd.f32 %v10883, %v10931
    %10933 = vmatmul.bf16.gmra.mxu0 %v6446
    %v10934 = vpop.f32.mrf.mxu0
    %v10935 = vadd.f32 %v10886, %v10934
    %v10936 = vpop.f32.mrf.mxu0
    %v10937 = vadd.f32 %v10888, %v10936
    %10938 = vmatmul.bf16.gmra.mxu0 %v6454
    %v10939 = vpop.f32.mrf.mxu0
    %v10940 = vadd.f32 %v10891, %v10939
    %v10941 = vpop.f32.mrf.mxu0
    %v10942 = vadd.f32 %v10893, %v10941
    %10943 = vmatmul.bf16.gmra.mxu0 %v6462
    %v10944 = vpop.f32.mrf.mxu0
    %v10945 = vadd.f32 %v10896, %v10944
    %v10946 = vpop.f32.mrf.mxu0
    %v10947 = vadd.f32 %v10898, %v10946
    %10948 = vmatmul.bf16.gmra.mxu0 %v6470
    %v10949 = vpop.f32.mrf.mxu0
    %v10950 = vadd.f32 %v10901, %v10949
    %v10951 = vpop.f32.mrf.mxu0
    %v10952 = vadd.f32 %v10903, %v10951
    %10953 = vmatmul.bf16.gmra.mxu0 %v6478
    %v10954 = vpop.f32.mrf.mxu0
    %v10955 = vadd.f32 %v10906, %v10954
    %v10956 = vpop.f32.mrf.mxu0
    %v10957 = vadd.f32 %v10908, %v10956
    %10958 = vdwg.mxu0
    %10959 = vmatpush.bf16.msra.mxu0 %v8178
    %10960 = vmatpush.bf16.msra.mxu0 %v8171
    %10961 = vmatpush.bf16.msra.mxu0 %v8164
    %10962 = vmatpush.bf16.msra.mxu0 %v8157
    %10963 = vmatpush.bf16.msra.mxu0 %v8150
    %10964 = vmatpush.bf16.msra.mxu0 %v8143
    %10965 = vmatpush.bf16.msra.mxu0 %v8136
    %10966 = vmatpush.bf16.msra.mxu0 %v8129
    %10967 = vmatmul.bf16.gmra.mxu0 %v6423
    %v10968 = vpop.f32.mrf.mxu0
    %v10969 = vadd.f32 %v10920, %v10968
    %v10970 = vpop.f32.mrf.mxu0
    %v10971 = vadd.f32 %v10922, %v10970
    %10972 = vmatmul.bf16.gmra.mxu0 %v6431
    %v10973 = vpop.f32.mrf.mxu0
    %v10974 = vadd.f32 %v10925, %v10973
    %v10975 = vpop.f32.mrf.mxu0
    %v10976 = vadd.f32 %v10927, %v10975
    %10977 = vmatmul.bf16.gmra.mxu0 %v6439
    %v10978 = vpop.f32.mrf.mxu0
    %v10979 = vadd.f32 %v10930, %v10978
    %v10980 = vpop.f32.mrf.mxu0
    %v10981 = vadd.f32 %v10932, %v10980
    %10982 = vmatmul.bf16.gmra.mxu0 %v6447
    %v10983 = vpop.f32.mrf.mxu0
    %v10984 = vadd.f32 %v10935, %v10983
    %v10985 = vpop.f32.mrf.mxu0
    %v10986 = vadd.f32 %v10937, %v10985
    %10987 = vmatmul.bf16.gmra.mxu0 %v6455
    %v10988 = vpop.f32.mrf.mxu0
    %v10989 = vadd.f32 %v10940, %v10988
    %v10990 = vpop.f32.mrf.mxu0
    %v10991 = vadd.f32 %v10942, %v10990
    %10992 = vmatmul.bf16.gmra.mxu0 %v6463
    %v10993 = vpop.f32.mrf.mxu0
    %v10994 = vadd.f32 %v10945, %v10993
    %v10995 = vpop.f32.mrf.mxu0
    %v10996 = vadd.f32 %v10947, %v10995
    %10997 = vmatmul.bf16.gmra.mxu0 %v6471
    %v10998 = vpop.f32.mrf.mxu0
    %v10999 = vadd.f32 %v10950, %v10998
    %v11000 = vpop.f32.mrf.mxu0
    %v11001 = vadd.f32 %v10952, %v11000
    %11002 = vmatmul.bf16.gmra.mxu0 %v6479
    %v11003 = vpop.f32.mrf.mxu0
    %v11004 = vadd.f32 %v10955, %v11003
    %v11005 = vpop.f32.mrf.mxu0
    %v11006 = vadd.f32 %v10957, %v11005
    %11007 = vdwg.mxu0
    %11008 = vmatpush.bf16.msra.mxu0 %v8234
    %11009 = vmatpush.bf16.msra.mxu0 %v8227
    %11010 = vmatpush.bf16.msra.mxu0 %v8220
    %11011 = vmatpush.bf16.msra.mxu0 %v8213
    %11012 = vmatpush.bf16.msra.mxu0 %v8206
    %11013 = vmatpush.bf16.msra.mxu0 %v8199
    %11014 = vmatpush.bf16.msra.mxu0 %v8192
    %11015 = vmatpush.bf16.msra.mxu0 %v8185
    %11016 = vmatmul.bf16.gmra.mxu0 %v6424
    %v11017 = vpop.f32.mrf.mxu0
    %v11018 = vadd.f32 %v10969, %v11017
    %v11019 = vpop.f32.mrf.mxu0
    %v11020 = vadd.f32 %v10971, %v11019
    %11021 = vmatmul.bf16.gmra.mxu0 %v6432
    %v11022 = vpop.f32.mrf.mxu0
    %v11023 = vadd.f32 %v10974, %v11022
    %v11024 = vpop.f32.mrf.mxu0
    %v11025 = vadd.f32 %v10976, %v11024
    %11026 = vmatmul.bf16.gmra.mxu0 %v6440
    %v11027 = vpop.f32.mrf.mxu0
    %v11028 = vadd.f32 %v10979, %v11027
    %v11029 = vpop.f32.mrf.mxu0
    %v11030 = vadd.f32 %v10981, %v11029
    %11031 = vmatmul.bf16.gmra.mxu0 %v6448
    %v11032 = vpop.f32.mrf.mxu0
    %v11033 = vadd.f32 %v10984, %v11032
    %v11034 = vpop.f32.mrf.mxu0
    %v11035 = vadd.f32 %v10986, %v11034
    %11036 = vmatmul.bf16.gmra.mxu0 %v6456
    %v11037 = vpop.f32.mrf.mxu0
    %v11038 = vadd.f32 %v10989, %v11037
    %v11039 = vpop.f32.mrf.mxu0
    %v11040 = vadd.f32 %v10991, %v11039
    %11041 = vmatmul.bf16.gmra.mxu0 %v6464
    %v11042 = vpop.f32.mrf.mxu0
    %v11043 = vadd.f32 %v10994, %v11042
    %v11044 = vpop.f32.mrf.mxu0
    %v11045 = vadd.f32 %v10996, %v11044
    %11046 = vmatmul.bf16.gmra.mxu0 %v6472
    %v11047 = vpop.f32.mrf.mxu0
    %v11048 = vadd.f32 %v10999, %v11047
    %v11049 = vpop.f32.mrf.mxu0
    %v11050 = vadd.f32 %v11001, %v11049
    %11051 = vmatmul.bf16.gmra.mxu0 %v6480
    %v11052 = vpop.f32.mrf.mxu0
    %v11053 = vadd.f32 %v11004, %v11052
    %v11054 = vpop.f32.mrf.mxu0
    %v11055 = vadd.f32 %v11006, %v11054
    %11056 = vdwg.mxu0
    %11057 = vmatpush.bf16.msra.mxu0 %v8290
    %11058 = vmatpush.bf16.msra.mxu0 %v8283
    %11059 = vmatpush.bf16.msra.mxu0 %v8276
    %11060 = vmatpush.bf16.msra.mxu0 %v8269
    %11061 = vmatpush.bf16.msra.mxu0 %v8262
    %11062 = vmatpush.bf16.msra.mxu0 %v8255
    %11063 = vmatpush.bf16.msra.mxu0 %v8248
    %11064 = vmatpush.bf16.msra.mxu0 %v8241
    %11065 = vmatmul.bf16.gmra.mxu0 %v6425
    %v11066 = vpop.f32.mrf.mxu0
    %v11067 = vadd.f32 %v11018, %v11066
    %v11068 = vpop.f32.mrf.mxu0
    %v11069 = vadd.f32 %v11020, %v11068
    %11070 = vmatmul.bf16.gmra.mxu0 %v6433
    %v11071 = vpop.f32.mrf.mxu0
    %v11072 = vadd.f32 %v11023, %v11071
    %v11073 = vpop.f32.mrf.mxu0
    %v11074 = vadd.f32 %v11025, %v11073
    %11075 = vmatmul.bf16.gmra.mxu0 %v6441
    %v11076 = vpop.f32.mrf.mxu0
    %v11077 = vadd.f32 %v11028, %v11076
    %v11078 = vpop.f32.mrf.mxu0
    %v11079 = vadd.f32 %v11030, %v11078
    %11080 = vmatmul.bf16.gmra.mxu0 %v6449
    %v11081 = vpop.f32.mrf.mxu0
    %v11082 = vadd.f32 %v11033, %v11081
    %v11083 = vpop.f32.mrf.mxu0
    %v11084 = vadd.f32 %v11035, %v11083
    %11085 = vmatmul.bf16.gmra.mxu0 %v6457
    %v11086 = vpop.f32.mrf.mxu0
    %v11087 = vadd.f32 %v11038, %v11086
    %v11088 = vpop.f32.mrf.mxu0
    %v11089 = vadd.f32 %v11040, %v11088
    %11090 = vmatmul.bf16.gmra.mxu0 %v6465
    %v11091 = vpop.f32.mrf.mxu0
    %v11092 = vadd.f32 %v11043, %v11091
    %v11093 = vpop.f32.mrf.mxu0
    %v11094 = vadd.f32 %v11045, %v11093
    %11095 = vmatmul.bf16.gmra.mxu0 %v6473
    %v11096 = vpop.f32.mrf.mxu0
    %v11097 = vadd.f32 %v11048, %v11096
    %v11098 = vpop.f32.mrf.mxu0
    %v11099 = vadd.f32 %v11050, %v11098
    %11100 = vmatmul.bf16.gmra.mxu0 %v6481
    %v11101 = vpop.f32.mrf.mxu0
    %v11102 = vadd.f32 %v11053, %v11101
    %v11103 = vpop.f32.mrf.mxu0
    %v11104 = vadd.f32 %v11055, %v11103
    %11105 = vdwg.mxu0
    %11106 = vmatpush.bf16.msra.mxu0 %v8346
    %11107 = vmatpush.bf16.msra.mxu0 %v8339
    %11108 = vmatpush.bf16.msra.mxu0 %v8332
    %11109 = vmatpush.bf16.msra.mxu0 %v8325
    %11110 = vmatpush.bf16.msra.mxu0 %v8318
    %11111 = vmatpush.bf16.msra.mxu0 %v8311
    %11112 = vmatpush.bf16.msra.mxu0 %v8304
    %11113 = vmatpush.bf16.msra.mxu0 %v8297
    %11114 = vmatmul.bf16.gmra.mxu0 %v6426
    %v11115 = vpop.f32.mrf.mxu0
    %v11116 = vadd.f32 %v11067, %v11115
    %v11117 = vpop.f32.mrf.mxu0
    %v11118 = vadd.f32 %v11069, %v11117
    %11119 = vmatmul.bf16.gmra.mxu0 %v6434
    %v11120 = vpop.f32.mrf.mxu0
    %v11121 = vadd.f32 %v11072, %v11120
    %v11122 = vpop.f32.mrf.mxu0
    %v11123 = vadd.f32 %v11074, %v11122
    %11124 = vmatmul.bf16.gmra.mxu0 %v6442
    %v11125 = vpop.f32.mrf.mxu0
    %v11126 = vadd.f32 %v11077, %v11125
    %v11127 = vpop.f32.mrf.mxu0
    %v11128 = vadd.f32 %v11079, %v11127
    %11129 = vmatmul.bf16.gmra.mxu0 %v6450
    %v11130 = vpop.f32.mrf.mxu0
    %v11131 = vadd.f32 %v11082, %v11130
    %v11132 = vpop.f32.mrf.mxu0
    %v11133 = vadd.f32 %v11084, %v11132
    %11134 = vmatmul.bf16.gmra.mxu0 %v6458
    %v11135 = vpop.f32.mrf.mxu0
    %v11136 = vadd.f32 %v11087, %v11135
    %v11137 = vpop.f32.mrf.mxu0
    %v11138 = vadd.f32 %v11089, %v11137
    %11139 = vmatmul.bf16.gmra.mxu0 %v6466
    %v11140 = vpop.f32.mrf.mxu0
    %v11141 = vadd.f32 %v11092, %v11140
    %v11142 = vpop.f32.mrf.mxu0
    %v11143 = vadd.f32 %v11094, %v11142
    %11144 = vmatmul.bf16.gmra.mxu0 %v6474
    %v11145 = vpop.f32.mrf.mxu0
    %v11146 = vadd.f32 %v11097, %v11145
    %v11147 = vpop.f32.mrf.mxu0
    %v11148 = vadd.f32 %v11099, %v11147
    %11149 = vmatmul.bf16.gmra.mxu0 %v6482
    %v11150 = vpop.f32.mrf.mxu0
    %v11151 = vadd.f32 %v11102, %v11150
    %v11152 = vpop.f32.mrf.mxu0
    %v11153 = vadd.f32 %v11104, %v11152
    %11154 = vdwg.mxu0
    %11155 = vmatpush.bf16.msra.mxu0 %v8402
    %11156 = vmatpush.bf16.msra.mxu0 %v8395
    %11157 = vmatpush.bf16.msra.mxu0 %v8388
    %11158 = vmatpush.bf16.msra.mxu0 %v8381
    %11159 = vmatpush.bf16.msra.mxu0 %v8374
    %11160 = vmatpush.bf16.msra.mxu0 %v8367
    %11161 = vmatpush.bf16.msra.mxu0 %v8360
    %11162 = vmatpush.bf16.msra.mxu0 %v8353
    %11163 = vmatmul.bf16.gmra.mxu0 %v6427
    %v11164 = vpop.f32.mrf.mxu0
    %v11165 = vadd.f32 %v11116, %v11164
    %v11166 = vpop.f32.mrf.mxu0
    %v11167 = vadd.f32 %v11118, %v11166
    %11168 = vmatmul.bf16.gmra.mxu0 %v6435
    %v11169 = vpop.f32.mrf.mxu0
    %v11170 = vadd.f32 %v11121, %v11169
    %v11171 = vpop.f32.mrf.mxu0
    %v11172 = vadd.f32 %v11123, %v11171
    %11173 = vmatmul.bf16.gmra.mxu0 %v6443
    %v11174 = vpop.f32.mrf.mxu0
    %v11175 = vadd.f32 %v11126, %v11174
    %v11176 = vpop.f32.mrf.mxu0
    %v11177 = vadd.f32 %v11128, %v11176
    %11178 = vmatmul.bf16.gmra.mxu0 %v6451
    %v11179 = vpop.f32.mrf.mxu0
    %v11180 = vadd.f32 %v11131, %v11179
    %v11181 = vpop.f32.mrf.mxu0
    %v11182 = vadd.f32 %v11133, %v11181
    %11183 = vmatmul.bf16.gmra.mxu0 %v6459
    %v11184 = vpop.f32.mrf.mxu0
    %v11185 = vadd.f32 %v11136, %v11184
    %v11186 = vpop.f32.mrf.mxu0
    %v11187 = vadd.f32 %v11138, %v11186
    %11188 = vmatmul.bf16.gmra.mxu0 %v6467
    %v11189 = vpop.f32.mrf.mxu0
    %v11190 = vadd.f32 %v11141, %v11189
    %v11191 = vpop.f32.mrf.mxu0
    %v11192 = vadd.f32 %v11143, %v11191
    %11193 = vmatmul.bf16.gmra.mxu0 %v6475
    %v11194 = vpop.f32.mrf.mxu0
    %v11195 = vadd.f32 %v11146, %v11194
    %v11196 = vpop.f32.mrf.mxu0
    %v11197 = vadd.f32 %v11148, %v11196
    %11198 = vmatmul.bf16.gmra.mxu0 %v6483
    %v11199 = vpop.f32.mrf.mxu0
    %v11200 = vadd.f32 %v11151, %v11199
    %v11201 = vpop.f32.mrf.mxu0
    %v11202 = vadd.f32 %v11153, %v11201
    %11203 = vdwg.mxu0
    %11204 = vmatpush.bf16.msra.mxu0 %v8011
    %11205 = vmatpush.bf16.msra.mxu0 %v8004
    %11206 = vmatpush.bf16.msra.mxu0 %v7997
    %11207 = vmatpush.bf16.msra.mxu0 %v7990
    %11208 = vmatpush.bf16.msra.mxu0 %v7983
    %11209 = vmatpush.bf16.msra.mxu0 %v7976
    %11210 = vmatpush.bf16.msra.mxu0 %v7969
    %11211 = vmatpush.bf16.msra.mxu0 %v7962
    %11212 = vmatmul.bf16.gmra.mxu0 %v6420
    %v11213 = vpop.f32.mrf.mxu0
    %v11214 = vadd.f32 %v6220, %v11213
    %v11215 = vpop.f32.mrf.mxu0
    %v11216 = vadd.f32 %v6220, %v11215
    %11217 = vmatmul.bf16.gmra.mxu0 %v6428
    %v11218 = vpop.f32.mrf.mxu0
    %v11219 = vadd.f32 %v6220, %v11218
    %v11220 = vpop.f32.mrf.mxu0
    %v11221 = vadd.f32 %v6220, %v11220
    %11222 = vmatmul.bf16.gmra.mxu0 %v6436
    %v11223 = vpop.f32.mrf.mxu0
    %v11224 = vadd.f32 %v6220, %v11223
    %v11225 = vpop.f32.mrf.mxu0
    %v11226 = vadd.f32 %v6220, %v11225
    %11227 = vmatmul.bf16.gmra.mxu0 %v6444
    %v11228 = vpop.f32.mrf.mxu0
    %v11229 = vadd.f32 %v6220, %v11228
    %v11230 = vpop.f32.mrf.mxu0
    %v11231 = vadd.f32 %v6220, %v11230
    %11232 = vmatmul.bf16.gmra.mxu0 %v6452
    %v11233 = vpop.f32.mrf.mxu0
    %v11234 = vadd.f32 %v6220, %v11233
    %v11235 = vpop.f32.mrf.mxu0
    %v11236 = vadd.f32 %v6220, %v11235
    %11237 = vmatmul.bf16.gmra.mxu0 %v6460
    %v11238 = vpop.f32.mrf.mxu0
    %v11239 = vadd.f32 %v6220, %v11238
    %v11240 = vpop.f32.mrf.mxu0
    %v11241 = vadd.f32 %v6220, %v11240
    %11242 = vmatmul.bf16.gmra.mxu0 %v6468
    %v11243 = vpop.f32.mrf.mxu0
    %v11244 = vadd.f32 %v6220, %v11243
    %v11245 = vpop.f32.mrf.mxu0
    %v11246 = vadd.f32 %v6220, %v11245
    %11247 = vmatmul.bf16.gmra.mxu0 %v6476
    %v11248 = vpop.f32.mrf.mxu0
    %v11249 = vadd.f32 %v6220, %v11248
    %v11250 = vpop.f32.mrf.mxu0
    %v11251 = vadd.f32 %v6220, %v11250
    %11252 = vdwg.mxu0
    %11253 = vmatpush.bf16.msra.mxu0 %v8067
    %11254 = vmatpush.bf16.msra.mxu0 %v8060
    %11255 = vmatpush.bf16.msra.mxu0 %v8053
    %11256 = vmatpush.bf16.msra.mxu0 %v8046
    %11257 = vmatpush.bf16.msra.mxu0 %v8039
    %11258 = vmatpush.bf16.msra.mxu0 %v8032
    %11259 = vmatpush.bf16.msra.mxu0 %v8025
    %11260 = vmatpush.bf16.msra.mxu0 %v8018
    %11261 = vmatmul.bf16.gmra.mxu0 %v6421
    %v11262 = vpop.f32.mrf.mxu0
    %v11263 = vadd.f32 %v11214, %v11262
    %v11264 = vpop.f32.mrf.mxu0
    %v11265 = vadd.f32 %v11216, %v11264
    %11266 = vmatmul.bf16.gmra.mxu0 %v6429
    %v11267 = vpop.f32.mrf.mxu0
    %v11268 = vadd.f32 %v11219, %v11267
    %v11269 = vpop.f32.mrf.mxu0
    %v11270 = vadd.f32 %v11221, %v11269
    %11271 = vmatmul.bf16.gmra.mxu0 %v6437
    %v11272 = vpop.f32.mrf.mxu0
    %v11273 = vadd.f32 %v11224, %v11272
    %v11274 = vpop.f32.mrf.mxu0
    %v11275 = vadd.f32 %v11226, %v11274
    %11276 = vmatmul.bf16.gmra.mxu0 %v6445
    %v11277 = vpop.f32.mrf.mxu0
    %v11278 = vadd.f32 %v11229, %v11277
    %v11279 = vpop.f32.mrf.mxu0
    %v11280 = vadd.f32 %v11231, %v11279
    %11281 = vmatmul.bf16.gmra.mxu0 %v6453
    %v11282 = vpop.f32.mrf.mxu0
    %v11283 = vadd.f32 %v11234, %v11282
    %v11284 = vpop.f32.mrf.mxu0
    %v11285 = vadd.f32 %v11236, %v11284
    %11286 = vmatmul.bf16.gmra.mxu0 %v6461
    %v11287 = vpop.f32.mrf.mxu0
    %v11288 = vadd.f32 %v11239, %v11287
    %v11289 = vpop.f32.mrf.mxu0
    %v11290 = vadd.f32 %v11241, %v11289
    %11291 = vmatmul.bf16.gmra.mxu0 %v6469
    %v11292 = vpop.f32.mrf.mxu0
    %v11293 = vadd.f32 %v11244, %v11292
    %v11294 = vpop.f32.mrf.mxu0
    %v11295 = vadd.f32 %v11246, %v11294
    %11296 = vmatmul.bf16.gmra.mxu0 %v6477
    %v11297 = vpop.f32.mrf.mxu0
    %v11298 = vadd.f32 %v11249, %v11297
    %v11299 = vpop.f32.mrf.mxu0
    %v11300 = vadd.f32 %v11251, %v11299
    %11301 = vdwg.mxu0
    %11302 = vmatpush.bf16.msra.mxu0 %v8123
    %11303 = vmatpush.bf16.msra.mxu0 %v8116
    %11304 = vmatpush.bf16.msra.mxu0 %v8109
    %11305 = vmatpush.bf16.msra.mxu0 %v8102
    %11306 = vmatpush.bf16.msra.mxu0 %v8095
    %11307 = vmatpush.bf16.msra.mxu0 %v8088
    %11308 = vmatpush.bf16.msra.mxu0 %v8081
    %11309 = vmatpush.bf16.msra.mxu0 %v8074
    %11310 = vmatmul.bf16.gmra.mxu0 %v6422
    %v11311 = vpop.f32.mrf.mxu0
    %v11312 = vadd.f32 %v11263, %v11311
    %v11313 = vpop.f32.mrf.mxu0
    %v11314 = vadd.f32 %v11265, %v11313
    %11315 = vmatmul.bf16.gmra.mxu0 %v6430
    %v11316 = vpop.f32.mrf.mxu0
    %v11317 = vadd.f32 %v11268, %v11316
    %v11318 = vpop.f32.mrf.mxu0
    %v11319 = vadd.f32 %v11270, %v11318
    %11320 = vmatmul.bf16.gmra.mxu0 %v6438
    %v11321 = vpop.f32.mrf.mxu0
    %v11322 = vadd.f32 %v11273, %v11321
    %v11323 = vpop.f32.mrf.mxu0
    %v11324 = vadd.f32 %v11275, %v11323
    %11325 = vmatmul.bf16.gmra.mxu0 %v6446
    %v11326 = vpop.f32.mrf.mxu0
    %v11327 = vadd.f32 %v11278, %v11326
    %v11328 = vpop.f32.mrf.mxu0
    %v11329 = vadd.f32 %v11280, %v11328
    %11330 = vmatmul.bf16.gmra.mxu0 %v6454
    %v11331 = vpop.f32.mrf.mxu0
    %v11332 = vadd.f32 %v11283, %v11331
    %v11333 = vpop.f32.mrf.mxu0
    %v11334 = vadd.f32 %v11285, %v11333
    %11335 = vmatmul.bf16.gmra.mxu0 %v6462
    %v11336 = vpop.f32.mrf.mxu0
    %v11337 = vadd.f32 %v11288, %v11336
    %v11338 = vpop.f32.mrf.mxu0
    %v11339 = vadd.f32 %v11290, %v11338
    %11340 = vmatmul.bf16.gmra.mxu0 %v6470
    %v11341 = vpop.f32.mrf.mxu0
    %v11342 = vadd.f32 %v11293, %v11341
    %v11343 = vpop.f32.mrf.mxu0
    %v11344 = vadd.f32 %v11295, %v11343
    %11345 = vmatmul.bf16.gmra.mxu0 %v6478
    %v11346 = vpop.f32.mrf.mxu0
    %v11347 = vadd.f32 %v11298, %v11346
    %v11348 = vpop.f32.mrf.mxu0
    %v11349 = vadd.f32 %v11300, %v11348
    %11350 = vdwg.mxu0
    %11351 = vmatpush.bf16.msra.mxu0 %v8179
    %11352 = vmatpush.bf16.msra.mxu0 %v8172
    %11353 = vmatpush.bf16.msra.mxu0 %v8165
    %11354 = vmatpush.bf16.msra.mxu0 %v8158
    %11355 = vmatpush.bf16.msra.mxu0 %v8151
    %11356 = vmatpush.bf16.msra.mxu0 %v8144
    %11357 = vmatpush.bf16.msra.mxu0 %v8137
    %11358 = vmatpush.bf16.msra.mxu0 %v8130
    %11359 = vmatmul.bf16.gmra.mxu0 %v6423
    %v11360 = vpop.f32.mrf.mxu0
    %v11361 = vadd.f32 %v11312, %v11360
    %v11362 = vpop.f32.mrf.mxu0
    %v11363 = vadd.f32 %v11314, %v11362
    %11364 = vmatmul.bf16.gmra.mxu0 %v6431
    %v11365 = vpop.f32.mrf.mxu0
    %v11366 = vadd.f32 %v11317, %v11365
    %v11367 = vpop.f32.mrf.mxu0
    %v11368 = vadd.f32 %v11319, %v11367
    %11369 = vmatmul.bf16.gmra.mxu0 %v6439
    %v11370 = vpop.f32.mrf.mxu0
    %v11371 = vadd.f32 %v11322, %v11370
    %v11372 = vpop.f32.mrf.mxu0
    %v11373 = vadd.f32 %v11324, %v11372
    %11374 = vmatmul.bf16.gmra.mxu0 %v6447
    %v11375 = vpop.f32.mrf.mxu0
    %v11376 = vadd.f32 %v11327, %v11375
    %v11377 = vpop.f32.mrf.mxu0
    %v11378 = vadd.f32 %v11329, %v11377
    %11379 = vmatmul.bf16.gmra.mxu0 %v6455
    %v11380 = vpop.f32.mrf.mxu0
    %v11381 = vadd.f32 %v11332, %v11380
    %v11382 = vpop.f32.mrf.mxu0
    %v11383 = vadd.f32 %v11334, %v11382
    %11384 = vmatmul.bf16.gmra.mxu0 %v6463
    %v11385 = vpop.f32.mrf.mxu0
    %v11386 = vadd.f32 %v11337, %v11385
    %v11387 = vpop.f32.mrf.mxu0
    %v11388 = vadd.f32 %v11339, %v11387
    %11389 = vmatmul.bf16.gmra.mxu0 %v6471
    %v11390 = vpop.f32.mrf.mxu0
    %v11391 = vadd.f32 %v11342, %v11390
    %v11392 = vpop.f32.mrf.mxu0
    %v11393 = vadd.f32 %v11344, %v11392
    %11394 = vmatmul.bf16.gmra.mxu0 %v6479
    %v11395 = vpop.f32.mrf.mxu0
    %v11396 = vadd.f32 %v11347, %v11395
    %v11397 = vpop.f32.mrf.mxu0
    %v11398 = vadd.f32 %v11349, %v11397
    %11399 = vdwg.mxu0
    %11400 = vmatpush.bf16.msra.mxu0 %v8235
    %11401 = vmatpush.bf16.msra.mxu0 %v8228
    %11402 = vmatpush.bf16.msra.mxu0 %v8221
    %11403 = vmatpush.bf16.msra.mxu0 %v8214
    %11404 = vmatpush.bf16.msra.mxu0 %v8207
    %11405 = vmatpush.bf16.msra.mxu0 %v8200
    %11406 = vmatpush.bf16.msra.mxu0 %v8193
    %11407 = vmatpush.bf16.msra.mxu0 %v8186
    %11408 = vmatmul.bf16.gmra.mxu0 %v6424
    %v11409 = vpop.f32.mrf.mxu0
    %v11410 = vadd.f32 %v11361, %v11409
    %v11411 = vpop.f32.mrf.mxu0
    %v11412 = vadd.f32 %v11363, %v11411
    %11413 = vmatmul.bf16.gmra.mxu0 %v6432
    %v11414 = vpop.f32.mrf.mxu0
    %v11415 = vadd.f32 %v11366, %v11414
    %v11416 = vpop.f32.mrf.mxu0
    %v11417 = vadd.f32 %v11368, %v11416
    %11418 = vmatmul.bf16.gmra.mxu0 %v6440
    %v11419 = vpop.f32.mrf.mxu0
    %v11420 = vadd.f32 %v11371, %v11419
    %v11421 = vpop.f32.mrf.mxu0
    %v11422 = vadd.f32 %v11373, %v11421
    %11423 = vmatmul.bf16.gmra.mxu0 %v6448
    %v11424 = vpop.f32.mrf.mxu0
    %v11425 = vadd.f32 %v11376, %v11424
    %v11426 = vpop.f32.mrf.mxu0
    %v11427 = vadd.f32 %v11378, %v11426
    %11428 = vmatmul.bf16.gmra.mxu0 %v6456
    %v11429 = vpop.f32.mrf.mxu0
    %v11430 = vadd.f32 %v11381, %v11429
    %v11431 = vpop.f32.mrf.mxu0
    %v11432 = vadd.f32 %v11383, %v11431
    %11433 = vmatmul.bf16.gmra.mxu0 %v6464
    %v11434 = vpop.f32.mrf.mxu0
    %v11435 = vadd.f32 %v11386, %v11434
    %v11436 = vpop.f32.mrf.mxu0
    %v11437 = vadd.f32 %v11388, %v11436
    %11438 = vmatmul.bf16.gmra.mxu0 %v6472
    %v11439 = vpop.f32.mrf.mxu0
    %v11440 = vadd.f32 %v11391, %v11439
    %v11441 = vpop.f32.mrf.mxu0
    %v11442 = vadd.f32 %v11393, %v11441
    %11443 = vmatmul.bf16.gmra.mxu0 %v6480
    %v11444 = vpop.f32.mrf.mxu0
    %v11445 = vadd.f32 %v11396, %v11444
    %v11446 = vpop.f32.mrf.mxu0
    %v11447 = vadd.f32 %v11398, %v11446
    %11448 = vdwg.mxu0
    %11449 = vmatpush.bf16.msra.mxu0 %v8291
    %11450 = vmatpush.bf16.msra.mxu0 %v8284
    %11451 = vmatpush.bf16.msra.mxu0 %v8277
    %11452 = vmatpush.bf16.msra.mxu0 %v8270
    %11453 = vmatpush.bf16.msra.mxu0 %v8263
    %11454 = vmatpush.bf16.msra.mxu0 %v8256
    %11455 = vmatpush.bf16.msra.mxu0 %v8249
    %11456 = vmatpush.bf16.msra.mxu0 %v8242
    %11457 = vmatmul.bf16.gmra.mxu0 %v6425
    %v11458 = vpop.f32.mrf.mxu0
    %v11459 = vadd.f32 %v11410, %v11458
    %v11460 = vpop.f32.mrf.mxu0
    %v11461 = vadd.f32 %v11412, %v11460
    %11462 = vmatmul.bf16.gmra.mxu0 %v6433
    %v11463 = vpop.f32.mrf.mxu0
    %v11464 = vadd.f32 %v11415, %v11463
    %v11465 = vpop.f32.mrf.mxu0
    %v11466 = vadd.f32 %v11417, %v11465
    %11467 = vmatmul.bf16.gmra.mxu0 %v6441
    %v11468 = vpop.f32.mrf.mxu0
    %v11469 = vadd.f32 %v11420, %v11468
    %v11470 = vpop.f32.mrf.mxu0
    %v11471 = vadd.f32 %v11422, %v11470
    %11472 = vmatmul.bf16.gmra.mxu0 %v6449
    %v11473 = vpop.f32.mrf.mxu0
    %v11474 = vadd.f32 %v11425, %v11473
    %v11475 = vpop.f32.mrf.mxu0
    %v11476 = vadd.f32 %v11427, %v11475
    %11477 = vmatmul.bf16.gmra.mxu0 %v6457
    %v11478 = vpop.f32.mrf.mxu0
    %v11479 = vadd.f32 %v11430, %v11478
    %v11480 = vpop.f32.mrf.mxu0
    %v11481 = vadd.f32 %v11432, %v11480
    %11482 = vmatmul.bf16.gmra.mxu0 %v6465
    %v11483 = vpop.f32.mrf.mxu0
    %v11484 = vadd.f32 %v11435, %v11483
    %v11485 = vpop.f32.mrf.mxu0
    %v11486 = vadd.f32 %v11437, %v11485
    %11487 = vmatmul.bf16.gmra.mxu0 %v6473
    %v11488 = vpop.f32.mrf.mxu0
    %v11489 = vadd.f32 %v11440, %v11488
    %v11490 = vpop.f32.mrf.mxu0
    %v11491 = vadd.f32 %v11442, %v11490
    %11492 = vmatmul.bf16.gmra.mxu0 %v6481
    %v11493 = vpop.f32.mrf.mxu0
    %v11494 = vadd.f32 %v11445, %v11493
    %v11495 = vpop.f32.mrf.mxu0
    %v11496 = vadd.f32 %v11447, %v11495
    %11497 = vdwg.mxu0
    %11498 = vmatpush.bf16.msra.mxu0 %v8347
    %11499 = vmatpush.bf16.msra.mxu0 %v8340
    %11500 = vmatpush.bf16.msra.mxu0 %v8333
    %11501 = vmatpush.bf16.msra.mxu0 %v8326
    %11502 = vmatpush.bf16.msra.mxu0 %v8319
    %11503 = vmatpush.bf16.msra.mxu0 %v8312
    %11504 = vmatpush.bf16.msra.mxu0 %v8305
    %11505 = vmatpush.bf16.msra.mxu0 %v8298
    %11506 = vmatmul.bf16.gmra.mxu0 %v6426
    %v11507 = vpop.f32.mrf.mxu0
    %v11508 = vadd.f32 %v11459, %v11507
    %v11509 = vpop.f32.mrf.mxu0
    %v11510 = vadd.f32 %v11461, %v11509
    %11511 = vmatmul.bf16.gmra.mxu0 %v6434
    %v11512 = vpop.f32.mrf.mxu0
    %v11513 = vadd.f32 %v11464, %v11512
    %v11514 = vpop.f32.mrf.mxu0
    %v11515 = vadd.f32 %v11466, %v11514
    %11516 = vmatmul.bf16.gmra.mxu0 %v6442
    %v11517 = vpop.f32.mrf.mxu0
    %v11518 = vadd.f32 %v11469, %v11517
    %v11519 = vpop.f32.mrf.mxu0
    %v11520 = vadd.f32 %v11471, %v11519
    %11521 = vmatmul.bf16.gmra.mxu0 %v6450
    %v11522 = vpop.f32.mrf.mxu0
    %v11523 = vadd.f32 %v11474, %v11522
    %v11524 = vpop.f32.mrf.mxu0
    %v11525 = vadd.f32 %v11476, %v11524
    %11526 = vmatmul.bf16.gmra.mxu0 %v6458
    %v11527 = vpop.f32.mrf.mxu0
    %v11528 = vadd.f32 %v11479, %v11527
    %v11529 = vpop.f32.mrf.mxu0
    %v11530 = vadd.f32 %v11481, %v11529
    %11531 = vmatmul.bf16.gmra.mxu0 %v6466
    %v11532 = vpop.f32.mrf.mxu0
    %v11533 = vadd.f32 %v11484, %v11532
    %v11534 = vpop.f32.mrf.mxu0
    %v11535 = vadd.f32 %v11486, %v11534
    %11536 = vmatmul.bf16.gmra.mxu0 %v6474
    %v11537 = vpop.f32.mrf.mxu0
    %v11538 = vadd.f32 %v11489, %v11537
    %v11539 = vpop.f32.mrf.mxu0
    %v11540 = vadd.f32 %v11491, %v11539
    %11541 = vmatmul.bf16.gmra.mxu0 %v6482
    %v11542 = vpop.f32.mrf.mxu0
    %v11543 = vadd.f32 %v11494, %v11542
    %v11544 = vpop.f32.mrf.mxu0
    %v11545 = vadd.f32 %v11496, %v11544
    %11546 = vdwg.mxu0
    %11547 = vmatpush.bf16.msra.mxu0 %v8403
    %11548 = vmatpush.bf16.msra.mxu0 %v8396
    %11549 = vmatpush.bf16.msra.mxu0 %v8389
    %11550 = vmatpush.bf16.msra.mxu0 %v8382
    %11551 = vmatpush.bf16.msra.mxu0 %v8375
    %11552 = vmatpush.bf16.msra.mxu0 %v8368
    %11553 = vmatpush.bf16.msra.mxu0 %v8361
    %11554 = vmatpush.bf16.msra.mxu0 %v8354
    %11555 = vmatmul.bf16.gmra.mxu0 %v6427
    %v11556 = vpop.f32.mrf.mxu0
    %v11557 = vadd.f32 %v11508, %v11556
    %v11558 = vpop.f32.mrf.mxu0
    %v11559 = vadd.f32 %v11510, %v11558
    %11560 = vmatmul.bf16.gmra.mxu0 %v6435
    %v11561 = vpop.f32.mrf.mxu0
    %v11562 = vadd.f32 %v11513, %v11561
    %v11563 = vpop.f32.mrf.mxu0
    %v11564 = vadd.f32 %v11515, %v11563
    %11565 = vmatmul.bf16.gmra.mxu0 %v6443
    %v11566 = vpop.f32.mrf.mxu0
    %v11567 = vadd.f32 %v11518, %v11566
    %v11568 = vpop.f32.mrf.mxu0
    %v11569 = vadd.f32 %v11520, %v11568
    %11570 = vmatmul.bf16.gmra.mxu0 %v6451
    %v11571 = vpop.f32.mrf.mxu0
    %v11572 = vadd.f32 %v11523, %v11571
    %v11573 = vpop.f32.mrf.mxu0
    %v11574 = vadd.f32 %v11525, %v11573
    %11575 = vmatmul.bf16.gmra.mxu0 %v6459
    %v11576 = vpop.f32.mrf.mxu0
    %v11577 = vadd.f32 %v11528, %v11576
    %v11578 = vpop.f32.mrf.mxu0
    %v11579 = vadd.f32 %v11530, %v11578
    %11580 = vmatmul.bf16.gmra.mxu0 %v6467
    %v11581 = vpop.f32.mrf.mxu0
    %v11582 = vadd.f32 %v11533, %v11581
    %v11583 = vpop.f32.mrf.mxu0
    %v11584 = vadd.f32 %v11535, %v11583
    %11585 = vmatmul.bf16.gmra.mxu0 %v6475
    %v11586 = vpop.f32.mrf.mxu0
    %v11587 = vadd.f32 %v11538, %v11586
    %v11588 = vpop.f32.mrf.mxu0
    %v11589 = vadd.f32 %v11540, %v11588
    %11590 = vmatmul.bf16.gmra.mxu0 %v6483
    %v11591 = vpop.f32.mrf.mxu0
    %v11592 = vadd.f32 %v11543, %v11591
    %v11593 = vpop.f32.mrf.mxu0
    %v11594 = vadd.f32 %v11545, %v11593
    %11595 = vdwg.mxu0
    %v11596 = vtanh.pop %v9205
    %v11597 = vtanh.pop %v9597
    %v11598 = vtanh.pop %v9989
    %v11599 = vtanh.pop %v10381
    %v11600 = vtanh.pop %v10773
    %v11601 = vtanh.pop %v11165
    %v11602 = vtanh.pop %v11557
    %v11603 = vtanh.pop %v9207
    %v11604 = vtanh.pop %v9599
    %v11605 = vtanh.pop %v9991
    %v11606 = vtanh.pop %v10383
    %v11607 = vtanh.pop %v10775
    %v11608 = vtanh.pop %v11167
    %v11609 = vtanh.pop %v11559
    %v11610 = vtanh.pop %v9210
    %v11611 = vtanh.pop %v9602
    %v11612 = vtanh.pop %v9994
    %v11613 = vtanh.pop %v10386
    %v11614 = vtanh.pop %v10778
    %v11615 = vtanh.pop %v11170
    %v11616 = vtanh.pop %v11562
    %v11617 = vtanh.pop %v9212
    %v11618 = vtanh.pop %v9604
    %v11619 = vtanh.pop %v9996
    %v11620 = vtanh.pop %v10388
    %v11621 = vtanh.pop %v10780
    %v11622 = vtanh.pop %v11172
    %v11623 = vtanh.pop %v11564
    %v11624 = vtanh.pop %v9215
    %v11625 = vtanh.pop %v9607
    %v11626 = vtanh.pop %v9999
    %v11627 = vtanh.pop %v10391
    %v11628 = vtanh.pop %v10783
    %v11629 = vtanh.pop %v11175
    %v11630 = vtanh.pop %v11567
    %v11631 = vtanh.pop %v9217
    %v11632 = vtanh.pop %v9609
    %v11633 = vtanh.pop %v10001
    %v11634 = vtanh.pop %v10393
    %v11635 = vtanh.pop %v10785
    %v11636 = vtanh.pop %v11177
    %v11637 = vtanh.pop %v11569
    %v11638 = vtanh.pop %v9220
    %v11639 = vtanh.pop %v9612
    %v11640 = vtanh.pop %v10004
    %v11641 = vtanh.pop %v10396
    %v11642 = vtanh.pop %v10788
    %v11643 = vtanh.pop %v11180
    %v11644 = vtanh.pop %v11572
    %v11645 = vtanh.pop %v9222
    %v11646 = vtanh.pop %v9614
    %v11647 = vtanh.pop %v10006
    %v11648 = vtanh.pop %v10398
    %v11649 = vtanh.pop %v10790
    %v11650 = vtanh.pop %v11182
    %v11651 = vtanh.pop %v11574
    %v11652 = vtanh.pop %v9225
    %v11653 = vtanh.pop %v9617
    %v11654 = vtanh.pop %v10009
    %v11655 = vtanh.pop %v10401
    %v11656 = vtanh.pop %v10793
    %v11657 = vtanh.pop %v11185
    %v11658 = vtanh.pop %v11577
    %v11659 = vtanh.pop %v9227
    %v11660 = vtanh.pop %v9619
    %v11661 = vtanh.pop %v10011
    %v11662 = vtanh.pop %v10403
    %v11663 = vtanh.pop %v10795
    %v11664 = vtanh.pop %v11187
    %v11665 = vtanh.pop %v11579
    %v11666 = vtanh.pop %v9230
    %v11667 = vtanh.pop %v9622
    %v11668 = vtanh.pop %v10014
    %v11669 = vtanh.pop %v10406
    %v11670 = vtanh.pop %v10798
    %v11671 = vtanh.pop %v11190
    %v11672 = vtanh.pop %v11582
    %v11673 = vtanh.pop %v9232
    %v11674 = vtanh.pop %v9624
    %v11675 = vtanh.pop %v10016
    %v11676 = vtanh.pop %v10408
    %v11677 = vtanh.pop %v10800
    %v11678 = vtanh.pop %v11192
    %v11679 = vtanh.pop %v11584
    %v11680 = vtanh.pop %v9235
    %v11681 = vtanh.pop %v9627
    %v11682 = vtanh.pop %v10019
    %v11683 = vtanh.pop %v10411
    %v11684 = vtanh.pop %v10803
    %v11685 = vtanh.pop %v11195
    %v11686 = vtanh.pop %v11587
    %v11687 = vtanh.pop %v9237
    %v11688 = vtanh.pop %v9629
    %v11689 = vtanh.pop %v10021
    %v11690 = vtanh.pop %v10413
    %v11691 = vtanh.pop %v10805
    %v11692 = vtanh.pop %v11197
    %v11693 = vtanh.pop %v11589
    %v11694 = vtanh.pop %v9240
    %v11695 = vtanh.pop %v9632
    %v11696 = vtanh.pop %v10024
    %v11697 = vtanh.pop %v10416
    %v11698 = vtanh.pop %v10808
    %v11699 = vtanh.pop %v11200
    %v11700 = vtanh.pop %v11592
    %v11701 = vtanh.pop %v9242
    %v11702 = vtanh.pop %v9634
    %v11703 = vtanh.pop %v10026
    %v11704 = vtanh.pop %v10418
    %v11705 = vtanh.pop %v10810
    %v11706 = vtanh.pop %v11202
    %v11707 = vtanh.pop %v11594
    %v11708 = vpack.c.bf16 %v11597, %v11596
    %v11709 = vpack.c.bf16 %v11599, %v11598
    %v11710 = vpack.c.bf16 %v11601, %v11600
    %v11711 = vpack.c.bf16 %v11602, %v11602
    %v11712 = vpack.c.bf16 %v11604, %v11603
    %v11713 = vpack.c.bf16 %v11606, %v11605
    %v11714 = vpack.c.bf16 %v11608, %v11607
    %v11715 = vpack.c.bf16 %v11609, %v11609
    %v11716 = vpack.c.bf16 %v11611, %v11610
    %v11717 = vpack.c.bf16 %v11613, %v11612
    %v11718 = vpack.c.bf16 %v11615, %v11614
    %v11719 = vpack.c.bf16 %v11616, %v11616
    %v11720 = vpack.c.bf16 %v11618, %v11617
    %v11721 = vpack.c.bf16 %v11620, %v11619
    %v11722 = vpack.c.bf16 %v11622, %v11621
    %v11723 = vpack.c.bf16 %v11623, %v11623
    %v11724 = vpack.c.bf16 %v11625, %v11624
    %v11725 = vpack.c.bf16 %v11627, %v11626
    %v11726 = vpack.c.bf16 %v11629, %v11628
    %v11727 = vpack.c.bf16 %v11630, %v11630
    %v11728 = vpack.c.bf16 %v11632, %v11631
    %v11729 = vpack.c.bf16 %v11634, %v11633
    %v11730 = vpack.c.bf16 %v11636, %v11635
    %v11731 = vpack.c.bf16 %v11637, %v11637
    %v11732 = vpack.c.bf16 %v11639, %v11638
    %v11733 = vpack.c.bf16 %v11641, %v11640
    %v11734 = vpack.c.bf16 %v11643, %v11642
    %v11735 = vpack.c.bf16 %v11644, %v11644
    %v11736 = vpack.c.bf16 %v11646, %v11645
    %v11737 = vpack.c.bf16 %v11648, %v11647
    %v11738 = vpack.c.bf16 %v11650, %v11649
    %v11739 = vpack.c.bf16 %v11651, %v11651
    %v11740 = vpack.c.bf16 %v11653, %v11652
    %v11741 = vpack.c.bf16 %v11655, %v11654
    %v11742 = vpack.c.bf16 %v11657, %v11656
    %v11743 = vpack.c.bf16 %v11658, %v11658
    %v11744 = vpack.c.bf16 %v11660, %v11659
    %v11745 = vpack.c.bf16 %v11662, %v11661
    %v11746 = vpack.c.bf16 %v11664, %v11663
    %v11747 = vpack.c.bf16 %v11665, %v11665
    %v11748 = vpack.c.bf16 %v11667, %v11666
    %v11749 = vpack.c.bf16 %v11669, %v11668
    %v11750 = vpack.c.bf16 %v11671, %v11670
    %v11751 = vpack.c.bf16 %v11672, %v11672
    %v11752 = vpack.c.bf16 %v11674, %v11673
    %v11753 = vpack.c.bf16 %v11676, %v11675
    %v11754 = vpack.c.bf16 %v11678, %v11677
    %v11755 = vpack.c.bf16 %v11679, %v11679
    %v11756 = vpack.c.bf16 %v11681, %v11680
    %v11757 = vpack.c.bf16 %v11683, %v11682
    %v11758 = vpack.c.bf16 %v11685, %v11684
    %v11759 = vpack.c.bf16 %v11686, %v11686
    %v11760 = vpack.c.bf16 %v11688, %v11687
    %v11761 = vpack.c.bf16 %v11690, %v11689
    %v11762 = vpack.c.bf16 %v11692, %v11691
    %v11763 = vpack.c.bf16 %v11693, %v11693
    %v11764 = vpack.c.bf16 %v11695, %v11694
    %v11765 = vpack.c.bf16 %v11697, %v11696
    %v11766 = vpack.c.bf16 %v11699, %v11698
    %v11767 = vpack.c.bf16 %v11700, %v11700
    %v11768 = vpack.c.bf16 %v11702, %v11701
    %v11769 = vpack.c.bf16 %v11704, %v11703
    %v11770 = vpack.c.bf16 %v11706, %v11705
    %v11771 = vpack.c.bf16 %v11707, %v11707
    %11772 = vst [vmem:[%s9] sm:$0xff] %v11708
    %11773 = vst [vmem:[%s9 + $0x8] sm:$0xff] %v11709
    %11774 = vst [vmem:[%s9 + $0x10] sm:$0xff] %v11710
    %11775 = vst [vmem:[%s9 + $0x18] sm:$0xf] %v11711
    %11776 = vst [vmem:[%s9 + $0x1c] sm:$0xff] %v11712
    %11777 = vst [vmem:[%s9 + $0x24] sm:$0xff] %v11713
    %11778 = vst [vmem:[%s9 + $0x2c] sm:$0xff] %v11714
    %11779 = vst [vmem:[%s9 + $0x34] sm:$0xf] %v11715
    %11780 = vst [vmem:[%s9 + $0x38] sm:$0xff] %v11716
    %11781 = vst [vmem:[%s9 + $0x40] sm:$0xff] %v11717
    %11782 = vst [vmem:[%s9 + $0x48] sm:$0xff] %v11718
    %11783 = vst [vmem:[%s9 + $0x50] sm:$0xf] %v11719
    %11784 = vst [vmem:[%s9 + $0x54] sm:$0xff] %v11720
    %11785 = vst [vmem:[%s9 + $0x5c] sm:$0xff] %v11721
    %11786 = vst [vmem:[%s9 + $0x64] sm:$0xff] %v11722
    %11787 = vst [vmem:[%s9 + $0x6c] sm:$0xf] %v11723
    %11788 = vst [vmem:[%s9 + $0x70] sm:$0xff] %v11724
    %11789 = vst [vmem:[%s9 + $0x78] sm:$0xff] %v11725
    %11790 = vst [vmem:[%s9 + $0x80] sm:$0xff] %v11726
    %11791 = vst [vmem:[%s9 + $0x88] sm:$0xf] %v11727
    %11792 = vst [vmem:[%s9 + $0x8c] sm:$0xff] %v11728
    %11793 = vst [vmem:[%s9 + $0x94] sm:$0xff] %v11729
    %11794 = vst [vmem:[%s9 + $0x9c] sm:$0xff] %v11730
    %11795 = vst [vmem:[%s9 + $0xa4] sm:$0xf] %v11731
    %11796 = vst [vmem:[%s9 + $0xa8] sm:$0xff] %v11732
    %11797 = vst [vmem:[%s9 + $0xb0] sm:$0xff] %v11733
    %11798 = vst [vmem:[%s9 + $0xb8] sm:$0xff] %v11734
    %11799 = vst [vmem:[%s9 + $0xc0] sm:$0xf] %v11735
    %11800 = vst [vmem:[%s9 + $0xc4] sm:$0xff] %v11736
    %11801 = vst [vmem:[%s9 + $0xcc] sm:$0xff] %v11737
    %11802 = vst [vmem:[%s9 + $0xd4] sm:$0xff] %v11738
    %11803 = vst [vmem:[%s9 + $0xdc] sm:$0xf] %v11739
    %11804 = vst [vmem:[%s9 + $0xe0] sm:$0xff] %v11740
    %11805 = vst [vmem:[%s9 + $0xe8] sm:$0xff] %v11741
    %11806 = vst [vmem:[%s9 + $0xf0] sm:$0xff] %v11742
    %11807 = vst [vmem:[%s9 + $0xf8] sm:$0xf] %v11743
    %11808 = vst [vmem:[%s9 + $0xfc] sm:$0xff] %v11744
    %11809 = vst [vmem:[%s9 + $0x104] sm:$0xff] %v11745
    %11810 = vst [vmem:[%s9 + $0x10c] sm:$0xff] %v11746
    %11811 = vst [vmem:[%s9 + $0x114] sm:$0xf] %v11747
    %11812 = vst [vmem:[%s9 + $0x118] sm:$0xff] %v11748
    %11813 = vst [vmem:[%s9 + $0x120] sm:$0xff] %v11749
    %11814 = vst [vmem:[%s9 + $0x128] sm:$0xff] %v11750
    %11815 = vst [vmem:[%s9 + $0x130] sm:$0xf] %v11751
    %11816 = vst [vmem:[%s9 + $0x134] sm:$0xff] %v11752
    %11817 = vst [vmem:[%s9 + $0x13c] sm:$0xff] %v11753
    %11818 = vst [vmem:[%s9 + $0x144] sm:$0xff] %v11754
    %11819 = vst [vmem:[%s9 + $0x14c] sm:$0xf] %v11755
    %11820 = vst [vmem:[%s9 + $0x150] sm:$0xff] %v11756
    %11821 = vst [vmem:[%s9 + $0x158] sm:$0xff] %v11757
    %11822 = vst [vmem:[%s9 + $0x160] sm:$0xff] %v11758
    %11823 = vst [vmem:[%s9 + $0x168] sm:$0xf] %v11759
    %11824 = vst [vmem:[%s9 + $0x16c] sm:$0xff] %v11760
    %11825 = vst [vmem:[%s9 + $0x174] sm:$0xff] %v11761
    %11826 = vst [vmem:[%s9 + $0x17c] sm:$0xff] %v11762
    %11827 = vst [vmem:[%s9 + $0x184] sm:$0xf] %v11763
    %11828 = vst [vmem:[%s9 + $0x188] sm:$0xff] %v11764
    %11829 = vst [vmem:[%s9 + $0x190] sm:$0xff] %v11765
    %11830 = vst [vmem:[%s9 + $0x198] sm:$0xff] %v11766
    %11831 = vst [vmem:[%s9 + $0x1a0] sm:$0xf] %v11767
    %11832 = vst [vmem:[%s9 + $0x1a4] sm:$0xff] %v11768
    %11833 = vst [vmem:[%s9 + $0x1ac] sm:$0xff] %v11769
    %11834 = vst [vmem:[%s9 + $0x1b4] sm:$0xff] %v11770
    %11835 = vst [vmem:[%s9 + $0x1bc] sm:$0xf] %v11771
    // Predicated region
    $region66: #{generator_forward.1} parent=1 // pred_check
      _
    $region67: #{generator_forward.1} parent=1 // pred_check_branch
      %11837 = sbr.rel (0) target = $region69
    $region68: #{generator_forward.1} parent=1 // pred_region
      _
    $region69: #{generator_forward.1} parent=1 // pred_fallthru
      _
    // Predicated region
    $region70: #{generator_forward.1} parent=1 // pred_check
      _
    $region71: #{generator_forward.1} parent=1 // pred_check_branch
      %11839 = sbr.rel (0) target = $region73
    $region72: #{generator_forward.1} parent=1 // pred_region
      _
    $region73: #{generator_forward.1} parent=1 // pred_fallthru
      _
    %11840 = vsyncpa [#allocation3], 1
    %11841 = vsyncpa [#allocation5], 1
    %11842 = vsyncpa [#allocation8], 1
    %11843 = vsyncpa [#allocation11], 1

</llo_original>
